<compile_context>
chip_gen: v7x
topology: tpu7x:2x2x1
jax: 0.10.0
libtpu: 0.0.40
codegen_flags: <defaults>
</compile_context>

<pallas_src>
import functools

import numpy as np
import jax
import jax.numpy as jnp
from jax import lax
from jax.experimental import pallas as pl
from jax.experimental.pallas import tpu as pltpu

KSIZE = 10   # ConvTranspose1d kernel_size (fixed in the module)
PAD = 4      # ConvTranspose1d padding     (fixed in the module)

# TODO(synk): compute_similarity() is not defined in the spec; only the 'EUC' (Euclidean)
#             branch is implemented (CID/COR/... variants omitted).
# TODO(synk): init_centroids() uses sklearn AgglomerativeClustering on host; it is
#             training-time setup, not part of forward(), so it is not translated.


# ------------------------------ kernel 1: Q / P -------------------------------
def _qp_kernel(x_ref, c_ref, q_ref, p_ref, *, alpha):
    """Student-t soft assignments Q and target distribution P.

    x_ref: (B, D) latents   c_ref: (K, D) centroids   q_ref/p_ref: (B, K)
    """
    x = x_ref[...]
    c = c_ref[...]
    d_feat = x.shape[1]
    # ||x - c||^2 = ||x||^2 + ||c||^2 - 2 x.c   (x @ c^T on the MXU, f32 accumulation)
    xc = lax.dot_general(x, c, (((1,), (1,)), ((), ())),
                         preferred_element_type=jnp.float32)              # (B, K)
    x2 = jnp.sum(x * x, axis=1, keepdims=True)                            # (B, 1)
    c2 = lax.dot_general(jnp.ones((1, d_feat), jnp.float32), c * c,
                         (((1,), (1,)), ((), ())),
                         preferred_element_type=jnp.float32)              # (1, K)
    dist = jnp.sqrt(jnp.maximum(x2 + c2 - 2.0 * xc, 0.0))                 # (B, K)

    expo = -(alpha + 1.0) / 2.0
    q = jnp.exp(expo * jnp.log(1.0 + dist / alpha))    # == (1 + dist/alpha)^expo
    q = q / jnp.sum(q, axis=1, keepdims=True)          # row-normalize (over clusters)
    q_ref[...] = q

    p = (q * q) / jnp.sum(q, axis=0, keepdims=True)    # / column sums (over batch)
    p = p / jnp.sum(p, axis=1, keepdims=True)
    p_ref[...] = p


# ---------------------------- kernel 2: HeatMapNet ----------------------------
def _heatmap_kernel(up_ref, w_ref, b_ref, hmap_ref, probs_ref, *, l_out, ksize):
    """Fused ConvTranspose1d(in=1, stride=1) + ReLU + softmax-over-time max + cluster softmax.

    up_ref:   (TB, l_out + K - 1)  upsampled series, zero-padded by K-1-PAD on the left
    w_ref:    (C, K)  spatially flipped deconv weight: w_flip[c, d] = w[0, c, K-1-d]
    b_ref:    (C, 1)  bias
    hmap_ref: (TB, C, l_out)     probs_ref: (TB, C, 1)
    """
    w = w_ref[...]                                          # (C, K)
    acc = jnp.zeros(hmap_ref.shape, jnp.float32)            # (TB, C, l_out)
    # out[b, c, t] = bias[c] + sum_d up_pad[b, t + d] * w_flip[c, d]
    for d in range(ksize):                                  # K = 10 per-tap FMAs (VPU)
        shift = up_ref[:, d:d + l_out]                      # (TB, l_out)
        acc = acc + shift[:, None, :] * w[:, d:d + 1][None, :, :]
    z = jnp.maximum(acc + b_ref[...][None, :, :], 0.0)      # ReLU
    hmap_ref[...] = z

    # max_t softmax(z, dim=time)  ==  1 / sum_t exp(z - max_t z)
    m = jnp.max(z, axis=2, keepdims=True)                   # (TB, C, 1)
    s = jnp.sum(jnp.exp(z - m), axis=2, keepdims=True)      # (TB, C, 1)
    qh = 1.0 / s
    # softmax over clusters
    qm = jnp.max(qh, axis=1, keepdims=True)
    qe = jnp.exp(qh - qm)
    probs_ref[...] = qe / jnp.sum(qe, axis=1, keepdims=True)


# --------------------------------- wrapper ------------------------------------
def clusternet_forward(x, centroids, w_deconv, b_deconv, *, alpha, pooling):
    """x: (B, n_hidden) latent (the PyTorch x.squeeze()).  centroids: (n_clusters, n_hidden).
    w_deconv: (1, n_clusters, 10) ConvTranspose1d weight (in, out, K).  b_deconv: (n_clusters,).
    Returns (Q, P, hmap, hmap_probs)."""
    b_sz, d_hidden = x.shape
    n_clusters = centroids.shape[0]
    c_out, ks = w_deconv.shape[1], w_deconv.shape[2]
    assert ks == KSIZE

    # ---- kernel 1: Q / P (single step: P needs column sums over the whole batch) ----
    q, p = pl.pallas_call(
        functools.partial(_qp_kernel, alpha=float(alpha)),
        out_shape=(jax.ShapeDtypeStruct((b_sz, n_clusters), jnp.float32),
                   jax.ShapeDtypeStruct((b_sz, n_clusters), jnp.float32)),
        grid=(1,),
        in_specs=[pl.BlockSpec((b_sz, d_hidden), lambda i: (0, 0)),
                  pl.BlockSpec((n_clusters, d_hidden), lambda i: (0, 0))],
        out_specs=(pl.BlockSpec((b_sz, n_clusters), lambda i: (0, 0)),
                   pl.BlockSpec((b_sz, n_clusters), lambda i: (0, 0))),
    )(x, centroids)

    # ---- kernel 2: HeatMapNet ----
    l_in = d_hidden * pooling
    l_out = l_in + 1 - pooling            # ConvTranspose1d length (l_in+1), then [:, :, :-pooling]
    l_pad = l_out + ks - 1

    # Zero-FLOP glue (tiny, fused under jit): nearest upsample + zero pad.
    up = jnp.repeat(x, pooling, axis=1)                                   # (B, l_in)
    up_pad = jnp.pad(up, ((0, 0), (ks - 1 - PAD, ks)))[:, :l_pad]         # (B, l_pad)

    # Deconv params: just a flip of ~C*K*4 bytes -- no dense banded W_big is built.
    w_flip = w_deconv[0, :, ::-1]                                         # (C, K)
    bias2d = b_deconv.reshape(c_out, 1)                                   # (C, 1)

    tb = 8 if b_sz % 8 == 0 else b_sz   # 8-row slabs: full sublanes; >1 grid step for v7x's 2 TCs
    hmap, probs3 = pl.pallas_call(
        functools.partial(_heatmap_kernel, l_out=l_out, ksize=ks),
        out_shape=(jax.ShapeDtypeStruct((b_sz, c_out, l_out), jnp.float32),
                   jax.ShapeDtypeStruct((b_sz, c_out, 1), jnp.float32)),
        grid=(b_sz // tb,),
        in_specs=[pl.BlockSpec((tb, l_pad), lambda i: (i, 0)),
                  pl.BlockSpec((c_out, ks), lambda i: (0, 0)),
                  pl.BlockSpec((c_out, 1), lambda i: (0, 0))],
        out_specs=(pl.BlockSpec((tb, c_out, l_out), lambda i: (i, 0, 0)),
                   pl.BlockSpec((tb, c_out, 1), lambda i: (i, 0, 0))),
        compiler_params=pltpu.CompilerParams(dimension_semantics=("parallel",)),
    )(up_pad, w_flip, bias2d)

    return q, p, hmap, probs3[:, :, 0]


# -------------------------------- reference -----------------------------------
def _reference(x, centroids, w, b, alpha, pooling):
    """Pure-JAX mirror of ClusterNetSmooth.forward (similarity='EUC') + HeatMapNet."""
    diff = x[:, None, :] - centroids[None, :, :]
    sim = jnp.sqrt(jnp.sum(diff * diff, axis=2))
    q = jnp.power(1.0 + sim / alpha, -(alpha + 1.0) / 2.0)
    q = q / jnp.sum(q, axis=1, keepdims=True)
    p = (q ** 2) / jnp.sum(q, axis=0, keepdims=True)
    p = p / jnp.sum(p, axis=1, keepdims=True)

    b_sz, d_hidden = x.shape
    c_out, ks = w.shape[1], w.shape[2]
    up = jnp.repeat(x, pooling, axis=1)[:, None, :]                # (B, 1, l_in) nearest upsample
    # ConvTranspose1d(stride=1, padding=PAD) == correlation with the spatially flipped kernel
    # on an input zero-padded by K-1-PAD on each side.
    rhs = jnp.transpose(w, (1, 0, 2))[:, :, ::-1]                  # (C, 1, K)
    full = lax.conv_general_dilated(
        up, rhs, window_strides=(1,),
        padding=[(ks - 1 - PAD, ks - 1 - PAD)],
        dimension_numbers=("NCH", "OIH", "NCH"))                   # (B, C, l_in + 1)
    full = full + b[None, :, None]
    z = jnp.maximum(full[:, :, :-pooling], 0.0)
    qh = jnp.max(jax.nn.softmax(z, axis=2), axis=2)
    probs = jax.nn.softmax(qh, axis=1)
    return q, p, z, probs


if __name__ == "__main__":
    key = jax.random.PRNGKey(0)
    kx, kc, kw, kb = jax.random.split(key, 4)

    B = 16            # batch (multiple of 8 -> full sublanes, 2 "parallel" grid steps)
    D = 64            # n_hidden (latent / centroid size)
    NC = 16           # n_clusters == n_heatmap_filters
    POOL = 8          # pooling
    ALPHA = 1.0

    x = jax.random.normal(kx, (B, D), jnp.float32)
    centroids = jax.random.normal(kc, (NC, D), jnp.float32)
    bound = 1.0 / np.sqrt(1 * KSIZE)
    w = jax.random.uniform(kw, (1, NC, KSIZE), jnp.float32, -bound, bound)
    b = jax.random.uniform(kb, (NC,), jnp.float32, -bound, bound)

    fwd = jax.jit(functools.partial(clusternet_forward, alpha=ALPHA, pooling=POOL))
    q, p, hmap, probs = jax.block_until_ready(fwd(x, centroids, w, b))

    L_out = D * POOL + 1 - POOL
    assert q.shape == (B, NC) and p.shape == (B, NC)
    assert hmap.shape == (B, NC, L_out) and probs.shape == (B, NC)

    rq, rp, rh, rpr = _reference(x, centroids, w, b, ALPHA, POOL)
    np.testing.assert_allclose(np.asarray(q), np.asarray(rq), rtol=1e-4, atol=1e-5)
    np.testing.assert_allclose(np.asarray(p), np.asarray(rp), rtol=1e-4, atol=1e-5)
    np.testing.assert_allclose(np.asarray(hmap), np.asarray(rh), rtol=1e-4, atol=1e-5)
    np.testing.assert_allclose(np.asarray(probs), np.asarray(rpr), rtol=1e-4, atol=1e-5)

    print("KERNEL_OK")
</pallas_src>

<mosaic_0001>
module attributes {stable_mosaic.version = 11 : i64} {
  func.func @_heatmap_kernel(%arg0: i32, %arg1: memref<8x514xf32, #tpu.memory_space<vmem>>, %arg2: memref<16x10xf32, #tpu.memory_space<vmem>>, %arg3: memref<16x1xf32, #tpu.memory_space<vmem>>, %arg4: memref<8x16x505xf32, #tpu.memory_space<vmem>>, %arg5: memref<8x16x1xf32, #tpu.memory_space<vmem>>) attributes {dimension_semantics = [#tpu.dimension_semantics<parallel>], iteration_bounds = array<i64: 2>, scalar_prefetch = 0 : i64, scratch_operands = 0 : i64, tpu.core_type = #tpu.core_type<tc>, window_params = [{transform_indices = @transform_0, window_bounds = array<i64: 8, 514>}, {pipeline_mode = #tpu.pipeline_mode<synchronous>, transform_indices = @transform_1, window_bounds = array<i64: 16, 10>}, {pipeline_mode = #tpu.pipeline_mode<synchronous>, transform_indices = @transform_2, window_bounds = array<i64: 16, 1>}, {transform_indices = @transform_3, window_bounds = array<i64: 8, 16, 505>}, {transform_indices = @transform_4, window_bounds = array<i64: 8, 16, 1>}]} {
    %c0 = arith.constant 0 : index
    %c0_0 = arith.constant 0 : index
    %0 = vector.load %arg2[%c0, %c0_0] : memref<16x10xf32, #tpu.memory_space<vmem>>, vector<16x10xf32>
    %cst = arith.constant 0.000000e+00 : f32
    %1 = vector.broadcast %cst : f32 to vector<8x16x505xf32>
    %c0_1 = arith.constant 0 : index
    %c0_2 = arith.constant 0 : index
    %2 = vector.load %arg1[%c0_1, %c0_2] : memref<8x514xf32, #tpu.memory_space<vmem>>, vector<8x505xf32>
    %3 = vector.shape_cast %2 : vector<8x505xf32> to vector<8x1x505xf32>
    %4 = vector.extract_strided_slice %0 {offsets = [0, 0], sizes = [16, 1], strides = [1, 1]} : vector<16x10xf32> to vector<16x1xf32>
    %5 = vector.shape_cast %4 : vector<16x1xf32> to vector<1x16x1xf32>
    %6 = vector.broadcast %3 : vector<8x1x505xf32> to vector<8x16x505xf32>
    %7 = vector.broadcast %5 : vector<1x16x1xf32> to vector<8x16x505xf32>
    %8 = arith.mulf %6, %7 : vector<8x16x505xf32>
    %9 = arith.addf %1, %8 : vector<8x16x505xf32>
    %c0_3 = arith.constant 0 : index
    %c1 = arith.constant 1 : index
    %10 = vector.load %arg1[%c0_3, %c1] : memref<8x514xf32, #tpu.memory_space<vmem>>, vector<8x505xf32>
    %11 = vector.shape_cast %10 : vector<8x505xf32> to vector<8x1x505xf32>
    %12 = vector.extract_strided_slice %0 {offsets = [0, 1], sizes = [16, 1], strides = [1, 1]} : vector<16x10xf32> to vector<16x1xf32>
    %13 = vector.shape_cast %12 : vector<16x1xf32> to vector<1x16x1xf32>
    %14 = vector.broadcast %11 : vector<8x1x505xf32> to vector<8x16x505xf32>
    %15 = vector.broadcast %13 : vector<1x16x1xf32> to vector<8x16x505xf32>
    %16 = arith.mulf %14, %15 : vector<8x16x505xf32>
    %17 = arith.addf %9, %16 : vector<8x16x505xf32>
    %c0_4 = arith.constant 0 : index
    %c2 = arith.constant 2 : index
    %18 = vector.load %arg1[%c0_4, %c2] : memref<8x514xf32, #tpu.memory_space<vmem>>, vector<8x505xf32>
    %19 = vector.shape_cast %18 : vector<8x505xf32> to vector<8x1x505xf32>
    %20 = vector.extract_strided_slice %0 {offsets = [0, 2], sizes = [16, 1], strides = [1, 1]} : vector<16x10xf32> to vector<16x1xf32>
    %21 = vector.shape_cast %20 : vector<16x1xf32> to vector<1x16x1xf32>
    %22 = vector.broadcast %19 : vector<8x1x505xf32> to vector<8x16x505xf32>
    %23 = vector.broadcast %21 : vector<1x16x1xf32> to vector<8x16x505xf32>
    %24 = arith.mulf %22, %23 : vector<8x16x505xf32>
    %25 = arith.addf %17, %24 : vector<8x16x505xf32>
    %c0_5 = arith.constant 0 : index
    %c3 = arith.constant 3 : index
    %26 = vector.load %arg1[%c0_5, %c3] : memref<8x514xf32, #tpu.memory_space<vmem>>, vector<8x505xf32>
    %27 = vector.shape_cast %26 : vector<8x505xf32> to vector<8x1x505xf32>
    %28 = vector.extract_strided_slice %0 {offsets = [0, 3], sizes = [16, 1], strides = [1, 1]} : vector<16x10xf32> to vector<16x1xf32>
    %29 = vector.shape_cast %28 : vector<16x1xf32> to vector<1x16x1xf32>
    %30 = vector.broadcast %27 : vector<8x1x505xf32> to vector<8x16x505xf32>
    %31 = vector.broadcast %29 : vector<1x16x1xf32> to vector<8x16x505xf32>
    %32 = arith.mulf %30, %31 : vector<8x16x505xf32>
    %33 = arith.addf %25, %32 : vector<8x16x505xf32>
    %c0_6 = arith.constant 0 : index
    %c4 = arith.constant 4 : index
    %34 = vector.load %arg1[%c0_6, %c4] : memref<8x514xf32, #tpu.memory_space<vmem>>, vector<8x505xf32>
    %35 = vector.shape_cast %34 : vector<8x505xf32> to vector<8x1x505xf32>
    %36 = vector.extract_strided_slice %0 {offsets = [0, 4], sizes = [16, 1], strides = [1, 1]} : vector<16x10xf32> to vector<16x1xf32>
    %37 = vector.shape_cast %36 : vector<16x1xf32> to vector<1x16x1xf32>
    %38 = vector.broadcast %35 : vector<8x1x505xf32> to vector<8x16x505xf32>
    %39 = vector.broadcast %37 : vector<1x16x1xf32> to vector<8x16x505xf32>
    %40 = arith.mulf %38, %39 : vector<8x16x505xf32>
    %41 = arith.addf %33, %40 : vector<8x16x505xf32>
    %c0_7 = arith.constant 0 : index
    %c5 = arith.constant 5 : index
    %42 = vector.load %arg1[%c0_7, %c5] : memref<8x514xf32, #tpu.memory_space<vmem>>, vector<8x505xf32>
    %43 = vector.shape_cast %42 : vector<8x505xf32> to vector<8x1x505xf32>
    %44 = vector.extract_strided_slice %0 {offsets = [0, 5], sizes = [16, 1], strides = [1, 1]} : vector<16x10xf32> to vector<16x1xf32>
    %45 = vector.shape_cast %44 : vector<16x1xf32> to vector<1x16x1xf32>
    %46 = vector.broadcast %43 : vector<8x1x505xf32> to vector<8x16x505xf32>
    %47 = vector.broadcast %45 : vector<1x16x1xf32> to vector<8x16x505xf32>
    %48 = arith.mulf %46, %47 : vector<8x16x505xf32>
    %49 = arith.addf %41, %48 : vector<8x16x505xf32>
    %c0_8 = arith.constant 0 : index
    %c6 = arith.constant 6 : index
    %50 = vector.load %arg1[%c0_8, %c6] : memref<8x514xf32, #tpu.memory_space<vmem>>, vector<8x505xf32>
    %51 = vector.shape_cast %50 : vector<8x505xf32> to vector<8x1x505xf32>
    %52 = vector.extract_strided_slice %0 {offsets = [0, 6], sizes = [16, 1], strides = [1, 1]} : vector<16x10xf32> to vector<16x1xf32>
    %53 = vector.shape_cast %52 : vector<16x1xf32> to vector<1x16x1xf32>
    %54 = vector.broadcast %51 : vector<8x1x505xf32> to vector<8x16x505xf32>
    %55 = vector.broadcast %53 : vector<1x16x1xf32> to vector<8x16x505xf32>
    %56 = arith.mulf %54, %55 : vector<8x16x505xf32>
    %57 = arith.addf %49, %56 : vector<8x16x505xf32>
    %c0_9 = arith.constant 0 : index
    %c7 = arith.constant 7 : index
    %58 = vector.load %arg1[%c0_9, %c7] : memref<8x514xf32, #tpu.memory_space<vmem>>, vector<8x505xf32>
    %59 = vector.shape_cast %58 : vector<8x505xf32> to vector<8x1x505xf32>
    %60 = vector.extract_strided_slice %0 {offsets = [0, 7], sizes = [16, 1], strides = [1, 1]} : vector<16x10xf32> to vector<16x1xf32>
    %61 = vector.shape_cast %60 : vector<16x1xf32> to vector<1x16x1xf32>
    %62 = vector.broadcast %59 : vector<8x1x505xf32> to vector<8x16x505xf32>
    %63 = vector.broadcast %61 : vector<1x16x1xf32> to vector<8x16x505xf32>
    %64 = arith.mulf %62, %63 : vector<8x16x505xf32>
    %65 = arith.addf %57, %64 : vector<8x16x505xf32>
    %c0_10 = arith.constant 0 : index
    %c8 = arith.constant 8 : index
    %66 = vector.load %arg1[%c0_10, %c8] : memref<8x514xf32, #tpu.memory_space<vmem>>, vector<8x505xf32>
    %67 = vector.shape_cast %66 : vector<8x505xf32> to vector<8x1x505xf32>
    %68 = vector.extract_strided_slice %0 {offsets = [0, 8], sizes = [16, 1], strides = [1, 1]} : vector<16x10xf32> to vector<16x1xf32>
    %69 = vector.shape_cast %68 : vector<16x1xf32> to vector<1x16x1xf32>
    %70 = vector.broadcast %67 : vector<8x1x505xf32> to vector<8x16x505xf32>
    %71 = vector.broadcast %69 : vector<1x16x1xf32> to vector<8x16x505xf32>
    %72 = arith.mulf %70, %71 : vector<8x16x505xf32>
    %73 = arith.addf %65, %72 : vector<8x16x505xf32>
    %c0_11 = arith.constant 0 : index
    %c9 = arith.constant 9 : index
    %74 = vector.load %arg1[%c0_11, %c9] : memref<8x514xf32, #tpu.memory_space<vmem>>, vector<8x505xf32>
    %75 = vector.shape_cast %74 : vector<8x505xf32> to vector<8x1x505xf32>
    %76 = vector.extract_strided_slice %0 {offsets = [0, 9], sizes = [16, 1], strides = [1, 1]} : vector<16x10xf32> to vector<16x1xf32>
    %77 = vector.shape_cast %76 : vector<16x1xf32> to vector<1x16x1xf32>
    %78 = vector.broadcast %75 : vector<8x1x505xf32> to vector<8x16x505xf32>
    %79 = vector.broadcast %77 : vector<1x16x1xf32> to vector<8x16x505xf32>
    %80 = arith.mulf %78, %79 : vector<8x16x505xf32>
    %81 = arith.addf %73, %80 : vector<8x16x505xf32>
    %c0_12 = arith.constant 0 : index
    %c0_13 = arith.constant 0 : index
    %82 = vector.load %arg3[%c0_12, %c0_13] : memref<16x1xf32, #tpu.memory_space<vmem>>, vector<16x1xf32>
    %83 = vector.shape_cast %82 : vector<16x1xf32> to vector<1x16x1xf32>
    %84 = vector.broadcast %83 : vector<1x16x1xf32> to vector<8x16x505xf32>
    %85 = arith.addf %81, %84 : vector<8x16x505xf32>
    %cst_14 = arith.constant 0.000000e+00 : f32
    %86 = vector.broadcast %cst_14 : f32 to vector<8x16x505xf32>
    %87 = arith.maximumf %85, %86 : vector<8x16x505xf32>
    %c0_15 = arith.constant 0 : index
    %c0_16 = arith.constant 0 : index
    %c0_17 = arith.constant 0 : index
    %88 = vector.load %arg4[%c0_15, %c0_16, %c0_17] : memref<8x16x505xf32, #tpu.memory_space<vmem>>, vector<8x16x505xf32>
    tpu.vector_store %arg4[%c0_15, %c0_16, %c0_17], %87 {strides = array<i32>} : memref<8x16x505xf32, #tpu.memory_space<vmem>>, vector<8x16x505xf32>,
    %cst_18 = arith.constant dense<0xFF800000> : vector<8x16xf32>
    %89 = vector.multi_reduction <maximumf>, %87, %cst_18 [2] : vector<8x16x505xf32> to vector<8x16xf32>
    %90 = vector.shape_cast %89 : vector<8x16xf32> to vector<8x16x1xf32>
    %91 = vector.broadcast %90 : vector<8x16x1xf32> to vector<8x16x505xf32>
    %92 = arith.subf %87, %91 : vector<8x16x505xf32>
    %93 = math.exp %92 : vector<8x16x505xf32>
    %cst_19 = arith.constant dense<0.000000e+00> : vector<8x16xf32>
    %94 = vector.multi_reduction <add>, %93, %cst_19 [2] : vector<8x16x505xf32> to vector<8x16xf32>
    %95 = vector.shape_cast %94 : vector<8x16xf32> to vector<8x16x1xf32>
    %cst_20 = arith.constant 1.000000e+00 : f32
    %96 = vector.broadcast %cst_20 : f32 to vector<8x16x1xf32>
    %97 = arith.divf %96, %95 : vector<8x16x1xf32>
    %cst_21 = arith.constant dense<0xFF800000> : vector<8x1xf32>
    %98 = vector.multi_reduction <maximumf>, %97, %cst_21 [1] : vector<8x16x1xf32> to vector<8x1xf32>
    %99 = vector.shape_cast %98 : vector<8x1xf32> to vector<8x1x1xf32>
    %100 = vector.broadcast %99 : vector<8x1x1xf32> to vector<8x16x1xf32>
    %101 = arith.subf %97, %100 : vector<8x16x1xf32>
    %102 = math.exp %101 : vector<8x16x1xf32>
    %cst_22 = arith.constant dense<0.000000e+00> : vector<8x1xf32>
    %103 = vector.multi_reduction <add>, %102, %cst_22 [1] : vector<8x16x1xf32> to vector<8x1xf32>
    %104 = vector.shape_cast %103 : vector<8x1xf32> to vector<8x1x1xf32>
    %105 = vector.broadcast %104 : vector<8x1x1xf32> to vector<8x16x1xf32>
    %106 = arith.divf %102, %105 : vector<8x16x1xf32>
    %c0_23 = arith.constant 0 : index
    %c0_24 = arith.constant 0 : index
    %c0_25 = arith.constant 0 : index
    %107 = vector.load %arg5[%c0_23, %c0_24, %c0_25] : memref<8x16x1xf32, #tpu.memory_space<vmem>>, vector<8x16x1xf32>
    tpu.vector_store %arg5[%c0_23, %c0_24, %c0_25], %106 {strides = array<i32>} : memref<8x16x1xf32, #tpu.memory_space<vmem>>, vector<8x16x1xf32>,
    return
  }
  func.func @transform_0(%arg0: i32) -> (i32, i32) {
    %c0_i32 = arith.constant 0 : i32
    %c0_i32_0 = arith.constant 0 : i32
    return %arg0, %c0_i32 : i32, i32
  }
  func.func @transform_1(%arg0: i32) -> (i32, i32) {
    %c0_i32 = arith.constant 0 : i32
    %c0_i32_0 = arith.constant 0 : i32
    %c0_i32_1 = arith.constant 0 : i32
    return %c0_i32, %c0_i32_0 : i32, i32
  }
  func.func @transform_2(%arg0: i32) -> (i32, i32) {
    %c0_i32 = arith.constant 0 : i32
    %c0_i32_0 = arith.constant 0 : i32
    %c0_i32_1 = arith.constant 0 : i32
    return %c0_i32, %c0_i32_0 : i32, i32
  }
  func.func @transform_3(%arg0: i32) -> (i32, i32, i32) {
    %c0_i32 = arith.constant 0 : i32
    %c0_i32_0 = arith.constant 0 : i32
    %c0_i32_1 = arith.constant 0 : i32
    return %arg0, %c0_i32, %c0_i32_0 : i32, i32, i32
  }
  func.func @transform_4(%arg0: i32) -> (i32, i32, i32) {
    %c0_i32 = arith.constant 0 : i32
    %c0_i32_0 = arith.constant 0 : i32
    %c0_i32_1 = arith.constant 0 : i32
    return %arg0, %c0_i32, %c0_i32_0 : i32, i32, i32
  }
}

module attributes {stable_mosaic.version = 11 : i64} {
  func.func @_qp_kernel(%arg0: i32, %arg1: memref<16x64xf32, #tpu.memory_space<vmem>>, %arg2: memref<16x64xf32, #tpu.memory_space<vmem>>, %arg3: memref<16x16xf32, #tpu.memory_space<vmem>>, %arg4: memref<16x16xf32, #tpu.memory_space<vmem>>) attributes {dimension_semantics = [#tpu.dimension_semantics<arbitrary>], iteration_bounds = array<i64: 1>, scalar_prefetch = 0 : i64, scratch_operands = 0 : i64, tpu.core_type = #tpu.core_type<tc>, window_params = [{pipeline_mode = #tpu.pipeline_mode<synchronous>, transform_indices = @transform_0, window_bounds = array<i64: 16, 64>}, {pipeline_mode = #tpu.pipeline_mode<synchronous>, transform_indices = @transform_1, window_bounds = array<i64: 16, 64>}, {pipeline_mode = #tpu.pipeline_mode<synchronous>, transform_indices = @transform_2, window_bounds = array<i64: 16, 16>}, {pipeline_mode = #tpu.pipeline_mode<synchronous>, transform_indices = @transform_3, window_bounds = array<i64: 16, 16>}]} {
    %c0 = arith.constant 0 : index
    %c0_0 = arith.constant 0 : index
    %0 = vector.load %arg1[%c0, %c0_0] : memref<16x64xf32, #tpu.memory_space<vmem>>, vector<16x64xf32>
    %c0_1 = arith.constant 0 : index
    %c0_2 = arith.constant 0 : index
    %1 = vector.load %arg2[%c0_1, %c0_2] : memref<16x64xf32, #tpu.memory_space<vmem>>, vector<16x64xf32>
    %cst = arith.constant dense<0.000000e+00> : vector<16x16xf32>
    %2 = tpu.matmul %0, %1, %cst {dimension_numbers = #tpu.dot_dimension_numbers<[1], [1], [0], [0], [0, 0, 1, 0], [], []>} : vector<16x64xf32>, vector<16x64xf32>, vector<16x16xf32> -> vector<16x16xf32>
    %3 = arith.mulf %0, %0 : vector<16x64xf32>
    %cst_3 = arith.constant dense<0.000000e+00> : vector<16xf32>
    %4 = vector.multi_reduction <add>, %3, %cst_3 [1] : vector<16x64xf32> to vector<16xf32>
    %5 = vector.shape_cast %4 : vector<16xf32> to vector<16x1xf32>
    %cst_4 = arith.constant 1.000000e+00 : f32
    %6 = vector.broadcast %cst_4 : f32 to vector<1x64xf32>
    %7 = arith.mulf %1, %1 : vector<16x64xf32>
    %cst_5 = arith.constant dense<0.000000e+00> : vector<1x16xf32>
    %8 = tpu.matmul %6, %7, %cst_5 {dimension_numbers = #tpu.dot_dimension_numbers<[1], [1], [0], [0], [0, 0, 1, 0], [], []>} : vector<1x64xf32>, vector<16x64xf32>, vector<1x16xf32> -> vector<1x16xf32>
    %9 = vector.broadcast %5 : vector<16x1xf32> to vector<16x16xf32>
    %10 = vector.broadcast %8 : vector<1x16xf32> to vector<16x16xf32>
    %11 = arith.addf %9, %10 : vector<16x16xf32>
    %cst_6 = arith.constant 2.000000e+00 : f32
    %12 = vector.broadcast %cst_6 : f32 to vector<16x16xf32>
    %13 = arith.mulf %12, %2 : vector<16x16xf32>
    %14 = arith.subf %11, %13 : vector<16x16xf32>
    %cst_7 = arith.constant 0.000000e+00 : f32
    %15 = vector.broadcast %cst_7 : f32 to vector<16x16xf32>
    %16 = arith.maximumf %14, %15 : vector<16x16xf32>
    %17 = math.sqrt %16 : vector<16x16xf32>
    %cst_8 = arith.constant 1.000000e+00 : f32
    %18 = vector.broadcast %cst_8 : f32 to vector<16x16xf32>
    %19 = arith.divf %17, %18 : vector<16x16xf32>
    %cst_9 = arith.constant 1.000000e+00 : f32
    %20 = vector.broadcast %cst_9 : f32 to vector<16x16xf32>
    %21 = arith.addf %20, %19 : vector<16x16xf32>
    %22 = math.log %21 : vector<16x16xf32>
    %cst_10 = arith.constant -1.000000e+00 : f32
    %23 = vector.broadcast %cst_10 : f32 to vector<16x16xf32>
    %24 = arith.mulf %23, %22 : vector<16x16xf32>
    %25 = math.exp %24 : vector<16x16xf32>
    %cst_11 = arith.constant dense<0.000000e+00> : vector<16xf32>
    %26 = vector.multi_reduction <add>, %25, %cst_11 [1] : vector<16x16xf32> to vector<16xf32>
    %27 = vector.shape_cast %26 : vector<16xf32> to vector<16x1xf32>
    %28 = vector.broadcast %27 : vector<16x1xf32> to vector<16x16xf32>
    %29 = arith.divf %25, %28 : vector<16x16xf32>
    %c0_12 = arith.constant 0 : index
    %c0_13 = arith.constant 0 : index
    %30 = vector.load %arg3[%c0_12, %c0_13] : memref<16x16xf32, #tpu.memory_space<vmem>>, vector<16x16xf32>
    tpu.vector_store %arg3[%c0_12, %c0_13], %29 {strides = array<i32>} : memref<16x16xf32, #tpu.memory_space<vmem>>, vector<16x16xf32>,
    %31 = arith.mulf %29, %29 : vector<16x16xf32>
    %cst_14 = arith.constant dense<0.000000e+00> : vector<16xf32>
    %32 = vector.multi_reduction <add>, %29, %cst_14 [0] : vector<16x16xf32> to vector<16xf32>
    %33 = vector.shape_cast %32 : vector<16xf32> to vector<1x16xf32>
    %34 = vector.broadcast %33 : vector<1x16xf32> to vector<16x16xf32>
    %35 = arith.divf %31, %34 : vector<16x16xf32>
    %cst_15 = arith.constant dense<0.000000e+00> : vector<16xf32>
    %36 = vector.multi_reduction <add>, %35, %cst_15 [1] : vector<16x16xf32> to vector<16xf32>
    %37 = vector.shape_cast %36 : vector<16xf32> to vector<16x1xf32>
    %38 = vector.broadcast %37 : vector<16x1xf32> to vector<16x16xf32>
    %39 = arith.divf %35, %38 : vector<16x16xf32>
    %c0_16 = arith.constant 0 : index
    %c0_17 = arith.constant 0 : index
    %40 = vector.load %arg4[%c0_16, %c0_17] : memref<16x16xf32, #tpu.memory_space<vmem>>, vector<16x16xf32>
    tpu.vector_store %arg4[%c0_16, %c0_17], %39 {strides = array<i32>} : memref<16x16xf32, #tpu.memory_space<vmem>>, vector<16x16xf32>,
    return
  }
  func.func @transform_0(%arg0: i32) -> (i32, i32) {
    %c0_i32 = arith.constant 0 : i32
    %c0_i32_0 = arith.constant 0 : i32
    %c0_i32_1 = arith.constant 0 : i32
    return %c0_i32, %c0_i32_0 : i32, i32
  }
  func.func @transform_1(%arg0: i32) -> (i32, i32) {
    %c0_i32 = arith.constant 0 : i32
    %c0_i32_0 = arith.constant 0 : i32
    %c0_i32_1 = arith.constant 0 : i32
    return %c0_i32, %c0_i32_0 : i32, i32
  }
  func.func @transform_2(%arg0: i32) -> (i32, i32) {
    %c0_i32 = arith.constant 0 : i32
    %c0_i32_0 = arith.constant 0 : i32
    %c0_i32_1 = arith.constant 0 : i32
    return %c0_i32, %c0_i32_0 : i32, i32
  }
  func.func @transform_3(%arg0: i32) -> (i32, i32) {
    %c0_i32 = arith.constant 0 : i32
    %c0_i32_0 = arith.constant 0 : i32
    %c0_i32_1 = arith.constant 0 : i32
    return %c0_i32, %c0_i32_0 : i32, i32
  }
}

</mosaic_0001>

<llo_original>
// kernel: clusternet_forward.2
$region0: #{clusternet_forward.2}
  #allocation0 [shape = 'u32[]', space=smem, size = 0x4, offset = 0x4, fixed_abs, tag = 'smem constant byte address 0x4 - core index']
  #allocation1 [shape = 'u32[144,128]{1,0:T(1,128)}', space=vmem, size = 0x12000, scoped, tag = 'internal scratch']
  %s0 = inlined_call_operand.vmem [shape: f32[16,64], index: 0, kind: input, shape index: {}]
  %s1 = inlined_call_operand.vmem [shape: f32[16,64], index: 1, kind: input, shape index: {}]
  %s2 = inlined_call_operand.hbm [shape: f32[16,16], index: 2, kind: output, shape index: {0}]
  %s3 = inlined_call_operand.hbm [shape: f32[16,16], index: 3, kind: output, shape index: {1}]
  %4 = xla_tuple %s2, %s3
  %s5 = sld [smem:[#allocation0]]
  $region26: #{clusternet_forward.2} parent=0
    _
  %s7 = ssub.s32 1, %s5
  %s8 = scalar_select 0, %s7, %s5
  $region1: #{clusternet_forward.2} parent=0
    #allocation2 [shape = 'u8[8192]{0}', space=vmem, size = 0x2000, scoped, tag = 'output window, operand 0, single buffered']
    #allocation3 [shape = 's32[1]{0}', space=sflag, size = 0x4, scoped, tag = 'scoped memory for clusternet_forward.2']
    #allocation4 [shape = 'u8[8192]{0}', space=vmem, size = 0x2000, scoped, tag = 'output window, operand 1, single buffered']
    #allocation5 [shape = 's32[1]{0}', space=sflag, size = 0x4, scoped, tag = 'scoped memory for clusternet_forward.2']
    %9 = vsyncpa [#allocation3], 0
    %10 = vsyncpa [#allocation5], 0
    // Predicated region
    $region2: #{clusternet_forward.2} parent=1 // pred_check
      _
    $region3: #{clusternet_forward.2} parent=1 // pred_check_branch
      %12 = sbr.rel (0) target = $region5
    $region4: #{clusternet_forward.2} parent=1 // pred_region
      _
    $region5: #{clusternet_forward.2} parent=1 // pred_fallthru
      _
    // Predicated region
    $region6: #{clusternet_forward.2} parent=1 // pred_check
      _
    $region7: #{clusternet_forward.2} parent=1 // pred_check_branch
      %14 = sbr.rel (0) target = $region9
    $region8: #{clusternet_forward.2} parent=1 // pred_region
      _
    $region9: #{clusternet_forward.2} parent=1 // pred_fallthru
      _
    %v15 = vld [vmem:[%s0] sm:$0xff]
    %v16 = vld [vmem:[%s0 + $0x8] sm:$0xff]
    %v17 = vld [vmem:[%s1] sm:$0xff]
    %v18 = vld [vmem:[%s1 + $0x8] sm:$0xff]
    %vm19 = vcmask 523264
    %v21 = vsel %vm19, %v15, 0
    %v24 = vsel %vm19, %v16, 0
    %v27 = vsel %vm19, %v17, 0
    %v30 = vsel %vm19, %v18, 0
    %32 = vmatprep.subr.mxu0 0.0
    %33 = vmatpush1.xpose.msra.mxu0 %v27
    %34 = vmatprep.subr.mxu0 0.0
    %35 = vmatpush1.xpose.msra.mxu0 %v30
    %36 = vmatprep.subr.mxu0 0.0
    %37 = vmatpush1.xpose.msra.mxu0 0.0
    %38 = vmatprep.subr.mxu0 0.0
    %39 = vmatpush1.xpose.msra.mxu0 0.0
    %40 = vmatprep.subr.mxu0 0.0
    %41 = vmatpush1.xpose.msra.mxu0 0.0
    %42 = vmatprep.subr.mxu0 0.0
    %43 = vmatpush1.xpose.msra.mxu0 0.0
    %44 = vmatprep.subr.mxu0 0.0
    %45 = vmatpush1.xpose.msra.mxu0 0.0
    %46 = vmatprep.subr.mxu0 0.0
    %47 = vmatpush1.xpose.msra.mxu0 0.0
    %48 = vmatprep.subr.mxu0 0.0
    %49 = vmatpush1.xpose.msra.mxu0 0.0
    %50 = vmatprep.subr.mxu0 0.0
    %51 = vmatpush1.xpose.msra.mxu0 0.0
    %52 = vmatprep.subr.mxu0 0.0
    %53 = vmatpush1.xpose.msra.mxu0 0.0
    %54 = vmatprep.subr.mxu0 0.0
    %55 = vmatpush1.xpose.msra.mxu0 0.0
    %56 = vmatprep.subr.mxu0 0.0
    %57 = vmatpush1.xpose.msra.mxu0 0.0
    %58 = vmatprep.subr.mxu0 0.0
    %59 = vmatpush1.xpose.msra.mxu0 0.0
    %60 = vmatprep.subr.mxu0 0.0
    %61 = vmatpush1.xpose.msra.mxu0 0.0
    %62 = vmatprep.subr.mxu0 0.0
    %63 = vmatpush1.xpose.msra.mxu0 0.0
    %64 = vmatprep.subr.mxu0 0.0
    %65 = vmatpush1.xpose.msra.mxu0 0.0
    %66 = vmatprep.subr.mxu0 0.0
    %67 = vmatpush1.xpose.msra.mxu0 0.0
    %68 = vmatprep.subr.mxu0 0.0
    %69 = vmatpush1.xpose.msra.mxu0 0.0
    %70 = vmatprep.subr.mxu0 0.0
    %71 = vmatpush1.xpose.msra.mxu0 0.0
    %72 = vmatprep.subr.mxu0 0.0
    %73 = vmatpush1.xpose.msra.mxu0 0.0
    %74 = vmatprep.subr.mxu0 0.0
    %75 = vmatpush1.xpose.msra.mxu0 0.0
    %76 = vmatprep.subr.mxu0 0.0
    %77 = vmatpush1.xpose.msra.mxu0 0.0
    %78 = vmatprep.subr.mxu0 0.0
    %79 = vmatpush1.xpose.msra.mxu0 0.0
    %80 = vmatprep.subr.mxu0 0.0
    %81 = vmatpush1.xpose.msra.mxu0 0.0
    %82 = vmatprep.subr.mxu0 0.0
    %83 = vmatpush1.xpose.msra.mxu0 0.0
    %84 = vmatprep.subr.mxu0 0.0
    %85 = vmatpush1.xpose.msra.mxu0 0.0
    %86 = vmatprep.subr.mxu0 0.0
    %87 = vmatpush1.xpose.msra.mxu0 0.0
    %88 = vmatprep.subr.mxu0 0.0
    %89 = vmatpush1.xpose.msra.mxu0 0.0
    %90 = vmatprep.subr.mxu0 0.0
    %91 = vmatpush1.xpose.msra.mxu0 0.0
    %92 = vmatprep.subr.mxu0 0.0
    %93 = vmatpush1.xpose.msra.mxu0 0.0
    %94 = vmatprep.subr.mxu0 0.0
    %95 = vmatpush1.xpose.msra.mxu0 0.0
    %96 = vmatprep.mubr.f32.mxu0 0.0
    %97 = vmatmul.mubr.f32.gmra.mrb[0].mxu0 %v21
    %v98 = vpop.f32.mrb[0].mxu0
    %v99 = vadd.f32 0.0, %v98
    %v100 = vpop.f32.mrb[0].mxu0
    %101 = vmatprep.mubr.f32.mxu0 0.0
    %102 = vmatmul.mubr.f32.gmra.mrb[0].mxu0 %v24
    %v103 = vpop.f32.mrb[0].mxu0
    %v104 = vadd.f32 0.0, %v103
    %v105 = vpop.f32.mrb[0].mxu0
    %106 = vdwg.mxu0
    %v107 = vmul.f32 %v15, %v15
    %v108 = vmul.f32 %v16, %v16
    %v109 = vsel %vm19, %v107, 0.0
    %110 = vadd.xlane.f32.xlu0 %v109
    %v111 = vpop.xlane.xlu0 %110
    %v112 = vsel %vm19, %v108, 0.0
    %113 = vadd.xlane.f32.xlu0 %v112
    %v114 = vpop.xlane.xlu0 %113
    %v115 = vmul.f32 %v17, %v17
    %v116 = vmul.f32 %v18, %v18
    %v118 = vsel %vm19, 1.0, 0
    %v121 = vsel %vm19, %v115, 0
    %v124 = vsel %vm19, %v116, 0
    %126 = vmatprep.subr.mxu0 0.0
    %127 = vmatpush1.xpose.msra.mxu0 %v121
    %128 = vmatprep.subr.mxu0 0.0
    %129 = vmatpush1.xpose.msra.mxu0 %v124
    %130 = vmatprep.subr.mxu0 0.0
    %131 = vmatpush1.xpose.msra.mxu0 0.0
    %132 = vmatprep.subr.mxu0 0.0
    %133 = vmatpush1.xpose.msra.mxu0 0.0
    %134 = vmatprep.subr.mxu0 0.0
    %135 = vmatpush1.xpose.msra.mxu0 0.0
    %136 = vmatprep.subr.mxu0 0.0
    %137 = vmatpush1.xpose.msra.mxu0 0.0
    %138 = vmatprep.subr.mxu0 0.0
    %139 = vmatpush1.xpose.msra.mxu0 0.0
    %140 = vmatprep.subr.mxu0 0.0
    %141 = vmatpush1.xpose.msra.mxu0 0.0
    %142 = vmatprep.subr.mxu0 0.0
    %143 = vmatpush1.xpose.msra.mxu0 0.0
    %144 = vmatprep.subr.mxu0 0.0
    %145 = vmatpush1.xpose.msra.mxu0 0.0
    %146 = vmatprep.subr.mxu0 0.0
    %147 = vmatpush1.xpose.msra.mxu0 0.0
    %148 = vmatprep.subr.mxu0 0.0
    %149 = vmatpush1.xpose.msra.mxu0 0.0
    %150 = vmatprep.subr.mxu0 0.0
    %151 = vmatpush1.xpose.msra.mxu0 0.0
    %152 = vmatprep.subr.mxu0 0.0
    %153 = vmatpush1.xpose.msra.mxu0 0.0
    %154 = vmatprep.subr.mxu0 0.0
    %155 = vmatpush1.xpose.msra.mxu0 0.0
    %156 = vmatprep.subr.mxu0 0.0
    %157 = vmatpush1.xpose.msra.mxu0 0.0
    %158 = vmatprep.subr.mxu0 0.0
    %159 = vmatpush1.xpose.msra.mxu0 0.0
    %160 = vmatprep.subr.mxu0 0.0
    %161 = vmatpush1.xpose.msra.mxu0 0.0
    %162 = vmatprep.subr.mxu0 0.0
    %163 = vmatpush1.xpose.msra.mxu0 0.0
    %164 = vmatprep.subr.mxu0 0.0
    %165 = vmatpush1.xpose.msra.mxu0 0.0
    %166 = vmatprep.subr.mxu0 0.0
    %167 = vmatpush1.xpose.msra.mxu0 0.0
    %168 = vmatprep.subr.mxu0 0.0
    %169 = vmatpush1.xpose.msra.mxu0 0.0
    %170 = vmatprep.subr.mxu0 0.0
    %171 = vmatpush1.xpose.msra.mxu0 0.0
    %172 = vmatprep.subr.mxu0 0.0
    %173 = vmatpush1.xpose.msra.mxu0 0.0
    %174 = vmatprep.subr.mxu0 0.0
    %175 = vmatpush1.xpose.msra.mxu0 0.0
    %176 = vmatprep.subr.mxu0 0.0
    %177 = vmatpush1.xpose.msra.mxu0 0.0
    %178 = vmatprep.subr.mxu0 0.0
    %179 = vmatpush1.xpose.msra.mxu0 0.0
    %180 = vmatprep.subr.mxu0 0.0
    %181 = vmatpush1.xpose.msra.mxu0 0.0
    %182 = vmatprep.subr.mxu0 0.0
    %183 = vmatpush1.xpose.msra.mxu0 0.0
    %184 = vmatprep.subr.mxu0 0.0
    %185 = vmatpush1.xpose.msra.mxu0 0.0
    %186 = vmatprep.subr.mxu0 0.0
    %187 = vmatpush1.xpose.msra.mxu0 0.0
    %188 = vmatprep.subr.mxu0 0.0
    %189 = vmatpush1.xpose.msra.mxu0 0.0
    %190 = vmatprep.mubr.f32.mxu0 0.0
    %191 = vmatmul.mubr.f32.gmra.mrb[0].mxu0 %v118
    %v192 = vpop.f32.mrb[0].mxu0
    %v193 = vadd.f32 0.0, %v192
    %v194 = vpop.f32.mrb[0].mxu0
    %195 = vdwg.mxu0
    %v196 = vlaneseq
    %v197 = vshrl.u32 %v196, 7
    %v198 = vsub.s32 0, %v197
    %v199 = vrot.slane %v193, %v198
    %v200 = vadd.f32 %v111, %v199
    %v201 = vadd.f32 %v114, %v199
    %v202 = vmul.f32 %v99, 2.0
    %v203 = vmul.f32 %v104, 2.0
    %v204 = vsub.f32 %v200, %v202
    %v205 = vsub.f32 %v201, %v203
    %v206 = vmax.f32 %v204, 0.0
    %v207 = vmax.f32 %v205, 0.0
    %v208 = vrsqrt.pop %v206
    %v209 = vmul.f32 %v206, %v208
    %vm210 = vcmp.eq.f32.partialorder %v206, inf
    %v211 = vsel %vm210, %v206, %v209
    %vm212 = vcmp.eq.f32.partialorder %v206, 0.0
    %v213 = vand.u32 %v206, 2147483648
    %v214 = vsel %vm212, %v213, %v211
    %v215 = vrsqrt.pop %v207
    %v216 = vmul.f32 %v207, %v215
    %vm217 = vcmp.eq.f32.partialorder %v207, inf
    %v218 = vsel %vm217, %v207, %v216
    %vm219 = vcmp.eq.f32.partialorder %v207, 0.0
    %v220 = vand.u32 %v207, 2147483648
    %v221 = vsel %vm219, %v220, %v218
    %v222 = vadd.f32 %v214, 1.0
    %v223 = vadd.f32 %v221, 1.0
    %v224 = vlog2.pop %v222
    %v225 = vmul.f32 %v224, 0.6931472
    %v226 = vlog2.pop %v223
    %v227 = vmul.f32 %v226, 0.6931472
    %v228 = vmul.f32 %v225, -1.0
    %v229 = vmul.f32 %v227, -1.0
    %v230 = vmul.f32 %v228, 1.442695
    %v231 = vpow.pop %v230
    %v232 = vmul.f32 %v229, 1.442695
    %v233 = vpow.pop %v232
    %vm234 = vcmask 130048
    %v235 = vsel %vm234, %v231, 0.0
    %236 = vadd.xlane.f32.xlu0 %v235
    %v237 = vpop.xlane.xlu0 %236
    %v238 = vsel %vm234, %v233, 0.0
    %239 = vadd.xlane.f32.xlu0 %v238
    %v240 = vpop.xlane.xlu0 %239
    %v241 = vrcp.pop %v237
    %v242 = vmul.f32 %v231, %v241
    %v243 = vrcp.pop %v240
    %v244 = vmul.f32 %v233, %v243
    %245 = vst.msk [vmem:[#allocation2] sm:$0xff] %vm234, %v242
    %246 = vst.msk [vmem:[#allocation2 + $0x8] sm:$0xff] %vm234, %v244
    %v247 = vmul.f32 %v242, %v242
    %v248 = vmul.f32 %v244, %v244
    %v249 = vsel %vm234, %v242, 0.0
    %v250 = vsel %vm234, %v244, 0.0
    %v251 = vadd.f32 %v249, %v250
    %v252 = vrot.slane %v251, 4
    %v253 = vadd.f32 %v251, %v252
    %v254 = vrot.slane %v253, 2
    %v255 = vadd.f32 %v253, %v254
    %v256 = vrot.slane %v255, 1
    %v257 = vadd.f32 %v255, %v256
    %v258 = vrcp.pop %v257
    %v259 = vmul.f32 %v247, %v258
    %v260 = vmul.f32 %v248, %v258
    %v261 = vsel %vm234, %v259, 0.0
    %262 = vadd.xlane.f32.xlu0 %v261
    %v263 = vpop.xlane.xlu0 %262
    %v264 = vsel %vm234, %v260, 0.0
    %265 = vadd.xlane.f32.xlu0 %v264
    %v266 = vpop.xlane.xlu0 %265
    %v267 = vrcp.pop %v263
    %v268 = vmul.f32 %v259, %v267
    %v269 = vrcp.pop %v266
    %v270 = vmul.f32 %v260, %v269
    %271 = vst.msk [vmem:[#allocation4] sm:$0xff] %vm234, %v268
    %272 = vst.msk [vmem:[#allocation4 + $0x8] sm:$0xff] %vm234, %v270
    // Predicated region
    $region10: #{clusternet_forward.2} parent=1 // pred_check
      _
    $region11: #{clusternet_forward.2} parent=1 // pred_check_branch
      %274 = sbr.rel (0) target = $region13
    $region12: #{clusternet_forward.2} parent=1 // pred_region
      %s276 = ssub.s32 256, 256
      %277 = vsyncadd [#allocation3], %s276
      %s278 = sshll.u32 [#allocation2], 4
      %s279 = int_to_ptr.vmem [resolvable:$true] %s278
      %284 = dma.vmem_to_hbm [thread:$0]  %s279, 256, %s2, [#allocation3], 128, 128, 8
    $region13: #{clusternet_forward.2} parent=1 // pred_fallthru
      _
    // Predicated region
    $region14: #{clusternet_forward.2} parent=1 // pred_check
      _
    $region15: #{clusternet_forward.2} parent=1 // pred_check_branch
      %286 = sbr.rel (0) target = $region17
    $region16: #{clusternet_forward.2} parent=1 // pred_region
      %s288 = ssub.s32 256, 256
      %289 = vsyncadd [#allocation5], %s288
      %s290 = sshll.u32 [#allocation4], 4
      %s291 = int_to_ptr.vmem [resolvable:$true] %s290
      %296 = dma.vmem_to_hbm [thread:$0]  %s291, 256, %s3, [#allocation5], 128, 128, 8
    $region17: #{clusternet_forward.2} parent=1 // pred_fallthru
      _
    // Predicated region
    $region18: #{clusternet_forward.2} parent=1 // pred_check
      _
    $region19: #{clusternet_forward.2} parent=1 // pred_check_branch
      %298 = sbr.rel (0) target = $region21
    $region20: #{clusternet_forward.2} parent=1 // pred_region
      %299 = dma.done [#allocation3], 256
    $region21: #{clusternet_forward.2} parent=1 // pred_fallthru
      _
    // Predicated region
    $region22: #{clusternet_forward.2} parent=1 // pred_check
      _
    $region23: #{clusternet_forward.2} parent=1 // pred_check_branch
      %301 = sbr.rel (0) target = $region25
    $region24: #{clusternet_forward.2} parent=1 // pred_region
      %302 = dma.done [#allocation5], 256
    $region25: #{clusternet_forward.2} parent=1 // pred_fallthru
      _
    %303 = vsyncpa [#allocation3], 1
    %304 = vsyncpa [#allocation5], 1

// kernel: clusternet_forward.3
$region0: #{clusternet_forward.3}
  #allocation0 [shape = 'u32[]', space=smem, size = 0x4, offset = 0x4, fixed_abs, tag = 'smem constant byte address 0x4 - core index']
  #allocation1 [shape = 'u32[144,128]{1,0:T(1,128)}', space=vmem, size = 0x12000, scoped, tag = 'internal scratch']
  %s0 = inlined_call_operand.vmem [shape: f32[16,514], index: 0, kind: input, shape index: {}]
  %s1 = inlined_call_operand.vmem [shape: f32[16,10], index: 1, kind: input, shape index: {}]
  %s2 = inlined_call_operand.vmem [shape: f32[16,1], index: 2, kind: input, shape index: {}]
  %s3 = inlined_call_operand.hbm [shape: f32[16,16,505], index: 3, kind: output, shape index: {0}]
  %s4 = inlined_call_operand.vmem [shape: f32[16,16,1], index: 4, kind: output, shape index: {1}]
  %5 = xla_tuple %s3, %s4
  %s6 = sld [smem:[#allocation0]]
  $region53: #{clusternet_forward.3} parent=0
    _
  %s8 = ssub.s32 1, %s6
  %s9 = scalar_select 0, %s8, %s6
  $region1: #{clusternet_forward.3} parent=0
    #allocation2 [shape = 'u8[524288]{0}', space=vmem, size = 0x80000, scoped, tag = 'output window, operand 0']
    #allocation3 [shape = 's32[2]{0}', space=sflag, size = 0x8, scoped, tag = 'scoped memory for clusternet_forward.3']
    %10 = vsyncpa [#allocation3], 0
    %s11 = scalar_lea.sflag [#allocation3], 1
    %12 = vsyncpa %s11, 0
    loop: start=0, step=1, limit=4
    $region2: #{clusternet_forward.3} parent=1 // loop_pre_header
      _
    $region3: #{clusternet_forward.3} parent=1 // loop_header
      %s14 = sphi 0, %s18
      %p15 = scmp.ge.s32.totalorder %s14, 4
      %s24 = sphi 0, %s26
      %s27 = sphi 0, %s24
      %s28 = sphi 0, %s27
      %s44 = sphi 0, %s28
      %s48 = sphi 0, %s48
      %s50 = sphi 0, %s48
      %s51 = sphi 0, %s50
      %s65 = sphi 0, %s51
      %s69 = sphi 0, %s69
      %s71 = sphi 0, %s69
      %s72 = sphi 0, %s71
      %s86 = sphi 0, %s72
      %s92 = sphi 0, %s94
      %s95 = sphi 0, %s92
      %s96 = sphi 0, %s95
      %s112 = sphi 0, %s96
      %s118 = sphi 0, %s120
      %s121 = sphi 0, %s118
      %s122 = sphi 0, %s121
      %s138 = sphi 0, %s122
    $region4: #{clusternet_forward.3} parent=1 // loop_header_branch
      %17 = sbr.rel (%p15) target = $region8
    $region5: #{clusternet_forward.3} parent=1 // loop_body
      %s19 = ssub.s32 %s14, 1
      %s20 = ssub.s32 %s14, 2
      %s21 = sadd.s32 %s14, 1
      %s22 = ssub.s32 %s14, %s21
      %p23 = scmp.eq.s32.totalorder %s22, 0
      %s25 = sadd.s32 %s24, 1
      %s26 = scalar_select %p23, %s24, %s25
      %p29 = pneg %p23
      %p30 = scmp.eq.s32.totalorder %s14, 1
      %p31 = por %p29, %p30
      %p32 = scmp.ne.s32.totalorder %s24, %s27
      %p33 = scmp.eq.s32.totalorder %s14, 0
      %p34 = por %p32, %p33
      %p35 = scmp.ne.s32.totalorder %s24, %s27
      %p36 = scmp.eq.s32.totalorder %s19, 1
      %p37 = por %p35, %p36
      %p38 = scmp.ne.s32.totalorder %s27, %s28
      %p39 = scmp.eq.s32.totalorder %s19, 0
      %p40 = por %p38, %p39
      %p41 = scmp.ne.s32.totalorder %s27, %s28
      %p42 = scmp.eq.s32.totalorder %s20, 1
      %p43 = por %p41, %p42
      %p45 = scmp.ne.s32.totalorder %s28, %s44
      %p46 = scmp.eq.s32.totalorder %s20, 0
      %p47 = por %p45, %p46
      %s49 = sadd.s32 %s48, 1
      %p52 = scmp.eq.s32.totalorder %s14, 1
      %p53 = scmp.ne.s32.totalorder %s48, %s50
      %p54 = scmp.eq.s32.totalorder %s14, 0
      %p55 = por %p53, %p54
      %p56 = scmp.ne.s32.totalorder %s48, %s50
      %p57 = scmp.eq.s32.totalorder %s19, 1
      %p58 = por %p56, %p57
      %p59 = scmp.ne.s32.totalorder %s50, %s51
      %p60 = scmp.eq.s32.totalorder %s19, 0
      %p61 = por %p59, %p60
      %p62 = scmp.ne.s32.totalorder %s50, %s51
      %p63 = scmp.eq.s32.totalorder %s20, 1
      %p64 = por %p62, %p63
      %p66 = scmp.ne.s32.totalorder %s51, %s65
      %p67 = scmp.eq.s32.totalorder %s20, 0
      %p68 = por %p66, %p67
      %s70 = sadd.s32 %s69, 1
      %p73 = scmp.eq.s32.totalorder %s14, 1
      %p74 = scmp.ne.s32.totalorder %s69, %s71
      %p75 = scmp.eq.s32.totalorder %s14, 0
      %p76 = por %p74, %p75
      %p77 = scmp.ne.s32.totalorder %s69, %s71
      %p78 = scmp.eq.s32.totalorder %s19, 1
      %p79 = por %p77, %p78
      %p80 = scmp.ne.s32.totalorder %s71, %s72
      %p81 = scmp.eq.s32.totalorder %s19, 0
      %p82 = por %p80, %p81
      %p83 = scmp.ne.s32.totalorder %s71, %s72
      %p84 = scmp.eq.s32.totalorder %s20, 1
      %p85 = por %p83, %p84
      %p87 = scmp.ne.s32.totalorder %s72, %s86
      %p88 = scmp.eq.s32.totalorder %s20, 0
      %p89 = por %p87, %p88
      %s90 = ssub.s32 %s14, %s21
      %p91 = scmp.eq.s32.totalorder %s90, 0
      %s93 = sadd.s32 %s92, 1
      %s94 = scalar_select %p91, %s92, %s93
      %p97 = pneg %p91
      %p98 = scmp.eq.s32.totalorder %s14, 1
      %p99 = por %p97, %p98
      %p100 = scmp.ne.s32.totalorder %s92, %s95
      %p101 = scmp.eq.s32.totalorder %s14, 0
      %p102 = por %p100, %p101
      %p103 = scmp.ne.s32.totalorder %s92, %s95
      %p104 = scmp.eq.s32.totalorder %s19, 1
      %p105 = por %p103, %p104
      %p106 = scmp.ne.s32.totalorder %s95, %s96
      %p107 = scmp.eq.s32.totalorder %s19, 0
      %p108 = por %p106, %p107
      %p109 = scmp.ne.s32.totalorder %s95, %s96
      %p110 = scmp.eq.s32.totalorder %s20, 1
      %p111 = por %p109, %p110
      %p113 = scmp.ne.s32.totalorder %s96, %s112
      %p114 = scmp.eq.s32.totalorder %s20, 0
      %p115 = por %p113, %p114
      %s116 = ssub.s32 %s14, %s21
      %p117 = scmp.eq.s32.totalorder %s116, 0
      %s119 = sadd.s32 %s118, 1
      %s120 = scalar_select %p117, %s118, %s119
      %p123 = pneg %p117
      %p124 = scmp.eq.s32.totalorder %s14, 1
      %p125 = por %p123, %p124
      %p126 = scmp.ne.s32.totalorder %s118, %s121
      %p127 = scmp.eq.s32.totalorder %s14, 0
      %p128 = por %p126, %p127
      %p129 = scmp.ne.s32.totalorder %s118, %s121
      %p130 = scmp.eq.s32.totalorder %s19, 1
      %p131 = por %p129, %p130
      %p132 = scmp.ne.s32.totalorder %s121, %s122
      %p133 = scmp.eq.s32.totalorder %s19, 0
      %p134 = por %p132, %p133
      %p135 = scmp.ne.s32.totalorder %s121, %s122
      %p136 = scmp.eq.s32.totalorder %s20, 1
      %p137 = por %p135, %p136
      %p139 = scmp.ne.s32.totalorder %s122, %s138
      %p140 = scmp.eq.s32.totalorder %s20, 0
      %p141 = por %p139, %p140
      %p142 = scmp.le.s32.totalorder 1, %s14
      %p143 = scmp.lt.s32.totalorder %s14, 3
      %p144 = pnand %p142, %p143
      %p145 = pneg %p144
      // Predicated region
      $region9: #{clusternet_forward.3} parent=5 // pred_check
        _
      $region10: #{clusternet_forward.3} parent=5 // pred_check_branch
        %147 = sbr.rel (%p144) target = $region12
      $region11: #{clusternet_forward.3} parent=5 // pred_region
        %s148 = ssub.s32 %s14, 1
        // Predicated region
        $region13: #{clusternet_forward.3} parent=11 // pred_check
          %p149 = pneg %p61
        $region14: #{clusternet_forward.3} parent=11 // pred_check_branch
          %151 = sbr.rel (%p149) target = $region16
        $region15: #{clusternet_forward.3} parent=11 // pred_region
          _
        $region16: #{clusternet_forward.3} parent=11 // pred_fallthru
          _
        // Predicated region
        $region17: #{clusternet_forward.3} parent=11 // pred_check
          %p152 = pneg %p82
        $region18: #{clusternet_forward.3} parent=11 // pred_check_branch
          %154 = sbr.rel (%p152) target = $region20
        $region19: #{clusternet_forward.3} parent=11 // pred_region
          _
        $region20: #{clusternet_forward.3} parent=11 // pred_fallthru
          _
      $region12: #{clusternet_forward.3} parent=5 // pred_fallthru
        _
      %p155 = scmp.lt.s32.totalorder %s14, 2
      // Predicated region
      $region21: #{clusternet_forward.3} parent=5 // pred_check
        %p156 = pneg %p155
      $region22: #{clusternet_forward.3} parent=5 // pred_check_branch
        %158 = sbr.rel (%p156) target = $region24
      $region23: #{clusternet_forward.3} parent=5 // pred_region
        // Predicated region
        $region25: #{clusternet_forward.3} parent=23 // pred_check
          %p159 = pneg %p34
        $region26: #{clusternet_forward.3} parent=23 // pred_check_branch
          %161 = sbr.rel (%p159) target = $region28
        $region27: #{clusternet_forward.3} parent=23 // pred_region
          %p162 = scmp.lt.s32.totalorder %s14, 1
          %s163 = scalar_select %p162, %s14, 1
          %s164 = smul.addr %s163, 5
          %s165 = smul.addr %s164, 8
          %s166 = scalar_lea.vmem %s0, %s165
        $region28: #{clusternet_forward.3} parent=23 // pred_fallthru
          _
      $region24: #{clusternet_forward.3} parent=5 // pred_fallthru
        _
      %p167 = scmp.le.s32.totalorder 1, %s14
      %p168 = scmp.lt.s32.totalorder %s14, 3
      %p169 = pnand %p167, %p168
      %p170 = pneg %p169
      // Predicated region
      $region29: #{clusternet_forward.3} parent=5 // pred_check
        _
      $region30: #{clusternet_forward.3} parent=5 // pred_check_branch
        %172 = sbr.rel (%p169) target = $region32
      $region31: #{clusternet_forward.3} parent=5 // pred_region
        %s173 = ssub.s32 %s14, 1
        %p174 = scmp.lt.s32.totalorder %s19, 1
        %s175 = scalar_select %p174, %s19, 1
        %s176 = smul.addr %s175, 5
        %s177 = smul.addr %s176, 8
        %s178 = scalar_lea.vmem %s0, %s177
        %p179 = pneg %p40
        %p180 = pneg %p37
        %p181 = pneg %p61
        %p182 = pneg %p58
        %p183 = pneg %p82
        %p184 = pneg %p79
        %p185 = pneg %p108
        %p186 = pneg %p105
        %s187 = sand.u32 %s95, 1
        %s188 = scalar_lea.sflag [#allocation3], %s187
        %s189 = sand.u32 %s95, 1
        %s190 = smul.addr %s189, 512
        %s191 = scalar_lea.vmem [#allocation2], %s190
        %p192 = pneg %p134
        %p193 = pneg %p131
        %s194 = smul.u32 8, %s19
        %p195 = scmp.lt.s32.totalorder %s194, 15
        %s196 = scalar_select %p195, %s194, 15
        %s197 = smul.addr %s196, 2
        %s198 = smul.addr %s197, 8
        %s199 = scalar_lea.vmem %s4, %s198
        %p200 = scmp.lt.s32.totalorder %s19, 1
        %s201 = scalar_select %p200, %s19, 1
        %s202 = smul.addr %s201, 5
        %s203 = smul.addr %s202, 8
        %s204 = scalar_lea.vmem %s0, %s203
        %s205 = smul.u32 8, %s19
        %s206 = smul.u32 8, %s19
        %p207 = scmp.lt.s32.totalorder %s206, 15
        %s208 = scalar_select %p207, %s206, 15
        %s209 = smul.addr %s208, 2
        %s210 = smul.addr %s209, 8
        %s211 = scalar_lea.vmem %s4, %s210
        %s212 = smul.u32 8, %s19
        %v213 = vld [vmem:[%s1] sm:$0xff]
        %v214 = vld [vmem:[%s1 + $0x8] sm:$0xff]
        %v215 = vld [vmem:[%s204] sm:$0xff]
        %v216 = vld [vmem:[%s204 + $0x8] sm:$0xff]
        %v217 = vld [vmem:[%s204 + $0x10] sm:$0xff]
        %v218 = vld [vmem:[%s204 + $0x18] sm:$0xff]
        %v223 = vcombine.low %v215, %v216
        %v224 = vcombine.high %v215, %v216
        %v225 = vcombine.low %v217, %v218
        %v226 = vcombine.high %v217, %v218
        %v228 = vunpack.c.l.s4 1966171168
        %v229 = vunpack.c.0.s8 %v228
        %v230 = vlaneseq
        %v231 = vshrl.u32 %v230, 7
        %v232 = vsub.s32 %v229, %v231
        %v233 = vrot.slane %v223, %v232
        %v235 = vunpack.c.l.s4 1966171168
        %v236 = vunpack.c.0.s8 %v235
        %v237 = vlaneseq
        %v238 = vshrl.u32 %v237, 7
        %v239 = vsub.s32 %v236, %v238
        %v240 = vrot.slane %v224, %v239
        %v242 = vunpack.c.l.s4 1966171168
        %v243 = vunpack.c.0.s8 %v242
        %v244 = vlaneseq
        %v245 = vshrl.u32 %v244, 7
        %v246 = vsub.s32 %v243, %v245
        %v247 = vrot.slane %v225, %v246
        %v249 = vunpack.c.l.s4 1966171168
        %v250 = vunpack.c.0.s8 %v249
        %v251 = vlaneseq
        %v252 = vshrl.u32 %v251, 7
        %v253 = vsub.s32 %v250, %v252
        %v254 = vrot.slane %v226, %v253
        %v255 = vcombine.low %v233, %v247
        %v256 = vcombine.high %v233, %v247
        %v257 = vcombine.low %v240, %v254
        %v258 = vcombine.high %v240, %v254
        %v260 = vunpack.c.l.s4 1966171168
        %v261 = vunpack.c.0.s8 %v260
        %v262 = vlaneseq
        %v263 = vshrl.u32 %v262, 7
        %v264 = vsub.s32 %v261, %v263
        %v265 = vrot.slane %v255, %v264
        %v267 = vunpack.c.l.s4 1966171168
        %v268 = vunpack.c.0.s8 %v267
        %v269 = vlaneseq
        %v270 = vshrl.u32 %v269, 7
        %v271 = vsub.s32 %v268, %v270
        %v272 = vrot.slane %v257, %v271
        %v274 = vunpack.c.l.s4 1966171168
        %v275 = vunpack.c.0.s8 %v274
        %v276 = vlaneseq
        %v277 = vshrl.u32 %v276, 7
        %v278 = vsub.s32 %v275, %v277
        %v279 = vrot.slane %v256, %v278
        %v281 = vunpack.c.l.s4 1966171168
        %v282 = vunpack.c.0.s8 %v281
        %v283 = vlaneseq
        %v284 = vshrl.u32 %v283, 7
        %v285 = vsub.s32 %v282, %v284
        %v286 = vrot.slane %v258, %v285
        %v287 = vcombine.high %v265, %v265
        %v288 = vcombine.high %v272, %v272
        %v289 = vcombine.high %v279, %v279
        %v290 = vcombine.high %v286, %v286
        %v291 = vlaneseq
        %v292 = vshrl.u32 %v291, 7
        %v293 = vsub.s32 0, %v292
        %v294 = vrot.slane %v265, %v293
        %v295 = vlaneseq
        %v296 = vshrl.u32 %v295, 7
        %v297 = vsub.s32 1, %v296
        %v298 = vrot.slane %v265, %v297
        %v299 = vlaneseq
        %v300 = vshrl.u32 %v299, 7
        %v301 = vsub.s32 2, %v300
        %v302 = vrot.slane %v265, %v301
        %v303 = vlaneseq
        %v304 = vshrl.u32 %v303, 7
        %v305 = vsub.s32 3, %v304
        %v306 = vrot.slane %v265, %v305
        %v307 = vlaneseq
        %v308 = vshrl.u32 %v307, 7
        %v309 = vsub.s32 0, %v308
        %v310 = vrot.slane %v279, %v309
        %v311 = vlaneseq
        %v312 = vshrl.u32 %v311, 7
        %v313 = vsub.s32 1, %v312
        %v314 = vrot.slane %v279, %v313
        %v315 = vlaneseq
        %v316 = vshrl.u32 %v315, 7
        %v317 = vsub.s32 2, %v316
        %v318 = vrot.slane %v279, %v317
        %v319 = vlaneseq
        %v320 = vshrl.u32 %v319, 7
        %v321 = vsub.s32 3, %v320
        %v322 = vrot.slane %v279, %v321
        %v323 = vlaneseq
        %v324 = vshrl.u32 %v323, 7
        %v325 = vsub.s32 0, %v324
        %v326 = vrot.slane %v287, %v325
        %v327 = vlaneseq
        %v328 = vshrl.u32 %v327, 7
        %v329 = vsub.s32 1, %v328
        %v330 = vrot.slane %v287, %v329
        %v331 = vlaneseq
        %v332 = vshrl.u32 %v331, 7
        %v333 = vsub.s32 2, %v332
        %v334 = vrot.slane %v287, %v333
        %v335 = vlaneseq
        %v336 = vshrl.u32 %v335, 7
        %v337 = vsub.s32 3, %v336
        %v338 = vrot.slane %v287, %v337
        %v339 = vlaneseq
        %v340 = vshrl.u32 %v339, 7
        %v341 = vsub.s32 0, %v340
        %v342 = vrot.slane %v289, %v341
        %v343 = vlaneseq
        %v344 = vshrl.u32 %v343, 7
        %v345 = vsub.s32 1, %v344
        %v346 = vrot.slane %v289, %v345
        %v347 = vlaneseq
        %v348 = vshrl.u32 %v347, 7
        %v349 = vsub.s32 2, %v348
        %v350 = vrot.slane %v289, %v349
        %v351 = vlaneseq
        %v352 = vshrl.u32 %v351, 7
        %v353 = vsub.s32 3, %v352
        %v354 = vrot.slane %v289, %v353
        %v355 = vlaneseq
        %v356 = vshrl.u32 %v355, 7
        %v357 = vsub.s32 0, %v356
        %v358 = vrot.slane %v272, %v357
        %v359 = vlaneseq
        %v360 = vshrl.u32 %v359, 7
        %v361 = vsub.s32 1, %v360
        %v362 = vrot.slane %v272, %v361
        %v363 = vlaneseq
        %v364 = vshrl.u32 %v363, 7
        %v365 = vsub.s32 2, %v364
        %v366 = vrot.slane %v272, %v365
        %v367 = vlaneseq
        %v368 = vshrl.u32 %v367, 7
        %v369 = vsub.s32 3, %v368
        %v370 = vrot.slane %v272, %v369
        %v371 = vlaneseq
        %v372 = vshrl.u32 %v371, 7
        %v373 = vsub.s32 0, %v372
        %v374 = vrot.slane %v286, %v373
        %v375 = vlaneseq
        %v376 = vshrl.u32 %v375, 7
        %v377 = vsub.s32 1, %v376
        %v378 = vrot.slane %v286, %v377
        %v379 = vlaneseq
        %v380 = vshrl.u32 %v379, 7
        %v381 = vsub.s32 2, %v380
        %v382 = vrot.slane %v286, %v381
        %v383 = vlaneseq
        %v384 = vshrl.u32 %v383, 7
        %v385 = vsub.s32 3, %v384
        %v386 = vrot.slane %v286, %v385
        %v387 = vlaneseq
        %v388 = vshrl.u32 %v387, 7
        %v389 = vsub.s32 0, %v388
        %v390 = vrot.slane %v288, %v389
        %v391 = vlaneseq
        %v392 = vshrl.u32 %v391, 7
        %v393 = vsub.s32 1, %v392
        %v394 = vrot.slane %v288, %v393
        %v395 = vlaneseq
        %v396 = vshrl.u32 %v395, 7
        %v397 = vsub.s32 2, %v396
        %v398 = vrot.slane %v288, %v397
        %v399 = vlaneseq
        %v400 = vshrl.u32 %v399, 7
        %v401 = vsub.s32 3, %v400
        %v402 = vrot.slane %v288, %v401
        %v403 = vlaneseq
        %v404 = vshrl.u32 %v403, 7
        %v405 = vsub.s32 0, %v404
        %v406 = vrot.slane %v290, %v405
        %v407 = vlaneseq
        %v408 = vshrl.u32 %v407, 7
        %v409 = vsub.s32 1, %v408
        %v410 = vrot.slane %v290, %v409
        %v411 = vlaneseq
        %v412 = vshrl.u32 %v411, 7
        %v413 = vsub.s32 2, %v412
        %v414 = vrot.slane %v290, %v413
        %v415 = vlaneseq
        %v416 = vshrl.u32 %v415, 7
        %v417 = vsub.s32 3, %v416
        %v418 = vrot.slane %v290, %v417
        %452 = vset.pattern.permute.xlu0 0
        %453 = vperm.xlu0 %452, %v213
        %v454 = vpop.permute.xlu0 %453
        %457 = vset.pattern.permute.xlu0 0
        %458 = vperm.xlu0 %457, %v214
        %v459 = vpop.permute.xlu0 %458
        %v461 = vmul.f32 %v294, %v454
        %v462 = vmul.f32 %v298, %v454
        %v463 = vmul.f32 %v302, %v454
        %v464 = vmul.f32 %v306, %v454
        %v465 = vmul.f32 %v294, %v459
        %v466 = vmul.f32 %v298, %v459
        %v467 = vmul.f32 %v302, %v459
        %v468 = vmul.f32 %v306, %v459
        %v469 = vmul.f32 %v310, %v454
        %v470 = vmul.f32 %v314, %v454
        %v471 = vmul.f32 %v318, %v454
        %v472 = vmul.f32 %v322, %v454
        %v473 = vmul.f32 %v310, %v459
        %v474 = vmul.f32 %v314, %v459
        %v475 = vmul.f32 %v318, %v459
        %v476 = vmul.f32 %v322, %v459
        %v477 = vmul.f32 %v326, %v454
        %v478 = vmul.f32 %v330, %v454
        %v479 = vmul.f32 %v334, %v454
        %v480 = vmul.f32 %v338, %v454
        %v481 = vmul.f32 %v326, %v459
        %v482 = vmul.f32 %v330, %v459
        %v483 = vmul.f32 %v334, %v459
        %v484 = vmul.f32 %v338, %v459
        %v485 = vmul.f32 %v342, %v454
        %v486 = vmul.f32 %v346, %v454
        %v487 = vmul.f32 %v350, %v454
        %v488 = vmul.f32 %v354, %v454
        %v489 = vmul.f32 %v342, %v459
        %v490 = vmul.f32 %v346, %v459
        %v491 = vmul.f32 %v350, %v459
        %v492 = vmul.f32 %v354, %v459
        %v493 = vmul.f32 %v358, %v454
        %v494 = vmul.f32 %v362, %v454
        %v495 = vmul.f32 %v366, %v454
        %v496 = vmul.f32 %v370, %v454
        %v497 = vmul.f32 %v358, %v459
        %v498 = vmul.f32 %v362, %v459
        %v499 = vmul.f32 %v366, %v459
        %v500 = vmul.f32 %v370, %v459
        %v501 = vmul.f32 %v374, %v454
        %v502 = vmul.f32 %v378, %v454
        %v503 = vmul.f32 %v382, %v454
        %v504 = vmul.f32 %v386, %v454
        %v505 = vmul.f32 %v374, %v459
        %v506 = vmul.f32 %v378, %v459
        %v507 = vmul.f32 %v382, %v459
        %v508 = vmul.f32 %v386, %v459
        %v509 = vmul.f32 %v390, %v454
        %v510 = vmul.f32 %v394, %v454
        %v511 = vmul.f32 %v398, %v454
        %v512 = vmul.f32 %v402, %v454
        %v513 = vmul.f32 %v390, %v459
        %v514 = vmul.f32 %v394, %v459
        %v515 = vmul.f32 %v398, %v459
        %v516 = vmul.f32 %v402, %v459
        %v517 = vmul.f32 %v406, %v454
        %v518 = vmul.f32 %v410, %v454
        %v519 = vmul.f32 %v414, %v454
        %v520 = vmul.f32 %v418, %v454
        %v521 = vmul.f32 %v406, %v459
        %v522 = vmul.f32 %v410, %v459
        %v523 = vmul.f32 %v414, %v459
        %v524 = vmul.f32 %v418, %v459
        %v525 = vadd.f32 %v461, 0.0
        %v526 = vadd.f32 %v462, 0.0
        %v527 = vadd.f32 %v463, 0.0
        %v528 = vadd.f32 %v464, 0.0
        %v529 = vadd.f32 %v465, 0.0
        %v530 = vadd.f32 %v466, 0.0
        %v531 = vadd.f32 %v467, 0.0
        %v532 = vadd.f32 %v468, 0.0
        %v533 = vadd.f32 %v469, 0.0
        %v534 = vadd.f32 %v470, 0.0
        %v535 = vadd.f32 %v471, 0.0
        %v536 = vadd.f32 %v472, 0.0
        %v537 = vadd.f32 %v473, 0.0
        %v538 = vadd.f32 %v474, 0.0
        %v539 = vadd.f32 %v475, 0.0
        %v540 = vadd.f32 %v476, 0.0
        %v541 = vadd.f32 %v477, 0.0
        %v542 = vadd.f32 %v478, 0.0
        %v543 = vadd.f32 %v479, 0.0
        %v544 = vadd.f32 %v480, 0.0
        %v545 = vadd.f32 %v481, 0.0
        %v546 = vadd.f32 %v482, 0.0
        %v547 = vadd.f32 %v483, 0.0
        %v548 = vadd.f32 %v484, 0.0
        %v549 = vadd.f32 %v485, 0.0
        %v550 = vadd.f32 %v486, 0.0
        %v551 = vadd.f32 %v487, 0.0
        %v552 = vadd.f32 %v488, 0.0
        %v553 = vadd.f32 %v489, 0.0
        %v554 = vadd.f32 %v490, 0.0
        %v555 = vadd.f32 %v491, 0.0
        %v556 = vadd.f32 %v492, 0.0
        %v557 = vadd.f32 %v493, 0.0
        %v558 = vadd.f32 %v494, 0.0
        %v559 = vadd.f32 %v495, 0.0
        %v560 = vadd.f32 %v496, 0.0
        %v561 = vadd.f32 %v497, 0.0
        %v562 = vadd.f32 %v498, 0.0
        %v563 = vadd.f32 %v499, 0.0
        %v564 = vadd.f32 %v500, 0.0
        %v565 = vadd.f32 %v501, 0.0
        %v566 = vadd.f32 %v502, 0.0
        %v567 = vadd.f32 %v503, 0.0
        %v568 = vadd.f32 %v504, 0.0
        %v569 = vadd.f32 %v505, 0.0
        %v570 = vadd.f32 %v506, 0.0
        %v571 = vadd.f32 %v507, 0.0
        %v572 = vadd.f32 %v508, 0.0
        %v573 = vadd.f32 %v509, 0.0
        %v574 = vadd.f32 %v510, 0.0
        %v575 = vadd.f32 %v511, 0.0
        %v576 = vadd.f32 %v512, 0.0
        %v577 = vadd.f32 %v513, 0.0
        %v578 = vadd.f32 %v514, 0.0
        %v579 = vadd.f32 %v515, 0.0
        %v580 = vadd.f32 %v516, 0.0
        %v581 = vadd.f32 %v517, 0.0
        %v582 = vadd.f32 %v518, 0.0
        %v583 = vadd.f32 %v519, 0.0
        %v584 = vadd.f32 %v520, 0.0
        %v585 = vadd.f32 %v521, 0.0
        %v586 = vadd.f32 %v522, 0.0
        %v587 = vadd.f32 %v523, 0.0
        %v588 = vadd.f32 %v524, 0.0
        %v589 = vld [vmem:[%s204] sm:$0xff]
        %v590 = vld [vmem:[%s204 + $0x8] sm:$0xff]
        %v591 = vld [vmem:[%s204 + $0x10] sm:$0xff]
        %v592 = vld [vmem:[%s204 + $0x18] sm:$0xff]
        %v597 = vcombine.low %v589, %v590
        %v598 = vcombine.high %v589, %v590
        %v599 = vcombine.low %v591, %v592
        %v600 = vcombine.high %v591, %v592
        %v602 = vunpack.c.l.s4 1966171168
        %v603 = vunpack.c.0.s8 %v602
        %v604 = vlaneseq
        %v605 = vshrl.u32 %v604, 7
        %v606 = vsub.s32 %v603, %v605
        %v607 = vrot.slane %v597, %v606
        %v609 = vunpack.c.l.s4 1966171168
        %v610 = vunpack.c.0.s8 %v609
        %v611 = vlaneseq
        %v612 = vshrl.u32 %v611, 7
        %v613 = vsub.s32 %v610, %v612
        %v614 = vrot.slane %v598, %v613
        %v616 = vunpack.c.l.s4 1966171168
        %v617 = vunpack.c.0.s8 %v616
        %v618 = vlaneseq
        %v619 = vshrl.u32 %v618, 7
        %v620 = vsub.s32 %v617, %v619
        %v621 = vrot.slane %v599, %v620
        %v623 = vunpack.c.l.s4 1966171168
        %v624 = vunpack.c.0.s8 %v623
        %v625 = vlaneseq
        %v626 = vshrl.u32 %v625, 7
        %v627 = vsub.s32 %v624, %v626
        %v628 = vrot.slane %v600, %v627
        %v629 = vcombine.low %v607, %v621
        %v630 = vcombine.high %v607, %v621
        %v631 = vcombine.low %v614, %v628
        %v632 = vcombine.high %v614, %v628
        %v634 = vunpack.c.l.s4 1966171168
        %v635 = vunpack.c.0.s8 %v634
        %v636 = vlaneseq
        %v637 = vshrl.u32 %v636, 7
        %v638 = vsub.s32 %v635, %v637
        %v639 = vrot.slane %v629, %v638
        %v641 = vunpack.c.l.s4 1966171168
        %v642 = vunpack.c.0.s8 %v641
        %v643 = vlaneseq
        %v644 = vshrl.u32 %v643, 7
        %v645 = vsub.s32 %v642, %v644
        %v646 = vrot.slane %v631, %v645
        %v648 = vunpack.c.l.s4 1966171168
        %v649 = vunpack.c.0.s8 %v648
        %v650 = vlaneseq
        %v651 = vshrl.u32 %v650, 7
        %v652 = vsub.s32 %v649, %v651
        %v653 = vrot.slane %v630, %v652
        %v655 = vunpack.c.l.s4 1966171168
        %v656 = vunpack.c.0.s8 %v655
        %v657 = vlaneseq
        %v658 = vshrl.u32 %v657, 7
        %v659 = vsub.s32 %v656, %v658
        %v660 = vrot.slane %v632, %v659
        %v661 = vcombine.high %v639, %v639
        %v662 = vcombine.high %v646, %v646
        %v663 = vcombine.high %v653, %v653
        %v664 = vcombine.high %v660, %v660
        %v665 = vlaneseq
        %v666 = vshrl.u32 %v665, 7
        %v667 = vsub.s32 0, %v666
        %v668 = vrot.slane %v639, %v667
        %v669 = vlaneseq
        %v670 = vshrl.u32 %v669, 7
        %v671 = vsub.s32 1, %v670
        %v672 = vrot.slane %v639, %v671
        %v673 = vlaneseq
        %v674 = vshrl.u32 %v673, 7
        %v675 = vsub.s32 2, %v674
        %v676 = vrot.slane %v639, %v675
        %v677 = vlaneseq
        %v678 = vshrl.u32 %v677, 7
        %v679 = vsub.s32 3, %v678
        %v680 = vrot.slane %v639, %v679
        %v681 = vlaneseq
        %v682 = vshrl.u32 %v681, 7
        %v683 = vsub.s32 0, %v682
        %v684 = vrot.slane %v653, %v683
        %v685 = vlaneseq
        %v686 = vshrl.u32 %v685, 7
        %v687 = vsub.s32 1, %v686
        %v688 = vrot.slane %v653, %v687
        %v689 = vlaneseq
        %v690 = vshrl.u32 %v689, 7
        %v691 = vsub.s32 2, %v690
        %v692 = vrot.slane %v653, %v691
        %v693 = vlaneseq
        %v694 = vshrl.u32 %v693, 7
        %v695 = vsub.s32 3, %v694
        %v696 = vrot.slane %v653, %v695
        %v697 = vlaneseq
        %v698 = vshrl.u32 %v697, 7
        %v699 = vsub.s32 0, %v698
        %v700 = vrot.slane %v661, %v699
        %v701 = vlaneseq
        %v702 = vshrl.u32 %v701, 7
        %v703 = vsub.s32 1, %v702
        %v704 = vrot.slane %v661, %v703
        %v705 = vlaneseq
        %v706 = vshrl.u32 %v705, 7
        %v707 = vsub.s32 2, %v706
        %v708 = vrot.slane %v661, %v707
        %v709 = vlaneseq
        %v710 = vshrl.u32 %v709, 7
        %v711 = vsub.s32 3, %v710
        %v712 = vrot.slane %v661, %v711
        %v713 = vlaneseq
        %v714 = vshrl.u32 %v713, 7
        %v715 = vsub.s32 0, %v714
        %v716 = vrot.slane %v663, %v715
        %v717 = vlaneseq
        %v718 = vshrl.u32 %v717, 7
        %v719 = vsub.s32 1, %v718
        %v720 = vrot.slane %v663, %v719
        %v721 = vlaneseq
        %v722 = vshrl.u32 %v721, 7
        %v723 = vsub.s32 2, %v722
        %v724 = vrot.slane %v663, %v723
        %v725 = vlaneseq
        %v726 = vshrl.u32 %v725, 7
        %v727 = vsub.s32 3, %v726
        %v728 = vrot.slane %v663, %v727
        %v729 = vlaneseq
        %v730 = vshrl.u32 %v729, 7
        %v731 = vsub.s32 0, %v730
        %v732 = vrot.slane %v646, %v731
        %v733 = vlaneseq
        %v734 = vshrl.u32 %v733, 7
        %v735 = vsub.s32 1, %v734
        %v736 = vrot.slane %v646, %v735
        %v737 = vlaneseq
        %v738 = vshrl.u32 %v737, 7
        %v739 = vsub.s32 2, %v738
        %v740 = vrot.slane %v646, %v739
        %v741 = vlaneseq
        %v742 = vshrl.u32 %v741, 7
        %v743 = vsub.s32 3, %v742
        %v744 = vrot.slane %v646, %v743
        %v745 = vlaneseq
        %v746 = vshrl.u32 %v745, 7
        %v747 = vsub.s32 0, %v746
        %v748 = vrot.slane %v660, %v747
        %v749 = vlaneseq
        %v750 = vshrl.u32 %v749, 7
        %v751 = vsub.s32 1, %v750
        %v752 = vrot.slane %v660, %v751
        %v753 = vlaneseq
        %v754 = vshrl.u32 %v753, 7
        %v755 = vsub.s32 2, %v754
        %v756 = vrot.slane %v660, %v755
        %v757 = vlaneseq
        %v758 = vshrl.u32 %v757, 7
        %v759 = vsub.s32 3, %v758
        %v760 = vrot.slane %v660, %v759
        %v761 = vlaneseq
        %v762 = vshrl.u32 %v761, 7
        %v763 = vsub.s32 0, %v762
        %v764 = vrot.slane %v662, %v763
        %v765 = vlaneseq
        %v766 = vshrl.u32 %v765, 7
        %v767 = vsub.s32 1, %v766
        %v768 = vrot.slane %v662, %v767
        %v769 = vlaneseq
        %v770 = vshrl.u32 %v769, 7
        %v771 = vsub.s32 2, %v770
        %v772 = vrot.slane %v662, %v771
        %v773 = vlaneseq
        %v774 = vshrl.u32 %v773, 7
        %v775 = vsub.s32 3, %v774
        %v776 = vrot.slane %v662, %v775
        %v777 = vlaneseq
        %v778 = vshrl.u32 %v777, 7
        %v779 = vsub.s32 0, %v778
        %v780 = vrot.slane %v664, %v779
        %v781 = vlaneseq
        %v782 = vshrl.u32 %v781, 7
        %v783 = vsub.s32 1, %v782
        %v784 = vrot.slane %v664, %v783
        %v785 = vlaneseq
        %v786 = vshrl.u32 %v785, 7
        %v787 = vsub.s32 2, %v786
        %v788 = vrot.slane %v664, %v787
        %v789 = vlaneseq
        %v790 = vshrl.u32 %v789, 7
        %v791 = vsub.s32 3, %v790
        %v792 = vrot.slane %v664, %v791
        %825 = vset.pattern.permute.xlu0 1
        %826 = vperm.xlu0 %825, %v213
        %v827 = vpop.permute.xlu0 %826
        %829 = vset.pattern.permute.xlu0 1
        %830 = vperm.xlu0 %829, %v214
        %v831 = vpop.permute.xlu0 %830
        %v833 = vmul.f32 %v668, %v827
        %v834 = vmul.f32 %v672, %v827
        %v835 = vmul.f32 %v676, %v827
        %v836 = vmul.f32 %v680, %v827
        %v837 = vmul.f32 %v668, %v831
        %v838 = vmul.f32 %v672, %v831
        %v839 = vmul.f32 %v676, %v831
        %v840 = vmul.f32 %v680, %v831
        %v841 = vmul.f32 %v684, %v827
        %v842 = vmul.f32 %v688, %v827
        %v843 = vmul.f32 %v692, %v827
        %v844 = vmul.f32 %v696, %v827
        %v845 = vmul.f32 %v684, %v831
        %v846 = vmul.f32 %v688, %v831
        %v847 = vmul.f32 %v692, %v831
        %v848 = vmul.f32 %v696, %v831
        %v849 = vmul.f32 %v700, %v827
        %v850 = vmul.f32 %v704, %v827
        %v851 = vmul.f32 %v708, %v827
        %v852 = vmul.f32 %v712, %v827
        %v853 = vmul.f32 %v700, %v831
        %v854 = vmul.f32 %v704, %v831
        %v855 = vmul.f32 %v708, %v831
        %v856 = vmul.f32 %v712, %v831
        %v857 = vmul.f32 %v716, %v827
        %v858 = vmul.f32 %v720, %v827
        %v859 = vmul.f32 %v724, %v827
        %v860 = vmul.f32 %v728, %v827
        %v861 = vmul.f32 %v716, %v831
        %v862 = vmul.f32 %v720, %v831
        %v863 = vmul.f32 %v724, %v831
        %v864 = vmul.f32 %v728, %v831
        %v865 = vmul.f32 %v732, %v827
        %v866 = vmul.f32 %v736, %v827
        %v867 = vmul.f32 %v740, %v827
        %v868 = vmul.f32 %v744, %v827
        %v869 = vmul.f32 %v732, %v831
        %v870 = vmul.f32 %v736, %v831
        %v871 = vmul.f32 %v740, %v831
        %v872 = vmul.f32 %v744, %v831
        %v873 = vmul.f32 %v748, %v827
        %v874 = vmul.f32 %v752, %v827
        %v875 = vmul.f32 %v756, %v827
        %v876 = vmul.f32 %v760, %v827
        %v877 = vmul.f32 %v748, %v831
        %v878 = vmul.f32 %v752, %v831
        %v879 = vmul.f32 %v756, %v831
        %v880 = vmul.f32 %v760, %v831
        %v881 = vmul.f32 %v764, %v827
        %v882 = vmul.f32 %v768, %v827
        %v883 = vmul.f32 %v772, %v827
        %v884 = vmul.f32 %v776, %v827
        %v885 = vmul.f32 %v764, %v831
        %v886 = vmul.f32 %v768, %v831
        %v887 = vmul.f32 %v772, %v831
        %v888 = vmul.f32 %v776, %v831
        %v889 = vmul.f32 %v780, %v827
        %v890 = vmul.f32 %v784, %v827
        %v891 = vmul.f32 %v788, %v827
        %v892 = vmul.f32 %v792, %v827
        %v893 = vmul.f32 %v780, %v831
        %v894 = vmul.f32 %v784, %v831
        %v895 = vmul.f32 %v788, %v831
        %v896 = vmul.f32 %v792, %v831
        %961 = vrot.lane.b32.xlu0 %v833, 127
        %v962 = vpop.permute.xlu0 %961
        %963 = vrot.lane.b32.xlu0 %v834, 127
        %v964 = vpop.permute.xlu0 %963
        %965 = vrot.lane.b32.xlu0 %v835, 127
        %v966 = vpop.permute.xlu0 %965
        %967 = vrot.lane.b32.xlu0 %v836, 127
        %v968 = vpop.permute.xlu0 %967
        %969 = vrot.lane.b32.xlu0 %v837, 127
        %v970 = vpop.permute.xlu0 %969
        %971 = vrot.lane.b32.xlu0 %v838, 127
        %v972 = vpop.permute.xlu0 %971
        %973 = vrot.lane.b32.xlu0 %v839, 127
        %v974 = vpop.permute.xlu0 %973
        %975 = vrot.lane.b32.xlu0 %v840, 127
        %v976 = vpop.permute.xlu0 %975
        %977 = vrot.lane.b32.xlu0 %v841, 127
        %v978 = vpop.permute.xlu0 %977
        %979 = vrot.lane.b32.xlu0 %v842, 127
        %v980 = vpop.permute.xlu0 %979
        %981 = vrot.lane.b32.xlu0 %v843, 127
        %v982 = vpop.permute.xlu0 %981
        %983 = vrot.lane.b32.xlu0 %v844, 127
        %v984 = vpop.permute.xlu0 %983
        %985 = vrot.lane.b32.xlu0 %v845, 127
        %v986 = vpop.permute.xlu0 %985
        %987 = vrot.lane.b32.xlu0 %v846, 127
        %v988 = vpop.permute.xlu0 %987
        %989 = vrot.lane.b32.xlu0 %v847, 127
        %v990 = vpop.permute.xlu0 %989
        %991 = vrot.lane.b32.xlu0 %v848, 127
        %v992 = vpop.permute.xlu0 %991
        %993 = vrot.lane.b32.xlu0 %v849, 127
        %v994 = vpop.permute.xlu0 %993
        %995 = vrot.lane.b32.xlu0 %v850, 127
        %v996 = vpop.permute.xlu0 %995
        %997 = vrot.lane.b32.xlu0 %v851, 127
        %v998 = vpop.permute.xlu0 %997
        %999 = vrot.lane.b32.xlu0 %v852, 127
        %v1000 = vpop.permute.xlu0 %999
        %1001 = vrot.lane.b32.xlu0 %v853, 127
        %v1002 = vpop.permute.xlu0 %1001
        %1003 = vrot.lane.b32.xlu0 %v854, 127
        %v1004 = vpop.permute.xlu0 %1003
        %1005 = vrot.lane.b32.xlu0 %v855, 127
        %v1006 = vpop.permute.xlu0 %1005
        %1007 = vrot.lane.b32.xlu0 %v856, 127
        %v1008 = vpop.permute.xlu0 %1007
        %1009 = vrot.lane.b32.xlu0 %v857, 127
        %v1010 = vpop.permute.xlu0 %1009
        %1011 = vrot.lane.b32.xlu0 %v858, 127
        %v1012 = vpop.permute.xlu0 %1011
        %1013 = vrot.lane.b32.xlu0 %v859, 127
        %v1014 = vpop.permute.xlu0 %1013
        %1015 = vrot.lane.b32.xlu0 %v860, 127
        %v1016 = vpop.permute.xlu0 %1015
        %1017 = vrot.lane.b32.xlu0 %v861, 127
        %v1018 = vpop.permute.xlu0 %1017
        %1019 = vrot.lane.b32.xlu0 %v862, 127
        %v1020 = vpop.permute.xlu0 %1019
        %1021 = vrot.lane.b32.xlu0 %v863, 127
        %v1022 = vpop.permute.xlu0 %1021
        %1023 = vrot.lane.b32.xlu0 %v864, 127
        %v1024 = vpop.permute.xlu0 %1023
        %1025 = vrot.lane.b32.xlu0 %v865, 127
        %v1026 = vpop.permute.xlu0 %1025
        %1027 = vrot.lane.b32.xlu0 %v866, 127
        %v1028 = vpop.permute.xlu0 %1027
        %1029 = vrot.lane.b32.xlu0 %v867, 127
        %v1030 = vpop.permute.xlu0 %1029
        %1031 = vrot.lane.b32.xlu0 %v868, 127
        %v1032 = vpop.permute.xlu0 %1031
        %1033 = vrot.lane.b32.xlu0 %v869, 127
        %v1034 = vpop.permute.xlu0 %1033
        %1035 = vrot.lane.b32.xlu0 %v870, 127
        %v1036 = vpop.permute.xlu0 %1035
        %1037 = vrot.lane.b32.xlu0 %v871, 127
        %v1038 = vpop.permute.xlu0 %1037
        %1039 = vrot.lane.b32.xlu0 %v872, 127
        %v1040 = vpop.permute.xlu0 %1039
        %1041 = vrot.lane.b32.xlu0 %v873, 127
        %v1042 = vpop.permute.xlu0 %1041
        %1043 = vrot.lane.b32.xlu0 %v874, 127
        %v1044 = vpop.permute.xlu0 %1043
        %1045 = vrot.lane.b32.xlu0 %v875, 127
        %v1046 = vpop.permute.xlu0 %1045
        %1047 = vrot.lane.b32.xlu0 %v876, 127
        %v1048 = vpop.permute.xlu0 %1047
        %1049 = vrot.lane.b32.xlu0 %v877, 127
        %v1050 = vpop.permute.xlu0 %1049
        %1051 = vrot.lane.b32.xlu0 %v878, 127
        %v1052 = vpop.permute.xlu0 %1051
        %1053 = vrot.lane.b32.xlu0 %v879, 127
        %v1054 = vpop.permute.xlu0 %1053
        %1055 = vrot.lane.b32.xlu0 %v880, 127
        %v1056 = vpop.permute.xlu0 %1055
        %1057 = vrot.lane.b32.xlu0 %v881, 127
        %v1058 = vpop.permute.xlu0 %1057
        %1059 = vrot.lane.b32.xlu0 %v882, 127
        %v1060 = vpop.permute.xlu0 %1059
        %1061 = vrot.lane.b32.xlu0 %v883, 127
        %v1062 = vpop.permute.xlu0 %1061
        %1063 = vrot.lane.b32.xlu0 %v884, 127
        %v1064 = vpop.permute.xlu0 %1063
        %1065 = vrot.lane.b32.xlu0 %v885, 127
        %v1066 = vpop.permute.xlu0 %1065
        %1067 = vrot.lane.b32.xlu0 %v886, 127
        %v1068 = vpop.permute.xlu0 %1067
        %1069 = vrot.lane.b32.xlu0 %v887, 127
        %v1070 = vpop.permute.xlu0 %1069
        %1071 = vrot.lane.b32.xlu0 %v888, 127
        %v1072 = vpop.permute.xlu0 %1071
        %1073 = vrot.lane.b32.xlu0 %v889, 127
        %v1074 = vpop.permute.xlu0 %1073
        %1075 = vrot.lane.b32.xlu0 %v890, 127
        %v1076 = vpop.permute.xlu0 %1075
        %1077 = vrot.lane.b32.xlu0 %v891, 127
        %v1078 = vpop.permute.xlu0 %1077
        %1079 = vrot.lane.b32.xlu0 %v892, 127
        %v1080 = vpop.permute.xlu0 %1079
        %1081 = vrot.lane.b32.xlu0 %v893, 127
        %v1082 = vpop.permute.xlu0 %1081
        %1083 = vrot.lane.b32.xlu0 %v894, 127
        %v1084 = vpop.permute.xlu0 %1083
        %1085 = vrot.lane.b32.xlu0 %v895, 127
        %v1086 = vpop.permute.xlu0 %1085
        %1087 = vrot.lane.b32.xlu0 %v896, 127
        %v1088 = vpop.permute.xlu0 %1087
        %vm1089 = vcmask 1039360
        %v1090 = vsel %vm1089, %v962, %v964
        %v1091 = vsel %vm1089, %v964, %v966
        %v1092 = vsel %vm1089, %v966, %v968
        %v1093 = vsel %vm1089, %v970, %v972
        %v1094 = vsel %vm1089, %v972, %v974
        %v1095 = vsel %vm1089, %v974, %v976
        %v1096 = vsel %vm1089, %v978, %v980
        %v1097 = vsel %vm1089, %v980, %v982
        %v1098 = vsel %vm1089, %v982, %v984
        %v1099 = vsel %vm1089, %v986, %v988
        %v1100 = vsel %vm1089, %v988, %v990
        %v1101 = vsel %vm1089, %v990, %v992
        %v1102 = vsel %vm1089, %v994, %v996
        %v1103 = vsel %vm1089, %v996, %v998
        %v1104 = vsel %vm1089, %v998, %v1000
        %v1105 = vsel %vm1089, %v1002, %v1004
        %v1106 = vsel %vm1089, %v1004, %v1006
        %v1107 = vsel %vm1089, %v1006, %v1008
        %v1108 = vsel %vm1089, %v1010, %v1012
        %v1109 = vsel %vm1089, %v1012, %v1014
        %v1110 = vsel %vm1089, %v1014, %v1016
        %v1111 = vsel %vm1089, %v1018, %v1020
        %v1112 = vsel %vm1089, %v1020, %v1022
        %v1113 = vsel %vm1089, %v1022, %v1024
        %v1114 = vsel %vm1089, %v1026, %v1028
        %v1115 = vsel %vm1089, %v1028, %v1030
        %v1116 = vsel %vm1089, %v1030, %v1032
        %v1117 = vsel %vm1089, %v1034, %v1036
        %v1118 = vsel %vm1089, %v1036, %v1038
        %v1119 = vsel %vm1089, %v1038, %v1040
        %v1120 = vsel %vm1089, %v1042, %v1044
        %v1121 = vsel %vm1089, %v1044, %v1046
        %v1122 = vsel %vm1089, %v1046, %v1048
        %v1123 = vsel %vm1089, %v1050, %v1052
        %v1124 = vsel %vm1089, %v1052, %v1054
        %v1125 = vsel %vm1089, %v1054, %v1056
        %v1126 = vsel %vm1089, %v1058, %v1060
        %v1127 = vsel %vm1089, %v1060, %v1062
        %v1128 = vsel %vm1089, %v1062, %v1064
        %v1129 = vsel %vm1089, %v1066, %v1068
        %v1130 = vsel %vm1089, %v1068, %v1070
        %v1131 = vsel %vm1089, %v1070, %v1072
        %v1132 = vsel %vm1089, %v1074, %v1076
        %v1133 = vsel %vm1089, %v1076, %v1078
        %v1134 = vsel %vm1089, %v1078, %v1080
        %v1135 = vsel %vm1089, %v1082, %v1084
        %v1136 = vsel %vm1089, %v1084, %v1086
        %v1137 = vsel %vm1089, %v1086, %v1088
        %v1202 = vadd.f32 %v525, %v1090
        %v1203 = vadd.f32 %v526, %v1091
        %v1204 = vadd.f32 %v527, %v1092
        %v1205 = vadd.f32 %v528, %v968
        %v1206 = vadd.f32 %v529, %v1093
        %v1207 = vadd.f32 %v530, %v1094
        %v1208 = vadd.f32 %v531, %v1095
        %v1209 = vadd.f32 %v532, %v976
        %v1210 = vadd.f32 %v533, %v1096
        %v1211 = vadd.f32 %v534, %v1097
        %v1212 = vadd.f32 %v535, %v1098
        %v1213 = vadd.f32 %v536, %v984
        %v1214 = vadd.f32 %v537, %v1099
        %v1215 = vadd.f32 %v538, %v1100
        %v1216 = vadd.f32 %v539, %v1101
        %v1217 = vadd.f32 %v540, %v992
        %v1218 = vadd.f32 %v541, %v1102
        %v1219 = vadd.f32 %v542, %v1103
        %v1220 = vadd.f32 %v543, %v1104
        %v1221 = vadd.f32 %v544, %v1000
        %v1222 = vadd.f32 %v545, %v1105
        %v1223 = vadd.f32 %v546, %v1106
        %v1224 = vadd.f32 %v547, %v1107
        %v1225 = vadd.f32 %v548, %v1008
        %v1226 = vadd.f32 %v549, %v1108
        %v1227 = vadd.f32 %v550, %v1109
        %v1228 = vadd.f32 %v551, %v1110
        %v1229 = vadd.f32 %v552, %v1016
        %v1230 = vadd.f32 %v553, %v1111
        %v1231 = vadd.f32 %v554, %v1112
        %v1232 = vadd.f32 %v555, %v1113
        %v1233 = vadd.f32 %v556, %v1024
        %v1234 = vadd.f32 %v557, %v1114
        %v1235 = vadd.f32 %v558, %v1115
        %v1236 = vadd.f32 %v559, %v1116
        %v1237 = vadd.f32 %v560, %v1032
        %v1238 = vadd.f32 %v561, %v1117
        %v1239 = vadd.f32 %v562, %v1118
        %v1240 = vadd.f32 %v563, %v1119
        %v1241 = vadd.f32 %v564, %v1040
        %v1242 = vadd.f32 %v565, %v1120
        %v1243 = vadd.f32 %v566, %v1121
        %v1244 = vadd.f32 %v567, %v1122
        %v1245 = vadd.f32 %v568, %v1048
        %v1246 = vadd.f32 %v569, %v1123
        %v1247 = vadd.f32 %v570, %v1124
        %v1248 = vadd.f32 %v571, %v1125
        %v1249 = vadd.f32 %v572, %v1056
        %v1250 = vadd.f32 %v573, %v1126
        %v1251 = vadd.f32 %v574, %v1127
        %v1252 = vadd.f32 %v575, %v1128
        %v1253 = vadd.f32 %v576, %v1064
        %v1254 = vadd.f32 %v577, %v1129
        %v1255 = vadd.f32 %v578, %v1130
        %v1256 = vadd.f32 %v579, %v1131
        %v1257 = vadd.f32 %v580, %v1072
        %v1258 = vadd.f32 %v581, %v1132
        %v1259 = vadd.f32 %v582, %v1133
        %v1260 = vadd.f32 %v583, %v1134
        %v1261 = vadd.f32 %v584, %v1080
        %v1262 = vadd.f32 %v585, %v1135
        %v1263 = vadd.f32 %v586, %v1136
        %v1264 = vadd.f32 %v587, %v1137
        %v1265 = vadd.f32 %v588, %v1088
        %v1266 = vld [vmem:[%s204] sm:$0xff]
        %v1267 = vld [vmem:[%s204 + $0x8] sm:$0xff]
        %v1268 = vld [vmem:[%s204 + $0x10] sm:$0xff]
        %v1269 = vld [vmem:[%s204 + $0x18] sm:$0xff]
        %v1274 = vcombine.low %v1266, %v1267
        %v1275 = vcombine.high %v1266, %v1267
        %v1276 = vcombine.low %v1268, %v1269
        %v1277 = vcombine.high %v1268, %v1269
        %v1279 = vunpack.c.l.s4 1966171168
        %v1280 = vunpack.c.0.s8 %v1279
        %v1281 = vlaneseq
        %v1282 = vshrl.u32 %v1281, 7
        %v1283 = vsub.s32 %v1280, %v1282
        %v1284 = vrot.slane %v1274, %v1283
        %v1286 = vunpack.c.l.s4 1966171168
        %v1287 = vunpack.c.0.s8 %v1286
        %v1288 = vlaneseq
        %v1289 = vshrl.u32 %v1288, 7
        %v1290 = vsub.s32 %v1287, %v1289
        %v1291 = vrot.slane %v1275, %v1290
        %v1293 = vunpack.c.l.s4 1966171168
        %v1294 = vunpack.c.0.s8 %v1293
        %v1295 = vlaneseq
        %v1296 = vshrl.u32 %v1295, 7
        %v1297 = vsub.s32 %v1294, %v1296
        %v1298 = vrot.slane %v1276, %v1297
        %v1300 = vunpack.c.l.s4 1966171168
        %v1301 = vunpack.c.0.s8 %v1300
        %v1302 = vlaneseq
        %v1303 = vshrl.u32 %v1302, 7
        %v1304 = vsub.s32 %v1301, %v1303
        %v1305 = vrot.slane %v1277, %v1304
        %v1306 = vcombine.low %v1284, %v1298
        %v1307 = vcombine.high %v1284, %v1298
        %v1308 = vcombine.low %v1291, %v1305
        %v1309 = vcombine.high %v1291, %v1305
        %v1311 = vunpack.c.l.s4 1966171168
        %v1312 = vunpack.c.0.s8 %v1311
        %v1313 = vlaneseq
        %v1314 = vshrl.u32 %v1313, 7
        %v1315 = vsub.s32 %v1312, %v1314
        %v1316 = vrot.slane %v1306, %v1315
        %v1318 = vunpack.c.l.s4 1966171168
        %v1319 = vunpack.c.0.s8 %v1318
        %v1320 = vlaneseq
        %v1321 = vshrl.u32 %v1320, 7
        %v1322 = vsub.s32 %v1319, %v1321
        %v1323 = vrot.slane %v1308, %v1322
        %v1325 = vunpack.c.l.s4 1966171168
        %v1326 = vunpack.c.0.s8 %v1325
        %v1327 = vlaneseq
        %v1328 = vshrl.u32 %v1327, 7
        %v1329 = vsub.s32 %v1326, %v1328
        %v1330 = vrot.slane %v1307, %v1329
        %v1332 = vunpack.c.l.s4 1966171168
        %v1333 = vunpack.c.0.s8 %v1332
        %v1334 = vlaneseq
        %v1335 = vshrl.u32 %v1334, 7
        %v1336 = vsub.s32 %v1333, %v1335
        %v1337 = vrot.slane %v1309, %v1336
        %v1338 = vcombine.high %v1316, %v1316
        %v1339 = vcombine.high %v1323, %v1323
        %v1340 = vcombine.high %v1330, %v1330
        %v1341 = vcombine.high %v1337, %v1337
        %v1342 = vlaneseq
        %v1343 = vshrl.u32 %v1342, 7
        %v1344 = vsub.s32 0, %v1343
        %v1345 = vrot.slane %v1316, %v1344
        %v1346 = vlaneseq
        %v1347 = vshrl.u32 %v1346, 7
        %v1348 = vsub.s32 1, %v1347
        %v1349 = vrot.slane %v1316, %v1348
        %v1350 = vlaneseq
        %v1351 = vshrl.u32 %v1350, 7
        %v1352 = vsub.s32 2, %v1351
        %v1353 = vrot.slane %v1316, %v1352
        %v1354 = vlaneseq
        %v1355 = vshrl.u32 %v1354, 7
        %v1356 = vsub.s32 3, %v1355
        %v1357 = vrot.slane %v1316, %v1356
        %v1358 = vlaneseq
        %v1359 = vshrl.u32 %v1358, 7
        %v1360 = vsub.s32 0, %v1359
        %v1361 = vrot.slane %v1330, %v1360
        %v1362 = vlaneseq
        %v1363 = vshrl.u32 %v1362, 7
        %v1364 = vsub.s32 1, %v1363
        %v1365 = vrot.slane %v1330, %v1364
        %v1366 = vlaneseq
        %v1367 = vshrl.u32 %v1366, 7
        %v1368 = vsub.s32 2, %v1367
        %v1369 = vrot.slane %v1330, %v1368
        %v1370 = vlaneseq
        %v1371 = vshrl.u32 %v1370, 7
        %v1372 = vsub.s32 3, %v1371
        %v1373 = vrot.slane %v1330, %v1372
        %v1374 = vlaneseq
        %v1375 = vshrl.u32 %v1374, 7
        %v1376 = vsub.s32 0, %v1375
        %v1377 = vrot.slane %v1338, %v1376
        %v1378 = vlaneseq
        %v1379 = vshrl.u32 %v1378, 7
        %v1380 = vsub.s32 1, %v1379
        %v1381 = vrot.slane %v1338, %v1380
        %v1382 = vlaneseq
        %v1383 = vshrl.u32 %v1382, 7
        %v1384 = vsub.s32 2, %v1383
        %v1385 = vrot.slane %v1338, %v1384
        %v1386 = vlaneseq
        %v1387 = vshrl.u32 %v1386, 7
        %v1388 = vsub.s32 3, %v1387
        %v1389 = vrot.slane %v1338, %v1388
        %v1390 = vlaneseq
        %v1391 = vshrl.u32 %v1390, 7
        %v1392 = vsub.s32 0, %v1391
        %v1393 = vrot.slane %v1340, %v1392
        %v1394 = vlaneseq
        %v1395 = vshrl.u32 %v1394, 7
        %v1396 = vsub.s32 1, %v1395
        %v1397 = vrot.slane %v1340, %v1396
        %v1398 = vlaneseq
        %v1399 = vshrl.u32 %v1398, 7
        %v1400 = vsub.s32 2, %v1399
        %v1401 = vrot.slane %v1340, %v1400
        %v1402 = vlaneseq
        %v1403 = vshrl.u32 %v1402, 7
        %v1404 = vsub.s32 3, %v1403
        %v1405 = vrot.slane %v1340, %v1404
        %v1406 = vlaneseq
        %v1407 = vshrl.u32 %v1406, 7
        %v1408 = vsub.s32 0, %v1407
        %v1409 = vrot.slane %v1323, %v1408
        %v1410 = vlaneseq
        %v1411 = vshrl.u32 %v1410, 7
        %v1412 = vsub.s32 1, %v1411
        %v1413 = vrot.slane %v1323, %v1412
        %v1414 = vlaneseq
        %v1415 = vshrl.u32 %v1414, 7
        %v1416 = vsub.s32 2, %v1415
        %v1417 = vrot.slane %v1323, %v1416
        %v1418 = vlaneseq
        %v1419 = vshrl.u32 %v1418, 7
        %v1420 = vsub.s32 3, %v1419
        %v1421 = vrot.slane %v1323, %v1420
        %v1422 = vlaneseq
        %v1423 = vshrl.u32 %v1422, 7
        %v1424 = vsub.s32 0, %v1423
        %v1425 = vrot.slane %v1337, %v1424
        %v1426 = vlaneseq
        %v1427 = vshrl.u32 %v1426, 7
        %v1428 = vsub.s32 1, %v1427
        %v1429 = vrot.slane %v1337, %v1428
        %v1430 = vlaneseq
        %v1431 = vshrl.u32 %v1430, 7
        %v1432 = vsub.s32 2, %v1431
        %v1433 = vrot.slane %v1337, %v1432
        %v1434 = vlaneseq
        %v1435 = vshrl.u32 %v1434, 7
        %v1436 = vsub.s32 3, %v1435
        %v1437 = vrot.slane %v1337, %v1436
        %v1438 = vlaneseq
        %v1439 = vshrl.u32 %v1438, 7
        %v1440 = vsub.s32 0, %v1439
        %v1441 = vrot.slane %v1339, %v1440
        %v1442 = vlaneseq
        %v1443 = vshrl.u32 %v1442, 7
        %v1444 = vsub.s32 1, %v1443
        %v1445 = vrot.slane %v1339, %v1444
        %v1446 = vlaneseq
        %v1447 = vshrl.u32 %v1446, 7
        %v1448 = vsub.s32 2, %v1447
        %v1449 = vrot.slane %v1339, %v1448
        %v1450 = vlaneseq
        %v1451 = vshrl.u32 %v1450, 7
        %v1452 = vsub.s32 3, %v1451
        %v1453 = vrot.slane %v1339, %v1452
        %v1454 = vlaneseq
        %v1455 = vshrl.u32 %v1454, 7
        %v1456 = vsub.s32 0, %v1455
        %v1457 = vrot.slane %v1341, %v1456
        %v1458 = vlaneseq
        %v1459 = vshrl.u32 %v1458, 7
        %v1460 = vsub.s32 1, %v1459
        %v1461 = vrot.slane %v1341, %v1460
        %v1462 = vlaneseq
        %v1463 = vshrl.u32 %v1462, 7
        %v1464 = vsub.s32 2, %v1463
        %v1465 = vrot.slane %v1341, %v1464
        %v1466 = vlaneseq
        %v1467 = vshrl.u32 %v1466, 7
        %v1468 = vsub.s32 3, %v1467
        %v1469 = vrot.slane %v1341, %v1468
        %1502 = vset.pattern.permute.xlu0 2
        %1503 = vperm.xlu0 %1502, %v213
        %v1504 = vpop.permute.xlu0 %1503
        %1506 = vset.pattern.permute.xlu0 2
        %1507 = vperm.xlu0 %1506, %v214
        %v1508 = vpop.permute.xlu0 %1507
        %v1510 = vmul.f32 %v1345, %v1504
        %v1511 = vmul.f32 %v1349, %v1504
        %v1512 = vmul.f32 %v1353, %v1504
        %v1513 = vmul.f32 %v1357, %v1504
        %v1514 = vmul.f32 %v1345, %v1508
        %v1515 = vmul.f32 %v1349, %v1508
        %v1516 = vmul.f32 %v1353, %v1508
        %v1517 = vmul.f32 %v1357, %v1508
        %v1518 = vmul.f32 %v1361, %v1504
        %v1519 = vmul.f32 %v1365, %v1504
        %v1520 = vmul.f32 %v1369, %v1504
        %v1521 = vmul.f32 %v1373, %v1504
        %v1522 = vmul.f32 %v1361, %v1508
        %v1523 = vmul.f32 %v1365, %v1508
        %v1524 = vmul.f32 %v1369, %v1508
        %v1525 = vmul.f32 %v1373, %v1508
        %v1526 = vmul.f32 %v1377, %v1504
        %v1527 = vmul.f32 %v1381, %v1504
        %v1528 = vmul.f32 %v1385, %v1504
        %v1529 = vmul.f32 %v1389, %v1504
        %v1530 = vmul.f32 %v1377, %v1508
        %v1531 = vmul.f32 %v1381, %v1508
        %v1532 = vmul.f32 %v1385, %v1508
        %v1533 = vmul.f32 %v1389, %v1508
        %v1534 = vmul.f32 %v1393, %v1504
        %v1535 = vmul.f32 %v1397, %v1504
        %v1536 = vmul.f32 %v1401, %v1504
        %v1537 = vmul.f32 %v1405, %v1504
        %v1538 = vmul.f32 %v1393, %v1508
        %v1539 = vmul.f32 %v1397, %v1508
        %v1540 = vmul.f32 %v1401, %v1508
        %v1541 = vmul.f32 %v1405, %v1508
        %v1542 = vmul.f32 %v1409, %v1504
        %v1543 = vmul.f32 %v1413, %v1504
        %v1544 = vmul.f32 %v1417, %v1504
        %v1545 = vmul.f32 %v1421, %v1504
        %v1546 = vmul.f32 %v1409, %v1508
        %v1547 = vmul.f32 %v1413, %v1508
        %v1548 = vmul.f32 %v1417, %v1508
        %v1549 = vmul.f32 %v1421, %v1508
        %v1550 = vmul.f32 %v1425, %v1504
        %v1551 = vmul.f32 %v1429, %v1504
        %v1552 = vmul.f32 %v1433, %v1504
        %v1553 = vmul.f32 %v1437, %v1504
        %v1554 = vmul.f32 %v1425, %v1508
        %v1555 = vmul.f32 %v1429, %v1508
        %v1556 = vmul.f32 %v1433, %v1508
        %v1557 = vmul.f32 %v1437, %v1508
        %v1558 = vmul.f32 %v1441, %v1504
        %v1559 = vmul.f32 %v1445, %v1504
        %v1560 = vmul.f32 %v1449, %v1504
        %v1561 = vmul.f32 %v1453, %v1504
        %v1562 = vmul.f32 %v1441, %v1508
        %v1563 = vmul.f32 %v1445, %v1508
        %v1564 = vmul.f32 %v1449, %v1508
        %v1565 = vmul.f32 %v1453, %v1508
        %v1566 = vmul.f32 %v1457, %v1504
        %v1567 = vmul.f32 %v1461, %v1504
        %v1568 = vmul.f32 %v1465, %v1504
        %v1569 = vmul.f32 %v1469, %v1504
        %v1570 = vmul.f32 %v1457, %v1508
        %v1571 = vmul.f32 %v1461, %v1508
        %v1572 = vmul.f32 %v1465, %v1508
        %v1573 = vmul.f32 %v1469, %v1508
        %1638 = vrot.lane.b32.xlu0 %v1510, 126
        %v1639 = vpop.permute.xlu0 %1638
        %1640 = vrot.lane.b32.xlu0 %v1511, 126
        %v1641 = vpop.permute.xlu0 %1640
        %1642 = vrot.lane.b32.xlu0 %v1512, 126
        %v1643 = vpop.permute.xlu0 %1642
        %1644 = vrot.lane.b32.xlu0 %v1513, 126
        %v1645 = vpop.permute.xlu0 %1644
        %1646 = vrot.lane.b32.xlu0 %v1514, 126
        %v1647 = vpop.permute.xlu0 %1646
        %1648 = vrot.lane.b32.xlu0 %v1515, 126
        %v1649 = vpop.permute.xlu0 %1648
        %1650 = vrot.lane.b32.xlu0 %v1516, 126
        %v1651 = vpop.permute.xlu0 %1650
        %1652 = vrot.lane.b32.xlu0 %v1517, 126
        %v1653 = vpop.permute.xlu0 %1652
        %1654 = vrot.lane.b32.xlu0 %v1518, 126
        %v1655 = vpop.permute.xlu0 %1654
        %1656 = vrot.lane.b32.xlu0 %v1519, 126
        %v1657 = vpop.permute.xlu0 %1656
        %1658 = vrot.lane.b32.xlu0 %v1520, 126
        %v1659 = vpop.permute.xlu0 %1658
        %1660 = vrot.lane.b32.xlu0 %v1521, 126
        %v1661 = vpop.permute.xlu0 %1660
        %1662 = vrot.lane.b32.xlu0 %v1522, 126
        %v1663 = vpop.permute.xlu0 %1662
        %1664 = vrot.lane.b32.xlu0 %v1523, 126
        %v1665 = vpop.permute.xlu0 %1664
        %1666 = vrot.lane.b32.xlu0 %v1524, 126
        %v1667 = vpop.permute.xlu0 %1666
        %1668 = vrot.lane.b32.xlu0 %v1525, 126
        %v1669 = vpop.permute.xlu0 %1668
        %1670 = vrot.lane.b32.xlu0 %v1526, 126
        %v1671 = vpop.permute.xlu0 %1670
        %1672 = vrot.lane.b32.xlu0 %v1527, 126
        %v1673 = vpop.permute.xlu0 %1672
        %1674 = vrot.lane.b32.xlu0 %v1528, 126
        %v1675 = vpop.permute.xlu0 %1674
        %1676 = vrot.lane.b32.xlu0 %v1529, 126
        %v1677 = vpop.permute.xlu0 %1676
        %1678 = vrot.lane.b32.xlu0 %v1530, 126
        %v1679 = vpop.permute.xlu0 %1678
        %1680 = vrot.lane.b32.xlu0 %v1531, 126
        %v1681 = vpop.permute.xlu0 %1680
        %1682 = vrot.lane.b32.xlu0 %v1532, 126
        %v1683 = vpop.permute.xlu0 %1682
        %1684 = vrot.lane.b32.xlu0 %v1533, 126
        %v1685 = vpop.permute.xlu0 %1684
        %1686 = vrot.lane.b32.xlu0 %v1534, 126
        %v1687 = vpop.permute.xlu0 %1686
        %1688 = vrot.lane.b32.xlu0 %v1535, 126
        %v1689 = vpop.permute.xlu0 %1688
        %1690 = vrot.lane.b32.xlu0 %v1536, 126
        %v1691 = vpop.permute.xlu0 %1690
        %1692 = vrot.lane.b32.xlu0 %v1537, 126
        %v1693 = vpop.permute.xlu0 %1692
        %1694 = vrot.lane.b32.xlu0 %v1538, 126
        %v1695 = vpop.permute.xlu0 %1694
        %1696 = vrot.lane.b32.xlu0 %v1539, 126
        %v1697 = vpop.permute.xlu0 %1696
        %1698 = vrot.lane.b32.xlu0 %v1540, 126
        %v1699 = vpop.permute.xlu0 %1698
        %1700 = vrot.lane.b32.xlu0 %v1541, 126
        %v1701 = vpop.permute.xlu0 %1700
        %1702 = vrot.lane.b32.xlu0 %v1542, 126
        %v1703 = vpop.permute.xlu0 %1702
        %1704 = vrot.lane.b32.xlu0 %v1543, 126
        %v1705 = vpop.permute.xlu0 %1704
        %1706 = vrot.lane.b32.xlu0 %v1544, 126
        %v1707 = vpop.permute.xlu0 %1706
        %1708 = vrot.lane.b32.xlu0 %v1545, 126
        %v1709 = vpop.permute.xlu0 %1708
        %1710 = vrot.lane.b32.xlu0 %v1546, 126
        %v1711 = vpop.permute.xlu0 %1710
        %1712 = vrot.lane.b32.xlu0 %v1547, 126
        %v1713 = vpop.permute.xlu0 %1712
        %1714 = vrot.lane.b32.xlu0 %v1548, 126
        %v1715 = vpop.permute.xlu0 %1714
        %1716 = vrot.lane.b32.xlu0 %v1549, 126
        %v1717 = vpop.permute.xlu0 %1716
        %1718 = vrot.lane.b32.xlu0 %v1550, 126
        %v1719 = vpop.permute.xlu0 %1718
        %1720 = vrot.lane.b32.xlu0 %v1551, 126
        %v1721 = vpop.permute.xlu0 %1720
        %1722 = vrot.lane.b32.xlu0 %v1552, 126
        %v1723 = vpop.permute.xlu0 %1722
        %1724 = vrot.lane.b32.xlu0 %v1553, 126
        %v1725 = vpop.permute.xlu0 %1724
        %1726 = vrot.lane.b32.xlu0 %v1554, 126
        %v1727 = vpop.permute.xlu0 %1726
        %1728 = vrot.lane.b32.xlu0 %v1555, 126
        %v1729 = vpop.permute.xlu0 %1728
        %1730 = vrot.lane.b32.xlu0 %v1556, 126
        %v1731 = vpop.permute.xlu0 %1730
        %1732 = vrot.lane.b32.xlu0 %v1557, 126
        %v1733 = vpop.permute.xlu0 %1732
        %1734 = vrot.lane.b32.xlu0 %v1558, 126
        %v1735 = vpop.permute.xlu0 %1734
        %1736 = vrot.lane.b32.xlu0 %v1559, 126
        %v1737 = vpop.permute.xlu0 %1736
        %1738 = vrot.lane.b32.xlu0 %v1560, 126
        %v1739 = vpop.permute.xlu0 %1738
        %1740 = vrot.lane.b32.xlu0 %v1561, 126
        %v1741 = vpop.permute.xlu0 %1740
        %1742 = vrot.lane.b32.xlu0 %v1562, 126
        %v1743 = vpop.permute.xlu0 %1742
        %1744 = vrot.lane.b32.xlu0 %v1563, 126
        %v1745 = vpop.permute.xlu0 %1744
        %1746 = vrot.lane.b32.xlu0 %v1564, 126
        %v1747 = vpop.permute.xlu0 %1746
        %1748 = vrot.lane.b32.xlu0 %v1565, 126
        %v1749 = vpop.permute.xlu0 %1748
        %1750 = vrot.lane.b32.xlu0 %v1566, 126
        %v1751 = vpop.permute.xlu0 %1750
        %1752 = vrot.lane.b32.xlu0 %v1567, 126
        %v1753 = vpop.permute.xlu0 %1752
        %1754 = vrot.lane.b32.xlu0 %v1568, 126
        %v1755 = vpop.permute.xlu0 %1754
        %1756 = vrot.lane.b32.xlu0 %v1569, 126
        %v1757 = vpop.permute.xlu0 %1756
        %1758 = vrot.lane.b32.xlu0 %v1570, 126
        %v1759 = vpop.permute.xlu0 %1758
        %1760 = vrot.lane.b32.xlu0 %v1571, 126
        %v1761 = vpop.permute.xlu0 %1760
        %1762 = vrot.lane.b32.xlu0 %v1572, 126
        %v1763 = vpop.permute.xlu0 %1762
        %1764 = vrot.lane.b32.xlu0 %v1573, 126
        %v1765 = vpop.permute.xlu0 %1764
        %vm1766 = vcmask 1031168
        %v1767 = vsel %vm1766, %v1639, %v1641
        %v1768 = vsel %vm1766, %v1641, %v1643
        %v1769 = vsel %vm1766, %v1643, %v1645
        %v1770 = vsel %vm1766, %v1647, %v1649
        %v1771 = vsel %vm1766, %v1649, %v1651
        %v1772 = vsel %vm1766, %v1651, %v1653
        %v1773 = vsel %vm1766, %v1655, %v1657
        %v1774 = vsel %vm1766, %v1657, %v1659
        %v1775 = vsel %vm1766, %v1659, %v1661
        %v1776 = vsel %vm1766, %v1663, %v1665
        %v1777 = vsel %vm1766, %v1665, %v1667
        %v1778 = vsel %vm1766, %v1667, %v1669
        %v1779 = vsel %vm1766, %v1671, %v1673
        %v1780 = vsel %vm1766, %v1673, %v1675
        %v1781 = vsel %vm1766, %v1675, %v1677
        %v1782 = vsel %vm1766, %v1679, %v1681
        %v1783 = vsel %vm1766, %v1681, %v1683
        %v1784 = vsel %vm1766, %v1683, %v1685
        %v1785 = vsel %vm1766, %v1687, %v1689
        %v1786 = vsel %vm1766, %v1689, %v1691
        %v1787 = vsel %vm1766, %v1691, %v1693
        %v1788 = vsel %vm1766, %v1695, %v1697
        %v1789 = vsel %vm1766, %v1697, %v1699
        %v1790 = vsel %vm1766, %v1699, %v1701
        %v1791 = vsel %vm1766, %v1703, %v1705
        %v1792 = vsel %vm1766, %v1705, %v1707
        %v1793 = vsel %vm1766, %v1707, %v1709
        %v1794 = vsel %vm1766, %v1711, %v1713
        %v1795 = vsel %vm1766, %v1713, %v1715
        %v1796 = vsel %vm1766, %v1715, %v1717
        %v1797 = vsel %vm1766, %v1719, %v1721
        %v1798 = vsel %vm1766, %v1721, %v1723
        %v1799 = vsel %vm1766, %v1723, %v1725
        %v1800 = vsel %vm1766, %v1727, %v1729
        %v1801 = vsel %vm1766, %v1729, %v1731
        %v1802 = vsel %vm1766, %v1731, %v1733
        %v1803 = vsel %vm1766, %v1735, %v1737
        %v1804 = vsel %vm1766, %v1737, %v1739
        %v1805 = vsel %vm1766, %v1739, %v1741
        %v1806 = vsel %vm1766, %v1743, %v1745
        %v1807 = vsel %vm1766, %v1745, %v1747
        %v1808 = vsel %vm1766, %v1747, %v1749
        %v1809 = vsel %vm1766, %v1751, %v1753
        %v1810 = vsel %vm1766, %v1753, %v1755
        %v1811 = vsel %vm1766, %v1755, %v1757
        %v1812 = vsel %vm1766, %v1759, %v1761
        %v1813 = vsel %vm1766, %v1761, %v1763
        %v1814 = vsel %vm1766, %v1763, %v1765
        %v1879 = vadd.f32 %v1202, %v1767
        %v1880 = vadd.f32 %v1203, %v1768
        %v1881 = vadd.f32 %v1204, %v1769
        %v1882 = vadd.f32 %v1205, %v1645
        %v1883 = vadd.f32 %v1206, %v1770
        %v1884 = vadd.f32 %v1207, %v1771
        %v1885 = vadd.f32 %v1208, %v1772
        %v1886 = vadd.f32 %v1209, %v1653
        %v1887 = vadd.f32 %v1210, %v1773
        %v1888 = vadd.f32 %v1211, %v1774
        %v1889 = vadd.f32 %v1212, %v1775
        %v1890 = vadd.f32 %v1213, %v1661
        %v1891 = vadd.f32 %v1214, %v1776
        %v1892 = vadd.f32 %v1215, %v1777
        %v1893 = vadd.f32 %v1216, %v1778
        %v1894 = vadd.f32 %v1217, %v1669
        %v1895 = vadd.f32 %v1218, %v1779
        %v1896 = vadd.f32 %v1219, %v1780
        %v1897 = vadd.f32 %v1220, %v1781
        %v1898 = vadd.f32 %v1221, %v1677
        %v1899 = vadd.f32 %v1222, %v1782
        %v1900 = vadd.f32 %v1223, %v1783
        %v1901 = vadd.f32 %v1224, %v1784
        %v1902 = vadd.f32 %v1225, %v1685
        %v1903 = vadd.f32 %v1226, %v1785
        %v1904 = vadd.f32 %v1227, %v1786
        %v1905 = vadd.f32 %v1228, %v1787
        %v1906 = vadd.f32 %v1229, %v1693
        %v1907 = vadd.f32 %v1230, %v1788
        %v1908 = vadd.f32 %v1231, %v1789
        %v1909 = vadd.f32 %v1232, %v1790
        %v1910 = vadd.f32 %v1233, %v1701
        %v1911 = vadd.f32 %v1234, %v1791
        %v1912 = vadd.f32 %v1235, %v1792
        %v1913 = vadd.f32 %v1236, %v1793
        %v1914 = vadd.f32 %v1237, %v1709
        %v1915 = vadd.f32 %v1238, %v1794
        %v1916 = vadd.f32 %v1239, %v1795
        %v1917 = vadd.f32 %v1240, %v1796
        %v1918 = vadd.f32 %v1241, %v1717
        %v1919 = vadd.f32 %v1242, %v1797
        %v1920 = vadd.f32 %v1243, %v1798
        %v1921 = vadd.f32 %v1244, %v1799
        %v1922 = vadd.f32 %v1245, %v1725
        %v1923 = vadd.f32 %v1246, %v1800
        %v1924 = vadd.f32 %v1247, %v1801
        %v1925 = vadd.f32 %v1248, %v1802
        %v1926 = vadd.f32 %v1249, %v1733
        %v1927 = vadd.f32 %v1250, %v1803
        %v1928 = vadd.f32 %v1251, %v1804
        %v1929 = vadd.f32 %v1252, %v1805
        %v1930 = vadd.f32 %v1253, %v1741
        %v1931 = vadd.f32 %v1254, %v1806
        %v1932 = vadd.f32 %v1255, %v1807
        %v1933 = vadd.f32 %v1256, %v1808
        %v1934 = vadd.f32 %v1257, %v1749
        %v1935 = vadd.f32 %v1258, %v1809
        %v1936 = vadd.f32 %v1259, %v1810
        %v1937 = vadd.f32 %v1260, %v1811
        %v1938 = vadd.f32 %v1261, %v1757
        %v1939 = vadd.f32 %v1262, %v1812
        %v1940 = vadd.f32 %v1263, %v1813
        %v1941 = vadd.f32 %v1264, %v1814
        %v1942 = vadd.f32 %v1265, %v1765
        %v1943 = vld [vmem:[%s204] sm:$0xff]
        %v1944 = vld [vmem:[%s204 + $0x8] sm:$0xff]
        %v1945 = vld [vmem:[%s204 + $0x10] sm:$0xff]
        %v1946 = vld [vmem:[%s204 + $0x18] sm:$0xff]
        %v1951 = vcombine.low %v1943, %v1944
        %v1952 = vcombine.high %v1943, %v1944
        %v1953 = vcombine.low %v1945, %v1946
        %v1954 = vcombine.high %v1945, %v1946
        %v1956 = vunpack.c.l.s4 1966171168
        %v1957 = vunpack.c.0.s8 %v1956
        %v1958 = vlaneseq
        %v1959 = vshrl.u32 %v1958, 7
        %v1960 = vsub.s32 %v1957, %v1959
        %v1961 = vrot.slane %v1951, %v1960
        %v1963 = vunpack.c.l.s4 1966171168
        %v1964 = vunpack.c.0.s8 %v1963
        %v1965 = vlaneseq
        %v1966 = vshrl.u32 %v1965, 7
        %v1967 = vsub.s32 %v1964, %v1966
        %v1968 = vrot.slane %v1952, %v1967
        %v1970 = vunpack.c.l.s4 1966171168
        %v1971 = vunpack.c.0.s8 %v1970
        %v1972 = vlaneseq
        %v1973 = vshrl.u32 %v1972, 7
        %v1974 = vsub.s32 %v1971, %v1973
        %v1975 = vrot.slane %v1953, %v1974
        %v1977 = vunpack.c.l.s4 1966171168
        %v1978 = vunpack.c.0.s8 %v1977
        %v1979 = vlaneseq
        %v1980 = vshrl.u32 %v1979, 7
        %v1981 = vsub.s32 %v1978, %v1980
        %v1982 = vrot.slane %v1954, %v1981
        %v1983 = vcombine.low %v1961, %v1975
        %v1984 = vcombine.high %v1961, %v1975
        %v1985 = vcombine.low %v1968, %v1982
        %v1986 = vcombine.high %v1968, %v1982
        %v1988 = vunpack.c.l.s4 1966171168
        %v1989 = vunpack.c.0.s8 %v1988
        %v1990 = vlaneseq
        %v1991 = vshrl.u32 %v1990, 7
        %v1992 = vsub.s32 %v1989, %v1991
        %v1993 = vrot.slane %v1983, %v1992
        %v1995 = vunpack.c.l.s4 1966171168
        %v1996 = vunpack.c.0.s8 %v1995
        %v1997 = vlaneseq
        %v1998 = vshrl.u32 %v1997, 7
        %v1999 = vsub.s32 %v1996, %v1998
        %v2000 = vrot.slane %v1985, %v1999
        %v2002 = vunpack.c.l.s4 1966171168
        %v2003 = vunpack.c.0.s8 %v2002
        %v2004 = vlaneseq
        %v2005 = vshrl.u32 %v2004, 7
        %v2006 = vsub.s32 %v2003, %v2005
        %v2007 = vrot.slane %v1984, %v2006
        %v2009 = vunpack.c.l.s4 1966171168
        %v2010 = vunpack.c.0.s8 %v2009
        %v2011 = vlaneseq
        %v2012 = vshrl.u32 %v2011, 7
        %v2013 = vsub.s32 %v2010, %v2012
        %v2014 = vrot.slane %v1986, %v2013
        %v2015 = vcombine.high %v1993, %v1993
        %v2016 = vcombine.high %v2000, %v2000
        %v2017 = vcombine.high %v2007, %v2007
        %v2018 = vcombine.high %v2014, %v2014
        %v2019 = vlaneseq
        %v2020 = vshrl.u32 %v2019, 7
        %v2021 = vsub.s32 0, %v2020
        %v2022 = vrot.slane %v1993, %v2021
        %v2023 = vlaneseq
        %v2024 = vshrl.u32 %v2023, 7
        %v2025 = vsub.s32 1, %v2024
        %v2026 = vrot.slane %v1993, %v2025
        %v2027 = vlaneseq
        %v2028 = vshrl.u32 %v2027, 7
        %v2029 = vsub.s32 2, %v2028
        %v2030 = vrot.slane %v1993, %v2029
        %v2031 = vlaneseq
        %v2032 = vshrl.u32 %v2031, 7
        %v2033 = vsub.s32 3, %v2032
        %v2034 = vrot.slane %v1993, %v2033
        %v2035 = vlaneseq
        %v2036 = vshrl.u32 %v2035, 7
        %v2037 = vsub.s32 0, %v2036
        %v2038 = vrot.slane %v2007, %v2037
        %v2039 = vlaneseq
        %v2040 = vshrl.u32 %v2039, 7
        %v2041 = vsub.s32 1, %v2040
        %v2042 = vrot.slane %v2007, %v2041
        %v2043 = vlaneseq
        %v2044 = vshrl.u32 %v2043, 7
        %v2045 = vsub.s32 2, %v2044
        %v2046 = vrot.slane %v2007, %v2045
        %v2047 = vlaneseq
        %v2048 = vshrl.u32 %v2047, 7
        %v2049 = vsub.s32 3, %v2048
        %v2050 = vrot.slane %v2007, %v2049
        %v2051 = vlaneseq
        %v2052 = vshrl.u32 %v2051, 7
        %v2053 = vsub.s32 0, %v2052
        %v2054 = vrot.slane %v2015, %v2053
        %v2055 = vlaneseq
        %v2056 = vshrl.u32 %v2055, 7
        %v2057 = vsub.s32 1, %v2056
        %v2058 = vrot.slane %v2015, %v2057
        %v2059 = vlaneseq
        %v2060 = vshrl.u32 %v2059, 7
        %v2061 = vsub.s32 2, %v2060
        %v2062 = vrot.slane %v2015, %v2061
        %v2063 = vlaneseq
        %v2064 = vshrl.u32 %v2063, 7
        %v2065 = vsub.s32 3, %v2064
        %v2066 = vrot.slane %v2015, %v2065
        %v2067 = vlaneseq
        %v2068 = vshrl.u32 %v2067, 7
        %v2069 = vsub.s32 0, %v2068
        %v2070 = vrot.slane %v2017, %v2069
        %v2071 = vlaneseq
        %v2072 = vshrl.u32 %v2071, 7
        %v2073 = vsub.s32 1, %v2072
        %v2074 = vrot.slane %v2017, %v2073
        %v2075 = vlaneseq
        %v2076 = vshrl.u32 %v2075, 7
        %v2077 = vsub.s32 2, %v2076
        %v2078 = vrot.slane %v2017, %v2077
        %v2079 = vlaneseq
        %v2080 = vshrl.u32 %v2079, 7
        %v2081 = vsub.s32 3, %v2080
        %v2082 = vrot.slane %v2017, %v2081
        %v2083 = vlaneseq
        %v2084 = vshrl.u32 %v2083, 7
        %v2085 = vsub.s32 0, %v2084
        %v2086 = vrot.slane %v2000, %v2085
        %v2087 = vlaneseq
        %v2088 = vshrl.u32 %v2087, 7
        %v2089 = vsub.s32 1, %v2088
        %v2090 = vrot.slane %v2000, %v2089
        %v2091 = vlaneseq
        %v2092 = vshrl.u32 %v2091, 7
        %v2093 = vsub.s32 2, %v2092
        %v2094 = vrot.slane %v2000, %v2093
        %v2095 = vlaneseq
        %v2096 = vshrl.u32 %v2095, 7
        %v2097 = vsub.s32 3, %v2096
        %v2098 = vrot.slane %v2000, %v2097
        %v2099 = vlaneseq
        %v2100 = vshrl.u32 %v2099, 7
        %v2101 = vsub.s32 0, %v2100
        %v2102 = vrot.slane %v2014, %v2101
        %v2103 = vlaneseq
        %v2104 = vshrl.u32 %v2103, 7
        %v2105 = vsub.s32 1, %v2104
        %v2106 = vrot.slane %v2014, %v2105
        %v2107 = vlaneseq
        %v2108 = vshrl.u32 %v2107, 7
        %v2109 = vsub.s32 2, %v2108
        %v2110 = vrot.slane %v2014, %v2109
        %v2111 = vlaneseq
        %v2112 = vshrl.u32 %v2111, 7
        %v2113 = vsub.s32 3, %v2112
        %v2114 = vrot.slane %v2014, %v2113
        %v2115 = vlaneseq
        %v2116 = vshrl.u32 %v2115, 7
        %v2117 = vsub.s32 0, %v2116
        %v2118 = vrot.slane %v2016, %v2117
        %v2119 = vlaneseq
        %v2120 = vshrl.u32 %v2119, 7
        %v2121 = vsub.s32 1, %v2120
        %v2122 = vrot.slane %v2016, %v2121
        %v2123 = vlaneseq
        %v2124 = vshrl.u32 %v2123, 7
        %v2125 = vsub.s32 2, %v2124
        %v2126 = vrot.slane %v2016, %v2125
        %v2127 = vlaneseq
        %v2128 = vshrl.u32 %v2127, 7
        %v2129 = vsub.s32 3, %v2128
        %v2130 = vrot.slane %v2016, %v2129
        %v2131 = vlaneseq
        %v2132 = vshrl.u32 %v2131, 7
        %v2133 = vsub.s32 0, %v2132
        %v2134 = vrot.slane %v2018, %v2133
        %v2135 = vlaneseq
        %v2136 = vshrl.u32 %v2135, 7
        %v2137 = vsub.s32 1, %v2136
        %v2138 = vrot.slane %v2018, %v2137
        %v2139 = vlaneseq
        %v2140 = vshrl.u32 %v2139, 7
        %v2141 = vsub.s32 2, %v2140
        %v2142 = vrot.slane %v2018, %v2141
        %v2143 = vlaneseq
        %v2144 = vshrl.u32 %v2143, 7
        %v2145 = vsub.s32 3, %v2144
        %v2146 = vrot.slane %v2018, %v2145
        %2179 = vset.pattern.permute.xlu0 3
        %2180 = vperm.xlu0 %2179, %v213
        %v2181 = vpop.permute.xlu0 %2180
        %2183 = vset.pattern.permute.xlu0 3
        %2184 = vperm.xlu0 %2183, %v214
        %v2185 = vpop.permute.xlu0 %2184
        %v2187 = vmul.f32 %v2022, %v2181
        %v2188 = vmul.f32 %v2026, %v2181
        %v2189 = vmul.f32 %v2030, %v2181
        %v2190 = vmul.f32 %v2034, %v2181
        %v2191 = vmul.f32 %v2022, %v2185
        %v2192 = vmul.f32 %v2026, %v2185
        %v2193 = vmul.f32 %v2030, %v2185
        %v2194 = vmul.f32 %v2034, %v2185
        %v2195 = vmul.f32 %v2038, %v2181
        %v2196 = vmul.f32 %v2042, %v2181
        %v2197 = vmul.f32 %v2046, %v2181
        %v2198 = vmul.f32 %v2050, %v2181
        %v2199 = vmul.f32 %v2038, %v2185
        %v2200 = vmul.f32 %v2042, %v2185
        %v2201 = vmul.f32 %v2046, %v2185
        %v2202 = vmul.f32 %v2050, %v2185
        %v2203 = vmul.f32 %v2054, %v2181
        %v2204 = vmul.f32 %v2058, %v2181
        %v2205 = vmul.f32 %v2062, %v2181
        %v2206 = vmul.f32 %v2066, %v2181
        %v2207 = vmul.f32 %v2054, %v2185
        %v2208 = vmul.f32 %v2058, %v2185
        %v2209 = vmul.f32 %v2062, %v2185
        %v2210 = vmul.f32 %v2066, %v2185
        %v2211 = vmul.f32 %v2070, %v2181
        %v2212 = vmul.f32 %v2074, %v2181
        %v2213 = vmul.f32 %v2078, %v2181
        %v2214 = vmul.f32 %v2082, %v2181
        %v2215 = vmul.f32 %v2070, %v2185
        %v2216 = vmul.f32 %v2074, %v2185
        %v2217 = vmul.f32 %v2078, %v2185
        %v2218 = vmul.f32 %v2082, %v2185
        %v2219 = vmul.f32 %v2086, %v2181
        %v2220 = vmul.f32 %v2090, %v2181
        %v2221 = vmul.f32 %v2094, %v2181
        %v2222 = vmul.f32 %v2098, %v2181
        %v2223 = vmul.f32 %v2086, %v2185
        %v2224 = vmul.f32 %v2090, %v2185
        %v2225 = vmul.f32 %v2094, %v2185
        %v2226 = vmul.f32 %v2098, %v2185
        %v2227 = vmul.f32 %v2102, %v2181
        %v2228 = vmul.f32 %v2106, %v2181
        %v2229 = vmul.f32 %v2110, %v2181
        %v2230 = vmul.f32 %v2114, %v2181
        %v2231 = vmul.f32 %v2102, %v2185
        %v2232 = vmul.f32 %v2106, %v2185
        %v2233 = vmul.f32 %v2110, %v2185
        %v2234 = vmul.f32 %v2114, %v2185
        %v2235 = vmul.f32 %v2118, %v2181
        %v2236 = vmul.f32 %v2122, %v2181
        %v2237 = vmul.f32 %v2126, %v2181
        %v2238 = vmul.f32 %v2130, %v2181
        %v2239 = vmul.f32 %v2118, %v2185
        %v2240 = vmul.f32 %v2122, %v2185
        %v2241 = vmul.f32 %v2126, %v2185
        %v2242 = vmul.f32 %v2130, %v2185
        %v2243 = vmul.f32 %v2134, %v2181
        %v2244 = vmul.f32 %v2138, %v2181
        %v2245 = vmul.f32 %v2142, %v2181
        %v2246 = vmul.f32 %v2146, %v2181
        %v2247 = vmul.f32 %v2134, %v2185
        %v2248 = vmul.f32 %v2138, %v2185
        %v2249 = vmul.f32 %v2142, %v2185
        %v2250 = vmul.f32 %v2146, %v2185
        %2315 = vrot.lane.b32.xlu0 %v2187, 125
        %v2316 = vpop.permute.xlu0 %2315
        %2317 = vrot.lane.b32.xlu0 %v2188, 125
        %v2318 = vpop.permute.xlu0 %2317
        %2319 = vrot.lane.b32.xlu0 %v2189, 125
        %v2320 = vpop.permute.xlu0 %2319
        %2321 = vrot.lane.b32.xlu0 %v2190, 125
        %v2322 = vpop.permute.xlu0 %2321
        %2323 = vrot.lane.b32.xlu0 %v2191, 125
        %v2324 = vpop.permute.xlu0 %2323
        %2325 = vrot.lane.b32.xlu0 %v2192, 125
        %v2326 = vpop.permute.xlu0 %2325
        %2327 = vrot.lane.b32.xlu0 %v2193, 125
        %v2328 = vpop.permute.xlu0 %2327
        %2329 = vrot.lane.b32.xlu0 %v2194, 125
        %v2330 = vpop.permute.xlu0 %2329
        %2331 = vrot.lane.b32.xlu0 %v2195, 125
        %v2332 = vpop.permute.xlu0 %2331
        %2333 = vrot.lane.b32.xlu0 %v2196, 125
        %v2334 = vpop.permute.xlu0 %2333
        %2335 = vrot.lane.b32.xlu0 %v2197, 125
        %v2336 = vpop.permute.xlu0 %2335
        %2337 = vrot.lane.b32.xlu0 %v2198, 125
        %v2338 = vpop.permute.xlu0 %2337
        %2339 = vrot.lane.b32.xlu0 %v2199, 125
        %v2340 = vpop.permute.xlu0 %2339
        %2341 = vrot.lane.b32.xlu0 %v2200, 125
        %v2342 = vpop.permute.xlu0 %2341
        %2343 = vrot.lane.b32.xlu0 %v2201, 125
        %v2344 = vpop.permute.xlu0 %2343
        %2345 = vrot.lane.b32.xlu0 %v2202, 125
        %v2346 = vpop.permute.xlu0 %2345
        %2347 = vrot.lane.b32.xlu0 %v2203, 125
        %v2348 = vpop.permute.xlu0 %2347
        %2349 = vrot.lane.b32.xlu0 %v2204, 125
        %v2350 = vpop.permute.xlu0 %2349
        %2351 = vrot.lane.b32.xlu0 %v2205, 125
        %v2352 = vpop.permute.xlu0 %2351
        %2353 = vrot.lane.b32.xlu0 %v2206, 125
        %v2354 = vpop.permute.xlu0 %2353
        %2355 = vrot.lane.b32.xlu0 %v2207, 125
        %v2356 = vpop.permute.xlu0 %2355
        %2357 = vrot.lane.b32.xlu0 %v2208, 125
        %v2358 = vpop.permute.xlu0 %2357
        %2359 = vrot.lane.b32.xlu0 %v2209, 125
        %v2360 = vpop.permute.xlu0 %2359
        %2361 = vrot.lane.b32.xlu0 %v2210, 125
        %v2362 = vpop.permute.xlu0 %2361
        %2363 = vrot.lane.b32.xlu0 %v2211, 125
        %v2364 = vpop.permute.xlu0 %2363
        %2365 = vrot.lane.b32.xlu0 %v2212, 125
        %v2366 = vpop.permute.xlu0 %2365
        %2367 = vrot.lane.b32.xlu0 %v2213, 125
        %v2368 = vpop.permute.xlu0 %2367
        %2369 = vrot.lane.b32.xlu0 %v2214, 125
        %v2370 = vpop.permute.xlu0 %2369
        %2371 = vrot.lane.b32.xlu0 %v2215, 125
        %v2372 = vpop.permute.xlu0 %2371
        %2373 = vrot.lane.b32.xlu0 %v2216, 125
        %v2374 = vpop.permute.xlu0 %2373
        %2375 = vrot.lane.b32.xlu0 %v2217, 125
        %v2376 = vpop.permute.xlu0 %2375
        %2377 = vrot.lane.b32.xlu0 %v2218, 125
        %v2378 = vpop.permute.xlu0 %2377
        %2379 = vrot.lane.b32.xlu0 %v2219, 125
        %v2380 = vpop.permute.xlu0 %2379
        %2381 = vrot.lane.b32.xlu0 %v2220, 125
        %v2382 = vpop.permute.xlu0 %2381
        %2383 = vrot.lane.b32.xlu0 %v2221, 125
        %v2384 = vpop.permute.xlu0 %2383
        %2385 = vrot.lane.b32.xlu0 %v2222, 125
        %v2386 = vpop.permute.xlu0 %2385
        %2387 = vrot.lane.b32.xlu0 %v2223, 125
        %v2388 = vpop.permute.xlu0 %2387
        %2389 = vrot.lane.b32.xlu0 %v2224, 125
        %v2390 = vpop.permute.xlu0 %2389
        %2391 = vrot.lane.b32.xlu0 %v2225, 125
        %v2392 = vpop.permute.xlu0 %2391
        %2393 = vrot.lane.b32.xlu0 %v2226, 125
        %v2394 = vpop.permute.xlu0 %2393
        %2395 = vrot.lane.b32.xlu0 %v2227, 125
        %v2396 = vpop.permute.xlu0 %2395
        %2397 = vrot.lane.b32.xlu0 %v2228, 125
        %v2398 = vpop.permute.xlu0 %2397
        %2399 = vrot.lane.b32.xlu0 %v2229, 125
        %v2400 = vpop.permute.xlu0 %2399
        %2401 = vrot.lane.b32.xlu0 %v2230, 125
        %v2402 = vpop.permute.xlu0 %2401
        %2403 = vrot.lane.b32.xlu0 %v2231, 125
        %v2404 = vpop.permute.xlu0 %2403
        %2405 = vrot.lane.b32.xlu0 %v2232, 125
        %v2406 = vpop.permute.xlu0 %2405
        %2407 = vrot.lane.b32.xlu0 %v2233, 125
        %v2408 = vpop.permute.xlu0 %2407
        %2409 = vrot.lane.b32.xlu0 %v2234, 125
        %v2410 = vpop.permute.xlu0 %2409
        %2411 = vrot.lane.b32.xlu0 %v2235, 125
        %v2412 = vpop.permute.xlu0 %2411
        %2413 = vrot.lane.b32.xlu0 %v2236, 125
        %v2414 = vpop.permute.xlu0 %2413
        %2415 = vrot.lane.b32.xlu0 %v2237, 125
        %v2416 = vpop.permute.xlu0 %2415
        %2417 = vrot.lane.b32.xlu0 %v2238, 125
        %v2418 = vpop.permute.xlu0 %2417
        %2419 = vrot.lane.b32.xlu0 %v2239, 125
        %v2420 = vpop.permute.xlu0 %2419
        %2421 = vrot.lane.b32.xlu0 %v2240, 125
        %v2422 = vpop.permute.xlu0 %2421
        %2423 = vrot.lane.b32.xlu0 %v2241, 125
        %v2424 = vpop.permute.xlu0 %2423
        %2425 = vrot.lane.b32.xlu0 %v2242, 125
        %v2426 = vpop.permute.xlu0 %2425
        %2427 = vrot.lane.b32.xlu0 %v2243, 125
        %v2428 = vpop.permute.xlu0 %2427
        %2429 = vrot.lane.b32.xlu0 %v2244, 125
        %v2430 = vpop.permute.xlu0 %2429
        %2431 = vrot.lane.b32.xlu0 %v2245, 125
        %v2432 = vpop.permute.xlu0 %2431
        %2433 = vrot.lane.b32.xlu0 %v2246, 125
        %v2434 = vpop.permute.xlu0 %2433
        %2435 = vrot.lane.b32.xlu0 %v2247, 125
        %v2436 = vpop.permute.xlu0 %2435
        %2437 = vrot.lane.b32.xlu0 %v2248, 125
        %v2438 = vpop.permute.xlu0 %2437
        %2439 = vrot.lane.b32.xlu0 %v2249, 125
        %v2440 = vpop.permute.xlu0 %2439
        %2441 = vrot.lane.b32.xlu0 %v2250, 125
        %v2442 = vpop.permute.xlu0 %2441
        %vm2443 = vcmask 1022976
        %v2444 = vsel %vm2443, %v2316, %v2318
        %v2445 = vsel %vm2443, %v2318, %v2320
        %v2446 = vsel %vm2443, %v2320, %v2322
        %v2447 = vsel %vm2443, %v2324, %v2326
        %v2448 = vsel %vm2443, %v2326, %v2328
        %v2449 = vsel %vm2443, %v2328, %v2330
        %v2450 = vsel %vm2443, %v2332, %v2334
        %v2451 = vsel %vm2443, %v2334, %v2336
        %v2452 = vsel %vm2443, %v2336, %v2338
        %v2453 = vsel %vm2443, %v2340, %v2342
        %v2454 = vsel %vm2443, %v2342, %v2344
        %v2455 = vsel %vm2443, %v2344, %v2346
        %v2456 = vsel %vm2443, %v2348, %v2350
        %v2457 = vsel %vm2443, %v2350, %v2352
        %v2458 = vsel %vm2443, %v2352, %v2354
        %v2459 = vsel %vm2443, %v2356, %v2358
        %v2460 = vsel %vm2443, %v2358, %v2360
        %v2461 = vsel %vm2443, %v2360, %v2362
        %v2462 = vsel %vm2443, %v2364, %v2366
        %v2463 = vsel %vm2443, %v2366, %v2368
        %v2464 = vsel %vm2443, %v2368, %v2370
        %v2465 = vsel %vm2443, %v2372, %v2374
        %v2466 = vsel %vm2443, %v2374, %v2376
        %v2467 = vsel %vm2443, %v2376, %v2378
        %v2468 = vsel %vm2443, %v2380, %v2382
        %v2469 = vsel %vm2443, %v2382, %v2384
        %v2470 = vsel %vm2443, %v2384, %v2386
        %v2471 = vsel %vm2443, %v2388, %v2390
        %v2472 = vsel %vm2443, %v2390, %v2392
        %v2473 = vsel %vm2443, %v2392, %v2394
        %v2474 = vsel %vm2443, %v2396, %v2398
        %v2475 = vsel %vm2443, %v2398, %v2400
        %v2476 = vsel %vm2443, %v2400, %v2402
        %v2477 = vsel %vm2443, %v2404, %v2406
        %v2478 = vsel %vm2443, %v2406, %v2408
        %v2479 = vsel %vm2443, %v2408, %v2410
        %v2480 = vsel %vm2443, %v2412, %v2414
        %v2481 = vsel %vm2443, %v2414, %v2416
        %v2482 = vsel %vm2443, %v2416, %v2418
        %v2483 = vsel %vm2443, %v2420, %v2422
        %v2484 = vsel %vm2443, %v2422, %v2424
        %v2485 = vsel %vm2443, %v2424, %v2426
        %v2486 = vsel %vm2443, %v2428, %v2430
        %v2487 = vsel %vm2443, %v2430, %v2432
        %v2488 = vsel %vm2443, %v2432, %v2434
        %v2489 = vsel %vm2443, %v2436, %v2438
        %v2490 = vsel %vm2443, %v2438, %v2440
        %v2491 = vsel %vm2443, %v2440, %v2442
        %v2556 = vadd.f32 %v1879, %v2444
        %v2557 = vadd.f32 %v1880, %v2445
        %v2558 = vadd.f32 %v1881, %v2446
        %v2559 = vadd.f32 %v1882, %v2322
        %v2560 = vadd.f32 %v1883, %v2447
        %v2561 = vadd.f32 %v1884, %v2448
        %v2562 = vadd.f32 %v1885, %v2449
        %v2563 = vadd.f32 %v1886, %v2330
        %v2564 = vadd.f32 %v1887, %v2450
        %v2565 = vadd.f32 %v1888, %v2451
        %v2566 = vadd.f32 %v1889, %v2452
        %v2567 = vadd.f32 %v1890, %v2338
        %v2568 = vadd.f32 %v1891, %v2453
        %v2569 = vadd.f32 %v1892, %v2454
        %v2570 = vadd.f32 %v1893, %v2455
        %v2571 = vadd.f32 %v1894, %v2346
        %v2572 = vadd.f32 %v1895, %v2456
        %v2573 = vadd.f32 %v1896, %v2457
        %v2574 = vadd.f32 %v1897, %v2458
        %v2575 = vadd.f32 %v1898, %v2354
        %v2576 = vadd.f32 %v1899, %v2459
        %v2577 = vadd.f32 %v1900, %v2460
        %v2578 = vadd.f32 %v1901, %v2461
        %v2579 = vadd.f32 %v1902, %v2362
        %v2580 = vadd.f32 %v1903, %v2462
        %v2581 = vadd.f32 %v1904, %v2463
        %v2582 = vadd.f32 %v1905, %v2464
        %v2583 = vadd.f32 %v1906, %v2370
        %v2584 = vadd.f32 %v1907, %v2465
        %v2585 = vadd.f32 %v1908, %v2466
        %v2586 = vadd.f32 %v1909, %v2467
        %v2587 = vadd.f32 %v1910, %v2378
        %v2588 = vadd.f32 %v1911, %v2468
        %v2589 = vadd.f32 %v1912, %v2469
        %v2590 = vadd.f32 %v1913, %v2470
        %v2591 = vadd.f32 %v1914, %v2386
        %v2592 = vadd.f32 %v1915, %v2471
        %v2593 = vadd.f32 %v1916, %v2472
        %v2594 = vadd.f32 %v1917, %v2473
        %v2595 = vadd.f32 %v1918, %v2394
        %v2596 = vadd.f32 %v1919, %v2474
        %v2597 = vadd.f32 %v1920, %v2475
        %v2598 = vadd.f32 %v1921, %v2476
        %v2599 = vadd.f32 %v1922, %v2402
        %v2600 = vadd.f32 %v1923, %v2477
        %v2601 = vadd.f32 %v1924, %v2478
        %v2602 = vadd.f32 %v1925, %v2479
        %v2603 = vadd.f32 %v1926, %v2410
        %v2604 = vadd.f32 %v1927, %v2480
        %v2605 = vadd.f32 %v1928, %v2481
        %v2606 = vadd.f32 %v1929, %v2482
        %v2607 = vadd.f32 %v1930, %v2418
        %v2608 = vadd.f32 %v1931, %v2483
        %v2609 = vadd.f32 %v1932, %v2484
        %v2610 = vadd.f32 %v1933, %v2485
        %v2611 = vadd.f32 %v1934, %v2426
        %v2612 = vadd.f32 %v1935, %v2486
        %v2613 = vadd.f32 %v1936, %v2487
        %v2614 = vadd.f32 %v1937, %v2488
        %v2615 = vadd.f32 %v1938, %v2434
        %v2616 = vadd.f32 %v1939, %v2489
        %v2617 = vadd.f32 %v1940, %v2490
        %v2618 = vadd.f32 %v1941, %v2491
        %v2619 = vadd.f32 %v1942, %v2442
        %v2620 = vld [vmem:[%s204] sm:$0xff]
        %v2621 = vld [vmem:[%s204 + $0x8] sm:$0xff]
        %v2622 = vld [vmem:[%s204 + $0x10] sm:$0xff]
        %v2623 = vld [vmem:[%s204 + $0x18] sm:$0xff]
        %v2628 = vcombine.low %v2620, %v2621
        %v2629 = vcombine.high %v2620, %v2621
        %v2630 = vcombine.low %v2622, %v2623
        %v2631 = vcombine.high %v2622, %v2623
        %v2633 = vunpack.c.l.s4 1966171168
        %v2634 = vunpack.c.0.s8 %v2633
        %v2635 = vlaneseq
        %v2636 = vshrl.u32 %v2635, 7
        %v2637 = vsub.s32 %v2634, %v2636
        %v2638 = vrot.slane %v2628, %v2637
        %v2640 = vunpack.c.l.s4 1966171168
        %v2641 = vunpack.c.0.s8 %v2640
        %v2642 = vlaneseq
        %v2643 = vshrl.u32 %v2642, 7
        %v2644 = vsub.s32 %v2641, %v2643
        %v2645 = vrot.slane %v2629, %v2644
        %v2647 = vunpack.c.l.s4 1966171168
        %v2648 = vunpack.c.0.s8 %v2647
        %v2649 = vlaneseq
        %v2650 = vshrl.u32 %v2649, 7
        %v2651 = vsub.s32 %v2648, %v2650
        %v2652 = vrot.slane %v2630, %v2651
        %v2654 = vunpack.c.l.s4 1966171168
        %v2655 = vunpack.c.0.s8 %v2654
        %v2656 = vlaneseq
        %v2657 = vshrl.u32 %v2656, 7
        %v2658 = vsub.s32 %v2655, %v2657
        %v2659 = vrot.slane %v2631, %v2658
        %v2660 = vcombine.low %v2638, %v2652
        %v2661 = vcombine.high %v2638, %v2652
        %v2662 = vcombine.low %v2645, %v2659
        %v2663 = vcombine.high %v2645, %v2659
        %v2665 = vunpack.c.l.s4 1966171168
        %v2666 = vunpack.c.0.s8 %v2665
        %v2667 = vlaneseq
        %v2668 = vshrl.u32 %v2667, 7
        %v2669 = vsub.s32 %v2666, %v2668
        %v2670 = vrot.slane %v2660, %v2669
        %v2672 = vunpack.c.l.s4 1966171168
        %v2673 = vunpack.c.0.s8 %v2672
        %v2674 = vlaneseq
        %v2675 = vshrl.u32 %v2674, 7
        %v2676 = vsub.s32 %v2673, %v2675
        %v2677 = vrot.slane %v2662, %v2676
        %v2679 = vunpack.c.l.s4 1966171168
        %v2680 = vunpack.c.0.s8 %v2679
        %v2681 = vlaneseq
        %v2682 = vshrl.u32 %v2681, 7
        %v2683 = vsub.s32 %v2680, %v2682
        %v2684 = vrot.slane %v2661, %v2683
        %v2686 = vunpack.c.l.s4 1966171168
        %v2687 = vunpack.c.0.s8 %v2686
        %v2688 = vlaneseq
        %v2689 = vshrl.u32 %v2688, 7
        %v2690 = vsub.s32 %v2687, %v2689
        %v2691 = vrot.slane %v2663, %v2690
        %v2692 = vcombine.high %v2670, %v2670
        %v2693 = vcombine.high %v2677, %v2677
        %v2694 = vcombine.high %v2684, %v2684
        %v2695 = vcombine.high %v2691, %v2691
        %v2696 = vlaneseq
        %v2697 = vshrl.u32 %v2696, 7
        %v2698 = vsub.s32 0, %v2697
        %v2699 = vrot.slane %v2670, %v2698
        %v2700 = vlaneseq
        %v2701 = vshrl.u32 %v2700, 7
        %v2702 = vsub.s32 1, %v2701
        %v2703 = vrot.slane %v2670, %v2702
        %v2704 = vlaneseq
        %v2705 = vshrl.u32 %v2704, 7
        %v2706 = vsub.s32 2, %v2705
        %v2707 = vrot.slane %v2670, %v2706
        %v2708 = vlaneseq
        %v2709 = vshrl.u32 %v2708, 7
        %v2710 = vsub.s32 3, %v2709
        %v2711 = vrot.slane %v2670, %v2710
        %v2712 = vlaneseq
        %v2713 = vshrl.u32 %v2712, 7
        %v2714 = vsub.s32 0, %v2713
        %v2715 = vrot.slane %v2684, %v2714
        %v2716 = vlaneseq
        %v2717 = vshrl.u32 %v2716, 7
        %v2718 = vsub.s32 1, %v2717
        %v2719 = vrot.slane %v2684, %v2718
        %v2720 = vlaneseq
        %v2721 = vshrl.u32 %v2720, 7
        %v2722 = vsub.s32 2, %v2721
        %v2723 = vrot.slane %v2684, %v2722
        %v2724 = vlaneseq
        %v2725 = vshrl.u32 %v2724, 7
        %v2726 = vsub.s32 3, %v2725
        %v2727 = vrot.slane %v2684, %v2726
        %v2728 = vlaneseq
        %v2729 = vshrl.u32 %v2728, 7
        %v2730 = vsub.s32 0, %v2729
        %v2731 = vrot.slane %v2692, %v2730
        %v2732 = vlaneseq
        %v2733 = vshrl.u32 %v2732, 7
        %v2734 = vsub.s32 1, %v2733
        %v2735 = vrot.slane %v2692, %v2734
        %v2736 = vlaneseq
        %v2737 = vshrl.u32 %v2736, 7
        %v2738 = vsub.s32 2, %v2737
        %v2739 = vrot.slane %v2692, %v2738
        %v2740 = vlaneseq
        %v2741 = vshrl.u32 %v2740, 7
        %v2742 = vsub.s32 3, %v2741
        %v2743 = vrot.slane %v2692, %v2742
        %v2744 = vlaneseq
        %v2745 = vshrl.u32 %v2744, 7
        %v2746 = vsub.s32 0, %v2745
        %v2747 = vrot.slane %v2694, %v2746
        %v2748 = vlaneseq
        %v2749 = vshrl.u32 %v2748, 7
        %v2750 = vsub.s32 1, %v2749
        %v2751 = vrot.slane %v2694, %v2750
        %v2752 = vlaneseq
        %v2753 = vshrl.u32 %v2752, 7
        %v2754 = vsub.s32 2, %v2753
        %v2755 = vrot.slane %v2694, %v2754
        %v2756 = vlaneseq
        %v2757 = vshrl.u32 %v2756, 7
        %v2758 = vsub.s32 3, %v2757
        %v2759 = vrot.slane %v2694, %v2758
        %v2760 = vlaneseq
        %v2761 = vshrl.u32 %v2760, 7
        %v2762 = vsub.s32 0, %v2761
        %v2763 = vrot.slane %v2677, %v2762
        %v2764 = vlaneseq
        %v2765 = vshrl.u32 %v2764, 7
        %v2766 = vsub.s32 1, %v2765
        %v2767 = vrot.slane %v2677, %v2766
        %v2768 = vlaneseq
        %v2769 = vshrl.u32 %v2768, 7
        %v2770 = vsub.s32 2, %v2769
        %v2771 = vrot.slane %v2677, %v2770
        %v2772 = vlaneseq
        %v2773 = vshrl.u32 %v2772, 7
        %v2774 = vsub.s32 3, %v2773
        %v2775 = vrot.slane %v2677, %v2774
        %v2776 = vlaneseq
        %v2777 = vshrl.u32 %v2776, 7
        %v2778 = vsub.s32 0, %v2777
        %v2779 = vrot.slane %v2691, %v2778
        %v2780 = vlaneseq
        %v2781 = vshrl.u32 %v2780, 7
        %v2782 = vsub.s32 1, %v2781
        %v2783 = vrot.slane %v2691, %v2782
        %v2784 = vlaneseq
        %v2785 = vshrl.u32 %v2784, 7
        %v2786 = vsub.s32 2, %v2785
        %v2787 = vrot.slane %v2691, %v2786
        %v2788 = vlaneseq
        %v2789 = vshrl.u32 %v2788, 7
        %v2790 = vsub.s32 3, %v2789
        %v2791 = vrot.slane %v2691, %v2790
        %v2792 = vlaneseq
        %v2793 = vshrl.u32 %v2792, 7
        %v2794 = vsub.s32 0, %v2793
        %v2795 = vrot.slane %v2693, %v2794
        %v2796 = vlaneseq
        %v2797 = vshrl.u32 %v2796, 7
        %v2798 = vsub.s32 1, %v2797
        %v2799 = vrot.slane %v2693, %v2798
        %v2800 = vlaneseq
        %v2801 = vshrl.u32 %v2800, 7
        %v2802 = vsub.s32 2, %v2801
        %v2803 = vrot.slane %v2693, %v2802
        %v2804 = vlaneseq
        %v2805 = vshrl.u32 %v2804, 7
        %v2806 = vsub.s32 3, %v2805
        %v2807 = vrot.slane %v2693, %v2806
        %v2808 = vlaneseq
        %v2809 = vshrl.u32 %v2808, 7
        %v2810 = vsub.s32 0, %v2809
        %v2811 = vrot.slane %v2695, %v2810
        %v2812 = vlaneseq
        %v2813 = vshrl.u32 %v2812, 7
        %v2814 = vsub.s32 1, %v2813
        %v2815 = vrot.slane %v2695, %v2814
        %v2816 = vlaneseq
        %v2817 = vshrl.u32 %v2816, 7
        %v2818 = vsub.s32 2, %v2817
        %v2819 = vrot.slane %v2695, %v2818
        %v2820 = vlaneseq
        %v2821 = vshrl.u32 %v2820, 7
        %v2822 = vsub.s32 3, %v2821
        %v2823 = vrot.slane %v2695, %v2822
        %2856 = vset.pattern.permute.xlu0 4
        %2857 = vperm.xlu0 %2856, %v213
        %v2858 = vpop.permute.xlu0 %2857
        %2860 = vset.pattern.permute.xlu0 4
        %2861 = vperm.xlu0 %2860, %v214
        %v2862 = vpop.permute.xlu0 %2861
        %v2864 = vmul.f32 %v2699, %v2858
        %v2865 = vmul.f32 %v2703, %v2858
        %v2866 = vmul.f32 %v2707, %v2858
        %v2867 = vmul.f32 %v2711, %v2858
        %v2868 = vmul.f32 %v2699, %v2862
        %v2869 = vmul.f32 %v2703, %v2862
        %v2870 = vmul.f32 %v2707, %v2862
        %v2871 = vmul.f32 %v2711, %v2862
        %v2872 = vmul.f32 %v2715, %v2858
        %v2873 = vmul.f32 %v2719, %v2858
        %v2874 = vmul.f32 %v2723, %v2858
        %v2875 = vmul.f32 %v2727, %v2858
        %v2876 = vmul.f32 %v2715, %v2862
        %v2877 = vmul.f32 %v2719, %v2862
        %v2878 = vmul.f32 %v2723, %v2862
        %v2879 = vmul.f32 %v2727, %v2862
        %v2880 = vmul.f32 %v2731, %v2858
        %v2881 = vmul.f32 %v2735, %v2858
        %v2882 = vmul.f32 %v2739, %v2858
        %v2883 = vmul.f32 %v2743, %v2858
        %v2884 = vmul.f32 %v2731, %v2862
        %v2885 = vmul.f32 %v2735, %v2862
        %v2886 = vmul.f32 %v2739, %v2862
        %v2887 = vmul.f32 %v2743, %v2862
        %v2888 = vmul.f32 %v2747, %v2858
        %v2889 = vmul.f32 %v2751, %v2858
        %v2890 = vmul.f32 %v2755, %v2858
        %v2891 = vmul.f32 %v2759, %v2858
        %v2892 = vmul.f32 %v2747, %v2862
        %v2893 = vmul.f32 %v2751, %v2862
        %v2894 = vmul.f32 %v2755, %v2862
        %v2895 = vmul.f32 %v2759, %v2862
        %v2896 = vmul.f32 %v2763, %v2858
        %v2897 = vmul.f32 %v2767, %v2858
        %v2898 = vmul.f32 %v2771, %v2858
        %v2899 = vmul.f32 %v2775, %v2858
        %v2900 = vmul.f32 %v2763, %v2862
        %v2901 = vmul.f32 %v2767, %v2862
        %v2902 = vmul.f32 %v2771, %v2862
        %v2903 = vmul.f32 %v2775, %v2862
        %v2904 = vmul.f32 %v2779, %v2858
        %v2905 = vmul.f32 %v2783, %v2858
        %v2906 = vmul.f32 %v2787, %v2858
        %v2907 = vmul.f32 %v2791, %v2858
        %v2908 = vmul.f32 %v2779, %v2862
        %v2909 = vmul.f32 %v2783, %v2862
        %v2910 = vmul.f32 %v2787, %v2862
        %v2911 = vmul.f32 %v2791, %v2862
        %v2912 = vmul.f32 %v2795, %v2858
        %v2913 = vmul.f32 %v2799, %v2858
        %v2914 = vmul.f32 %v2803, %v2858
        %v2915 = vmul.f32 %v2807, %v2858
        %v2916 = vmul.f32 %v2795, %v2862
        %v2917 = vmul.f32 %v2799, %v2862
        %v2918 = vmul.f32 %v2803, %v2862
        %v2919 = vmul.f32 %v2807, %v2862
        %v2920 = vmul.f32 %v2811, %v2858
        %v2921 = vmul.f32 %v2815, %v2858
        %v2922 = vmul.f32 %v2819, %v2858
        %v2923 = vmul.f32 %v2823, %v2858
        %v2924 = vmul.f32 %v2811, %v2862
        %v2925 = vmul.f32 %v2815, %v2862
        %v2926 = vmul.f32 %v2819, %v2862
        %v2927 = vmul.f32 %v2823, %v2862
        %2992 = vrot.lane.b32.xlu0 %v2864, 124
        %v2993 = vpop.permute.xlu0 %2992
        %2994 = vrot.lane.b32.xlu0 %v2865, 124
        %v2995 = vpop.permute.xlu0 %2994
        %2996 = vrot.lane.b32.xlu0 %v2866, 124
        %v2997 = vpop.permute.xlu0 %2996
        %2998 = vrot.lane.b32.xlu0 %v2867, 124
        %v2999 = vpop.permute.xlu0 %2998
        %3000 = vrot.lane.b32.xlu0 %v2868, 124
        %v3001 = vpop.permute.xlu0 %3000
        %3002 = vrot.lane.b32.xlu0 %v2869, 124
        %v3003 = vpop.permute.xlu0 %3002
        %3004 = vrot.lane.b32.xlu0 %v2870, 124
        %v3005 = vpop.permute.xlu0 %3004
        %3006 = vrot.lane.b32.xlu0 %v2871, 124
        %v3007 = vpop.permute.xlu0 %3006
        %3008 = vrot.lane.b32.xlu0 %v2872, 124
        %v3009 = vpop.permute.xlu0 %3008
        %3010 = vrot.lane.b32.xlu0 %v2873, 124
        %v3011 = vpop.permute.xlu0 %3010
        %3012 = vrot.lane.b32.xlu0 %v2874, 124
        %v3013 = vpop.permute.xlu0 %3012
        %3014 = vrot.lane.b32.xlu0 %v2875, 124
        %v3015 = vpop.permute.xlu0 %3014
        %3016 = vrot.lane.b32.xlu0 %v2876, 124
        %v3017 = vpop.permute.xlu0 %3016
        %3018 = vrot.lane.b32.xlu0 %v2877, 124
        %v3019 = vpop.permute.xlu0 %3018
        %3020 = vrot.lane.b32.xlu0 %v2878, 124
        %v3021 = vpop.permute.xlu0 %3020
        %3022 = vrot.lane.b32.xlu0 %v2879, 124
        %v3023 = vpop.permute.xlu0 %3022
        %3024 = vrot.lane.b32.xlu0 %v2880, 124
        %v3025 = vpop.permute.xlu0 %3024
        %3026 = vrot.lane.b32.xlu0 %v2881, 124
        %v3027 = vpop.permute.xlu0 %3026
        %3028 = vrot.lane.b32.xlu0 %v2882, 124
        %v3029 = vpop.permute.xlu0 %3028
        %3030 = vrot.lane.b32.xlu0 %v2883, 124
        %v3031 = vpop.permute.xlu0 %3030
        %3032 = vrot.lane.b32.xlu0 %v2884, 124
        %v3033 = vpop.permute.xlu0 %3032
        %3034 = vrot.lane.b32.xlu0 %v2885, 124
        %v3035 = vpop.permute.xlu0 %3034
        %3036 = vrot.lane.b32.xlu0 %v2886, 124
        %v3037 = vpop.permute.xlu0 %3036
        %3038 = vrot.lane.b32.xlu0 %v2887, 124
        %v3039 = vpop.permute.xlu0 %3038
        %3040 = vrot.lane.b32.xlu0 %v2888, 124
        %v3041 = vpop.permute.xlu0 %3040
        %3042 = vrot.lane.b32.xlu0 %v2889, 124
        %v3043 = vpop.permute.xlu0 %3042
        %3044 = vrot.lane.b32.xlu0 %v2890, 124
        %v3045 = vpop.permute.xlu0 %3044
        %3046 = vrot.lane.b32.xlu0 %v2891, 124
        %v3047 = vpop.permute.xlu0 %3046
        %3048 = vrot.lane.b32.xlu0 %v2892, 124
        %v3049 = vpop.permute.xlu0 %3048
        %3050 = vrot.lane.b32.xlu0 %v2893, 124
        %v3051 = vpop.permute.xlu0 %3050
        %3052 = vrot.lane.b32.xlu0 %v2894, 124
        %v3053 = vpop.permute.xlu0 %3052
        %3054 = vrot.lane.b32.xlu0 %v2895, 124
        %v3055 = vpop.permute.xlu0 %3054
        %3056 = vrot.lane.b32.xlu0 %v2896, 124
        %v3057 = vpop.permute.xlu0 %3056
        %3058 = vrot.lane.b32.xlu0 %v2897, 124
        %v3059 = vpop.permute.xlu0 %3058
        %3060 = vrot.lane.b32.xlu0 %v2898, 124
        %v3061 = vpop.permute.xlu0 %3060
        %3062 = vrot.lane.b32.xlu0 %v2899, 124
        %v3063 = vpop.permute.xlu0 %3062
        %3064 = vrot.lane.b32.xlu0 %v2900, 124
        %v3065 = vpop.permute.xlu0 %3064
        %3066 = vrot.lane.b32.xlu0 %v2901, 124
        %v3067 = vpop.permute.xlu0 %3066
        %3068 = vrot.lane.b32.xlu0 %v2902, 124
        %v3069 = vpop.permute.xlu0 %3068
        %3070 = vrot.lane.b32.xlu0 %v2903, 124
        %v3071 = vpop.permute.xlu0 %3070
        %3072 = vrot.lane.b32.xlu0 %v2904, 124
        %v3073 = vpop.permute.xlu0 %3072
        %3074 = vrot.lane.b32.xlu0 %v2905, 124
        %v3075 = vpop.permute.xlu0 %3074
        %3076 = vrot.lane.b32.xlu0 %v2906, 124
        %v3077 = vpop.permute.xlu0 %3076
        %3078 = vrot.lane.b32.xlu0 %v2907, 124
        %v3079 = vpop.permute.xlu0 %3078
        %3080 = vrot.lane.b32.xlu0 %v2908, 124
        %v3081 = vpop.permute.xlu0 %3080
        %3082 = vrot.lane.b32.xlu0 %v2909, 124
        %v3083 = vpop.permute.xlu0 %3082
        %3084 = vrot.lane.b32.xlu0 %v2910, 124
        %v3085 = vpop.permute.xlu0 %3084
        %3086 = vrot.lane.b32.xlu0 %v2911, 124
        %v3087 = vpop.permute.xlu0 %3086
        %3088 = vrot.lane.b32.xlu0 %v2912, 124
        %v3089 = vpop.permute.xlu0 %3088
        %3090 = vrot.lane.b32.xlu0 %v2913, 124
        %v3091 = vpop.permute.xlu0 %3090
        %3092 = vrot.lane.b32.xlu0 %v2914, 124
        %v3093 = vpop.permute.xlu0 %3092
        %3094 = vrot.lane.b32.xlu0 %v2915, 124
        %v3095 = vpop.permute.xlu0 %3094
        %3096 = vrot.lane.b32.xlu0 %v2916, 124
        %v3097 = vpop.permute.xlu0 %3096
        %3098 = vrot.lane.b32.xlu0 %v2917, 124
        %v3099 = vpop.permute.xlu0 %3098
        %3100 = vrot.lane.b32.xlu0 %v2918, 124
        %v3101 = vpop.permute.xlu0 %3100
        %3102 = vrot.lane.b32.xlu0 %v2919, 124
        %v3103 = vpop.permute.xlu0 %3102
        %3104 = vrot.lane.b32.xlu0 %v2920, 124
        %v3105 = vpop.permute.xlu0 %3104
        %3106 = vrot.lane.b32.xlu0 %v2921, 124
        %v3107 = vpop.permute.xlu0 %3106
        %3108 = vrot.lane.b32.xlu0 %v2922, 124
        %v3109 = vpop.permute.xlu0 %3108
        %3110 = vrot.lane.b32.xlu0 %v2923, 124
        %v3111 = vpop.permute.xlu0 %3110
        %3112 = vrot.lane.b32.xlu0 %v2924, 124
        %v3113 = vpop.permute.xlu0 %3112
        %3114 = vrot.lane.b32.xlu0 %v2925, 124
        %v3115 = vpop.permute.xlu0 %3114
        %3116 = vrot.lane.b32.xlu0 %v2926, 124
        %v3117 = vpop.permute.xlu0 %3116
        %3118 = vrot.lane.b32.xlu0 %v2927, 124
        %v3119 = vpop.permute.xlu0 %3118
        %vm3120 = vcmask 1014784
        %v3121 = vsel %vm3120, %v2993, %v2995
        %v3122 = vsel %vm3120, %v2995, %v2997
        %v3123 = vsel %vm3120, %v2997, %v2999
        %v3124 = vsel %vm3120, %v3001, %v3003
        %v3125 = vsel %vm3120, %v3003, %v3005
        %v3126 = vsel %vm3120, %v3005, %v3007
        %v3127 = vsel %vm3120, %v3009, %v3011
        %v3128 = vsel %vm3120, %v3011, %v3013
        %v3129 = vsel %vm3120, %v3013, %v3015
        %v3130 = vsel %vm3120, %v3017, %v3019
        %v3131 = vsel %vm3120, %v3019, %v3021
        %v3132 = vsel %vm3120, %v3021, %v3023
        %v3133 = vsel %vm3120, %v3025, %v3027
        %v3134 = vsel %vm3120, %v3027, %v3029
        %v3135 = vsel %vm3120, %v3029, %v3031
        %v3136 = vsel %vm3120, %v3033, %v3035
        %v3137 = vsel %vm3120, %v3035, %v3037
        %v3138 = vsel %vm3120, %v3037, %v3039
        %v3139 = vsel %vm3120, %v3041, %v3043
        %v3140 = vsel %vm3120, %v3043, %v3045
        %v3141 = vsel %vm3120, %v3045, %v3047
        %v3142 = vsel %vm3120, %v3049, %v3051
        %v3143 = vsel %vm3120, %v3051, %v3053
        %v3144 = vsel %vm3120, %v3053, %v3055
        %v3145 = vsel %vm3120, %v3057, %v3059
        %v3146 = vsel %vm3120, %v3059, %v3061
        %v3147 = vsel %vm3120, %v3061, %v3063
        %v3148 = vsel %vm3120, %v3065, %v3067
        %v3149 = vsel %vm3120, %v3067, %v3069
        %v3150 = vsel %vm3120, %v3069, %v3071
        %v3151 = vsel %vm3120, %v3073, %v3075
        %v3152 = vsel %vm3120, %v3075, %v3077
        %v3153 = vsel %vm3120, %v3077, %v3079
        %v3154 = vsel %vm3120, %v3081, %v3083
        %v3155 = vsel %vm3120, %v3083, %v3085
        %v3156 = vsel %vm3120, %v3085, %v3087
        %v3157 = vsel %vm3120, %v3089, %v3091
        %v3158 = vsel %vm3120, %v3091, %v3093
        %v3159 = vsel %vm3120, %v3093, %v3095
        %v3160 = vsel %vm3120, %v3097, %v3099
        %v3161 = vsel %vm3120, %v3099, %v3101
        %v3162 = vsel %vm3120, %v3101, %v3103
        %v3163 = vsel %vm3120, %v3105, %v3107
        %v3164 = vsel %vm3120, %v3107, %v3109
        %v3165 = vsel %vm3120, %v3109, %v3111
        %v3166 = vsel %vm3120, %v3113, %v3115
        %v3167 = vsel %vm3120, %v3115, %v3117
        %v3168 = vsel %vm3120, %v3117, %v3119
        %v3233 = vadd.f32 %v2556, %v3121
        %v3234 = vadd.f32 %v2557, %v3122
        %v3235 = vadd.f32 %v2558, %v3123
        %v3236 = vadd.f32 %v2559, %v2999
        %v3237 = vadd.f32 %v2560, %v3124
        %v3238 = vadd.f32 %v2561, %v3125
        %v3239 = vadd.f32 %v2562, %v3126
        %v3240 = vadd.f32 %v2563, %v3007
        %v3241 = vadd.f32 %v2564, %v3127
        %v3242 = vadd.f32 %v2565, %v3128
        %v3243 = vadd.f32 %v2566, %v3129
        %v3244 = vadd.f32 %v2567, %v3015
        %v3245 = vadd.f32 %v2568, %v3130
        %v3246 = vadd.f32 %v2569, %v3131
        %v3247 = vadd.f32 %v2570, %v3132
        %v3248 = vadd.f32 %v2571, %v3023
        %v3249 = vadd.f32 %v2572, %v3133
        %v3250 = vadd.f32 %v2573, %v3134
        %v3251 = vadd.f32 %v2574, %v3135
        %v3252 = vadd.f32 %v2575, %v3031
        %v3253 = vadd.f32 %v2576, %v3136
        %v3254 = vadd.f32 %v2577, %v3137
        %v3255 = vadd.f32 %v2578, %v3138
        %v3256 = vadd.f32 %v2579, %v3039
        %v3257 = vadd.f32 %v2580, %v3139
        %v3258 = vadd.f32 %v2581, %v3140
        %v3259 = vadd.f32 %v2582, %v3141
        %v3260 = vadd.f32 %v2583, %v3047
        %v3261 = vadd.f32 %v2584, %v3142
        %v3262 = vadd.f32 %v2585, %v3143
        %v3263 = vadd.f32 %v2586, %v3144
        %v3264 = vadd.f32 %v2587, %v3055
        %v3265 = vadd.f32 %v2588, %v3145
        %v3266 = vadd.f32 %v2589, %v3146
        %v3267 = vadd.f32 %v2590, %v3147
        %v3268 = vadd.f32 %v2591, %v3063
        %v3269 = vadd.f32 %v2592, %v3148
        %v3270 = vadd.f32 %v2593, %v3149
        %v3271 = vadd.f32 %v2594, %v3150
        %v3272 = vadd.f32 %v2595, %v3071
        %v3273 = vadd.f32 %v2596, %v3151
        %v3274 = vadd.f32 %v2597, %v3152
        %v3275 = vadd.f32 %v2598, %v3153
        %v3276 = vadd.f32 %v2599, %v3079
        %v3277 = vadd.f32 %v2600, %v3154
        %v3278 = vadd.f32 %v2601, %v3155
        %v3279 = vadd.f32 %v2602, %v3156
        %v3280 = vadd.f32 %v2603, %v3087
        %v3281 = vadd.f32 %v2604, %v3157
        %v3282 = vadd.f32 %v2605, %v3158
        %v3283 = vadd.f32 %v2606, %v3159
        %v3284 = vadd.f32 %v2607, %v3095
        %v3285 = vadd.f32 %v2608, %v3160
        %v3286 = vadd.f32 %v2609, %v3161
        %v3287 = vadd.f32 %v2610, %v3162
        %v3288 = vadd.f32 %v2611, %v3103
        %v3289 = vadd.f32 %v2612, %v3163
        %v3290 = vadd.f32 %v2613, %v3164
        %v3291 = vadd.f32 %v2614, %v3165
        %v3292 = vadd.f32 %v2615, %v3111
        %v3293 = vadd.f32 %v2616, %v3166
        %v3294 = vadd.f32 %v2617, %v3167
        %v3295 = vadd.f32 %v2618, %v3168
        %v3296 = vadd.f32 %v2619, %v3119
        %v3297 = vld [vmem:[%s204] sm:$0xff]
        %v3298 = vld [vmem:[%s204 + $0x8] sm:$0xff]
        %v3299 = vld [vmem:[%s204 + $0x10] sm:$0xff]
        %v3300 = vld [vmem:[%s204 + $0x18] sm:$0xff]
        %v3305 = vcombine.low %v3297, %v3298
        %v3306 = vcombine.high %v3297, %v3298
        %v3307 = vcombine.low %v3299, %v3300
        %v3308 = vcombine.high %v3299, %v3300
        %v3310 = vunpack.c.l.s4 1966171168
        %v3311 = vunpack.c.0.s8 %v3310
        %v3312 = vlaneseq
        %v3313 = vshrl.u32 %v3312, 7
        %v3314 = vsub.s32 %v3311, %v3313
        %v3315 = vrot.slane %v3305, %v3314
        %v3317 = vunpack.c.l.s4 1966171168
        %v3318 = vunpack.c.0.s8 %v3317
        %v3319 = vlaneseq
        %v3320 = vshrl.u32 %v3319, 7
        %v3321 = vsub.s32 %v3318, %v3320
        %v3322 = vrot.slane %v3306, %v3321
        %v3324 = vunpack.c.l.s4 1966171168
        %v3325 = vunpack.c.0.s8 %v3324
        %v3326 = vlaneseq
        %v3327 = vshrl.u32 %v3326, 7
        %v3328 = vsub.s32 %v3325, %v3327
        %v3329 = vrot.slane %v3307, %v3328
        %v3331 = vunpack.c.l.s4 1966171168
        %v3332 = vunpack.c.0.s8 %v3331
        %v3333 = vlaneseq
        %v3334 = vshrl.u32 %v3333, 7
        %v3335 = vsub.s32 %v3332, %v3334
        %v3336 = vrot.slane %v3308, %v3335
        %v3337 = vcombine.low %v3315, %v3329
        %v3338 = vcombine.high %v3315, %v3329
        %v3339 = vcombine.low %v3322, %v3336
        %v3340 = vcombine.high %v3322, %v3336
        %v3342 = vunpack.c.l.s4 1966171168
        %v3343 = vunpack.c.0.s8 %v3342
        %v3344 = vlaneseq
        %v3345 = vshrl.u32 %v3344, 7
        %v3346 = vsub.s32 %v3343, %v3345
        %v3347 = vrot.slane %v3337, %v3346
        %v3349 = vunpack.c.l.s4 1966171168
        %v3350 = vunpack.c.0.s8 %v3349
        %v3351 = vlaneseq
        %v3352 = vshrl.u32 %v3351, 7
        %v3353 = vsub.s32 %v3350, %v3352
        %v3354 = vrot.slane %v3339, %v3353
        %v3356 = vunpack.c.l.s4 1966171168
        %v3357 = vunpack.c.0.s8 %v3356
        %v3358 = vlaneseq
        %v3359 = vshrl.u32 %v3358, 7
        %v3360 = vsub.s32 %v3357, %v3359
        %v3361 = vrot.slane %v3338, %v3360
        %v3363 = vunpack.c.l.s4 1966171168
        %v3364 = vunpack.c.0.s8 %v3363
        %v3365 = vlaneseq
        %v3366 = vshrl.u32 %v3365, 7
        %v3367 = vsub.s32 %v3364, %v3366
        %v3368 = vrot.slane %v3340, %v3367
        %v3369 = vcombine.high %v3347, %v3347
        %v3370 = vcombine.high %v3354, %v3354
        %v3371 = vcombine.high %v3361, %v3361
        %v3372 = vcombine.high %v3368, %v3368
        %v3373 = vlaneseq
        %v3374 = vshrl.u32 %v3373, 7
        %v3375 = vsub.s32 0, %v3374
        %v3376 = vrot.slane %v3347, %v3375
        %v3377 = vlaneseq
        %v3378 = vshrl.u32 %v3377, 7
        %v3379 = vsub.s32 1, %v3378
        %v3380 = vrot.slane %v3347, %v3379
        %v3381 = vlaneseq
        %v3382 = vshrl.u32 %v3381, 7
        %v3383 = vsub.s32 2, %v3382
        %v3384 = vrot.slane %v3347, %v3383
        %v3385 = vlaneseq
        %v3386 = vshrl.u32 %v3385, 7
        %v3387 = vsub.s32 3, %v3386
        %v3388 = vrot.slane %v3347, %v3387
        %v3389 = vlaneseq
        %v3390 = vshrl.u32 %v3389, 7
        %v3391 = vsub.s32 0, %v3390
        %v3392 = vrot.slane %v3361, %v3391
        %v3393 = vlaneseq
        %v3394 = vshrl.u32 %v3393, 7
        %v3395 = vsub.s32 1, %v3394
        %v3396 = vrot.slane %v3361, %v3395
        %v3397 = vlaneseq
        %v3398 = vshrl.u32 %v3397, 7
        %v3399 = vsub.s32 2, %v3398
        %v3400 = vrot.slane %v3361, %v3399
        %v3401 = vlaneseq
        %v3402 = vshrl.u32 %v3401, 7
        %v3403 = vsub.s32 3, %v3402
        %v3404 = vrot.slane %v3361, %v3403
        %v3405 = vlaneseq
        %v3406 = vshrl.u32 %v3405, 7
        %v3407 = vsub.s32 0, %v3406
        %v3408 = vrot.slane %v3369, %v3407
        %v3409 = vlaneseq
        %v3410 = vshrl.u32 %v3409, 7
        %v3411 = vsub.s32 1, %v3410
        %v3412 = vrot.slane %v3369, %v3411
        %v3413 = vlaneseq
        %v3414 = vshrl.u32 %v3413, 7
        %v3415 = vsub.s32 2, %v3414
        %v3416 = vrot.slane %v3369, %v3415
        %v3417 = vlaneseq
        %v3418 = vshrl.u32 %v3417, 7
        %v3419 = vsub.s32 3, %v3418
        %v3420 = vrot.slane %v3369, %v3419
        %v3421 = vlaneseq
        %v3422 = vshrl.u32 %v3421, 7
        %v3423 = vsub.s32 0, %v3422
        %v3424 = vrot.slane %v3371, %v3423
        %v3425 = vlaneseq
        %v3426 = vshrl.u32 %v3425, 7
        %v3427 = vsub.s32 1, %v3426
        %v3428 = vrot.slane %v3371, %v3427
        %v3429 = vlaneseq
        %v3430 = vshrl.u32 %v3429, 7
        %v3431 = vsub.s32 2, %v3430
        %v3432 = vrot.slane %v3371, %v3431
        %v3433 = vlaneseq
        %v3434 = vshrl.u32 %v3433, 7
        %v3435 = vsub.s32 3, %v3434
        %v3436 = vrot.slane %v3371, %v3435
        %v3437 = vlaneseq
        %v3438 = vshrl.u32 %v3437, 7
        %v3439 = vsub.s32 0, %v3438
        %v3440 = vrot.slane %v3354, %v3439
        %v3441 = vlaneseq
        %v3442 = vshrl.u32 %v3441, 7
        %v3443 = vsub.s32 1, %v3442
        %v3444 = vrot.slane %v3354, %v3443
        %v3445 = vlaneseq
        %v3446 = vshrl.u32 %v3445, 7
        %v3447 = vsub.s32 2, %v3446
        %v3448 = vrot.slane %v3354, %v3447
        %v3449 = vlaneseq
        %v3450 = vshrl.u32 %v3449, 7
        %v3451 = vsub.s32 3, %v3450
        %v3452 = vrot.slane %v3354, %v3451
        %v3453 = vlaneseq
        %v3454 = vshrl.u32 %v3453, 7
        %v3455 = vsub.s32 0, %v3454
        %v3456 = vrot.slane %v3368, %v3455
        %v3457 = vlaneseq
        %v3458 = vshrl.u32 %v3457, 7
        %v3459 = vsub.s32 1, %v3458
        %v3460 = vrot.slane %v3368, %v3459
        %v3461 = vlaneseq
        %v3462 = vshrl.u32 %v3461, 7
        %v3463 = vsub.s32 2, %v3462
        %v3464 = vrot.slane %v3368, %v3463
        %v3465 = vlaneseq
        %v3466 = vshrl.u32 %v3465, 7
        %v3467 = vsub.s32 3, %v3466
        %v3468 = vrot.slane %v3368, %v3467
        %v3469 = vlaneseq
        %v3470 = vshrl.u32 %v3469, 7
        %v3471 = vsub.s32 0, %v3470
        %v3472 = vrot.slane %v3370, %v3471
        %v3473 = vlaneseq
        %v3474 = vshrl.u32 %v3473, 7
        %v3475 = vsub.s32 1, %v3474
        %v3476 = vrot.slane %v3370, %v3475
        %v3477 = vlaneseq
        %v3478 = vshrl.u32 %v3477, 7
        %v3479 = vsub.s32 2, %v3478
        %v3480 = vrot.slane %v3370, %v3479
        %v3481 = vlaneseq
        %v3482 = vshrl.u32 %v3481, 7
        %v3483 = vsub.s32 3, %v3482
        %v3484 = vrot.slane %v3370, %v3483
        %v3485 = vlaneseq
        %v3486 = vshrl.u32 %v3485, 7
        %v3487 = vsub.s32 0, %v3486
        %v3488 = vrot.slane %v3372, %v3487
        %v3489 = vlaneseq
        %v3490 = vshrl.u32 %v3489, 7
        %v3491 = vsub.s32 1, %v3490
        %v3492 = vrot.slane %v3372, %v3491
        %v3493 = vlaneseq
        %v3494 = vshrl.u32 %v3493, 7
        %v3495 = vsub.s32 2, %v3494
        %v3496 = vrot.slane %v3372, %v3495
        %v3497 = vlaneseq
        %v3498 = vshrl.u32 %v3497, 7
        %v3499 = vsub.s32 3, %v3498
        %v3500 = vrot.slane %v3372, %v3499
        %3533 = vset.pattern.permute.xlu0 5
        %3534 = vperm.xlu0 %3533, %v213
        %v3535 = vpop.permute.xlu0 %3534
        %3537 = vset.pattern.permute.xlu0 5
        %3538 = vperm.xlu0 %3537, %v214
        %v3539 = vpop.permute.xlu0 %3538
        %v3541 = vmul.f32 %v3376, %v3535
        %v3542 = vmul.f32 %v3380, %v3535
        %v3543 = vmul.f32 %v3384, %v3535
        %v3544 = vmul.f32 %v3388, %v3535
        %v3545 = vmul.f32 %v3376, %v3539
        %v3546 = vmul.f32 %v3380, %v3539
        %v3547 = vmul.f32 %v3384, %v3539
        %v3548 = vmul.f32 %v3388, %v3539
        %v3549 = vmul.f32 %v3392, %v3535
        %v3550 = vmul.f32 %v3396, %v3535
        %v3551 = vmul.f32 %v3400, %v3535
        %v3552 = vmul.f32 %v3404, %v3535
        %v3553 = vmul.f32 %v3392, %v3539
        %v3554 = vmul.f32 %v3396, %v3539
        %v3555 = vmul.f32 %v3400, %v3539
        %v3556 = vmul.f32 %v3404, %v3539
        %v3557 = vmul.f32 %v3408, %v3535
        %v3558 = vmul.f32 %v3412, %v3535
        %v3559 = vmul.f32 %v3416, %v3535
        %v3560 = vmul.f32 %v3420, %v3535
        %v3561 = vmul.f32 %v3408, %v3539
        %v3562 = vmul.f32 %v3412, %v3539
        %v3563 = vmul.f32 %v3416, %v3539
        %v3564 = vmul.f32 %v3420, %v3539
        %v3565 = vmul.f32 %v3424, %v3535
        %v3566 = vmul.f32 %v3428, %v3535
        %v3567 = vmul.f32 %v3432, %v3535
        %v3568 = vmul.f32 %v3436, %v3535
        %v3569 = vmul.f32 %v3424, %v3539
        %v3570 = vmul.f32 %v3428, %v3539
        %v3571 = vmul.f32 %v3432, %v3539
        %v3572 = vmul.f32 %v3436, %v3539
        %v3573 = vmul.f32 %v3440, %v3535
        %v3574 = vmul.f32 %v3444, %v3535
        %v3575 = vmul.f32 %v3448, %v3535
        %v3576 = vmul.f32 %v3452, %v3535
        %v3577 = vmul.f32 %v3440, %v3539
        %v3578 = vmul.f32 %v3444, %v3539
        %v3579 = vmul.f32 %v3448, %v3539
        %v3580 = vmul.f32 %v3452, %v3539
        %v3581 = vmul.f32 %v3456, %v3535
        %v3582 = vmul.f32 %v3460, %v3535
        %v3583 = vmul.f32 %v3464, %v3535
        %v3584 = vmul.f32 %v3468, %v3535
        %v3585 = vmul.f32 %v3456, %v3539
        %v3586 = vmul.f32 %v3460, %v3539
        %v3587 = vmul.f32 %v3464, %v3539
        %v3588 = vmul.f32 %v3468, %v3539
        %v3589 = vmul.f32 %v3472, %v3535
        %v3590 = vmul.f32 %v3476, %v3535
        %v3591 = vmul.f32 %v3480, %v3535
        %v3592 = vmul.f32 %v3484, %v3535
        %v3593 = vmul.f32 %v3472, %v3539
        %v3594 = vmul.f32 %v3476, %v3539
        %v3595 = vmul.f32 %v3480, %v3539
        %v3596 = vmul.f32 %v3484, %v3539
        %v3597 = vmul.f32 %v3488, %v3535
        %v3598 = vmul.f32 %v3492, %v3535
        %v3599 = vmul.f32 %v3496, %v3535
        %v3600 = vmul.f32 %v3500, %v3535
        %v3601 = vmul.f32 %v3488, %v3539
        %v3602 = vmul.f32 %v3492, %v3539
        %v3603 = vmul.f32 %v3496, %v3539
        %v3604 = vmul.f32 %v3500, %v3539
        %3669 = vrot.lane.b32.xlu0 %v3541, 123
        %v3670 = vpop.permute.xlu0 %3669
        %3671 = vrot.lane.b32.xlu0 %v3542, 123
        %v3672 = vpop.permute.xlu0 %3671
        %3673 = vrot.lane.b32.xlu0 %v3543, 123
        %v3674 = vpop.permute.xlu0 %3673
        %3675 = vrot.lane.b32.xlu0 %v3544, 123
        %v3676 = vpop.permute.xlu0 %3675
        %3677 = vrot.lane.b32.xlu0 %v3545, 123
        %v3678 = vpop.permute.xlu0 %3677
        %3679 = vrot.lane.b32.xlu0 %v3546, 123
        %v3680 = vpop.permute.xlu0 %3679
        %3681 = vrot.lane.b32.xlu0 %v3547, 123
        %v3682 = vpop.permute.xlu0 %3681
        %3683 = vrot.lane.b32.xlu0 %v3548, 123
        %v3684 = vpop.permute.xlu0 %3683
        %3685 = vrot.lane.b32.xlu0 %v3549, 123
        %v3686 = vpop.permute.xlu0 %3685
        %3687 = vrot.lane.b32.xlu0 %v3550, 123
        %v3688 = vpop.permute.xlu0 %3687
        %3689 = vrot.lane.b32.xlu0 %v3551, 123
        %v3690 = vpop.permute.xlu0 %3689
        %3691 = vrot.lane.b32.xlu0 %v3552, 123
        %v3692 = vpop.permute.xlu0 %3691
        %3693 = vrot.lane.b32.xlu0 %v3553, 123
        %v3694 = vpop.permute.xlu0 %3693
        %3695 = vrot.lane.b32.xlu0 %v3554, 123
        %v3696 = vpop.permute.xlu0 %3695
        %3697 = vrot.lane.b32.xlu0 %v3555, 123
        %v3698 = vpop.permute.xlu0 %3697
        %3699 = vrot.lane.b32.xlu0 %v3556, 123
        %v3700 = vpop.permute.xlu0 %3699
        %3701 = vrot.lane.b32.xlu0 %v3557, 123
        %v3702 = vpop.permute.xlu0 %3701
        %3703 = vrot.lane.b32.xlu0 %v3558, 123
        %v3704 = vpop.permute.xlu0 %3703
        %3705 = vrot.lane.b32.xlu0 %v3559, 123
        %v3706 = vpop.permute.xlu0 %3705
        %3707 = vrot.lane.b32.xlu0 %v3560, 123
        %v3708 = vpop.permute.xlu0 %3707
        %3709 = vrot.lane.b32.xlu0 %v3561, 123
        %v3710 = vpop.permute.xlu0 %3709
        %3711 = vrot.lane.b32.xlu0 %v3562, 123
        %v3712 = vpop.permute.xlu0 %3711
        %3713 = vrot.lane.b32.xlu0 %v3563, 123
        %v3714 = vpop.permute.xlu0 %3713
        %3715 = vrot.lane.b32.xlu0 %v3564, 123
        %v3716 = vpop.permute.xlu0 %3715
        %3717 = vrot.lane.b32.xlu0 %v3565, 123
        %v3718 = vpop.permute.xlu0 %3717
        %3719 = vrot.lane.b32.xlu0 %v3566, 123
        %v3720 = vpop.permute.xlu0 %3719
        %3721 = vrot.lane.b32.xlu0 %v3567, 123
        %v3722 = vpop.permute.xlu0 %3721
        %3723 = vrot.lane.b32.xlu0 %v3568, 123
        %v3724 = vpop.permute.xlu0 %3723
        %3725 = vrot.lane.b32.xlu0 %v3569, 123
        %v3726 = vpop.permute.xlu0 %3725
        %3727 = vrot.lane.b32.xlu0 %v3570, 123
        %v3728 = vpop.permute.xlu0 %3727
        %3729 = vrot.lane.b32.xlu0 %v3571, 123
        %v3730 = vpop.permute.xlu0 %3729
        %3731 = vrot.lane.b32.xlu0 %v3572, 123
        %v3732 = vpop.permute.xlu0 %3731
        %3733 = vrot.lane.b32.xlu0 %v3573, 123
        %v3734 = vpop.permute.xlu0 %3733
        %3735 = vrot.lane.b32.xlu0 %v3574, 123
        %v3736 = vpop.permute.xlu0 %3735
        %3737 = vrot.lane.b32.xlu0 %v3575, 123
        %v3738 = vpop.permute.xlu0 %3737
        %3739 = vrot.lane.b32.xlu0 %v3576, 123
        %v3740 = vpop.permute.xlu0 %3739
        %3741 = vrot.lane.b32.xlu0 %v3577, 123
        %v3742 = vpop.permute.xlu0 %3741
        %3743 = vrot.lane.b32.xlu0 %v3578, 123
        %v3744 = vpop.permute.xlu0 %3743
        %3745 = vrot.lane.b32.xlu0 %v3579, 123
        %v3746 = vpop.permute.xlu0 %3745
        %3747 = vrot.lane.b32.xlu0 %v3580, 123
        %v3748 = vpop.permute.xlu0 %3747
        %3749 = vrot.lane.b32.xlu0 %v3581, 123
        %v3750 = vpop.permute.xlu0 %3749
        %3751 = vrot.lane.b32.xlu0 %v3582, 123
        %v3752 = vpop.permute.xlu0 %3751
        %3753 = vrot.lane.b32.xlu0 %v3583, 123
        %v3754 = vpop.permute.xlu0 %3753
        %3755 = vrot.lane.b32.xlu0 %v3584, 123
        %v3756 = vpop.permute.xlu0 %3755
        %3757 = vrot.lane.b32.xlu0 %v3585, 123
        %v3758 = vpop.permute.xlu0 %3757
        %3759 = vrot.lane.b32.xlu0 %v3586, 123
        %v3760 = vpop.permute.xlu0 %3759
        %3761 = vrot.lane.b32.xlu0 %v3587, 123
        %v3762 = vpop.permute.xlu0 %3761
        %3763 = vrot.lane.b32.xlu0 %v3588, 123
        %v3764 = vpop.permute.xlu0 %3763
        %3765 = vrot.lane.b32.xlu0 %v3589, 123
        %v3766 = vpop.permute.xlu0 %3765
        %3767 = vrot.lane.b32.xlu0 %v3590, 123
        %v3768 = vpop.permute.xlu0 %3767
        %3769 = vrot.lane.b32.xlu0 %v3591, 123
        %v3770 = vpop.permute.xlu0 %3769
        %3771 = vrot.lane.b32.xlu0 %v3592, 123
        %v3772 = vpop.permute.xlu0 %3771
        %3773 = vrot.lane.b32.xlu0 %v3593, 123
        %v3774 = vpop.permute.xlu0 %3773
        %3775 = vrot.lane.b32.xlu0 %v3594, 123
        %v3776 = vpop.permute.xlu0 %3775
        %3777 = vrot.lane.b32.xlu0 %v3595, 123
        %v3778 = vpop.permute.xlu0 %3777
        %3779 = vrot.lane.b32.xlu0 %v3596, 123
        %v3780 = vpop.permute.xlu0 %3779
        %3781 = vrot.lane.b32.xlu0 %v3597, 123
        %v3782 = vpop.permute.xlu0 %3781
        %3783 = vrot.lane.b32.xlu0 %v3598, 123
        %v3784 = vpop.permute.xlu0 %3783
        %3785 = vrot.lane.b32.xlu0 %v3599, 123
        %v3786 = vpop.permute.xlu0 %3785
        %3787 = vrot.lane.b32.xlu0 %v3600, 123
        %v3788 = vpop.permute.xlu0 %3787
        %3789 = vrot.lane.b32.xlu0 %v3601, 123
        %v3790 = vpop.permute.xlu0 %3789
        %3791 = vrot.lane.b32.xlu0 %v3602, 123
        %v3792 = vpop.permute.xlu0 %3791
        %3793 = vrot.lane.b32.xlu0 %v3603, 123
        %v3794 = vpop.permute.xlu0 %3793
        %3795 = vrot.lane.b32.xlu0 %v3604, 123
        %v3796 = vpop.permute.xlu0 %3795
        %vm3797 = vcmask 1006592
        %v3798 = vsel %vm3797, %v3670, %v3672
        %v3799 = vsel %vm3797, %v3672, %v3674
        %v3800 = vsel %vm3797, %v3674, %v3676
        %v3801 = vsel %vm3797, %v3678, %v3680
        %v3802 = vsel %vm3797, %v3680, %v3682
        %v3803 = vsel %vm3797, %v3682, %v3684
        %v3804 = vsel %vm3797, %v3686, %v3688
        %v3805 = vsel %vm3797, %v3688, %v3690
        %v3806 = vsel %vm3797, %v3690, %v3692
        %v3807 = vsel %vm3797, %v3694, %v3696
        %v3808 = vsel %vm3797, %v3696, %v3698
        %v3809 = vsel %vm3797, %v3698, %v3700
        %v3810 = vsel %vm3797, %v3702, %v3704
        %v3811 = vsel %vm3797, %v3704, %v3706
        %v3812 = vsel %vm3797, %v3706, %v3708
        %v3813 = vsel %vm3797, %v3710, %v3712
        %v3814 = vsel %vm3797, %v3712, %v3714
        %v3815 = vsel %vm3797, %v3714, %v3716
        %v3816 = vsel %vm3797, %v3718, %v3720
        %v3817 = vsel %vm3797, %v3720, %v3722
        %v3818 = vsel %vm3797, %v3722, %v3724
        %v3819 = vsel %vm3797, %v3726, %v3728
        %v3820 = vsel %vm3797, %v3728, %v3730
        %v3821 = vsel %vm3797, %v3730, %v3732
        %v3822 = vsel %vm3797, %v3734, %v3736
        %v3823 = vsel %vm3797, %v3736, %v3738
        %v3824 = vsel %vm3797, %v3738, %v3740
        %v3825 = vsel %vm3797, %v3742, %v3744
        %v3826 = vsel %vm3797, %v3744, %v3746
        %v3827 = vsel %vm3797, %v3746, %v3748
        %v3828 = vsel %vm3797, %v3750, %v3752
        %v3829 = vsel %vm3797, %v3752, %v3754
        %v3830 = vsel %vm3797, %v3754, %v3756
        %v3831 = vsel %vm3797, %v3758, %v3760
        %v3832 = vsel %vm3797, %v3760, %v3762
        %v3833 = vsel %vm3797, %v3762, %v3764
        %v3834 = vsel %vm3797, %v3766, %v3768
        %v3835 = vsel %vm3797, %v3768, %v3770
        %v3836 = vsel %vm3797, %v3770, %v3772
        %v3837 = vsel %vm3797, %v3774, %v3776
        %v3838 = vsel %vm3797, %v3776, %v3778
        %v3839 = vsel %vm3797, %v3778, %v3780
        %v3840 = vsel %vm3797, %v3782, %v3784
        %v3841 = vsel %vm3797, %v3784, %v3786
        %v3842 = vsel %vm3797, %v3786, %v3788
        %v3843 = vsel %vm3797, %v3790, %v3792
        %v3844 = vsel %vm3797, %v3792, %v3794
        %v3845 = vsel %vm3797, %v3794, %v3796
        %v3910 = vadd.f32 %v3233, %v3798
        %v3911 = vadd.f32 %v3234, %v3799
        %v3912 = vadd.f32 %v3235, %v3800
        %v3913 = vadd.f32 %v3236, %v3676
        %v3914 = vadd.f32 %v3237, %v3801
        %v3915 = vadd.f32 %v3238, %v3802
        %v3916 = vadd.f32 %v3239, %v3803
        %v3917 = vadd.f32 %v3240, %v3684
        %v3918 = vadd.f32 %v3241, %v3804
        %v3919 = vadd.f32 %v3242, %v3805
        %v3920 = vadd.f32 %v3243, %v3806
        %v3921 = vadd.f32 %v3244, %v3692
        %v3922 = vadd.f32 %v3245, %v3807
        %v3923 = vadd.f32 %v3246, %v3808
        %v3924 = vadd.f32 %v3247, %v3809
        %v3925 = vadd.f32 %v3248, %v3700
        %v3926 = vadd.f32 %v3249, %v3810
        %v3927 = vadd.f32 %v3250, %v3811
        %v3928 = vadd.f32 %v3251, %v3812
        %v3929 = vadd.f32 %v3252, %v3708
        %v3930 = vadd.f32 %v3253, %v3813
        %v3931 = vadd.f32 %v3254, %v3814
        %v3932 = vadd.f32 %v3255, %v3815
        %v3933 = vadd.f32 %v3256, %v3716
        %v3934 = vadd.f32 %v3257, %v3816
        %v3935 = vadd.f32 %v3258, %v3817
        %v3936 = vadd.f32 %v3259, %v3818
        %v3937 = vadd.f32 %v3260, %v3724
        %v3938 = vadd.f32 %v3261, %v3819
        %v3939 = vadd.f32 %v3262, %v3820
        %v3940 = vadd.f32 %v3263, %v3821
        %v3941 = vadd.f32 %v3264, %v3732
        %v3942 = vadd.f32 %v3265, %v3822
        %v3943 = vadd.f32 %v3266, %v3823
        %v3944 = vadd.f32 %v3267, %v3824
        %v3945 = vadd.f32 %v3268, %v3740
        %v3946 = vadd.f32 %v3269, %v3825
        %v3947 = vadd.f32 %v3270, %v3826
        %v3948 = vadd.f32 %v3271, %v3827
        %v3949 = vadd.f32 %v3272, %v3748
        %v3950 = vadd.f32 %v3273, %v3828
        %v3951 = vadd.f32 %v3274, %v3829
        %v3952 = vadd.f32 %v3275, %v3830
        %v3953 = vadd.f32 %v3276, %v3756
        %v3954 = vadd.f32 %v3277, %v3831
        %v3955 = vadd.f32 %v3278, %v3832
        %v3956 = vadd.f32 %v3279, %v3833
        %v3957 = vadd.f32 %v3280, %v3764
        %v3958 = vadd.f32 %v3281, %v3834
        %v3959 = vadd.f32 %v3282, %v3835
        %v3960 = vadd.f32 %v3283, %v3836
        %v3961 = vadd.f32 %v3284, %v3772
        %v3962 = vadd.f32 %v3285, %v3837
        %v3963 = vadd.f32 %v3286, %v3838
        %v3964 = vadd.f32 %v3287, %v3839
        %v3965 = vadd.f32 %v3288, %v3780
        %v3966 = vadd.f32 %v3289, %v3840
        %v3967 = vadd.f32 %v3290, %v3841
        %v3968 = vadd.f32 %v3291, %v3842
        %v3969 = vadd.f32 %v3292, %v3788
        %v3970 = vadd.f32 %v3293, %v3843
        %v3971 = vadd.f32 %v3294, %v3844
        %v3972 = vadd.f32 %v3295, %v3845
        %v3973 = vadd.f32 %v3296, %v3796
        %v3974 = vld [vmem:[%s204] sm:$0xff]
        %v3975 = vld [vmem:[%s204 + $0x8] sm:$0xff]
        %v3976 = vld [vmem:[%s204 + $0x10] sm:$0xff]
        %v3977 = vld [vmem:[%s204 + $0x18] sm:$0xff]
        %v3982 = vcombine.low %v3974, %v3975
        %v3983 = vcombine.high %v3974, %v3975
        %v3984 = vcombine.low %v3976, %v3977
        %v3985 = vcombine.high %v3976, %v3977
        %v3987 = vunpack.c.l.s4 1966171168
        %v3988 = vunpack.c.0.s8 %v3987
        %v3989 = vlaneseq
        %v3990 = vshrl.u32 %v3989, 7
        %v3991 = vsub.s32 %v3988, %v3990
        %v3992 = vrot.slane %v3982, %v3991
        %v3994 = vunpack.c.l.s4 1966171168
        %v3995 = vunpack.c.0.s8 %v3994
        %v3996 = vlaneseq
        %v3997 = vshrl.u32 %v3996, 7
        %v3998 = vsub.s32 %v3995, %v3997
        %v3999 = vrot.slane %v3983, %v3998
        %v4001 = vunpack.c.l.s4 1966171168
        %v4002 = vunpack.c.0.s8 %v4001
        %v4003 = vlaneseq
        %v4004 = vshrl.u32 %v4003, 7
        %v4005 = vsub.s32 %v4002, %v4004
        %v4006 = vrot.slane %v3984, %v4005
        %v4008 = vunpack.c.l.s4 1966171168
        %v4009 = vunpack.c.0.s8 %v4008
        %v4010 = vlaneseq
        %v4011 = vshrl.u32 %v4010, 7
        %v4012 = vsub.s32 %v4009, %v4011
        %v4013 = vrot.slane %v3985, %v4012
        %v4014 = vcombine.low %v3992, %v4006
        %v4015 = vcombine.high %v3992, %v4006
        %v4016 = vcombine.low %v3999, %v4013
        %v4017 = vcombine.high %v3999, %v4013
        %v4019 = vunpack.c.l.s4 1966171168
        %v4020 = vunpack.c.0.s8 %v4019
        %v4021 = vlaneseq
        %v4022 = vshrl.u32 %v4021, 7
        %v4023 = vsub.s32 %v4020, %v4022
        %v4024 = vrot.slane %v4014, %v4023
        %v4026 = vunpack.c.l.s4 1966171168
        %v4027 = vunpack.c.0.s8 %v4026
        %v4028 = vlaneseq
        %v4029 = vshrl.u32 %v4028, 7
        %v4030 = vsub.s32 %v4027, %v4029
        %v4031 = vrot.slane %v4016, %v4030
        %v4033 = vunpack.c.l.s4 1966171168
        %v4034 = vunpack.c.0.s8 %v4033
        %v4035 = vlaneseq
        %v4036 = vshrl.u32 %v4035, 7
        %v4037 = vsub.s32 %v4034, %v4036
        %v4038 = vrot.slane %v4015, %v4037
        %v4040 = vunpack.c.l.s4 1966171168
        %v4041 = vunpack.c.0.s8 %v4040
        %v4042 = vlaneseq
        %v4043 = vshrl.u32 %v4042, 7
        %v4044 = vsub.s32 %v4041, %v4043
        %v4045 = vrot.slane %v4017, %v4044
        %v4046 = vcombine.high %v4024, %v4024
        %v4047 = vcombine.high %v4031, %v4031
        %v4048 = vcombine.high %v4038, %v4038
        %v4049 = vcombine.high %v4045, %v4045
        %v4050 = vlaneseq
        %v4051 = vshrl.u32 %v4050, 7
        %v4052 = vsub.s32 0, %v4051
        %v4053 = vrot.slane %v4024, %v4052
        %v4054 = vlaneseq
        %v4055 = vshrl.u32 %v4054, 7
        %v4056 = vsub.s32 1, %v4055
        %v4057 = vrot.slane %v4024, %v4056
        %v4058 = vlaneseq
        %v4059 = vshrl.u32 %v4058, 7
        %v4060 = vsub.s32 2, %v4059
        %v4061 = vrot.slane %v4024, %v4060
        %v4062 = vlaneseq
        %v4063 = vshrl.u32 %v4062, 7
        %v4064 = vsub.s32 3, %v4063
        %v4065 = vrot.slane %v4024, %v4064
        %v4066 = vlaneseq
        %v4067 = vshrl.u32 %v4066, 7
        %v4068 = vsub.s32 0, %v4067
        %v4069 = vrot.slane %v4038, %v4068
        %v4070 = vlaneseq
        %v4071 = vshrl.u32 %v4070, 7
        %v4072 = vsub.s32 1, %v4071
        %v4073 = vrot.slane %v4038, %v4072
        %v4074 = vlaneseq
        %v4075 = vshrl.u32 %v4074, 7
        %v4076 = vsub.s32 2, %v4075
        %v4077 = vrot.slane %v4038, %v4076
        %v4078 = vlaneseq
        %v4079 = vshrl.u32 %v4078, 7
        %v4080 = vsub.s32 3, %v4079
        %v4081 = vrot.slane %v4038, %v4080
        %v4082 = vlaneseq
        %v4083 = vshrl.u32 %v4082, 7
        %v4084 = vsub.s32 0, %v4083
        %v4085 = vrot.slane %v4046, %v4084
        %v4086 = vlaneseq
        %v4087 = vshrl.u32 %v4086, 7
        %v4088 = vsub.s32 1, %v4087
        %v4089 = vrot.slane %v4046, %v4088
        %v4090 = vlaneseq
        %v4091 = vshrl.u32 %v4090, 7
        %v4092 = vsub.s32 2, %v4091
        %v4093 = vrot.slane %v4046, %v4092
        %v4094 = vlaneseq
        %v4095 = vshrl.u32 %v4094, 7
        %v4096 = vsub.s32 3, %v4095
        %v4097 = vrot.slane %v4046, %v4096
        %v4098 = vlaneseq
        %v4099 = vshrl.u32 %v4098, 7
        %v4100 = vsub.s32 0, %v4099
        %v4101 = vrot.slane %v4048, %v4100
        %v4102 = vlaneseq
        %v4103 = vshrl.u32 %v4102, 7
        %v4104 = vsub.s32 1, %v4103
        %v4105 = vrot.slane %v4048, %v4104
        %v4106 = vlaneseq
        %v4107 = vshrl.u32 %v4106, 7
        %v4108 = vsub.s32 2, %v4107
        %v4109 = vrot.slane %v4048, %v4108
        %v4110 = vlaneseq
        %v4111 = vshrl.u32 %v4110, 7
        %v4112 = vsub.s32 3, %v4111
        %v4113 = vrot.slane %v4048, %v4112
        %v4114 = vlaneseq
        %v4115 = vshrl.u32 %v4114, 7
        %v4116 = vsub.s32 0, %v4115
        %v4117 = vrot.slane %v4031, %v4116
        %v4118 = vlaneseq
        %v4119 = vshrl.u32 %v4118, 7
        %v4120 = vsub.s32 1, %v4119
        %v4121 = vrot.slane %v4031, %v4120
        %v4122 = vlaneseq
        %v4123 = vshrl.u32 %v4122, 7
        %v4124 = vsub.s32 2, %v4123
        %v4125 = vrot.slane %v4031, %v4124
        %v4126 = vlaneseq
        %v4127 = vshrl.u32 %v4126, 7
        %v4128 = vsub.s32 3, %v4127
        %v4129 = vrot.slane %v4031, %v4128
        %v4130 = vlaneseq
        %v4131 = vshrl.u32 %v4130, 7
        %v4132 = vsub.s32 0, %v4131
        %v4133 = vrot.slane %v4045, %v4132
        %v4134 = vlaneseq
        %v4135 = vshrl.u32 %v4134, 7
        %v4136 = vsub.s32 1, %v4135
        %v4137 = vrot.slane %v4045, %v4136
        %v4138 = vlaneseq
        %v4139 = vshrl.u32 %v4138, 7
        %v4140 = vsub.s32 2, %v4139
        %v4141 = vrot.slane %v4045, %v4140
        %v4142 = vlaneseq
        %v4143 = vshrl.u32 %v4142, 7
        %v4144 = vsub.s32 3, %v4143
        %v4145 = vrot.slane %v4045, %v4144
        %v4146 = vlaneseq
        %v4147 = vshrl.u32 %v4146, 7
        %v4148 = vsub.s32 0, %v4147
        %v4149 = vrot.slane %v4047, %v4148
        %v4150 = vlaneseq
        %v4151 = vshrl.u32 %v4150, 7
        %v4152 = vsub.s32 1, %v4151
        %v4153 = vrot.slane %v4047, %v4152
        %v4154 = vlaneseq
        %v4155 = vshrl.u32 %v4154, 7
        %v4156 = vsub.s32 2, %v4155
        %v4157 = vrot.slane %v4047, %v4156
        %v4158 = vlaneseq
        %v4159 = vshrl.u32 %v4158, 7
        %v4160 = vsub.s32 3, %v4159
        %v4161 = vrot.slane %v4047, %v4160
        %v4162 = vlaneseq
        %v4163 = vshrl.u32 %v4162, 7
        %v4164 = vsub.s32 0, %v4163
        %v4165 = vrot.slane %v4049, %v4164
        %v4166 = vlaneseq
        %v4167 = vshrl.u32 %v4166, 7
        %v4168 = vsub.s32 1, %v4167
        %v4169 = vrot.slane %v4049, %v4168
        %v4170 = vlaneseq
        %v4171 = vshrl.u32 %v4170, 7
        %v4172 = vsub.s32 2, %v4171
        %v4173 = vrot.slane %v4049, %v4172
        %v4174 = vlaneseq
        %v4175 = vshrl.u32 %v4174, 7
        %v4176 = vsub.s32 3, %v4175
        %v4177 = vrot.slane %v4049, %v4176
        %4210 = vset.pattern.permute.xlu0 6
        %4211 = vperm.xlu0 %4210, %v213
        %v4212 = vpop.permute.xlu0 %4211
        %4214 = vset.pattern.permute.xlu0 6
        %4215 = vperm.xlu0 %4214, %v214
        %v4216 = vpop.permute.xlu0 %4215
        %v4218 = vmul.f32 %v4053, %v4212
        %v4219 = vmul.f32 %v4057, %v4212
        %v4220 = vmul.f32 %v4061, %v4212
        %v4221 = vmul.f32 %v4065, %v4212
        %v4222 = vmul.f32 %v4053, %v4216
        %v4223 = vmul.f32 %v4057, %v4216
        %v4224 = vmul.f32 %v4061, %v4216
        %v4225 = vmul.f32 %v4065, %v4216
        %v4226 = vmul.f32 %v4069, %v4212
        %v4227 = vmul.f32 %v4073, %v4212
        %v4228 = vmul.f32 %v4077, %v4212
        %v4229 = vmul.f32 %v4081, %v4212
        %v4230 = vmul.f32 %v4069, %v4216
        %v4231 = vmul.f32 %v4073, %v4216
        %v4232 = vmul.f32 %v4077, %v4216
        %v4233 = vmul.f32 %v4081, %v4216
        %v4234 = vmul.f32 %v4085, %v4212
        %v4235 = vmul.f32 %v4089, %v4212
        %v4236 = vmul.f32 %v4093, %v4212
        %v4237 = vmul.f32 %v4097, %v4212
        %v4238 = vmul.f32 %v4085, %v4216
        %v4239 = vmul.f32 %v4089, %v4216
        %v4240 = vmul.f32 %v4093, %v4216
        %v4241 = vmul.f32 %v4097, %v4216
        %v4242 = vmul.f32 %v4101, %v4212
        %v4243 = vmul.f32 %v4105, %v4212
        %v4244 = vmul.f32 %v4109, %v4212
        %v4245 = vmul.f32 %v4113, %v4212
        %v4246 = vmul.f32 %v4101, %v4216
        %v4247 = vmul.f32 %v4105, %v4216
        %v4248 = vmul.f32 %v4109, %v4216
        %v4249 = vmul.f32 %v4113, %v4216
        %v4250 = vmul.f32 %v4117, %v4212
        %v4251 = vmul.f32 %v4121, %v4212
        %v4252 = vmul.f32 %v4125, %v4212
        %v4253 = vmul.f32 %v4129, %v4212
        %v4254 = vmul.f32 %v4117, %v4216
        %v4255 = vmul.f32 %v4121, %v4216
        %v4256 = vmul.f32 %v4125, %v4216
        %v4257 = vmul.f32 %v4129, %v4216
        %v4258 = vmul.f32 %v4133, %v4212
        %v4259 = vmul.f32 %v4137, %v4212
        %v4260 = vmul.f32 %v4141, %v4212
        %v4261 = vmul.f32 %v4145, %v4212
        %v4262 = vmul.f32 %v4133, %v4216
        %v4263 = vmul.f32 %v4137, %v4216
        %v4264 = vmul.f32 %v4141, %v4216
        %v4265 = vmul.f32 %v4145, %v4216
        %v4266 = vmul.f32 %v4149, %v4212
        %v4267 = vmul.f32 %v4153, %v4212
        %v4268 = vmul.f32 %v4157, %v4212
        %v4269 = vmul.f32 %v4161, %v4212
        %v4270 = vmul.f32 %v4149, %v4216
        %v4271 = vmul.f32 %v4153, %v4216
        %v4272 = vmul.f32 %v4157, %v4216
        %v4273 = vmul.f32 %v4161, %v4216
        %v4274 = vmul.f32 %v4165, %v4212
        %v4275 = vmul.f32 %v4169, %v4212
        %v4276 = vmul.f32 %v4173, %v4212
        %v4277 = vmul.f32 %v4177, %v4212
        %v4278 = vmul.f32 %v4165, %v4216
        %v4279 = vmul.f32 %v4169, %v4216
        %v4280 = vmul.f32 %v4173, %v4216
        %v4281 = vmul.f32 %v4177, %v4216
        %4346 = vrot.lane.b32.xlu0 %v4218, 122
        %v4347 = vpop.permute.xlu0 %4346
        %4348 = vrot.lane.b32.xlu0 %v4219, 122
        %v4349 = vpop.permute.xlu0 %4348
        %4350 = vrot.lane.b32.xlu0 %v4220, 122
        %v4351 = vpop.permute.xlu0 %4350
        %4352 = vrot.lane.b32.xlu0 %v4221, 122
        %v4353 = vpop.permute.xlu0 %4352
        %4354 = vrot.lane.b32.xlu0 %v4222, 122
        %v4355 = vpop.permute.xlu0 %4354
        %4356 = vrot.lane.b32.xlu0 %v4223, 122
        %v4357 = vpop.permute.xlu0 %4356
        %4358 = vrot.lane.b32.xlu0 %v4224, 122
        %v4359 = vpop.permute.xlu0 %4358
        %4360 = vrot.lane.b32.xlu0 %v4225, 122
        %v4361 = vpop.permute.xlu0 %4360
        %4362 = vrot.lane.b32.xlu0 %v4226, 122
        %v4363 = vpop.permute.xlu0 %4362
        %4364 = vrot.lane.b32.xlu0 %v4227, 122
        %v4365 = vpop.permute.xlu0 %4364
        %4366 = vrot.lane.b32.xlu0 %v4228, 122
        %v4367 = vpop.permute.xlu0 %4366
        %4368 = vrot.lane.b32.xlu0 %v4229, 122
        %v4369 = vpop.permute.xlu0 %4368
        %4370 = vrot.lane.b32.xlu0 %v4230, 122
        %v4371 = vpop.permute.xlu0 %4370
        %4372 = vrot.lane.b32.xlu0 %v4231, 122
        %v4373 = vpop.permute.xlu0 %4372
        %4374 = vrot.lane.b32.xlu0 %v4232, 122
        %v4375 = vpop.permute.xlu0 %4374
        %4376 = vrot.lane.b32.xlu0 %v4233, 122
        %v4377 = vpop.permute.xlu0 %4376
        %4378 = vrot.lane.b32.xlu0 %v4234, 122
        %v4379 = vpop.permute.xlu0 %4378
        %4380 = vrot.lane.b32.xlu0 %v4235, 122
        %v4381 = vpop.permute.xlu0 %4380
        %4382 = vrot.lane.b32.xlu0 %v4236, 122
        %v4383 = vpop.permute.xlu0 %4382
        %4384 = vrot.lane.b32.xlu0 %v4237, 122
        %v4385 = vpop.permute.xlu0 %4384
        %4386 = vrot.lane.b32.xlu0 %v4238, 122
        %v4387 = vpop.permute.xlu0 %4386
        %4388 = vrot.lane.b32.xlu0 %v4239, 122
        %v4389 = vpop.permute.xlu0 %4388
        %4390 = vrot.lane.b32.xlu0 %v4240, 122
        %v4391 = vpop.permute.xlu0 %4390
        %4392 = vrot.lane.b32.xlu0 %v4241, 122
        %v4393 = vpop.permute.xlu0 %4392
        %4394 = vrot.lane.b32.xlu0 %v4242, 122
        %v4395 = vpop.permute.xlu0 %4394
        %4396 = vrot.lane.b32.xlu0 %v4243, 122
        %v4397 = vpop.permute.xlu0 %4396
        %4398 = vrot.lane.b32.xlu0 %v4244, 122
        %v4399 = vpop.permute.xlu0 %4398
        %4400 = vrot.lane.b32.xlu0 %v4245, 122
        %v4401 = vpop.permute.xlu0 %4400
        %4402 = vrot.lane.b32.xlu0 %v4246, 122
        %v4403 = vpop.permute.xlu0 %4402
        %4404 = vrot.lane.b32.xlu0 %v4247, 122
        %v4405 = vpop.permute.xlu0 %4404
        %4406 = vrot.lane.b32.xlu0 %v4248, 122
        %v4407 = vpop.permute.xlu0 %4406
        %4408 = vrot.lane.b32.xlu0 %v4249, 122
        %v4409 = vpop.permute.xlu0 %4408
        %4410 = vrot.lane.b32.xlu0 %v4250, 122
        %v4411 = vpop.permute.xlu0 %4410
        %4412 = vrot.lane.b32.xlu0 %v4251, 122
        %v4413 = vpop.permute.xlu0 %4412
        %4414 = vrot.lane.b32.xlu0 %v4252, 122
        %v4415 = vpop.permute.xlu0 %4414
        %4416 = vrot.lane.b32.xlu0 %v4253, 122
        %v4417 = vpop.permute.xlu0 %4416
        %4418 = vrot.lane.b32.xlu0 %v4254, 122
        %v4419 = vpop.permute.xlu0 %4418
        %4420 = vrot.lane.b32.xlu0 %v4255, 122
        %v4421 = vpop.permute.xlu0 %4420
        %4422 = vrot.lane.b32.xlu0 %v4256, 122
        %v4423 = vpop.permute.xlu0 %4422
        %4424 = vrot.lane.b32.xlu0 %v4257, 122
        %v4425 = vpop.permute.xlu0 %4424
        %4426 = vrot.lane.b32.xlu0 %v4258, 122
        %v4427 = vpop.permute.xlu0 %4426
        %4428 = vrot.lane.b32.xlu0 %v4259, 122
        %v4429 = vpop.permute.xlu0 %4428
        %4430 = vrot.lane.b32.xlu0 %v4260, 122
        %v4431 = vpop.permute.xlu0 %4430
        %4432 = vrot.lane.b32.xlu0 %v4261, 122
        %v4433 = vpop.permute.xlu0 %4432
        %4434 = vrot.lane.b32.xlu0 %v4262, 122
        %v4435 = vpop.permute.xlu0 %4434
        %4436 = vrot.lane.b32.xlu0 %v4263, 122
        %v4437 = vpop.permute.xlu0 %4436
        %4438 = vrot.lane.b32.xlu0 %v4264, 122
        %v4439 = vpop.permute.xlu0 %4438
        %4440 = vrot.lane.b32.xlu0 %v4265, 122
        %v4441 = vpop.permute.xlu0 %4440
        %4442 = vrot.lane.b32.xlu0 %v4266, 122
        %v4443 = vpop.permute.xlu0 %4442
        %4444 = vrot.lane.b32.xlu0 %v4267, 122
        %v4445 = vpop.permute.xlu0 %4444
        %4446 = vrot.lane.b32.xlu0 %v4268, 122
        %v4447 = vpop.permute.xlu0 %4446
        %4448 = vrot.lane.b32.xlu0 %v4269, 122
        %v4449 = vpop.permute.xlu0 %4448
        %4450 = vrot.lane.b32.xlu0 %v4270, 122
        %v4451 = vpop.permute.xlu0 %4450
        %4452 = vrot.lane.b32.xlu0 %v4271, 122
        %v4453 = vpop.permute.xlu0 %4452
        %4454 = vrot.lane.b32.xlu0 %v4272, 122
        %v4455 = vpop.permute.xlu0 %4454
        %4456 = vrot.lane.b32.xlu0 %v4273, 122
        %v4457 = vpop.permute.xlu0 %4456
        %4458 = vrot.lane.b32.xlu0 %v4274, 122
        %v4459 = vpop.permute.xlu0 %4458
        %4460 = vrot.lane.b32.xlu0 %v4275, 122
        %v4461 = vpop.permute.xlu0 %4460
        %4462 = vrot.lane.b32.xlu0 %v4276, 122
        %v4463 = vpop.permute.xlu0 %4462
        %4464 = vrot.lane.b32.xlu0 %v4277, 122
        %v4465 = vpop.permute.xlu0 %4464
        %4466 = vrot.lane.b32.xlu0 %v4278, 122
        %v4467 = vpop.permute.xlu0 %4466
        %4468 = vrot.lane.b32.xlu0 %v4279, 122
        %v4469 = vpop.permute.xlu0 %4468
        %4470 = vrot.lane.b32.xlu0 %v4280, 122
        %v4471 = vpop.permute.xlu0 %4470
        %4472 = vrot.lane.b32.xlu0 %v4281, 122
        %v4473 = vpop.permute.xlu0 %4472
        %vm4474 = vcmask 998400
        %v4475 = vsel %vm4474, %v4347, %v4349
        %v4476 = vsel %vm4474, %v4349, %v4351
        %v4477 = vsel %vm4474, %v4351, %v4353
        %v4478 = vsel %vm4474, %v4355, %v4357
        %v4479 = vsel %vm4474, %v4357, %v4359
        %v4480 = vsel %vm4474, %v4359, %v4361
        %v4481 = vsel %vm4474, %v4363, %v4365
        %v4482 = vsel %vm4474, %v4365, %v4367
        %v4483 = vsel %vm4474, %v4367, %v4369
        %v4484 = vsel %vm4474, %v4371, %v4373
        %v4485 = vsel %vm4474, %v4373, %v4375
        %v4486 = vsel %vm4474, %v4375, %v4377
        %v4487 = vsel %vm4474, %v4379, %v4381
        %v4488 = vsel %vm4474, %v4381, %v4383
        %v4489 = vsel %vm4474, %v4383, %v4385
        %v4490 = vsel %vm4474, %v4387, %v4389
        %v4491 = vsel %vm4474, %v4389, %v4391
        %v4492 = vsel %vm4474, %v4391, %v4393
        %v4493 = vsel %vm4474, %v4395, %v4397
        %v4494 = vsel %vm4474, %v4397, %v4399
        %v4495 = vsel %vm4474, %v4399, %v4401
        %v4496 = vsel %vm4474, %v4403, %v4405
        %v4497 = vsel %vm4474, %v4405, %v4407
        %v4498 = vsel %vm4474, %v4407, %v4409
        %v4499 = vsel %vm4474, %v4411, %v4413
        %v4500 = vsel %vm4474, %v4413, %v4415
        %v4501 = vsel %vm4474, %v4415, %v4417
        %v4502 = vsel %vm4474, %v4419, %v4421
        %v4503 = vsel %vm4474, %v4421, %v4423
        %v4504 = vsel %vm4474, %v4423, %v4425
        %v4505 = vsel %vm4474, %v4427, %v4429
        %v4506 = vsel %vm4474, %v4429, %v4431
        %v4507 = vsel %vm4474, %v4431, %v4433
        %v4508 = vsel %vm4474, %v4435, %v4437
        %v4509 = vsel %vm4474, %v4437, %v4439
        %v4510 = vsel %vm4474, %v4439, %v4441
        %v4511 = vsel %vm4474, %v4443, %v4445
        %v4512 = vsel %vm4474, %v4445, %v4447
        %v4513 = vsel %vm4474, %v4447, %v4449
        %v4514 = vsel %vm4474, %v4451, %v4453
        %v4515 = vsel %vm4474, %v4453, %v4455
        %v4516 = vsel %vm4474, %v4455, %v4457
        %v4517 = vsel %vm4474, %v4459, %v4461
        %v4518 = vsel %vm4474, %v4461, %v4463
        %v4519 = vsel %vm4474, %v4463, %v4465
        %v4520 = vsel %vm4474, %v4467, %v4469
        %v4521 = vsel %vm4474, %v4469, %v4471
        %v4522 = vsel %vm4474, %v4471, %v4473
        %v4587 = vadd.f32 %v3910, %v4475
        %v4588 = vadd.f32 %v3911, %v4476
        %v4589 = vadd.f32 %v3912, %v4477
        %v4590 = vadd.f32 %v3913, %v4353
        %v4591 = vadd.f32 %v3914, %v4478
        %v4592 = vadd.f32 %v3915, %v4479
        %v4593 = vadd.f32 %v3916, %v4480
        %v4594 = vadd.f32 %v3917, %v4361
        %v4595 = vadd.f32 %v3918, %v4481
        %v4596 = vadd.f32 %v3919, %v4482
        %v4597 = vadd.f32 %v3920, %v4483
        %v4598 = vadd.f32 %v3921, %v4369
        %v4599 = vadd.f32 %v3922, %v4484
        %v4600 = vadd.f32 %v3923, %v4485
        %v4601 = vadd.f32 %v3924, %v4486
        %v4602 = vadd.f32 %v3925, %v4377
        %v4603 = vadd.f32 %v3926, %v4487
        %v4604 = vadd.f32 %v3927, %v4488
        %v4605 = vadd.f32 %v3928, %v4489
        %v4606 = vadd.f32 %v3929, %v4385
        %v4607 = vadd.f32 %v3930, %v4490
        %v4608 = vadd.f32 %v3931, %v4491
        %v4609 = vadd.f32 %v3932, %v4492
        %v4610 = vadd.f32 %v3933, %v4393
        %v4611 = vadd.f32 %v3934, %v4493
        %v4612 = vadd.f32 %v3935, %v4494
        %v4613 = vadd.f32 %v3936, %v4495
        %v4614 = vadd.f32 %v3937, %v4401
        %v4615 = vadd.f32 %v3938, %v4496
        %v4616 = vadd.f32 %v3939, %v4497
        %v4617 = vadd.f32 %v3940, %v4498
        %v4618 = vadd.f32 %v3941, %v4409
        %v4619 = vadd.f32 %v3942, %v4499
        %v4620 = vadd.f32 %v3943, %v4500
        %v4621 = vadd.f32 %v3944, %v4501
        %v4622 = vadd.f32 %v3945, %v4417
        %v4623 = vadd.f32 %v3946, %v4502
        %v4624 = vadd.f32 %v3947, %v4503
        %v4625 = vadd.f32 %v3948, %v4504
        %v4626 = vadd.f32 %v3949, %v4425
        %v4627 = vadd.f32 %v3950, %v4505
        %v4628 = vadd.f32 %v3951, %v4506
        %v4629 = vadd.f32 %v3952, %v4507
        %v4630 = vadd.f32 %v3953, %v4433
        %v4631 = vadd.f32 %v3954, %v4508
        %v4632 = vadd.f32 %v3955, %v4509
        %v4633 = vadd.f32 %v3956, %v4510
        %v4634 = vadd.f32 %v3957, %v4441
        %v4635 = vadd.f32 %v3958, %v4511
        %v4636 = vadd.f32 %v3959, %v4512
        %v4637 = vadd.f32 %v3960, %v4513
        %v4638 = vadd.f32 %v3961, %v4449
        %v4639 = vadd.f32 %v3962, %v4514
        %v4640 = vadd.f32 %v3963, %v4515
        %v4641 = vadd.f32 %v3964, %v4516
        %v4642 = vadd.f32 %v3965, %v4457
        %v4643 = vadd.f32 %v3966, %v4517
        %v4644 = vadd.f32 %v3967, %v4518
        %v4645 = vadd.f32 %v3968, %v4519
        %v4646 = vadd.f32 %v3969, %v4465
        %v4647 = vadd.f32 %v3970, %v4520
        %v4648 = vadd.f32 %v3971, %v4521
        %v4649 = vadd.f32 %v3972, %v4522
        %v4650 = vadd.f32 %v3973, %v4473
        %v4651 = vld [vmem:[%s204] sm:$0xff]
        %v4652 = vld [vmem:[%s204 + $0x8] sm:$0xff]
        %v4653 = vld [vmem:[%s204 + $0x10] sm:$0xff]
        %v4654 = vld [vmem:[%s204 + $0x18] sm:$0xff]
        %v4659 = vcombine.low %v4651, %v4652
        %v4660 = vcombine.high %v4651, %v4652
        %v4661 = vcombine.low %v4653, %v4654
        %v4662 = vcombine.high %v4653, %v4654
        %v4664 = vunpack.c.l.s4 1966171168
        %v4665 = vunpack.c.0.s8 %v4664
        %v4666 = vlaneseq
        %v4667 = vshrl.u32 %v4666, 7
        %v4668 = vsub.s32 %v4665, %v4667
        %v4669 = vrot.slane %v4659, %v4668
        %v4671 = vunpack.c.l.s4 1966171168
        %v4672 = vunpack.c.0.s8 %v4671
        %v4673 = vlaneseq
        %v4674 = vshrl.u32 %v4673, 7
        %v4675 = vsub.s32 %v4672, %v4674
        %v4676 = vrot.slane %v4660, %v4675
        %v4678 = vunpack.c.l.s4 1966171168
        %v4679 = vunpack.c.0.s8 %v4678
        %v4680 = vlaneseq
        %v4681 = vshrl.u32 %v4680, 7
        %v4682 = vsub.s32 %v4679, %v4681
        %v4683 = vrot.slane %v4661, %v4682
        %v4685 = vunpack.c.l.s4 1966171168
        %v4686 = vunpack.c.0.s8 %v4685
        %v4687 = vlaneseq
        %v4688 = vshrl.u32 %v4687, 7
        %v4689 = vsub.s32 %v4686, %v4688
        %v4690 = vrot.slane %v4662, %v4689
        %v4691 = vcombine.low %v4669, %v4683
        %v4692 = vcombine.high %v4669, %v4683
        %v4693 = vcombine.low %v4676, %v4690
        %v4694 = vcombine.high %v4676, %v4690
        %v4696 = vunpack.c.l.s4 1966171168
        %v4697 = vunpack.c.0.s8 %v4696
        %v4698 = vlaneseq
        %v4699 = vshrl.u32 %v4698, 7
        %v4700 = vsub.s32 %v4697, %v4699
        %v4701 = vrot.slane %v4691, %v4700
        %v4703 = vunpack.c.l.s4 1966171168
        %v4704 = vunpack.c.0.s8 %v4703
        %v4705 = vlaneseq
        %v4706 = vshrl.u32 %v4705, 7
        %v4707 = vsub.s32 %v4704, %v4706
        %v4708 = vrot.slane %v4693, %v4707
        %v4710 = vunpack.c.l.s4 1966171168
        %v4711 = vunpack.c.0.s8 %v4710
        %v4712 = vlaneseq
        %v4713 = vshrl.u32 %v4712, 7
        %v4714 = vsub.s32 %v4711, %v4713
        %v4715 = vrot.slane %v4692, %v4714
        %v4717 = vunpack.c.l.s4 1966171168
        %v4718 = vunpack.c.0.s8 %v4717
        %v4719 = vlaneseq
        %v4720 = vshrl.u32 %v4719, 7
        %v4721 = vsub.s32 %v4718, %v4720
        %v4722 = vrot.slane %v4694, %v4721
        %v4723 = vcombine.high %v4701, %v4701
        %v4724 = vcombine.high %v4708, %v4708
        %v4725 = vcombine.high %v4715, %v4715
        %v4726 = vcombine.high %v4722, %v4722
        %v4727 = vlaneseq
        %v4728 = vshrl.u32 %v4727, 7
        %v4729 = vsub.s32 0, %v4728
        %v4730 = vrot.slane %v4701, %v4729
        %v4731 = vlaneseq
        %v4732 = vshrl.u32 %v4731, 7
        %v4733 = vsub.s32 1, %v4732
        %v4734 = vrot.slane %v4701, %v4733
        %v4735 = vlaneseq
        %v4736 = vshrl.u32 %v4735, 7
        %v4737 = vsub.s32 2, %v4736
        %v4738 = vrot.slane %v4701, %v4737
        %v4739 = vlaneseq
        %v4740 = vshrl.u32 %v4739, 7
        %v4741 = vsub.s32 3, %v4740
        %v4742 = vrot.slane %v4701, %v4741
        %v4743 = vlaneseq
        %v4744 = vshrl.u32 %v4743, 7
        %v4745 = vsub.s32 0, %v4744
        %v4746 = vrot.slane %v4715, %v4745
        %v4747 = vlaneseq
        %v4748 = vshrl.u32 %v4747, 7
        %v4749 = vsub.s32 1, %v4748
        %v4750 = vrot.slane %v4715, %v4749
        %v4751 = vlaneseq
        %v4752 = vshrl.u32 %v4751, 7
        %v4753 = vsub.s32 2, %v4752
        %v4754 = vrot.slane %v4715, %v4753
        %v4755 = vlaneseq
        %v4756 = vshrl.u32 %v4755, 7
        %v4757 = vsub.s32 3, %v4756
        %v4758 = vrot.slane %v4715, %v4757
        %v4759 = vlaneseq
        %v4760 = vshrl.u32 %v4759, 7
        %v4761 = vsub.s32 0, %v4760
        %v4762 = vrot.slane %v4723, %v4761
        %v4763 = vlaneseq
        %v4764 = vshrl.u32 %v4763, 7
        %v4765 = vsub.s32 1, %v4764
        %v4766 = vrot.slane %v4723, %v4765
        %v4767 = vlaneseq
        %v4768 = vshrl.u32 %v4767, 7
        %v4769 = vsub.s32 2, %v4768
        %v4770 = vrot.slane %v4723, %v4769
        %v4771 = vlaneseq
        %v4772 = vshrl.u32 %v4771, 7
        %v4773 = vsub.s32 3, %v4772
        %v4774 = vrot.slane %v4723, %v4773
        %v4775 = vlaneseq
        %v4776 = vshrl.u32 %v4775, 7
        %v4777 = vsub.s32 0, %v4776
        %v4778 = vrot.slane %v4725, %v4777
        %v4779 = vlaneseq
        %v4780 = vshrl.u32 %v4779, 7
        %v4781 = vsub.s32 1, %v4780
        %v4782 = vrot.slane %v4725, %v4781
        %v4783 = vlaneseq
        %v4784 = vshrl.u32 %v4783, 7
        %v4785 = vsub.s32 2, %v4784
        %v4786 = vrot.slane %v4725, %v4785
        %v4787 = vlaneseq
        %v4788 = vshrl.u32 %v4787, 7
        %v4789 = vsub.s32 3, %v4788
        %v4790 = vrot.slane %v4725, %v4789
        %v4791 = vlaneseq
        %v4792 = vshrl.u32 %v4791, 7
        %v4793 = vsub.s32 0, %v4792
        %v4794 = vrot.slane %v4708, %v4793
        %v4795 = vlaneseq
        %v4796 = vshrl.u32 %v4795, 7
        %v4797 = vsub.s32 1, %v4796
        %v4798 = vrot.slane %v4708, %v4797
        %v4799 = vlaneseq
        %v4800 = vshrl.u32 %v4799, 7
        %v4801 = vsub.s32 2, %v4800
        %v4802 = vrot.slane %v4708, %v4801
        %v4803 = vlaneseq
        %v4804 = vshrl.u32 %v4803, 7
        %v4805 = vsub.s32 3, %v4804
        %v4806 = vrot.slane %v4708, %v4805
        %v4807 = vlaneseq
        %v4808 = vshrl.u32 %v4807, 7
        %v4809 = vsub.s32 0, %v4808
        %v4810 = vrot.slane %v4722, %v4809
        %v4811 = vlaneseq
        %v4812 = vshrl.u32 %v4811, 7
        %v4813 = vsub.s32 1, %v4812
        %v4814 = vrot.slane %v4722, %v4813
        %v4815 = vlaneseq
        %v4816 = vshrl.u32 %v4815, 7
        %v4817 = vsub.s32 2, %v4816
        %v4818 = vrot.slane %v4722, %v4817
        %v4819 = vlaneseq
        %v4820 = vshrl.u32 %v4819, 7
        %v4821 = vsub.s32 3, %v4820
        %v4822 = vrot.slane %v4722, %v4821
        %v4823 = vlaneseq
        %v4824 = vshrl.u32 %v4823, 7
        %v4825 = vsub.s32 0, %v4824
        %v4826 = vrot.slane %v4724, %v4825
        %v4827 = vlaneseq
        %v4828 = vshrl.u32 %v4827, 7
        %v4829 = vsub.s32 1, %v4828
        %v4830 = vrot.slane %v4724, %v4829
        %v4831 = vlaneseq
        %v4832 = vshrl.u32 %v4831, 7
        %v4833 = vsub.s32 2, %v4832
        %v4834 = vrot.slane %v4724, %v4833
        %v4835 = vlaneseq
        %v4836 = vshrl.u32 %v4835, 7
        %v4837 = vsub.s32 3, %v4836
        %v4838 = vrot.slane %v4724, %v4837
        %v4839 = vlaneseq
        %v4840 = vshrl.u32 %v4839, 7
        %v4841 = vsub.s32 0, %v4840
        %v4842 = vrot.slane %v4726, %v4841
        %v4843 = vlaneseq
        %v4844 = vshrl.u32 %v4843, 7
        %v4845 = vsub.s32 1, %v4844
        %v4846 = vrot.slane %v4726, %v4845
        %v4847 = vlaneseq
        %v4848 = vshrl.u32 %v4847, 7
        %v4849 = vsub.s32 2, %v4848
        %v4850 = vrot.slane %v4726, %v4849
        %v4851 = vlaneseq
        %v4852 = vshrl.u32 %v4851, 7
        %v4853 = vsub.s32 3, %v4852
        %v4854 = vrot.slane %v4726, %v4853
        %4887 = vset.pattern.permute.xlu0 7
        %4888 = vperm.xlu0 %4887, %v213
        %v4889 = vpop.permute.xlu0 %4888
        %4891 = vset.pattern.permute.xlu0 7
        %4892 = vperm.xlu0 %4891, %v214
        %v4893 = vpop.permute.xlu0 %4892
        %v4895 = vmul.f32 %v4730, %v4889
        %v4896 = vmul.f32 %v4734, %v4889
        %v4897 = vmul.f32 %v4738, %v4889
        %v4898 = vmul.f32 %v4742, %v4889
        %v4899 = vmul.f32 %v4730, %v4893
        %v4900 = vmul.f32 %v4734, %v4893
        %v4901 = vmul.f32 %v4738, %v4893
        %v4902 = vmul.f32 %v4742, %v4893
        %v4903 = vmul.f32 %v4746, %v4889
        %v4904 = vmul.f32 %v4750, %v4889
        %v4905 = vmul.f32 %v4754, %v4889
        %v4906 = vmul.f32 %v4758, %v4889
        %v4907 = vmul.f32 %v4746, %v4893
        %v4908 = vmul.f32 %v4750, %v4893
        %v4909 = vmul.f32 %v4754, %v4893
        %v4910 = vmul.f32 %v4758, %v4893
        %v4911 = vmul.f32 %v4762, %v4889
        %v4912 = vmul.f32 %v4766, %v4889
        %v4913 = vmul.f32 %v4770, %v4889
        %v4914 = vmul.f32 %v4774, %v4889
        %v4915 = vmul.f32 %v4762, %v4893
        %v4916 = vmul.f32 %v4766, %v4893
        %v4917 = vmul.f32 %v4770, %v4893
        %v4918 = vmul.f32 %v4774, %v4893
        %v4919 = vmul.f32 %v4778, %v4889
        %v4920 = vmul.f32 %v4782, %v4889
        %v4921 = vmul.f32 %v4786, %v4889
        %v4922 = vmul.f32 %v4790, %v4889
        %v4923 = vmul.f32 %v4778, %v4893
        %v4924 = vmul.f32 %v4782, %v4893
        %v4925 = vmul.f32 %v4786, %v4893
        %v4926 = vmul.f32 %v4790, %v4893
        %v4927 = vmul.f32 %v4794, %v4889
        %v4928 = vmul.f32 %v4798, %v4889
        %v4929 = vmul.f32 %v4802, %v4889
        %v4930 = vmul.f32 %v4806, %v4889
        %v4931 = vmul.f32 %v4794, %v4893
        %v4932 = vmul.f32 %v4798, %v4893
        %v4933 = vmul.f32 %v4802, %v4893
        %v4934 = vmul.f32 %v4806, %v4893
        %v4935 = vmul.f32 %v4810, %v4889
        %v4936 = vmul.f32 %v4814, %v4889
        %v4937 = vmul.f32 %v4818, %v4889
        %v4938 = vmul.f32 %v4822, %v4889
        %v4939 = vmul.f32 %v4810, %v4893
        %v4940 = vmul.f32 %v4814, %v4893
        %v4941 = vmul.f32 %v4818, %v4893
        %v4942 = vmul.f32 %v4822, %v4893
        %v4943 = vmul.f32 %v4826, %v4889
        %v4944 = vmul.f32 %v4830, %v4889
        %v4945 = vmul.f32 %v4834, %v4889
        %v4946 = vmul.f32 %v4838, %v4889
        %v4947 = vmul.f32 %v4826, %v4893
        %v4948 = vmul.f32 %v4830, %v4893
        %v4949 = vmul.f32 %v4834, %v4893
        %v4950 = vmul.f32 %v4838, %v4893
        %v4951 = vmul.f32 %v4842, %v4889
        %v4952 = vmul.f32 %v4846, %v4889
        %v4953 = vmul.f32 %v4850, %v4889
        %v4954 = vmul.f32 %v4854, %v4889
        %v4955 = vmul.f32 %v4842, %v4893
        %v4956 = vmul.f32 %v4846, %v4893
        %v4957 = vmul.f32 %v4850, %v4893
        %v4958 = vmul.f32 %v4854, %v4893
        %5023 = vrot.lane.b32.xlu0 %v4895, 121
        %v5024 = vpop.permute.xlu0 %5023
        %5025 = vrot.lane.b32.xlu0 %v4896, 121
        %v5026 = vpop.permute.xlu0 %5025
        %5027 = vrot.lane.b32.xlu0 %v4897, 121
        %v5028 = vpop.permute.xlu0 %5027
        %5029 = vrot.lane.b32.xlu0 %v4898, 121
        %v5030 = vpop.permute.xlu0 %5029
        %5031 = vrot.lane.b32.xlu0 %v4899, 121
        %v5032 = vpop.permute.xlu0 %5031
        %5033 = vrot.lane.b32.xlu0 %v4900, 121
        %v5034 = vpop.permute.xlu0 %5033
        %5035 = vrot.lane.b32.xlu0 %v4901, 121
        %v5036 = vpop.permute.xlu0 %5035
        %5037 = vrot.lane.b32.xlu0 %v4902, 121
        %v5038 = vpop.permute.xlu0 %5037
        %5039 = vrot.lane.b32.xlu0 %v4903, 121
        %v5040 = vpop.permute.xlu0 %5039
        %5041 = vrot.lane.b32.xlu0 %v4904, 121
        %v5042 = vpop.permute.xlu0 %5041
        %5043 = vrot.lane.b32.xlu0 %v4905, 121
        %v5044 = vpop.permute.xlu0 %5043
        %5045 = vrot.lane.b32.xlu0 %v4906, 121
        %v5046 = vpop.permute.xlu0 %5045
        %5047 = vrot.lane.b32.xlu0 %v4907, 121
        %v5048 = vpop.permute.xlu0 %5047
        %5049 = vrot.lane.b32.xlu0 %v4908, 121
        %v5050 = vpop.permute.xlu0 %5049
        %5051 = vrot.lane.b32.xlu0 %v4909, 121
        %v5052 = vpop.permute.xlu0 %5051
        %5053 = vrot.lane.b32.xlu0 %v4910, 121
        %v5054 = vpop.permute.xlu0 %5053
        %5055 = vrot.lane.b32.xlu0 %v4911, 121
        %v5056 = vpop.permute.xlu0 %5055
        %5057 = vrot.lane.b32.xlu0 %v4912, 121
        %v5058 = vpop.permute.xlu0 %5057
        %5059 = vrot.lane.b32.xlu0 %v4913, 121
        %v5060 = vpop.permute.xlu0 %5059
        %5061 = vrot.lane.b32.xlu0 %v4914, 121
        %v5062 = vpop.permute.xlu0 %5061
        %5063 = vrot.lane.b32.xlu0 %v4915, 121
        %v5064 = vpop.permute.xlu0 %5063
        %5065 = vrot.lane.b32.xlu0 %v4916, 121
        %v5066 = vpop.permute.xlu0 %5065
        %5067 = vrot.lane.b32.xlu0 %v4917, 121
        %v5068 = vpop.permute.xlu0 %5067
        %5069 = vrot.lane.b32.xlu0 %v4918, 121
        %v5070 = vpop.permute.xlu0 %5069
        %5071 = vrot.lane.b32.xlu0 %v4919, 121
        %v5072 = vpop.permute.xlu0 %5071
        %5073 = vrot.lane.b32.xlu0 %v4920, 121
        %v5074 = vpop.permute.xlu0 %5073
        %5075 = vrot.lane.b32.xlu0 %v4921, 121
        %v5076 = vpop.permute.xlu0 %5075
        %5077 = vrot.lane.b32.xlu0 %v4922, 121
        %v5078 = vpop.permute.xlu0 %5077
        %5079 = vrot.lane.b32.xlu0 %v4923, 121
        %v5080 = vpop.permute.xlu0 %5079
        %5081 = vrot.lane.b32.xlu0 %v4924, 121
        %v5082 = vpop.permute.xlu0 %5081
        %5083 = vrot.lane.b32.xlu0 %v4925, 121
        %v5084 = vpop.permute.xlu0 %5083
        %5085 = vrot.lane.b32.xlu0 %v4926, 121
        %v5086 = vpop.permute.xlu0 %5085
        %5087 = vrot.lane.b32.xlu0 %v4927, 121
        %v5088 = vpop.permute.xlu0 %5087
        %5089 = vrot.lane.b32.xlu0 %v4928, 121
        %v5090 = vpop.permute.xlu0 %5089
        %5091 = vrot.lane.b32.xlu0 %v4929, 121
        %v5092 = vpop.permute.xlu0 %5091
        %5093 = vrot.lane.b32.xlu0 %v4930, 121
        %v5094 = vpop.permute.xlu0 %5093
        %5095 = vrot.lane.b32.xlu0 %v4931, 121
        %v5096 = vpop.permute.xlu0 %5095
        %5097 = vrot.lane.b32.xlu0 %v4932, 121
        %v5098 = vpop.permute.xlu0 %5097
        %5099 = vrot.lane.b32.xlu0 %v4933, 121
        %v5100 = vpop.permute.xlu0 %5099
        %5101 = vrot.lane.b32.xlu0 %v4934, 121
        %v5102 = vpop.permute.xlu0 %5101
        %5103 = vrot.lane.b32.xlu0 %v4935, 121
        %v5104 = vpop.permute.xlu0 %5103
        %5105 = vrot.lane.b32.xlu0 %v4936, 121
        %v5106 = vpop.permute.xlu0 %5105
        %5107 = vrot.lane.b32.xlu0 %v4937, 121
        %v5108 = vpop.permute.xlu0 %5107
        %5109 = vrot.lane.b32.xlu0 %v4938, 121
        %v5110 = vpop.permute.xlu0 %5109
        %5111 = vrot.lane.b32.xlu0 %v4939, 121
        %v5112 = vpop.permute.xlu0 %5111
        %5113 = vrot.lane.b32.xlu0 %v4940, 121
        %v5114 = vpop.permute.xlu0 %5113
        %5115 = vrot.lane.b32.xlu0 %v4941, 121
        %v5116 = vpop.permute.xlu0 %5115
        %5117 = vrot.lane.b32.xlu0 %v4942, 121
        %v5118 = vpop.permute.xlu0 %5117
        %5119 = vrot.lane.b32.xlu0 %v4943, 121
        %v5120 = vpop.permute.xlu0 %5119
        %5121 = vrot.lane.b32.xlu0 %v4944, 121
        %v5122 = vpop.permute.xlu0 %5121
        %5123 = vrot.lane.b32.xlu0 %v4945, 121
        %v5124 = vpop.permute.xlu0 %5123
        %5125 = vrot.lane.b32.xlu0 %v4946, 121
        %v5126 = vpop.permute.xlu0 %5125
        %5127 = vrot.lane.b32.xlu0 %v4947, 121
        %v5128 = vpop.permute.xlu0 %5127
        %5129 = vrot.lane.b32.xlu0 %v4948, 121
        %v5130 = vpop.permute.xlu0 %5129
        %5131 = vrot.lane.b32.xlu0 %v4949, 121
        %v5132 = vpop.permute.xlu0 %5131
        %5133 = vrot.lane.b32.xlu0 %v4950, 121
        %v5134 = vpop.permute.xlu0 %5133
        %5135 = vrot.lane.b32.xlu0 %v4951, 121
        %v5136 = vpop.permute.xlu0 %5135
        %5137 = vrot.lane.b32.xlu0 %v4952, 121
        %v5138 = vpop.permute.xlu0 %5137
        %5139 = vrot.lane.b32.xlu0 %v4953, 121
        %v5140 = vpop.permute.xlu0 %5139
        %5141 = vrot.lane.b32.xlu0 %v4954, 121
        %v5142 = vpop.permute.xlu0 %5141
        %5143 = vrot.lane.b32.xlu0 %v4955, 121
        %v5144 = vpop.permute.xlu0 %5143
        %5145 = vrot.lane.b32.xlu0 %v4956, 121
        %v5146 = vpop.permute.xlu0 %5145
        %5147 = vrot.lane.b32.xlu0 %v4957, 121
        %v5148 = vpop.permute.xlu0 %5147
        %5149 = vrot.lane.b32.xlu0 %v4958, 121
        %v5150 = vpop.permute.xlu0 %5149
        %vm5151 = vcmask 990208
        %v5152 = vsel %vm5151, %v5024, %v5026
        %v5153 = vsel %vm5151, %v5026, %v5028
        %v5154 = vsel %vm5151, %v5028, %v5030
        %v5155 = vsel %vm5151, %v5032, %v5034
        %v5156 = vsel %vm5151, %v5034, %v5036
        %v5157 = vsel %vm5151, %v5036, %v5038
        %v5158 = vsel %vm5151, %v5040, %v5042
        %v5159 = vsel %vm5151, %v5042, %v5044
        %v5160 = vsel %vm5151, %v5044, %v5046
        %v5161 = vsel %vm5151, %v5048, %v5050
        %v5162 = vsel %vm5151, %v5050, %v5052
        %v5163 = vsel %vm5151, %v5052, %v5054
        %v5164 = vsel %vm5151, %v5056, %v5058
        %v5165 = vsel %vm5151, %v5058, %v5060
        %v5166 = vsel %vm5151, %v5060, %v5062
        %v5167 = vsel %vm5151, %v5064, %v5066
        %v5168 = vsel %vm5151, %v5066, %v5068
        %v5169 = vsel %vm5151, %v5068, %v5070
        %v5170 = vsel %vm5151, %v5072, %v5074
        %v5171 = vsel %vm5151, %v5074, %v5076
        %v5172 = vsel %vm5151, %v5076, %v5078
        %v5173 = vsel %vm5151, %v5080, %v5082
        %v5174 = vsel %vm5151, %v5082, %v5084
        %v5175 = vsel %vm5151, %v5084, %v5086
        %v5176 = vsel %vm5151, %v5088, %v5090
        %v5177 = vsel %vm5151, %v5090, %v5092
        %v5178 = vsel %vm5151, %v5092, %v5094
        %v5179 = vsel %vm5151, %v5096, %v5098
        %v5180 = vsel %vm5151, %v5098, %v5100
        %v5181 = vsel %vm5151, %v5100, %v5102
        %v5182 = vsel %vm5151, %v5104, %v5106
        %v5183 = vsel %vm5151, %v5106, %v5108
        %v5184 = vsel %vm5151, %v5108, %v5110
        %v5185 = vsel %vm5151, %v5112, %v5114
        %v5186 = vsel %vm5151, %v5114, %v5116
        %v5187 = vsel %vm5151, %v5116, %v5118
        %v5188 = vsel %vm5151, %v5120, %v5122
        %v5189 = vsel %vm5151, %v5122, %v5124
        %v5190 = vsel %vm5151, %v5124, %v5126
        %v5191 = vsel %vm5151, %v5128, %v5130
        %v5192 = vsel %vm5151, %v5130, %v5132
        %v5193 = vsel %vm5151, %v5132, %v5134
        %v5194 = vsel %vm5151, %v5136, %v5138
        %v5195 = vsel %vm5151, %v5138, %v5140
        %v5196 = vsel %vm5151, %v5140, %v5142
        %v5197 = vsel %vm5151, %v5144, %v5146
        %v5198 = vsel %vm5151, %v5146, %v5148
        %v5199 = vsel %vm5151, %v5148, %v5150
        %v5264 = vadd.f32 %v4587, %v5152
        %v5265 = vadd.f32 %v4588, %v5153
        %v5266 = vadd.f32 %v4589, %v5154
        %v5267 = vadd.f32 %v4590, %v5030
        %v5268 = vadd.f32 %v4591, %v5155
        %v5269 = vadd.f32 %v4592, %v5156
        %v5270 = vadd.f32 %v4593, %v5157
        %v5271 = vadd.f32 %v4594, %v5038
        %v5272 = vadd.f32 %v4595, %v5158
        %v5273 = vadd.f32 %v4596, %v5159
        %v5274 = vadd.f32 %v4597, %v5160
        %v5275 = vadd.f32 %v4598, %v5046
        %v5276 = vadd.f32 %v4599, %v5161
        %v5277 = vadd.f32 %v4600, %v5162
        %v5278 = vadd.f32 %v4601, %v5163
        %v5279 = vadd.f32 %v4602, %v5054
        %v5280 = vadd.f32 %v4603, %v5164
        %v5281 = vadd.f32 %v4604, %v5165
        %v5282 = vadd.f32 %v4605, %v5166
        %v5283 = vadd.f32 %v4606, %v5062
        %v5284 = vadd.f32 %v4607, %v5167
        %v5285 = vadd.f32 %v4608, %v5168
        %v5286 = vadd.f32 %v4609, %v5169
        %v5287 = vadd.f32 %v4610, %v5070
        %v5288 = vadd.f32 %v4611, %v5170
        %v5289 = vadd.f32 %v4612, %v5171
        %v5290 = vadd.f32 %v4613, %v5172
        %v5291 = vadd.f32 %v4614, %v5078
        %v5292 = vadd.f32 %v4615, %v5173
        %v5293 = vadd.f32 %v4616, %v5174
        %v5294 = vadd.f32 %v4617, %v5175
        %v5295 = vadd.f32 %v4618, %v5086
        %v5296 = vadd.f32 %v4619, %v5176
        %v5297 = vadd.f32 %v4620, %v5177
        %v5298 = vadd.f32 %v4621, %v5178
        %v5299 = vadd.f32 %v4622, %v5094
        %v5300 = vadd.f32 %v4623, %v5179
        %v5301 = vadd.f32 %v4624, %v5180
        %v5302 = vadd.f32 %v4625, %v5181
        %v5303 = vadd.f32 %v4626, %v5102
        %v5304 = vadd.f32 %v4627, %v5182
        %v5305 = vadd.f32 %v4628, %v5183
        %v5306 = vadd.f32 %v4629, %v5184
        %v5307 = vadd.f32 %v4630, %v5110
        %v5308 = vadd.f32 %v4631, %v5185
        %v5309 = vadd.f32 %v4632, %v5186
        %v5310 = vadd.f32 %v4633, %v5187
        %v5311 = vadd.f32 %v4634, %v5118
        %v5312 = vadd.f32 %v4635, %v5188
        %v5313 = vadd.f32 %v4636, %v5189
        %v5314 = vadd.f32 %v4637, %v5190
        %v5315 = vadd.f32 %v4638, %v5126
        %v5316 = vadd.f32 %v4639, %v5191
        %v5317 = vadd.f32 %v4640, %v5192
        %v5318 = vadd.f32 %v4641, %v5193
        %v5319 = vadd.f32 %v4642, %v5134
        %v5320 = vadd.f32 %v4643, %v5194
        %v5321 = vadd.f32 %v4644, %v5195
        %v5322 = vadd.f32 %v4645, %v5196
        %v5323 = vadd.f32 %v4646, %v5142
        %v5324 = vadd.f32 %v4647, %v5197
        %v5325 = vadd.f32 %v4648, %v5198
        %v5326 = vadd.f32 %v4649, %v5199
        %v5327 = vadd.f32 %v4650, %v5150
        %v5328 = vld [vmem:[%s204] sm:$0xff]
        %v5329 = vld [vmem:[%s204 + $0x8] sm:$0xff]
        %v5330 = vld [vmem:[%s204 + $0x10] sm:$0xff]
        %v5331 = vld [vmem:[%s204 + $0x18] sm:$0xff]
        %v5332 = vld [vmem:[%s204 + $0x20] sm:$0xff]
        %v5338 = vcombine.low %v5328, %v5329
        %v5339 = vcombine.high %v5328, %v5329
        %v5340 = vcombine.low %v5330, %v5331
        %v5341 = vcombine.high %v5330, %v5331
        %v5342 = vcombine.high %v5332, %v5332
        %v5344 = vunpack.c.l.s4 1966171168
        %v5345 = vunpack.c.0.s8 %v5344
        %v5346 = vlaneseq
        %v5347 = vshrl.u32 %v5346, 7
        %v5348 = vsub.s32 %v5345, %v5347
        %v5349 = vrot.slane %v5338, %v5348
        %v5351 = vunpack.c.l.s4 1966171168
        %v5352 = vunpack.c.0.s8 %v5351
        %v5353 = vlaneseq
        %v5354 = vshrl.u32 %v5353, 7
        %v5355 = vsub.s32 %v5352, %v5354
        %v5356 = vrot.slane %v5339, %v5355
        %v5358 = vunpack.c.l.s4 1966171168
        %v5359 = vunpack.c.0.s8 %v5358
        %v5360 = vlaneseq
        %v5361 = vshrl.u32 %v5360, 7
        %v5362 = vsub.s32 %v5359, %v5361
        %v5363 = vrot.slane %v5340, %v5362
        %v5365 = vunpack.c.l.s4 1966171168
        %v5366 = vunpack.c.0.s8 %v5365
        %v5367 = vlaneseq
        %v5368 = vshrl.u32 %v5367, 7
        %v5369 = vsub.s32 %v5366, %v5368
        %v5370 = vrot.slane %v5341, %v5369
        %v5372 = vunpack.c.l.s4 1966171168
        %v5373 = vunpack.c.0.s8 %v5372
        %v5374 = vlaneseq
        %v5375 = vshrl.u32 %v5374, 7
        %v5376 = vsub.s32 %v5373, %v5375
        %v5377 = vrot.slane %v5332, %v5376
        %v5379 = vunpack.c.l.s4 1966171168
        %v5380 = vunpack.c.0.s8 %v5379
        %v5381 = vlaneseq
        %v5382 = vshrl.u32 %v5381, 7
        %v5383 = vsub.s32 %v5380, %v5382
        %v5384 = vrot.slane %v5342, %v5383
        %v5385 = vcombine.low %v5349, %v5363
        %v5386 = vcombine.high %v5349, %v5363
        %v5387 = vcombine.low %v5356, %v5370
        %v5388 = vcombine.high %v5356, %v5370
        %v5389 = vcombine.high %v5377, %v5377
        %v5390 = vcombine.high %v5384, %v5384
        %v5392 = vunpack.c.l.s4 1966171168
        %v5393 = vunpack.c.0.s8 %v5392
        %v5394 = vlaneseq
        %v5395 = vshrl.u32 %v5394, 7
        %v5396 = vsub.s32 %v5393, %v5395
        %v5397 = vrot.slane %v5385, %v5396
        %v5399 = vunpack.c.l.s4 1966171168
        %v5400 = vunpack.c.0.s8 %v5399
        %v5401 = vlaneseq
        %v5402 = vshrl.u32 %v5401, 7
        %v5403 = vsub.s32 %v5400, %v5402
        %v5404 = vrot.slane %v5387, %v5403
        %v5406 = vunpack.c.l.s4 1966171168
        %v5407 = vunpack.c.0.s8 %v5406
        %v5408 = vlaneseq
        %v5409 = vshrl.u32 %v5408, 7
        %v5410 = vsub.s32 %v5407, %v5409
        %v5411 = vrot.slane %v5386, %v5410
        %v5413 = vunpack.c.l.s4 1966171168
        %v5414 = vunpack.c.0.s8 %v5413
        %v5415 = vlaneseq
        %v5416 = vshrl.u32 %v5415, 7
        %v5417 = vsub.s32 %v5414, %v5416
        %v5418 = vrot.slane %v5388, %v5417
        %v5420 = vunpack.c.l.s4 1966171168
        %v5421 = vunpack.c.0.s8 %v5420
        %v5422 = vlaneseq
        %v5423 = vshrl.u32 %v5422, 7
        %v5424 = vsub.s32 %v5421, %v5423
        %v5425 = vrot.slane %v5377, %v5424
        %v5427 = vunpack.c.l.s4 1966171168
        %v5428 = vunpack.c.0.s8 %v5427
        %v5429 = vlaneseq
        %v5430 = vshrl.u32 %v5429, 7
        %v5431 = vsub.s32 %v5428, %v5430
        %v5432 = vrot.slane %v5384, %v5431
        %v5434 = vunpack.c.l.s4 1966171168
        %v5435 = vunpack.c.0.s8 %v5434
        %v5436 = vlaneseq
        %v5437 = vshrl.u32 %v5436, 7
        %v5438 = vsub.s32 %v5435, %v5437
        %v5439 = vrot.slane %v5389, %v5438
        %v5441 = vunpack.c.l.s4 1966171168
        %v5442 = vunpack.c.0.s8 %v5441
        %v5443 = vlaneseq
        %v5444 = vshrl.u32 %v5443, 7
        %v5445 = vsub.s32 %v5442, %v5444
        %v5446 = vrot.slane %v5390, %v5445
        %v5447 = vcombine.low %v5397, %v5425
        %v5448 = vcombine.high %v5397, %v5425
        %v5449 = vcombine.low %v5404, %v5432
        %v5450 = vcombine.high %v5404, %v5432
        %v5451 = vcombine.low %v5411, %v5439
        %v5452 = vcombine.high %v5411, %v5439
        %v5453 = vcombine.low %v5418, %v5446
        %v5454 = vcombine.high %v5418, %v5446
        %v5455 = vlaneseq
        %v5456 = vshrl.u32 %v5455, 7
        %v5457 = vsub.s32 0, %v5456
        %v5458 = vrot.slane %v5447, %v5457
        %v5459 = vlaneseq
        %v5460 = vshrl.u32 %v5459, 7
        %v5461 = vsub.s32 1, %v5460
        %v5462 = vrot.slane %v5447, %v5461
        %v5463 = vlaneseq
        %v5464 = vshrl.u32 %v5463, 7
        %v5465 = vsub.s32 2, %v5464
        %v5466 = vrot.slane %v5447, %v5465
        %v5467 = vlaneseq
        %v5468 = vshrl.u32 %v5467, 7
        %v5469 = vsub.s32 3, %v5468
        %v5470 = vrot.slane %v5447, %v5469
        %v5471 = vlaneseq
        %v5472 = vshrl.u32 %v5471, 7
        %v5473 = vsub.s32 4, %v5472
        %v5474 = vrot.slane %v5447, %v5473
        %v5475 = vlaneseq
        %v5476 = vshrl.u32 %v5475, 7
        %v5477 = vsub.s32 0, %v5476
        %v5478 = vrot.slane %v5451, %v5477
        %v5479 = vlaneseq
        %v5480 = vshrl.u32 %v5479, 7
        %v5481 = vsub.s32 1, %v5480
        %v5482 = vrot.slane %v5451, %v5481
        %v5483 = vlaneseq
        %v5484 = vshrl.u32 %v5483, 7
        %v5485 = vsub.s32 2, %v5484
        %v5486 = vrot.slane %v5451, %v5485
        %v5487 = vlaneseq
        %v5488 = vshrl.u32 %v5487, 7
        %v5489 = vsub.s32 3, %v5488
        %v5490 = vrot.slane %v5451, %v5489
        %v5491 = vlaneseq
        %v5492 = vshrl.u32 %v5491, 7
        %v5493 = vsub.s32 4, %v5492
        %v5494 = vrot.slane %v5451, %v5493
        %v5495 = vlaneseq
        %v5496 = vshrl.u32 %v5495, 7
        %v5497 = vsub.s32 0, %v5496
        %v5498 = vrot.slane %v5448, %v5497
        %v5499 = vlaneseq
        %v5500 = vshrl.u32 %v5499, 7
        %v5501 = vsub.s32 1, %v5500
        %v5502 = vrot.slane %v5448, %v5501
        %v5503 = vlaneseq
        %v5504 = vshrl.u32 %v5503, 7
        %v5505 = vsub.s32 2, %v5504
        %v5506 = vrot.slane %v5448, %v5505
        %v5507 = vlaneseq
        %v5508 = vshrl.u32 %v5507, 7
        %v5509 = vsub.s32 3, %v5508
        %v5510 = vrot.slane %v5448, %v5509
        %v5511 = vlaneseq
        %v5512 = vshrl.u32 %v5511, 7
        %v5513 = vsub.s32 4, %v5512
        %v5514 = vrot.slane %v5448, %v5513
        %v5515 = vlaneseq
        %v5516 = vshrl.u32 %v5515, 7
        %v5517 = vsub.s32 0, %v5516
        %v5518 = vrot.slane %v5452, %v5517
        %v5519 = vlaneseq
        %v5520 = vshrl.u32 %v5519, 7
        %v5521 = vsub.s32 1, %v5520
        %v5522 = vrot.slane %v5452, %v5521
        %v5523 = vlaneseq
        %v5524 = vshrl.u32 %v5523, 7
        %v5525 = vsub.s32 2, %v5524
        %v5526 = vrot.slane %v5452, %v5525
        %v5527 = vlaneseq
        %v5528 = vshrl.u32 %v5527, 7
        %v5529 = vsub.s32 3, %v5528
        %v5530 = vrot.slane %v5452, %v5529
        %v5531 = vlaneseq
        %v5532 = vshrl.u32 %v5531, 7
        %v5533 = vsub.s32 4, %v5532
        %v5534 = vrot.slane %v5452, %v5533
        %v5535 = vlaneseq
        %v5536 = vshrl.u32 %v5535, 7
        %v5537 = vsub.s32 0, %v5536
        %v5538 = vrot.slane %v5449, %v5537
        %v5539 = vlaneseq
        %v5540 = vshrl.u32 %v5539, 7
        %v5541 = vsub.s32 1, %v5540
        %v5542 = vrot.slane %v5449, %v5541
        %v5543 = vlaneseq
        %v5544 = vshrl.u32 %v5543, 7
        %v5545 = vsub.s32 2, %v5544
        %v5546 = vrot.slane %v5449, %v5545
        %v5547 = vlaneseq
        %v5548 = vshrl.u32 %v5547, 7
        %v5549 = vsub.s32 3, %v5548
        %v5550 = vrot.slane %v5449, %v5549
        %v5551 = vlaneseq
        %v5552 = vshrl.u32 %v5551, 7
        %v5553 = vsub.s32 4, %v5552
        %v5554 = vrot.slane %v5449, %v5553
        %v5555 = vlaneseq
        %v5556 = vshrl.u32 %v5555, 7
        %v5557 = vsub.s32 0, %v5556
        %v5558 = vrot.slane %v5453, %v5557
        %v5559 = vlaneseq
        %v5560 = vshrl.u32 %v5559, 7
        %v5561 = vsub.s32 1, %v5560
        %v5562 = vrot.slane %v5453, %v5561
        %v5563 = vlaneseq
        %v5564 = vshrl.u32 %v5563, 7
        %v5565 = vsub.s32 2, %v5564
        %v5566 = vrot.slane %v5453, %v5565
        %v5567 = vlaneseq
        %v5568 = vshrl.u32 %v5567, 7
        %v5569 = vsub.s32 3, %v5568
        %v5570 = vrot.slane %v5453, %v5569
        %v5571 = vlaneseq
        %v5572 = vshrl.u32 %v5571, 7
        %v5573 = vsub.s32 4, %v5572
        %v5574 = vrot.slane %v5453, %v5573
        %v5575 = vlaneseq
        %v5576 = vshrl.u32 %v5575, 7
        %v5577 = vsub.s32 0, %v5576
        %v5578 = vrot.slane %v5450, %v5577
        %v5579 = vlaneseq
        %v5580 = vshrl.u32 %v5579, 7
        %v5581 = vsub.s32 1, %v5580
        %v5582 = vrot.slane %v5450, %v5581
        %v5583 = vlaneseq
        %v5584 = vshrl.u32 %v5583, 7
        %v5585 = vsub.s32 2, %v5584
        %v5586 = vrot.slane %v5450, %v5585
        %v5587 = vlaneseq
        %v5588 = vshrl.u32 %v5587, 7
        %v5589 = vsub.s32 3, %v5588
        %v5590 = vrot.slane %v5450, %v5589
        %v5591 = vlaneseq
        %v5592 = vshrl.u32 %v5591, 7
        %v5593 = vsub.s32 4, %v5592
        %v5594 = vrot.slane %v5450, %v5593
        %v5595 = vlaneseq
        %v5596 = vshrl.u32 %v5595, 7
        %v5597 = vsub.s32 0, %v5596
        %v5598 = vrot.slane %v5454, %v5597
        %v5599 = vlaneseq
        %v5600 = vshrl.u32 %v5599, 7
        %v5601 = vsub.s32 1, %v5600
        %v5602 = vrot.slane %v5454, %v5601
        %v5603 = vlaneseq
        %v5604 = vshrl.u32 %v5603, 7
        %v5605 = vsub.s32 2, %v5604
        %v5606 = vrot.slane %v5454, %v5605
        %v5607 = vlaneseq
        %v5608 = vshrl.u32 %v5607, 7
        %v5609 = vsub.s32 3, %v5608
        %v5610 = vrot.slane %v5454, %v5609
        %v5611 = vlaneseq
        %v5612 = vshrl.u32 %v5611, 7
        %v5613 = vsub.s32 4, %v5612
        %v5614 = vrot.slane %v5454, %v5613
        %5655 = vset.pattern.permute.xlu0 8
        %5656 = vperm.xlu0 %5655, %v213
        %v5657 = vpop.permute.xlu0 %5656
        %5659 = vset.pattern.permute.xlu0 8
        %5660 = vperm.xlu0 %5659, %v214
        %v5661 = vpop.permute.xlu0 %5660
        %v5663 = vmul.f32 %v5458, %v5657
        %v5664 = vmul.f32 %v5462, %v5657
        %v5665 = vmul.f32 %v5466, %v5657
        %v5666 = vmul.f32 %v5470, %v5657
        %v5667 = vmul.f32 %v5474, %v5657
        %v5668 = vmul.f32 %v5458, %v5661
        %v5669 = vmul.f32 %v5462, %v5661
        %v5670 = vmul.f32 %v5466, %v5661
        %v5671 = vmul.f32 %v5470, %v5661
        %v5672 = vmul.f32 %v5474, %v5661
        %v5673 = vmul.f32 %v5478, %v5657
        %v5674 = vmul.f32 %v5482, %v5657
        %v5675 = vmul.f32 %v5486, %v5657
        %v5676 = vmul.f32 %v5490, %v5657
        %v5677 = vmul.f32 %v5494, %v5657
        %v5678 = vmul.f32 %v5478, %v5661
        %v5679 = vmul.f32 %v5482, %v5661
        %v5680 = vmul.f32 %v5486, %v5661
        %v5681 = vmul.f32 %v5490, %v5661
        %v5682 = vmul.f32 %v5494, %v5661
        %v5683 = vmul.f32 %v5498, %v5657
        %v5684 = vmul.f32 %v5502, %v5657
        %v5685 = vmul.f32 %v5506, %v5657
        %v5686 = vmul.f32 %v5510, %v5657
        %v5687 = vmul.f32 %v5514, %v5657
        %v5688 = vmul.f32 %v5498, %v5661
        %v5689 = vmul.f32 %v5502, %v5661
        %v5690 = vmul.f32 %v5506, %v5661
        %v5691 = vmul.f32 %v5510, %v5661
        %v5692 = vmul.f32 %v5514, %v5661
        %v5693 = vmul.f32 %v5518, %v5657
        %v5694 = vmul.f32 %v5522, %v5657
        %v5695 = vmul.f32 %v5526, %v5657
        %v5696 = vmul.f32 %v5530, %v5657
        %v5697 = vmul.f32 %v5534, %v5657
        %v5698 = vmul.f32 %v5518, %v5661
        %v5699 = vmul.f32 %v5522, %v5661
        %v5700 = vmul.f32 %v5526, %v5661
        %v5701 = vmul.f32 %v5530, %v5661
        %v5702 = vmul.f32 %v5534, %v5661
        %v5703 = vmul.f32 %v5538, %v5657
        %v5704 = vmul.f32 %v5542, %v5657
        %v5705 = vmul.f32 %v5546, %v5657
        %v5706 = vmul.f32 %v5550, %v5657
        %v5707 = vmul.f32 %v5554, %v5657
        %v5708 = vmul.f32 %v5538, %v5661
        %v5709 = vmul.f32 %v5542, %v5661
        %v5710 = vmul.f32 %v5546, %v5661
        %v5711 = vmul.f32 %v5550, %v5661
        %v5712 = vmul.f32 %v5554, %v5661
        %v5713 = vmul.f32 %v5558, %v5657
        %v5714 = vmul.f32 %v5562, %v5657
        %v5715 = vmul.f32 %v5566, %v5657
        %v5716 = vmul.f32 %v5570, %v5657
        %v5717 = vmul.f32 %v5574, %v5657
        %v5718 = vmul.f32 %v5558, %v5661
        %v5719 = vmul.f32 %v5562, %v5661
        %v5720 = vmul.f32 %v5566, %v5661
        %v5721 = vmul.f32 %v5570, %v5661
        %v5722 = vmul.f32 %v5574, %v5661
        %v5723 = vmul.f32 %v5578, %v5657
        %v5724 = vmul.f32 %v5582, %v5657
        %v5725 = vmul.f32 %v5586, %v5657
        %v5726 = vmul.f32 %v5590, %v5657
        %v5727 = vmul.f32 %v5594, %v5657
        %v5728 = vmul.f32 %v5578, %v5661
        %v5729 = vmul.f32 %v5582, %v5661
        %v5730 = vmul.f32 %v5586, %v5661
        %v5731 = vmul.f32 %v5590, %v5661
        %v5732 = vmul.f32 %v5594, %v5661
        %v5733 = vmul.f32 %v5598, %v5657
        %v5734 = vmul.f32 %v5602, %v5657
        %v5735 = vmul.f32 %v5606, %v5657
        %v5736 = vmul.f32 %v5610, %v5657
        %v5737 = vmul.f32 %v5614, %v5657
        %v5738 = vmul.f32 %v5598, %v5661
        %v5739 = vmul.f32 %v5602, %v5661
        %v5740 = vmul.f32 %v5606, %v5661
        %v5741 = vmul.f32 %v5610, %v5661
        %v5742 = vmul.f32 %v5614, %v5661
        %5823 = vrot.lane.b32.xlu0 %v5663, 120
        %v5824 = vpop.permute.xlu0 %5823
        %5825 = vrot.lane.b32.xlu0 %v5664, 120
        %v5826 = vpop.permute.xlu0 %5825
        %5827 = vrot.lane.b32.xlu0 %v5665, 120
        %v5828 = vpop.permute.xlu0 %5827
        %5829 = vrot.lane.b32.xlu0 %v5666, 120
        %v5830 = vpop.permute.xlu0 %5829
        %5831 = vrot.lane.b32.xlu0 %v5667, 120
        %v5832 = vpop.permute.xlu0 %5831
        %5833 = vrot.lane.b32.xlu0 %v5668, 120
        %v5834 = vpop.permute.xlu0 %5833
        %5835 = vrot.lane.b32.xlu0 %v5669, 120
        %v5836 = vpop.permute.xlu0 %5835
        %5837 = vrot.lane.b32.xlu0 %v5670, 120
        %v5838 = vpop.permute.xlu0 %5837
        %5839 = vrot.lane.b32.xlu0 %v5671, 120
        %v5840 = vpop.permute.xlu0 %5839
        %5841 = vrot.lane.b32.xlu0 %v5672, 120
        %v5842 = vpop.permute.xlu0 %5841
        %5843 = vrot.lane.b32.xlu0 %v5673, 120
        %v5844 = vpop.permute.xlu0 %5843
        %5845 = vrot.lane.b32.xlu0 %v5674, 120
        %v5846 = vpop.permute.xlu0 %5845
        %5847 = vrot.lane.b32.xlu0 %v5675, 120
        %v5848 = vpop.permute.xlu0 %5847
        %5849 = vrot.lane.b32.xlu0 %v5676, 120
        %v5850 = vpop.permute.xlu0 %5849
        %5851 = vrot.lane.b32.xlu0 %v5677, 120
        %v5852 = vpop.permute.xlu0 %5851
        %5853 = vrot.lane.b32.xlu0 %v5678, 120
        %v5854 = vpop.permute.xlu0 %5853
        %5855 = vrot.lane.b32.xlu0 %v5679, 120
        %v5856 = vpop.permute.xlu0 %5855
        %5857 = vrot.lane.b32.xlu0 %v5680, 120
        %v5858 = vpop.permute.xlu0 %5857
        %5859 = vrot.lane.b32.xlu0 %v5681, 120
        %v5860 = vpop.permute.xlu0 %5859
        %5861 = vrot.lane.b32.xlu0 %v5682, 120
        %v5862 = vpop.permute.xlu0 %5861
        %5863 = vrot.lane.b32.xlu0 %v5683, 120
        %v5864 = vpop.permute.xlu0 %5863
        %5865 = vrot.lane.b32.xlu0 %v5684, 120
        %v5866 = vpop.permute.xlu0 %5865
        %5867 = vrot.lane.b32.xlu0 %v5685, 120
        %v5868 = vpop.permute.xlu0 %5867
        %5869 = vrot.lane.b32.xlu0 %v5686, 120
        %v5870 = vpop.permute.xlu0 %5869
        %5871 = vrot.lane.b32.xlu0 %v5687, 120
        %v5872 = vpop.permute.xlu0 %5871
        %5873 = vrot.lane.b32.xlu0 %v5688, 120
        %v5874 = vpop.permute.xlu0 %5873
        %5875 = vrot.lane.b32.xlu0 %v5689, 120
        %v5876 = vpop.permute.xlu0 %5875
        %5877 = vrot.lane.b32.xlu0 %v5690, 120
        %v5878 = vpop.permute.xlu0 %5877
        %5879 = vrot.lane.b32.xlu0 %v5691, 120
        %v5880 = vpop.permute.xlu0 %5879
        %5881 = vrot.lane.b32.xlu0 %v5692, 120
        %v5882 = vpop.permute.xlu0 %5881
        %5883 = vrot.lane.b32.xlu0 %v5693, 120
        %v5884 = vpop.permute.xlu0 %5883
        %5885 = vrot.lane.b32.xlu0 %v5694, 120
        %v5886 = vpop.permute.xlu0 %5885
        %5887 = vrot.lane.b32.xlu0 %v5695, 120
        %v5888 = vpop.permute.xlu0 %5887
        %5889 = vrot.lane.b32.xlu0 %v5696, 120
        %v5890 = vpop.permute.xlu0 %5889
        %5891 = vrot.lane.b32.xlu0 %v5697, 120
        %v5892 = vpop.permute.xlu0 %5891
        %5893 = vrot.lane.b32.xlu0 %v5698, 120
        %v5894 = vpop.permute.xlu0 %5893
        %5895 = vrot.lane.b32.xlu0 %v5699, 120
        %v5896 = vpop.permute.xlu0 %5895
        %5897 = vrot.lane.b32.xlu0 %v5700, 120
        %v5898 = vpop.permute.xlu0 %5897
        %5899 = vrot.lane.b32.xlu0 %v5701, 120
        %v5900 = vpop.permute.xlu0 %5899
        %5901 = vrot.lane.b32.xlu0 %v5702, 120
        %v5902 = vpop.permute.xlu0 %5901
        %5903 = vrot.lane.b32.xlu0 %v5703, 120
        %v5904 = vpop.permute.xlu0 %5903
        %5905 = vrot.lane.b32.xlu0 %v5704, 120
        %v5906 = vpop.permute.xlu0 %5905
        %5907 = vrot.lane.b32.xlu0 %v5705, 120
        %v5908 = vpop.permute.xlu0 %5907
        %5909 = vrot.lane.b32.xlu0 %v5706, 120
        %v5910 = vpop.permute.xlu0 %5909
        %5911 = vrot.lane.b32.xlu0 %v5707, 120
        %v5912 = vpop.permute.xlu0 %5911
        %5913 = vrot.lane.b32.xlu0 %v5708, 120
        %v5914 = vpop.permute.xlu0 %5913
        %5915 = vrot.lane.b32.xlu0 %v5709, 120
        %v5916 = vpop.permute.xlu0 %5915
        %5917 = vrot.lane.b32.xlu0 %v5710, 120
        %v5918 = vpop.permute.xlu0 %5917
        %5919 = vrot.lane.b32.xlu0 %v5711, 120
        %v5920 = vpop.permute.xlu0 %5919
        %5921 = vrot.lane.b32.xlu0 %v5712, 120
        %v5922 = vpop.permute.xlu0 %5921
        %5923 = vrot.lane.b32.xlu0 %v5713, 120
        %v5924 = vpop.permute.xlu0 %5923
        %5925 = vrot.lane.b32.xlu0 %v5714, 120
        %v5926 = vpop.permute.xlu0 %5925
        %5927 = vrot.lane.b32.xlu0 %v5715, 120
        %v5928 = vpop.permute.xlu0 %5927
        %5929 = vrot.lane.b32.xlu0 %v5716, 120
        %v5930 = vpop.permute.xlu0 %5929
        %5931 = vrot.lane.b32.xlu0 %v5717, 120
        %v5932 = vpop.permute.xlu0 %5931
        %5933 = vrot.lane.b32.xlu0 %v5718, 120
        %v5934 = vpop.permute.xlu0 %5933
        %5935 = vrot.lane.b32.xlu0 %v5719, 120
        %v5936 = vpop.permute.xlu0 %5935
        %5937 = vrot.lane.b32.xlu0 %v5720, 120
        %v5938 = vpop.permute.xlu0 %5937
        %5939 = vrot.lane.b32.xlu0 %v5721, 120
        %v5940 = vpop.permute.xlu0 %5939
        %5941 = vrot.lane.b32.xlu0 %v5722, 120
        %v5942 = vpop.permute.xlu0 %5941
        %5943 = vrot.lane.b32.xlu0 %v5723, 120
        %v5944 = vpop.permute.xlu0 %5943
        %5945 = vrot.lane.b32.xlu0 %v5724, 120
        %v5946 = vpop.permute.xlu0 %5945
        %5947 = vrot.lane.b32.xlu0 %v5725, 120
        %v5948 = vpop.permute.xlu0 %5947
        %5949 = vrot.lane.b32.xlu0 %v5726, 120
        %v5950 = vpop.permute.xlu0 %5949
        %5951 = vrot.lane.b32.xlu0 %v5727, 120
        %v5952 = vpop.permute.xlu0 %5951
        %5953 = vrot.lane.b32.xlu0 %v5728, 120
        %v5954 = vpop.permute.xlu0 %5953
        %5955 = vrot.lane.b32.xlu0 %v5729, 120
        %v5956 = vpop.permute.xlu0 %5955
        %5957 = vrot.lane.b32.xlu0 %v5730, 120
        %v5958 = vpop.permute.xlu0 %5957
        %5959 = vrot.lane.b32.xlu0 %v5731, 120
        %v5960 = vpop.permute.xlu0 %5959
        %5961 = vrot.lane.b32.xlu0 %v5732, 120
        %v5962 = vpop.permute.xlu0 %5961
        %5963 = vrot.lane.b32.xlu0 %v5733, 120
        %v5964 = vpop.permute.xlu0 %5963
        %5965 = vrot.lane.b32.xlu0 %v5734, 120
        %v5966 = vpop.permute.xlu0 %5965
        %5967 = vrot.lane.b32.xlu0 %v5735, 120
        %v5968 = vpop.permute.xlu0 %5967
        %5969 = vrot.lane.b32.xlu0 %v5736, 120
        %v5970 = vpop.permute.xlu0 %5969
        %5971 = vrot.lane.b32.xlu0 %v5737, 120
        %v5972 = vpop.permute.xlu0 %5971
        %5973 = vrot.lane.b32.xlu0 %v5738, 120
        %v5974 = vpop.permute.xlu0 %5973
        %5975 = vrot.lane.b32.xlu0 %v5739, 120
        %v5976 = vpop.permute.xlu0 %5975
        %5977 = vrot.lane.b32.xlu0 %v5740, 120
        %v5978 = vpop.permute.xlu0 %5977
        %5979 = vrot.lane.b32.xlu0 %v5741, 120
        %v5980 = vpop.permute.xlu0 %5979
        %5981 = vrot.lane.b32.xlu0 %v5742, 120
        %v5982 = vpop.permute.xlu0 %5981
        %vm5983 = vcmask 982016
        %v5984 = vsel %vm5983, %v5824, %v5826
        %v5985 = vsel %vm5983, %v5826, %v5828
        %v5986 = vsel %vm5983, %v5828, %v5830
        %v5987 = vsel %vm5983, %v5830, %v5832
        %v5988 = vsel %vm5983, %v5834, %v5836
        %v5989 = vsel %vm5983, %v5836, %v5838
        %v5990 = vsel %vm5983, %v5838, %v5840
        %v5991 = vsel %vm5983, %v5840, %v5842
        %v5992 = vsel %vm5983, %v5844, %v5846
        %v5993 = vsel %vm5983, %v5846, %v5848
        %v5994 = vsel %vm5983, %v5848, %v5850
        %v5995 = vsel %vm5983, %v5850, %v5852
        %v5996 = vsel %vm5983, %v5854, %v5856
        %v5997 = vsel %vm5983, %v5856, %v5858
        %v5998 = vsel %vm5983, %v5858, %v5860
        %v5999 = vsel %vm5983, %v5860, %v5862
        %v6000 = vsel %vm5983, %v5864, %v5866
        %v6001 = vsel %vm5983, %v5866, %v5868
        %v6002 = vsel %vm5983, %v5868, %v5870
        %v6003 = vsel %vm5983, %v5870, %v5872
        %v6004 = vsel %vm5983, %v5874, %v5876
        %v6005 = vsel %vm5983, %v5876, %v5878
        %v6006 = vsel %vm5983, %v5878, %v5880
        %v6007 = vsel %vm5983, %v5880, %v5882
        %v6008 = vsel %vm5983, %v5884, %v5886
        %v6009 = vsel %vm5983, %v5886, %v5888
        %v6010 = vsel %vm5983, %v5888, %v5890
        %v6011 = vsel %vm5983, %v5890, %v5892
        %v6012 = vsel %vm5983, %v5894, %v5896
        %v6013 = vsel %vm5983, %v5896, %v5898
        %v6014 = vsel %vm5983, %v5898, %v5900
        %v6015 = vsel %vm5983, %v5900, %v5902
        %v6016 = vsel %vm5983, %v5904, %v5906
        %v6017 = vsel %vm5983, %v5906, %v5908
        %v6018 = vsel %vm5983, %v5908, %v5910
        %v6019 = vsel %vm5983, %v5910, %v5912
        %v6020 = vsel %vm5983, %v5914, %v5916
        %v6021 = vsel %vm5983, %v5916, %v5918
        %v6022 = vsel %vm5983, %v5918, %v5920
        %v6023 = vsel %vm5983, %v5920, %v5922
        %v6024 = vsel %vm5983, %v5924, %v5926
        %v6025 = vsel %vm5983, %v5926, %v5928
        %v6026 = vsel %vm5983, %v5928, %v5930
        %v6027 = vsel %vm5983, %v5930, %v5932
        %v6028 = vsel %vm5983, %v5934, %v5936
        %v6029 = vsel %vm5983, %v5936, %v5938
        %v6030 = vsel %vm5983, %v5938, %v5940
        %v6031 = vsel %vm5983, %v5940, %v5942
        %v6032 = vsel %vm5983, %v5944, %v5946
        %v6033 = vsel %vm5983, %v5946, %v5948
        %v6034 = vsel %vm5983, %v5948, %v5950
        %v6035 = vsel %vm5983, %v5950, %v5952
        %v6036 = vsel %vm5983, %v5954, %v5956
        %v6037 = vsel %vm5983, %v5956, %v5958
        %v6038 = vsel %vm5983, %v5958, %v5960
        %v6039 = vsel %vm5983, %v5960, %v5962
        %v6040 = vsel %vm5983, %v5964, %v5966
        %v6041 = vsel %vm5983, %v5966, %v5968
        %v6042 = vsel %vm5983, %v5968, %v5970
        %v6043 = vsel %vm5983, %v5970, %v5972
        %v6044 = vsel %vm5983, %v5974, %v5976
        %v6045 = vsel %vm5983, %v5976, %v5978
        %v6046 = vsel %vm5983, %v5978, %v5980
        %v6047 = vsel %vm5983, %v5980, %v5982
        %v6112 = vadd.f32 %v5264, %v5984
        %v6113 = vadd.f32 %v5265, %v5985
        %v6114 = vadd.f32 %v5266, %v5986
        %v6115 = vadd.f32 %v5267, %v5987
        %v6116 = vadd.f32 %v5268, %v5988
        %v6117 = vadd.f32 %v5269, %v5989
        %v6118 = vadd.f32 %v5270, %v5990
        %v6119 = vadd.f32 %v5271, %v5991
        %v6120 = vadd.f32 %v5272, %v5992
        %v6121 = vadd.f32 %v5273, %v5993
        %v6122 = vadd.f32 %v5274, %v5994
        %v6123 = vadd.f32 %v5275, %v5995
        %v6124 = vadd.f32 %v5276, %v5996
        %v6125 = vadd.f32 %v5277, %v5997
        %v6126 = vadd.f32 %v5278, %v5998
        %v6127 = vadd.f32 %v5279, %v5999
        %v6128 = vadd.f32 %v5280, %v6000
        %v6129 = vadd.f32 %v5281, %v6001
        %v6130 = vadd.f32 %v5282, %v6002
        %v6131 = vadd.f32 %v5283, %v6003
        %v6132 = vadd.f32 %v5284, %v6004
        %v6133 = vadd.f32 %v5285, %v6005
        %v6134 = vadd.f32 %v5286, %v6006
        %v6135 = vadd.f32 %v5287, %v6007
        %v6136 = vadd.f32 %v5288, %v6008
        %v6137 = vadd.f32 %v5289, %v6009
        %v6138 = vadd.f32 %v5290, %v6010
        %v6139 = vadd.f32 %v5291, %v6011
        %v6140 = vadd.f32 %v5292, %v6012
        %v6141 = vadd.f32 %v5293, %v6013
        %v6142 = vadd.f32 %v5294, %v6014
        %v6143 = vadd.f32 %v5295, %v6015
        %v6144 = vadd.f32 %v5296, %v6016
        %v6145 = vadd.f32 %v5297, %v6017
        %v6146 = vadd.f32 %v5298, %v6018
        %v6147 = vadd.f32 %v5299, %v6019
        %v6148 = vadd.f32 %v5300, %v6020
        %v6149 = vadd.f32 %v5301, %v6021
        %v6150 = vadd.f32 %v5302, %v6022
        %v6151 = vadd.f32 %v5303, %v6023
        %v6152 = vadd.f32 %v5304, %v6024
        %v6153 = vadd.f32 %v5305, %v6025
        %v6154 = vadd.f32 %v5306, %v6026
        %v6155 = vadd.f32 %v5307, %v6027
        %v6156 = vadd.f32 %v5308, %v6028
        %v6157 = vadd.f32 %v5309, %v6029
        %v6158 = vadd.f32 %v5310, %v6030
        %v6159 = vadd.f32 %v5311, %v6031
        %v6160 = vadd.f32 %v5312, %v6032
        %v6161 = vadd.f32 %v5313, %v6033
        %v6162 = vadd.f32 %v5314, %v6034
        %v6163 = vadd.f32 %v5315, %v6035
        %v6164 = vadd.f32 %v5316, %v6036
        %v6165 = vadd.f32 %v5317, %v6037
        %v6166 = vadd.f32 %v5318, %v6038
        %v6167 = vadd.f32 %v5319, %v6039
        %v6168 = vadd.f32 %v5320, %v6040
        %v6169 = vadd.f32 %v5321, %v6041
        %v6170 = vadd.f32 %v5322, %v6042
        %v6171 = vadd.f32 %v5323, %v6043
        %v6172 = vadd.f32 %v5324, %v6044
        %v6173 = vadd.f32 %v5325, %v6045
        %v6174 = vadd.f32 %v5326, %v6046
        %v6175 = vadd.f32 %v5327, %v6047
        %v6176 = vld [vmem:[%s204] sm:$0xff]
        %v6177 = vld [vmem:[%s204 + $0x8] sm:$0xff]
        %v6178 = vld [vmem:[%s204 + $0x10] sm:$0xff]
        %v6179 = vld [vmem:[%s204 + $0x18] sm:$0xff]
        %v6180 = vld [vmem:[%s204 + $0x20] sm:$0xff]
        %v6186 = vcombine.low %v6176, %v6177
        %v6187 = vcombine.high %v6176, %v6177
        %v6188 = vcombine.low %v6178, %v6179
        %v6189 = vcombine.high %v6178, %v6179
        %v6190 = vcombine.high %v6180, %v6180
        %v6192 = vunpack.c.l.s4 1966171168
        %v6193 = vunpack.c.0.s8 %v6192
        %v6194 = vlaneseq
        %v6195 = vshrl.u32 %v6194, 7
        %v6196 = vsub.s32 %v6193, %v6195
        %v6197 = vrot.slane %v6186, %v6196
        %v6199 = vunpack.c.l.s4 1966171168
        %v6200 = vunpack.c.0.s8 %v6199
        %v6201 = vlaneseq
        %v6202 = vshrl.u32 %v6201, 7
        %v6203 = vsub.s32 %v6200, %v6202
        %v6204 = vrot.slane %v6187, %v6203
        %v6206 = vunpack.c.l.s4 1966171168
        %v6207 = vunpack.c.0.s8 %v6206
        %v6208 = vlaneseq
        %v6209 = vshrl.u32 %v6208, 7
        %v6210 = vsub.s32 %v6207, %v6209
        %v6211 = vrot.slane %v6188, %v6210
        %v6213 = vunpack.c.l.s4 1966171168
        %v6214 = vunpack.c.0.s8 %v6213
        %v6215 = vlaneseq
        %v6216 = vshrl.u32 %v6215, 7
        %v6217 = vsub.s32 %v6214, %v6216
        %v6218 = vrot.slane %v6189, %v6217
        %v6220 = vunpack.c.l.s4 1966171168
        %v6221 = vunpack.c.0.s8 %v6220
        %v6222 = vlaneseq
        %v6223 = vshrl.u32 %v6222, 7
        %v6224 = vsub.s32 %v6221, %v6223
        %v6225 = vrot.slane %v6180, %v6224
        %v6227 = vunpack.c.l.s4 1966171168
        %v6228 = vunpack.c.0.s8 %v6227
        %v6229 = vlaneseq
        %v6230 = vshrl.u32 %v6229, 7
        %v6231 = vsub.s32 %v6228, %v6230
        %v6232 = vrot.slane %v6190, %v6231
        %v6233 = vcombine.low %v6197, %v6211
        %v6234 = vcombine.high %v6197, %v6211
        %v6235 = vcombine.low %v6204, %v6218
        %v6236 = vcombine.high %v6204, %v6218
        %v6237 = vcombine.high %v6225, %v6225
        %v6238 = vcombine.high %v6232, %v6232
        %v6240 = vunpack.c.l.s4 1966171168
        %v6241 = vunpack.c.0.s8 %v6240
        %v6242 = vlaneseq
        %v6243 = vshrl.u32 %v6242, 7
        %v6244 = vsub.s32 %v6241, %v6243
        %v6245 = vrot.slane %v6233, %v6244
        %v6247 = vunpack.c.l.s4 1966171168
        %v6248 = vunpack.c.0.s8 %v6247
        %v6249 = vlaneseq
        %v6250 = vshrl.u32 %v6249, 7
        %v6251 = vsub.s32 %v6248, %v6250
        %v6252 = vrot.slane %v6235, %v6251
        %v6254 = vunpack.c.l.s4 1966171168
        %v6255 = vunpack.c.0.s8 %v6254
        %v6256 = vlaneseq
        %v6257 = vshrl.u32 %v6256, 7
        %v6258 = vsub.s32 %v6255, %v6257
        %v6259 = vrot.slane %v6234, %v6258
        %v6261 = vunpack.c.l.s4 1966171168
        %v6262 = vunpack.c.0.s8 %v6261
        %v6263 = vlaneseq
        %v6264 = vshrl.u32 %v6263, 7
        %v6265 = vsub.s32 %v6262, %v6264
        %v6266 = vrot.slane %v6236, %v6265
        %v6268 = vunpack.c.l.s4 1966171168
        %v6269 = vunpack.c.0.s8 %v6268
        %v6270 = vlaneseq
        %v6271 = vshrl.u32 %v6270, 7
        %v6272 = vsub.s32 %v6269, %v6271
        %v6273 = vrot.slane %v6225, %v6272
        %v6275 = vunpack.c.l.s4 1966171168
        %v6276 = vunpack.c.0.s8 %v6275
        %v6277 = vlaneseq
        %v6278 = vshrl.u32 %v6277, 7
        %v6279 = vsub.s32 %v6276, %v6278
        %v6280 = vrot.slane %v6232, %v6279
        %v6282 = vunpack.c.l.s4 1966171168
        %v6283 = vunpack.c.0.s8 %v6282
        %v6284 = vlaneseq
        %v6285 = vshrl.u32 %v6284, 7
        %v6286 = vsub.s32 %v6283, %v6285
        %v6287 = vrot.slane %v6237, %v6286
        %v6289 = vunpack.c.l.s4 1966171168
        %v6290 = vunpack.c.0.s8 %v6289
        %v6291 = vlaneseq
        %v6292 = vshrl.u32 %v6291, 7
        %v6293 = vsub.s32 %v6290, %v6292
        %v6294 = vrot.slane %v6238, %v6293
        %v6295 = vcombine.low %v6245, %v6273
        %v6296 = vcombine.high %v6245, %v6273
        %v6297 = vcombine.low %v6252, %v6280
        %v6298 = vcombine.high %v6252, %v6280
        %v6299 = vcombine.low %v6259, %v6287
        %v6300 = vcombine.high %v6259, %v6287
        %v6301 = vcombine.low %v6266, %v6294
        %v6302 = vcombine.high %v6266, %v6294
        %v6303 = vlaneseq
        %v6304 = vshrl.u32 %v6303, 7
        %v6305 = vsub.s32 0, %v6304
        %v6306 = vrot.slane %v6295, %v6305
        %v6307 = vlaneseq
        %v6308 = vshrl.u32 %v6307, 7
        %v6309 = vsub.s32 1, %v6308
        %v6310 = vrot.slane %v6295, %v6309
        %v6311 = vlaneseq
        %v6312 = vshrl.u32 %v6311, 7
        %v6313 = vsub.s32 2, %v6312
        %v6314 = vrot.slane %v6295, %v6313
        %v6315 = vlaneseq
        %v6316 = vshrl.u32 %v6315, 7
        %v6317 = vsub.s32 3, %v6316
        %v6318 = vrot.slane %v6295, %v6317
        %v6319 = vlaneseq
        %v6320 = vshrl.u32 %v6319, 7
        %v6321 = vsub.s32 4, %v6320
        %v6322 = vrot.slane %v6295, %v6321
        %v6323 = vlaneseq
        %v6324 = vshrl.u32 %v6323, 7
        %v6325 = vsub.s32 0, %v6324
        %v6326 = vrot.slane %v6299, %v6325
        %v6327 = vlaneseq
        %v6328 = vshrl.u32 %v6327, 7
        %v6329 = vsub.s32 1, %v6328
        %v6330 = vrot.slane %v6299, %v6329
        %v6331 = vlaneseq
        %v6332 = vshrl.u32 %v6331, 7
        %v6333 = vsub.s32 2, %v6332
        %v6334 = vrot.slane %v6299, %v6333
        %v6335 = vlaneseq
        %v6336 = vshrl.u32 %v6335, 7
        %v6337 = vsub.s32 3, %v6336
        %v6338 = vrot.slane %v6299, %v6337
        %v6339 = vlaneseq
        %v6340 = vshrl.u32 %v6339, 7
        %v6341 = vsub.s32 4, %v6340
        %v6342 = vrot.slane %v6299, %v6341
        %v6343 = vlaneseq
        %v6344 = vshrl.u32 %v6343, 7
        %v6345 = vsub.s32 0, %v6344
        %v6346 = vrot.slane %v6296, %v6345
        %v6347 = vlaneseq
        %v6348 = vshrl.u32 %v6347, 7
        %v6349 = vsub.s32 1, %v6348
        %v6350 = vrot.slane %v6296, %v6349
        %v6351 = vlaneseq
        %v6352 = vshrl.u32 %v6351, 7
        %v6353 = vsub.s32 2, %v6352
        %v6354 = vrot.slane %v6296, %v6353
        %v6355 = vlaneseq
        %v6356 = vshrl.u32 %v6355, 7
        %v6357 = vsub.s32 3, %v6356
        %v6358 = vrot.slane %v6296, %v6357
        %v6359 = vlaneseq
        %v6360 = vshrl.u32 %v6359, 7
        %v6361 = vsub.s32 4, %v6360
        %v6362 = vrot.slane %v6296, %v6361
        %v6363 = vlaneseq
        %v6364 = vshrl.u32 %v6363, 7
        %v6365 = vsub.s32 0, %v6364
        %v6366 = vrot.slane %v6300, %v6365
        %v6367 = vlaneseq
        %v6368 = vshrl.u32 %v6367, 7
        %v6369 = vsub.s32 1, %v6368
        %v6370 = vrot.slane %v6300, %v6369
        %v6371 = vlaneseq
        %v6372 = vshrl.u32 %v6371, 7
        %v6373 = vsub.s32 2, %v6372
        %v6374 = vrot.slane %v6300, %v6373
        %v6375 = vlaneseq
        %v6376 = vshrl.u32 %v6375, 7
        %v6377 = vsub.s32 3, %v6376
        %v6378 = vrot.slane %v6300, %v6377
        %v6379 = vlaneseq
        %v6380 = vshrl.u32 %v6379, 7
        %v6381 = vsub.s32 4, %v6380
        %v6382 = vrot.slane %v6300, %v6381
        %v6383 = vlaneseq
        %v6384 = vshrl.u32 %v6383, 7
        %v6385 = vsub.s32 0, %v6384
        %v6386 = vrot.slane %v6297, %v6385
        %v6387 = vlaneseq
        %v6388 = vshrl.u32 %v6387, 7
        %v6389 = vsub.s32 1, %v6388
        %v6390 = vrot.slane %v6297, %v6389
        %v6391 = vlaneseq
        %v6392 = vshrl.u32 %v6391, 7
        %v6393 = vsub.s32 2, %v6392
        %v6394 = vrot.slane %v6297, %v6393
        %v6395 = vlaneseq
        %v6396 = vshrl.u32 %v6395, 7
        %v6397 = vsub.s32 3, %v6396
        %v6398 = vrot.slane %v6297, %v6397
        %v6399 = vlaneseq
        %v6400 = vshrl.u32 %v6399, 7
        %v6401 = vsub.s32 4, %v6400
        %v6402 = vrot.slane %v6297, %v6401
        %v6403 = vlaneseq
        %v6404 = vshrl.u32 %v6403, 7
        %v6405 = vsub.s32 0, %v6404
        %v6406 = vrot.slane %v6301, %v6405
        %v6407 = vlaneseq
        %v6408 = vshrl.u32 %v6407, 7
        %v6409 = vsub.s32 1, %v6408
        %v6410 = vrot.slane %v6301, %v6409
        %v6411 = vlaneseq
        %v6412 = vshrl.u32 %v6411, 7
        %v6413 = vsub.s32 2, %v6412
        %v6414 = vrot.slane %v6301, %v6413
        %v6415 = vlaneseq
        %v6416 = vshrl.u32 %v6415, 7
        %v6417 = vsub.s32 3, %v6416
        %v6418 = vrot.slane %v6301, %v6417
        %v6419 = vlaneseq
        %v6420 = vshrl.u32 %v6419, 7
        %v6421 = vsub.s32 4, %v6420
        %v6422 = vrot.slane %v6301, %v6421
        %v6423 = vlaneseq
        %v6424 = vshrl.u32 %v6423, 7
        %v6425 = vsub.s32 0, %v6424
        %v6426 = vrot.slane %v6298, %v6425
        %v6427 = vlaneseq
        %v6428 = vshrl.u32 %v6427, 7
        %v6429 = vsub.s32 1, %v6428
        %v6430 = vrot.slane %v6298, %v6429
        %v6431 = vlaneseq
        %v6432 = vshrl.u32 %v6431, 7
        %v6433 = vsub.s32 2, %v6432
        %v6434 = vrot.slane %v6298, %v6433
        %v6435 = vlaneseq
        %v6436 = vshrl.u32 %v6435, 7
        %v6437 = vsub.s32 3, %v6436
        %v6438 = vrot.slane %v6298, %v6437
        %v6439 = vlaneseq
        %v6440 = vshrl.u32 %v6439, 7
        %v6441 = vsub.s32 4, %v6440
        %v6442 = vrot.slane %v6298, %v6441
        %v6443 = vlaneseq
        %v6444 = vshrl.u32 %v6443, 7
        %v6445 = vsub.s32 0, %v6444
        %v6446 = vrot.slane %v6302, %v6445
        %v6447 = vlaneseq
        %v6448 = vshrl.u32 %v6447, 7
        %v6449 = vsub.s32 1, %v6448
        %v6450 = vrot.slane %v6302, %v6449
        %v6451 = vlaneseq
        %v6452 = vshrl.u32 %v6451, 7
        %v6453 = vsub.s32 2, %v6452
        %v6454 = vrot.slane %v6302, %v6453
        %v6455 = vlaneseq
        %v6456 = vshrl.u32 %v6455, 7
        %v6457 = vsub.s32 3, %v6456
        %v6458 = vrot.slane %v6302, %v6457
        %v6459 = vlaneseq
        %v6460 = vshrl.u32 %v6459, 7
        %v6461 = vsub.s32 4, %v6460
        %v6462 = vrot.slane %v6302, %v6461
        %6503 = vset.pattern.permute.xlu0 9
        %6504 = vperm.xlu0 %6503, %v213
        %v6505 = vpop.permute.xlu0 %6504
        %6507 = vset.pattern.permute.xlu0 9
        %6508 = vperm.xlu0 %6507, %v214
        %v6509 = vpop.permute.xlu0 %6508
        %v6511 = vmul.f32 %v6306, %v6505
        %v6512 = vmul.f32 %v6310, %v6505
        %v6513 = vmul.f32 %v6314, %v6505
        %v6514 = vmul.f32 %v6318, %v6505
        %v6515 = vmul.f32 %v6322, %v6505
        %v6516 = vmul.f32 %v6306, %v6509
        %v6517 = vmul.f32 %v6310, %v6509
        %v6518 = vmul.f32 %v6314, %v6509
        %v6519 = vmul.f32 %v6318, %v6509
        %v6520 = vmul.f32 %v6322, %v6509
        %v6521 = vmul.f32 %v6326, %v6505
        %v6522 = vmul.f32 %v6330, %v6505
        %v6523 = vmul.f32 %v6334, %v6505
        %v6524 = vmul.f32 %v6338, %v6505
        %v6525 = vmul.f32 %v6342, %v6505
        %v6526 = vmul.f32 %v6326, %v6509
        %v6527 = vmul.f32 %v6330, %v6509
        %v6528 = vmul.f32 %v6334, %v6509
        %v6529 = vmul.f32 %v6338, %v6509
        %v6530 = vmul.f32 %v6342, %v6509
        %v6531 = vmul.f32 %v6346, %v6505
        %v6532 = vmul.f32 %v6350, %v6505
        %v6533 = vmul.f32 %v6354, %v6505
        %v6534 = vmul.f32 %v6358, %v6505
        %v6535 = vmul.f32 %v6362, %v6505
        %v6536 = vmul.f32 %v6346, %v6509
        %v6537 = vmul.f32 %v6350, %v6509
        %v6538 = vmul.f32 %v6354, %v6509
        %v6539 = vmul.f32 %v6358, %v6509
        %v6540 = vmul.f32 %v6362, %v6509
        %v6541 = vmul.f32 %v6366, %v6505
        %v6542 = vmul.f32 %v6370, %v6505
        %v6543 = vmul.f32 %v6374, %v6505
        %v6544 = vmul.f32 %v6378, %v6505
        %v6545 = vmul.f32 %v6382, %v6505
        %v6546 = vmul.f32 %v6366, %v6509
        %v6547 = vmul.f32 %v6370, %v6509
        %v6548 = vmul.f32 %v6374, %v6509
        %v6549 = vmul.f32 %v6378, %v6509
        %v6550 = vmul.f32 %v6382, %v6509
        %v6551 = vmul.f32 %v6386, %v6505
        %v6552 = vmul.f32 %v6390, %v6505
        %v6553 = vmul.f32 %v6394, %v6505
        %v6554 = vmul.f32 %v6398, %v6505
        %v6555 = vmul.f32 %v6402, %v6505
        %v6556 = vmul.f32 %v6386, %v6509
        %v6557 = vmul.f32 %v6390, %v6509
        %v6558 = vmul.f32 %v6394, %v6509
        %v6559 = vmul.f32 %v6398, %v6509
        %v6560 = vmul.f32 %v6402, %v6509
        %v6561 = vmul.f32 %v6406, %v6505
        %v6562 = vmul.f32 %v6410, %v6505
        %v6563 = vmul.f32 %v6414, %v6505
        %v6564 = vmul.f32 %v6418, %v6505
        %v6565 = vmul.f32 %v6422, %v6505
        %v6566 = vmul.f32 %v6406, %v6509
        %v6567 = vmul.f32 %v6410, %v6509
        %v6568 = vmul.f32 %v6414, %v6509
        %v6569 = vmul.f32 %v6418, %v6509
        %v6570 = vmul.f32 %v6422, %v6509
        %v6571 = vmul.f32 %v6426, %v6505
        %v6572 = vmul.f32 %v6430, %v6505
        %v6573 = vmul.f32 %v6434, %v6505
        %v6574 = vmul.f32 %v6438, %v6505
        %v6575 = vmul.f32 %v6442, %v6505
        %v6576 = vmul.f32 %v6426, %v6509
        %v6577 = vmul.f32 %v6430, %v6509
        %v6578 = vmul.f32 %v6434, %v6509
        %v6579 = vmul.f32 %v6438, %v6509
        %v6580 = vmul.f32 %v6442, %v6509
        %v6581 = vmul.f32 %v6446, %v6505
        %v6582 = vmul.f32 %v6450, %v6505
        %v6583 = vmul.f32 %v6454, %v6505
        %v6584 = vmul.f32 %v6458, %v6505
        %v6585 = vmul.f32 %v6462, %v6505
        %v6586 = vmul.f32 %v6446, %v6509
        %v6587 = vmul.f32 %v6450, %v6509
        %v6588 = vmul.f32 %v6454, %v6509
        %v6589 = vmul.f32 %v6458, %v6509
        %v6590 = vmul.f32 %v6462, %v6509
        %6671 = vrot.lane.b32.xlu0 %v6511, 119
        %v6672 = vpop.permute.xlu0 %6671
        %6673 = vrot.lane.b32.xlu0 %v6512, 119
        %v6674 = vpop.permute.xlu0 %6673
        %6675 = vrot.lane.b32.xlu0 %v6513, 119
        %v6676 = vpop.permute.xlu0 %6675
        %6677 = vrot.lane.b32.xlu0 %v6514, 119
        %v6678 = vpop.permute.xlu0 %6677
        %6679 = vrot.lane.b32.xlu0 %v6515, 119
        %v6680 = vpop.permute.xlu0 %6679
        %6681 = vrot.lane.b32.xlu0 %v6516, 119
        %v6682 = vpop.permute.xlu0 %6681
        %6683 = vrot.lane.b32.xlu0 %v6517, 119
        %v6684 = vpop.permute.xlu0 %6683
        %6685 = vrot.lane.b32.xlu0 %v6518, 119
        %v6686 = vpop.permute.xlu0 %6685
        %6687 = vrot.lane.b32.xlu0 %v6519, 119
        %v6688 = vpop.permute.xlu0 %6687
        %6689 = vrot.lane.b32.xlu0 %v6520, 119
        %v6690 = vpop.permute.xlu0 %6689
        %6691 = vrot.lane.b32.xlu0 %v6521, 119
        %v6692 = vpop.permute.xlu0 %6691
        %6693 = vrot.lane.b32.xlu0 %v6522, 119
        %v6694 = vpop.permute.xlu0 %6693
        %6695 = vrot.lane.b32.xlu0 %v6523, 119
        %v6696 = vpop.permute.xlu0 %6695
        %6697 = vrot.lane.b32.xlu0 %v6524, 119
        %v6698 = vpop.permute.xlu0 %6697
        %6699 = vrot.lane.b32.xlu0 %v6525, 119
        %v6700 = vpop.permute.xlu0 %6699
        %6701 = vrot.lane.b32.xlu0 %v6526, 119
        %v6702 = vpop.permute.xlu0 %6701
        %6703 = vrot.lane.b32.xlu0 %v6527, 119
        %v6704 = vpop.permute.xlu0 %6703
        %6705 = vrot.lane.b32.xlu0 %v6528, 119
        %v6706 = vpop.permute.xlu0 %6705
        %6707 = vrot.lane.b32.xlu0 %v6529, 119
        %v6708 = vpop.permute.xlu0 %6707
        %6709 = vrot.lane.b32.xlu0 %v6530, 119
        %v6710 = vpop.permute.xlu0 %6709
        %6711 = vrot.lane.b32.xlu0 %v6531, 119
        %v6712 = vpop.permute.xlu0 %6711
        %6713 = vrot.lane.b32.xlu0 %v6532, 119
        %v6714 = vpop.permute.xlu0 %6713
        %6715 = vrot.lane.b32.xlu0 %v6533, 119
        %v6716 = vpop.permute.xlu0 %6715
        %6717 = vrot.lane.b32.xlu0 %v6534, 119
        %v6718 = vpop.permute.xlu0 %6717
        %6719 = vrot.lane.b32.xlu0 %v6535, 119
        %v6720 = vpop.permute.xlu0 %6719
        %6721 = vrot.lane.b32.xlu0 %v6536, 119
        %v6722 = vpop.permute.xlu0 %6721
        %6723 = vrot.lane.b32.xlu0 %v6537, 119
        %v6724 = vpop.permute.xlu0 %6723
        %6725 = vrot.lane.b32.xlu0 %v6538, 119
        %v6726 = vpop.permute.xlu0 %6725
        %6727 = vrot.lane.b32.xlu0 %v6539, 119
        %v6728 = vpop.permute.xlu0 %6727
        %6729 = vrot.lane.b32.xlu0 %v6540, 119
        %v6730 = vpop.permute.xlu0 %6729
        %6731 = vrot.lane.b32.xlu0 %v6541, 119
        %v6732 = vpop.permute.xlu0 %6731
        %6733 = vrot.lane.b32.xlu0 %v6542, 119
        %v6734 = vpop.permute.xlu0 %6733
        %6735 = vrot.lane.b32.xlu0 %v6543, 119
        %v6736 = vpop.permute.xlu0 %6735
        %6737 = vrot.lane.b32.xlu0 %v6544, 119
        %v6738 = vpop.permute.xlu0 %6737
        %6739 = vrot.lane.b32.xlu0 %v6545, 119
        %v6740 = vpop.permute.xlu0 %6739
        %6741 = vrot.lane.b32.xlu0 %v6546, 119
        %v6742 = vpop.permute.xlu0 %6741
        %6743 = vrot.lane.b32.xlu0 %v6547, 119
        %v6744 = vpop.permute.xlu0 %6743
        %6745 = vrot.lane.b32.xlu0 %v6548, 119
        %v6746 = vpop.permute.xlu0 %6745
        %6747 = vrot.lane.b32.xlu0 %v6549, 119
        %v6748 = vpop.permute.xlu0 %6747
        %6749 = vrot.lane.b32.xlu0 %v6550, 119
        %v6750 = vpop.permute.xlu0 %6749
        %6751 = vrot.lane.b32.xlu0 %v6551, 119
        %v6752 = vpop.permute.xlu0 %6751
        %6753 = vrot.lane.b32.xlu0 %v6552, 119
        %v6754 = vpop.permute.xlu0 %6753
        %6755 = vrot.lane.b32.xlu0 %v6553, 119
        %v6756 = vpop.permute.xlu0 %6755
        %6757 = vrot.lane.b32.xlu0 %v6554, 119
        %v6758 = vpop.permute.xlu0 %6757
        %6759 = vrot.lane.b32.xlu0 %v6555, 119
        %v6760 = vpop.permute.xlu0 %6759
        %6761 = vrot.lane.b32.xlu0 %v6556, 119
        %v6762 = vpop.permute.xlu0 %6761
        %6763 = vrot.lane.b32.xlu0 %v6557, 119
        %v6764 = vpop.permute.xlu0 %6763
        %6765 = vrot.lane.b32.xlu0 %v6558, 119
        %v6766 = vpop.permute.xlu0 %6765
        %6767 = vrot.lane.b32.xlu0 %v6559, 119
        %v6768 = vpop.permute.xlu0 %6767
        %6769 = vrot.lane.b32.xlu0 %v6560, 119
        %v6770 = vpop.permute.xlu0 %6769
        %6771 = vrot.lane.b32.xlu0 %v6561, 119
        %v6772 = vpop.permute.xlu0 %6771
        %6773 = vrot.lane.b32.xlu0 %v6562, 119
        %v6774 = vpop.permute.xlu0 %6773
        %6775 = vrot.lane.b32.xlu0 %v6563, 119
        %v6776 = vpop.permute.xlu0 %6775
        %6777 = vrot.lane.b32.xlu0 %v6564, 119
        %v6778 = vpop.permute.xlu0 %6777
        %6779 = vrot.lane.b32.xlu0 %v6565, 119
        %v6780 = vpop.permute.xlu0 %6779
        %6781 = vrot.lane.b32.xlu0 %v6566, 119
        %v6782 = vpop.permute.xlu0 %6781
        %6783 = vrot.lane.b32.xlu0 %v6567, 119
        %v6784 = vpop.permute.xlu0 %6783
        %6785 = vrot.lane.b32.xlu0 %v6568, 119
        %v6786 = vpop.permute.xlu0 %6785
        %6787 = vrot.lane.b32.xlu0 %v6569, 119
        %v6788 = vpop.permute.xlu0 %6787
        %6789 = vrot.lane.b32.xlu0 %v6570, 119
        %v6790 = vpop.permute.xlu0 %6789
        %6791 = vrot.lane.b32.xlu0 %v6571, 119
        %v6792 = vpop.permute.xlu0 %6791
        %6793 = vrot.lane.b32.xlu0 %v6572, 119
        %v6794 = vpop.permute.xlu0 %6793
        %6795 = vrot.lane.b32.xlu0 %v6573, 119
        %v6796 = vpop.permute.xlu0 %6795
        %6797 = vrot.lane.b32.xlu0 %v6574, 119
        %v6798 = vpop.permute.xlu0 %6797
        %6799 = vrot.lane.b32.xlu0 %v6575, 119
        %v6800 = vpop.permute.xlu0 %6799
        %6801 = vrot.lane.b32.xlu0 %v6576, 119
        %v6802 = vpop.permute.xlu0 %6801
        %6803 = vrot.lane.b32.xlu0 %v6577, 119
        %v6804 = vpop.permute.xlu0 %6803
        %6805 = vrot.lane.b32.xlu0 %v6578, 119
        %v6806 = vpop.permute.xlu0 %6805
        %6807 = vrot.lane.b32.xlu0 %v6579, 119
        %v6808 = vpop.permute.xlu0 %6807
        %6809 = vrot.lane.b32.xlu0 %v6580, 119
        %v6810 = vpop.permute.xlu0 %6809
        %6811 = vrot.lane.b32.xlu0 %v6581, 119
        %v6812 = vpop.permute.xlu0 %6811
        %6813 = vrot.lane.b32.xlu0 %v6582, 119
        %v6814 = vpop.permute.xlu0 %6813
        %6815 = vrot.lane.b32.xlu0 %v6583, 119
        %v6816 = vpop.permute.xlu0 %6815
        %6817 = vrot.lane.b32.xlu0 %v6584, 119
        %v6818 = vpop.permute.xlu0 %6817
        %6819 = vrot.lane.b32.xlu0 %v6585, 119
        %v6820 = vpop.permute.xlu0 %6819
        %6821 = vrot.lane.b32.xlu0 %v6586, 119
        %v6822 = vpop.permute.xlu0 %6821
        %6823 = vrot.lane.b32.xlu0 %v6587, 119
        %v6824 = vpop.permute.xlu0 %6823
        %6825 = vrot.lane.b32.xlu0 %v6588, 119
        %v6826 = vpop.permute.xlu0 %6825
        %6827 = vrot.lane.b32.xlu0 %v6589, 119
        %v6828 = vpop.permute.xlu0 %6827
        %6829 = vrot.lane.b32.xlu0 %v6590, 119
        %v6830 = vpop.permute.xlu0 %6829
        %vm6831 = vcmask 973824
        %v6832 = vsel %vm6831, %v6672, %v6674
        %v6833 = vsel %vm6831, %v6674, %v6676
        %v6834 = vsel %vm6831, %v6676, %v6678
        %v6835 = vsel %vm6831, %v6678, %v6680
        %v6836 = vsel %vm6831, %v6682, %v6684
        %v6837 = vsel %vm6831, %v6684, %v6686
        %v6838 = vsel %vm6831, %v6686, %v6688
        %v6839 = vsel %vm6831, %v6688, %v6690
        %v6840 = vsel %vm6831, %v6692, %v6694
        %v6841 = vsel %vm6831, %v6694, %v6696
        %v6842 = vsel %vm6831, %v6696, %v6698
        %v6843 = vsel %vm6831, %v6698, %v6700
        %v6844 = vsel %vm6831, %v6702, %v6704
        %v6845 = vsel %vm6831, %v6704, %v6706
        %v6846 = vsel %vm6831, %v6706, %v6708
        %v6847 = vsel %vm6831, %v6708, %v6710
        %v6848 = vsel %vm6831, %v6712, %v6714
        %v6849 = vsel %vm6831, %v6714, %v6716
        %v6850 = vsel %vm6831, %v6716, %v6718
        %v6851 = vsel %vm6831, %v6718, %v6720
        %v6852 = vsel %vm6831, %v6722, %v6724
        %v6853 = vsel %vm6831, %v6724, %v6726
        %v6854 = vsel %vm6831, %v6726, %v6728
        %v6855 = vsel %vm6831, %v6728, %v6730
        %v6856 = vsel %vm6831, %v6732, %v6734
        %v6857 = vsel %vm6831, %v6734, %v6736
        %v6858 = vsel %vm6831, %v6736, %v6738
        %v6859 = vsel %vm6831, %v6738, %v6740
        %v6860 = vsel %vm6831, %v6742, %v6744
        %v6861 = vsel %vm6831, %v6744, %v6746
        %v6862 = vsel %vm6831, %v6746, %v6748
        %v6863 = vsel %vm6831, %v6748, %v6750
        %v6864 = vsel %vm6831, %v6752, %v6754
        %v6865 = vsel %vm6831, %v6754, %v6756
        %v6866 = vsel %vm6831, %v6756, %v6758
        %v6867 = vsel %vm6831, %v6758, %v6760
        %v6868 = vsel %vm6831, %v6762, %v6764
        %v6869 = vsel %vm6831, %v6764, %v6766
        %v6870 = vsel %vm6831, %v6766, %v6768
        %v6871 = vsel %vm6831, %v6768, %v6770
        %v6872 = vsel %vm6831, %v6772, %v6774
        %v6873 = vsel %vm6831, %v6774, %v6776
        %v6874 = vsel %vm6831, %v6776, %v6778
        %v6875 = vsel %vm6831, %v6778, %v6780
        %v6876 = vsel %vm6831, %v6782, %v6784
        %v6877 = vsel %vm6831, %v6784, %v6786
        %v6878 = vsel %vm6831, %v6786, %v6788
        %v6879 = vsel %vm6831, %v6788, %v6790
        %v6880 = vsel %vm6831, %v6792, %v6794
        %v6881 = vsel %vm6831, %v6794, %v6796
        %v6882 = vsel %vm6831, %v6796, %v6798
        %v6883 = vsel %vm6831, %v6798, %v6800
        %v6884 = vsel %vm6831, %v6802, %v6804
        %v6885 = vsel %vm6831, %v6804, %v6806
        %v6886 = vsel %vm6831, %v6806, %v6808
        %v6887 = vsel %vm6831, %v6808, %v6810
        %v6888 = vsel %vm6831, %v6812, %v6814
        %v6889 = vsel %vm6831, %v6814, %v6816
        %v6890 = vsel %vm6831, %v6816, %v6818
        %v6891 = vsel %vm6831, %v6818, %v6820
        %v6892 = vsel %vm6831, %v6822, %v6824
        %v6893 = vsel %vm6831, %v6824, %v6826
        %v6894 = vsel %vm6831, %v6826, %v6828
        %v6895 = vsel %vm6831, %v6828, %v6830
        %v6960 = vadd.f32 %v6112, %v6832
        %v6961 = vadd.f32 %v6113, %v6833
        %v6962 = vadd.f32 %v6114, %v6834
        %v6963 = vadd.f32 %v6115, %v6835
        %v6964 = vadd.f32 %v6116, %v6836
        %v6965 = vadd.f32 %v6117, %v6837
        %v6966 = vadd.f32 %v6118, %v6838
        %v6967 = vadd.f32 %v6119, %v6839
        %v6968 = vadd.f32 %v6120, %v6840
        %v6969 = vadd.f32 %v6121, %v6841
        %v6970 = vadd.f32 %v6122, %v6842
        %v6971 = vadd.f32 %v6123, %v6843
        %v6972 = vadd.f32 %v6124, %v6844
        %v6973 = vadd.f32 %v6125, %v6845
        %v6974 = vadd.f32 %v6126, %v6846
        %v6975 = vadd.f32 %v6127, %v6847
        %v6976 = vadd.f32 %v6128, %v6848
        %v6977 = vadd.f32 %v6129, %v6849
        %v6978 = vadd.f32 %v6130, %v6850
        %v6979 = vadd.f32 %v6131, %v6851
        %v6980 = vadd.f32 %v6132, %v6852
        %v6981 = vadd.f32 %v6133, %v6853
        %v6982 = vadd.f32 %v6134, %v6854
        %v6983 = vadd.f32 %v6135, %v6855
        %v6984 = vadd.f32 %v6136, %v6856
        %v6985 = vadd.f32 %v6137, %v6857
        %v6986 = vadd.f32 %v6138, %v6858
        %v6987 = vadd.f32 %v6139, %v6859
        %v6988 = vadd.f32 %v6140, %v6860
        %v6989 = vadd.f32 %v6141, %v6861
        %v6990 = vadd.f32 %v6142, %v6862
        %v6991 = vadd.f32 %v6143, %v6863
        %v6992 = vadd.f32 %v6144, %v6864
        %v6993 = vadd.f32 %v6145, %v6865
        %v6994 = vadd.f32 %v6146, %v6866
        %v6995 = vadd.f32 %v6147, %v6867
        %v6996 = vadd.f32 %v6148, %v6868
        %v6997 = vadd.f32 %v6149, %v6869
        %v6998 = vadd.f32 %v6150, %v6870
        %v6999 = vadd.f32 %v6151, %v6871
        %v7000 = vadd.f32 %v6152, %v6872
        %v7001 = vadd.f32 %v6153, %v6873
        %v7002 = vadd.f32 %v6154, %v6874
        %v7003 = vadd.f32 %v6155, %v6875
        %v7004 = vadd.f32 %v6156, %v6876
        %v7005 = vadd.f32 %v6157, %v6877
        %v7006 = vadd.f32 %v6158, %v6878
        %v7007 = vadd.f32 %v6159, %v6879
        %v7008 = vadd.f32 %v6160, %v6880
        %v7009 = vadd.f32 %v6161, %v6881
        %v7010 = vadd.f32 %v6162, %v6882
        %v7011 = vadd.f32 %v6163, %v6883
        %v7012 = vadd.f32 %v6164, %v6884
        %v7013 = vadd.f32 %v6165, %v6885
        %v7014 = vadd.f32 %v6166, %v6886
        %v7015 = vadd.f32 %v6167, %v6887
        %v7016 = vadd.f32 %v6168, %v6888
        %v7017 = vadd.f32 %v6169, %v6889
        %v7018 = vadd.f32 %v6170, %v6890
        %v7019 = vadd.f32 %v6171, %v6891
        %v7020 = vadd.f32 %v6172, %v6892
        %v7021 = vadd.f32 %v6173, %v6893
        %v7022 = vadd.f32 %v6174, %v6894
        %v7023 = vadd.f32 %v6175, %v6895
        %v7024 = vld [vmem:[%s2] sm:$0xff]
        %v7025 = vld [vmem:[%s2 + $0x8] sm:$0xff]
        %7027 = vset.pattern.permute.xlu0 0
        %7028 = vperm.xlu0 %7027, %v7024
        %v7029 = vpop.permute.xlu0 %7028
        %7032 = vset.pattern.permute.xlu0 0
        %7033 = vperm.xlu0 %7032, %v7025
        %v7034 = vpop.permute.xlu0 %7033
        %v7036 = vadd.f32 %v6960, %v7029
        %v7037 = vadd.f32 %v6961, %v7029
        %v7038 = vadd.f32 %v6962, %v7029
        %v7039 = vadd.f32 %v6963, %v7029
        %v7040 = vadd.f32 %v6964, %v7034
        %v7041 = vadd.f32 %v6965, %v7034
        %v7042 = vadd.f32 %v6966, %v7034
        %v7043 = vadd.f32 %v6967, %v7034
        %v7044 = vadd.f32 %v6968, %v7029
        %v7045 = vadd.f32 %v6969, %v7029
        %v7046 = vadd.f32 %v6970, %v7029
        %v7047 = vadd.f32 %v6971, %v7029
        %v7048 = vadd.f32 %v6972, %v7034
        %v7049 = vadd.f32 %v6973, %v7034
        %v7050 = vadd.f32 %v6974, %v7034
        %v7051 = vadd.f32 %v6975, %v7034
        %v7052 = vadd.f32 %v6976, %v7029
        %v7053 = vadd.f32 %v6977, %v7029
        %v7054 = vadd.f32 %v6978, %v7029
        %v7055 = vadd.f32 %v6979, %v7029
        %v7056 = vadd.f32 %v6980, %v7034
        %v7057 = vadd.f32 %v6981, %v7034
        %v7058 = vadd.f32 %v6982, %v7034
        %v7059 = vadd.f32 %v6983, %v7034
        %v7060 = vadd.f32 %v6984, %v7029
        %v7061 = vadd.f32 %v6985, %v7029
        %v7062 = vadd.f32 %v6986, %v7029
        %v7063 = vadd.f32 %v6987, %v7029
        %v7064 = vadd.f32 %v6988, %v7034
        %v7065 = vadd.f32 %v6989, %v7034
        %v7066 = vadd.f32 %v6990, %v7034
        %v7067 = vadd.f32 %v6991, %v7034
        %v7068 = vadd.f32 %v6992, %v7029
        %v7069 = vadd.f32 %v6993, %v7029
        %v7070 = vadd.f32 %v6994, %v7029
        %v7071 = vadd.f32 %v6995, %v7029
        %v7072 = vadd.f32 %v6996, %v7034
        %v7073 = vadd.f32 %v6997, %v7034
        %v7074 = vadd.f32 %v6998, %v7034
        %v7075 = vadd.f32 %v6999, %v7034
        %v7076 = vadd.f32 %v7000, %v7029
        %v7077 = vadd.f32 %v7001, %v7029
        %v7078 = vadd.f32 %v7002, %v7029
        %v7079 = vadd.f32 %v7003, %v7029
        %v7080 = vadd.f32 %v7004, %v7034
        %v7081 = vadd.f32 %v7005, %v7034
        %v7082 = vadd.f32 %v7006, %v7034
        %v7083 = vadd.f32 %v7007, %v7034
        %v7084 = vadd.f32 %v7008, %v7029
        %v7085 = vadd.f32 %v7009, %v7029
        %v7086 = vadd.f32 %v7010, %v7029
        %v7087 = vadd.f32 %v7011, %v7029
        %v7088 = vadd.f32 %v7012, %v7034
        %v7089 = vadd.f32 %v7013, %v7034
        %v7090 = vadd.f32 %v7014, %v7034
        %v7091 = vadd.f32 %v7015, %v7034
        %v7092 = vadd.f32 %v7016, %v7029
        %v7093 = vadd.f32 %v7017, %v7029
        %v7094 = vadd.f32 %v7018, %v7029
        %v7095 = vadd.f32 %v7019, %v7029
        %v7096 = vadd.f32 %v7020, %v7034
        %v7097 = vadd.f32 %v7021, %v7034
        %v7098 = vadd.f32 %v7022, %v7034
        %v7099 = vadd.f32 %v7023, %v7034
        %v7100 = vmax.f32 %v7036, 0.0
        %v7101 = vmax.f32 %v7037, 0.0
        %v7102 = vmax.f32 %v7038, 0.0
        %v7103 = vmax.f32 %v7039, 0.0
        %v7104 = vmax.f32 %v7040, 0.0
        %v7105 = vmax.f32 %v7041, 0.0
        %v7106 = vmax.f32 %v7042, 0.0
        %v7107 = vmax.f32 %v7043, 0.0
        %v7108 = vmax.f32 %v7044, 0.0
        %v7109 = vmax.f32 %v7045, 0.0
        %v7110 = vmax.f32 %v7046, 0.0
        %v7111 = vmax.f32 %v7047, 0.0
        %v7112 = vmax.f32 %v7048, 0.0
        %v7113 = vmax.f32 %v7049, 0.0
        %v7114 = vmax.f32 %v7050, 0.0
        %v7115 = vmax.f32 %v7051, 0.0
        %v7116 = vmax.f32 %v7052, 0.0
        %v7117 = vmax.f32 %v7053, 0.0
        %v7118 = vmax.f32 %v7054, 0.0
        %v7119 = vmax.f32 %v7055, 0.0
        %v7120 = vmax.f32 %v7056, 0.0
        %v7121 = vmax.f32 %v7057, 0.0
        %v7122 = vmax.f32 %v7058, 0.0
        %v7123 = vmax.f32 %v7059, 0.0
        %v7124 = vmax.f32 %v7060, 0.0
        %v7125 = vmax.f32 %v7061, 0.0
        %v7126 = vmax.f32 %v7062, 0.0
        %v7127 = vmax.f32 %v7063, 0.0
        %v7128 = vmax.f32 %v7064, 0.0
        %v7129 = vmax.f32 %v7065, 0.0
        %v7130 = vmax.f32 %v7066, 0.0
        %v7131 = vmax.f32 %v7067, 0.0
        %v7132 = vmax.f32 %v7068, 0.0
        %v7133 = vmax.f32 %v7069, 0.0
        %v7134 = vmax.f32 %v7070, 0.0
        %v7135 = vmax.f32 %v7071, 0.0
        %v7136 = vmax.f32 %v7072, 0.0
        %v7137 = vmax.f32 %v7073, 0.0
        %v7138 = vmax.f32 %v7074, 0.0
        %v7139 = vmax.f32 %v7075, 0.0
        %v7140 = vmax.f32 %v7076, 0.0
        %v7141 = vmax.f32 %v7077, 0.0
        %v7142 = vmax.f32 %v7078, 0.0
        %v7143 = vmax.f32 %v7079, 0.0
        %v7144 = vmax.f32 %v7080, 0.0
        %v7145 = vmax.f32 %v7081, 0.0
        %v7146 = vmax.f32 %v7082, 0.0
        %v7147 = vmax.f32 %v7083, 0.0
        %v7148 = vmax.f32 %v7084, 0.0
        %v7149 = vmax.f32 %v7085, 0.0
        %v7150 = vmax.f32 %v7086, 0.0
        %v7151 = vmax.f32 %v7087, 0.0
        %v7152 = vmax.f32 %v7088, 0.0
        %v7153 = vmax.f32 %v7089, 0.0
        %v7154 = vmax.f32 %v7090, 0.0
        %v7155 = vmax.f32 %v7091, 0.0
        %v7156 = vmax.f32 %v7092, 0.0
        %v7157 = vmax.f32 %v7093, 0.0
        %v7158 = vmax.f32 %v7094, 0.0
        %v7159 = vmax.f32 %v7095, 0.0
        %v7160 = vmax.f32 %v7096, 0.0
        %v7161 = vmax.f32 %v7097, 0.0
        %v7162 = vmax.f32 %v7098, 0.0
        %v7163 = vmax.f32 %v7099, 0.0
        %7164 = vst [vmem:[%s191] sm:$0xff] %v7100
        %7165 = vst [vmem:[%s191 + $0x8] sm:$0xff] %v7101
        %7166 = vst [vmem:[%s191 + $0x10] sm:$0xff] %v7102
        %7167 = vst.msk [vmem:[%s191 + $0x18] sm:$0xff] %vm5151, %v7103
        %7168 = vst [vmem:[%s191 + $0x20] sm:$0xff] %v7104
        %7169 = vst [vmem:[%s191 + $0x28] sm:$0xff] %v7105
        %7170 = vst [vmem:[%s191 + $0x30] sm:$0xff] %v7106
        %7171 = vst.msk [vmem:[%s191 + $0x38] sm:$0xff] %vm5151, %v7107
        %7172 = vst [vmem:[%s191 + $0x40] sm:$0xff] %v7108
        %7173 = vst [vmem:[%s191 + $0x48] sm:$0xff] %v7109
        %7174 = vst [vmem:[%s191 + $0x50] sm:$0xff] %v7110
        %7175 = vst.msk [vmem:[%s191 + $0x58] sm:$0xff] %vm5151, %v7111
        %7176 = vst [vmem:[%s191 + $0x60] sm:$0xff] %v7112
        %7177 = vst [vmem:[%s191 + $0x68] sm:$0xff] %v7113
        %7178 = vst [vmem:[%s191 + $0x70] sm:$0xff] %v7114
        %7179 = vst.msk [vmem:[%s191 + $0x78] sm:$0xff] %vm5151, %v7115
        %7180 = vst [vmem:[%s191 + $0x80] sm:$0xff] %v7116
        %7181 = vst [vmem:[%s191 + $0x88] sm:$0xff] %v7117
        %7182 = vst [vmem:[%s191 + $0x90] sm:$0xff] %v7118
        %7183 = vst.msk [vmem:[%s191 + $0x98] sm:$0xff] %vm5151, %v7119
        %7184 = vst [vmem:[%s191 + $0xa0] sm:$0xff] %v7120
        %7185 = vst [vmem:[%s191 + $0xa8] sm:$0xff] %v7121
        %7186 = vst [vmem:[%s191 + $0xb0] sm:$0xff] %v7122
        %7187 = vst.msk [vmem:[%s191 + $0xb8] sm:$0xff] %vm5151, %v7123
        %7188 = vst [vmem:[%s191 + $0xc0] sm:$0xff] %v7124
        %7189 = vst [vmem:[%s191 + $0xc8] sm:$0xff] %v7125
        %7190 = vst [vmem:[%s191 + $0xd0] sm:$0xff] %v7126
        %7191 = vst.msk [vmem:[%s191 + $0xd8] sm:$0xff] %vm5151, %v7127
        %7192 = vst [vmem:[%s191 + $0xe0] sm:$0xff] %v7128
        %7193 = vst [vmem:[%s191 + $0xe8] sm:$0xff] %v7129
        %7194 = vst [vmem:[%s191 + $0xf0] sm:$0xff] %v7130
        %7195 = vst.msk [vmem:[%s191 + $0xf8] sm:$0xff] %vm5151, %v7131
        %7196 = vst [vmem:[%s191 + $0x100] sm:$0xff] %v7132
        %7197 = vst [vmem:[%s191 + $0x108] sm:$0xff] %v7133
        %7198 = vst [vmem:[%s191 + $0x110] sm:$0xff] %v7134
        %7199 = vst.msk [vmem:[%s191 + $0x118] sm:$0xff] %vm5151, %v7135
        %7200 = vst [vmem:[%s191 + $0x120] sm:$0xff] %v7136
        %7201 = vst [vmem:[%s191 + $0x128] sm:$0xff] %v7137
        %7202 = vst [vmem:[%s191 + $0x130] sm:$0xff] %v7138
        %7203 = vst.msk [vmem:[%s191 + $0x138] sm:$0xff] %vm5151, %v7139
        %7204 = vst [vmem:[%s191 + $0x140] sm:$0xff] %v7140
        %7205 = vst [vmem:[%s191 + $0x148] sm:$0xff] %v7141
        %7206 = vst [vmem:[%s191 + $0x150] sm:$0xff] %v7142
        %7207 = vst.msk [vmem:[%s191 + $0x158] sm:$0xff] %vm5151, %v7143
        %7208 = vst [vmem:[%s191 + $0x160] sm:$0xff] %v7144
        %7209 = vst [vmem:[%s191 + $0x168] sm:$0xff] %v7145
        %7210 = vst [vmem:[%s191 + $0x170] sm:$0xff] %v7146
        %7211 = vst.msk [vmem:[%s191 + $0x178] sm:$0xff] %vm5151, %v7147
        %7212 = vst [vmem:[%s191 + $0x180] sm:$0xff] %v7148
        %7213 = vst [vmem:[%s191 + $0x188] sm:$0xff] %v7149
        %7214 = vst [vmem:[%s191 + $0x190] sm:$0xff] %v7150
        %7215 = vst.msk [vmem:[%s191 + $0x198] sm:$0xff] %vm5151, %v7151
        %7216 = vst [vmem:[%s191 + $0x1a0] sm:$0xff] %v7152
        %7217 = vst [vmem:[%s191 + $0x1a8] sm:$0xff] %v7153
        %7218 = vst [vmem:[%s191 + $0x1b0] sm:$0xff] %v7154
        %7219 = vst.msk [vmem:[%s191 + $0x1b8] sm:$0xff] %vm5151, %v7155
        %7220 = vst [vmem:[%s191 + $0x1c0] sm:$0xff] %v7156
        %7221 = vst [vmem:[%s191 + $0x1c8] sm:$0xff] %v7157
        %7222 = vst [vmem:[%s191 + $0x1d0] sm:$0xff] %v7158
        %7223 = vst.msk [vmem:[%s191 + $0x1d8] sm:$0xff] %vm5151, %v7159
        %7224 = vst [vmem:[%s191 + $0x1e0] sm:$0xff] %v7160
        %7225 = vst [vmem:[%s191 + $0x1e8] sm:$0xff] %v7161
        %7226 = vst [vmem:[%s191 + $0x1f0] sm:$0xff] %v7162
        %7227 = vst.msk [vmem:[%s191 + $0x1f8] sm:$0xff] %vm5151, %v7163
        %v7228 = vmax.f32 %v7100, %v7101
        %v7229 = vmax.f32 %v7228, %v7102
        %v7230 = vsel %vm5151, %v7103, -inf
        %v7231 = vmax.f32 %v7229, %v7230
        %7232 = vmax.xlane.f32.xlu0 %v7231
        %v7233 = vpop.xlane.xlu0 %7232
        %v7234 = vmax.f32 %v7104, %v7105
        %v7235 = vmax.f32 %v7234, %v7106
        %v7236 = vsel %vm5151, %v7107, -inf
        %v7237 = vmax.f32 %v7235, %v7236
        %7238 = vmax.xlane.f32.xlu0 %v7237
        %v7239 = vpop.xlane.xlu0 %7238
        %v7240 = vmax.f32 %v7108, %v7109
        %v7241 = vmax.f32 %v7240, %v7110
        %v7242 = vsel %vm5151, %v7111, -inf
        %v7243 = vmax.f32 %v7241, %v7242
        %7244 = vmax.xlane.f32.xlu0 %v7243
        %v7245 = vpop.xlane.xlu0 %7244
        %v7246 = vmax.f32 %v7112, %v7113
        %v7247 = vmax.f32 %v7246, %v7114
        %v7248 = vsel %vm5151, %v7115, -inf
        %v7249 = vmax.f32 %v7247, %v7248
        %7250 = vmax.xlane.f32.xlu0 %v7249
        %v7251 = vpop.xlane.xlu0 %7250
        %v7252 = vmax.f32 %v7116, %v7117
        %v7253 = vmax.f32 %v7252, %v7118
        %v7254 = vsel %vm5151, %v7119, -inf
        %v7255 = vmax.f32 %v7253, %v7254
        %7256 = vmax.xlane.f32.xlu0 %v7255
        %v7257 = vpop.xlane.xlu0 %7256
        %v7258 = vmax.f32 %v7120, %v7121
        %v7259 = vmax.f32 %v7258, %v7122
        %v7260 = vsel %vm5151, %v7123, -inf
        %v7261 = vmax.f32 %v7259, %v7260
        %7262 = vmax.xlane.f32.xlu0 %v7261
        %v7263 = vpop.xlane.xlu0 %7262
        %v7264 = vmax.f32 %v7124, %v7125
        %v7265 = vmax.f32 %v7264, %v7126
        %v7266 = vsel %vm5151, %v7127, -inf
        %v7267 = vmax.f32 %v7265, %v7266
        %7268 = vmax.xlane.f32.xlu0 %v7267
        %v7269 = vpop.xlane.xlu0 %7268
        %v7270 = vmax.f32 %v7128, %v7129
        %v7271 = vmax.f32 %v7270, %v7130
        %v7272 = vsel %vm5151, %v7131, -inf
        %v7273 = vmax.f32 %v7271, %v7272
        %7274 = vmax.xlane.f32.xlu0 %v7273
        %v7275 = vpop.xlane.xlu0 %7274
        %v7276 = vmax.f32 %v7132, %v7133
        %v7277 = vmax.f32 %v7276, %v7134
        %v7278 = vsel %vm5151, %v7135, -inf
        %v7279 = vmax.f32 %v7277, %v7278
        %7280 = vmax.xlane.f32.xlu0 %v7279
        %v7281 = vpop.xlane.xlu0 %7280
        %v7282 = vmax.f32 %v7136, %v7137
        %v7283 = vmax.f32 %v7282, %v7138
        %v7284 = vsel %vm5151, %v7139, -inf
        %v7285 = vmax.f32 %v7283, %v7284
        %7286 = vmax.xlane.f32.xlu0 %v7285
        %v7287 = vpop.xlane.xlu0 %7286
        %v7288 = vmax.f32 %v7140, %v7141
        %v7289 = vmax.f32 %v7288, %v7142
        %v7290 = vsel %vm5151, %v7143, -inf
        %v7291 = vmax.f32 %v7289, %v7290
        %7292 = vmax.xlane.f32.xlu0 %v7291
        %v7293 = vpop.xlane.xlu0 %7292
        %v7294 = vmax.f32 %v7144, %v7145
        %v7295 = vmax.f32 %v7294, %v7146
        %v7296 = vsel %vm5151, %v7147, -inf
        %v7297 = vmax.f32 %v7295, %v7296
        %7298 = vmax.xlane.f32.xlu0 %v7297
        %v7299 = vpop.xlane.xlu0 %7298
        %v7300 = vmax.f32 %v7148, %v7149
        %v7301 = vmax.f32 %v7300, %v7150
        %v7302 = vsel %vm5151, %v7151, -inf
        %v7303 = vmax.f32 %v7301, %v7302
        %7304 = vmax.xlane.f32.xlu0 %v7303
        %v7305 = vpop.xlane.xlu0 %7304
        %v7306 = vmax.f32 %v7152, %v7153
        %v7307 = vmax.f32 %v7306, %v7154
        %v7308 = vsel %vm5151, %v7155, -inf
        %v7309 = vmax.f32 %v7307, %v7308
        %7310 = vmax.xlane.f32.xlu0 %v7309
        %v7311 = vpop.xlane.xlu0 %7310
        %v7312 = vmax.f32 %v7156, %v7157
        %v7313 = vmax.f32 %v7312, %v7158
        %v7314 = vsel %vm5151, %v7159, -inf
        %v7315 = vmax.f32 %v7313, %v7314
        %7316 = vmax.xlane.f32.xlu0 %v7315
        %v7317 = vpop.xlane.xlu0 %7316
        %v7318 = vmax.f32 %v7160, %v7161
        %v7319 = vmax.f32 %v7318, %v7162
        %v7320 = vsel %vm5151, %v7163, -inf
        %v7321 = vmax.f32 %v7319, %v7320
        %7322 = vmax.xlane.f32.xlu0 %v7321
        %v7323 = vpop.xlane.xlu0 %7322
        %v7324 = vsub.f32 %v7100, %v7233
        %v7325 = vsub.f32 %v7101, %v7233
        %v7326 = vsub.f32 %v7102, %v7233
        %v7327 = vsub.f32 %v7103, %v7233
        %v7328 = vsub.f32 %v7104, %v7239
        %v7329 = vsub.f32 %v7105, %v7239
        %v7330 = vsub.f32 %v7106, %v7239
        %v7331 = vsub.f32 %v7107, %v7239
        %v7332 = vsub.f32 %v7108, %v7245
        %v7333 = vsub.f32 %v7109, %v7245
        %v7334 = vsub.f32 %v7110, %v7245
        %v7335 = vsub.f32 %v7111, %v7245
        %v7336 = vsub.f32 %v7112, %v7251
        %v7337 = vsub.f32 %v7113, %v7251
        %v7338 = vsub.f32 %v7114, %v7251
        %v7339 = vsub.f32 %v7115, %v7251
        %v7340 = vsub.f32 %v7116, %v7257
        %v7341 = vsub.f32 %v7117, %v7257
        %v7342 = vsub.f32 %v7118, %v7257
        %v7343 = vsub.f32 %v7119, %v7257
        %v7344 = vsub.f32 %v7120, %v7263
        %v7345 = vsub.f32 %v7121, %v7263
        %v7346 = vsub.f32 %v7122, %v7263
        %v7347 = vsub.f32 %v7123, %v7263
        %v7348 = vsub.f32 %v7124, %v7269
        %v7349 = vsub.f32 %v7125, %v7269
        %v7350 = vsub.f32 %v7126, %v7269
        %v7351 = vsub.f32 %v7127, %v7269
        %v7352 = vsub.f32 %v7128, %v7275
        %v7353 = vsub.f32 %v7129, %v7275
        %v7354 = vsub.f32 %v7130, %v7275
        %v7355 = vsub.f32 %v7131, %v7275
        %v7356 = vsub.f32 %v7132, %v7281
        %v7357 = vsub.f32 %v7133, %v7281
        %v7358 = vsub.f32 %v7134, %v7281
        %v7359 = vsub.f32 %v7135, %v7281
        %v7360 = vsub.f32 %v7136, %v7287
        %v7361 = vsub.f32 %v7137, %v7287
        %v7362 = vsub.f32 %v7138, %v7287
        %v7363 = vsub.f32 %v7139, %v7287
        %v7364 = vsub.f32 %v7140, %v7293
        %v7365 = vsub.f32 %v7141, %v7293
        %v7366 = vsub.f32 %v7142, %v7293
        %v7367 = vsub.f32 %v7143, %v7293
        %v7368 = vsub.f32 %v7144, %v7299
        %v7369 = vsub.f32 %v7145, %v7299
        %v7370 = vsub.f32 %v7146, %v7299
        %v7371 = vsub.f32 %v7147, %v7299
        %v7372 = vsub.f32 %v7148, %v7305
        %v7373 = vsub.f32 %v7149, %v7305
        %v7374 = vsub.f32 %v7150, %v7305
        %v7375 = vsub.f32 %v7151, %v7305
        %v7376 = vsub.f32 %v7152, %v7311
        %v7377 = vsub.f32 %v7153, %v7311
        %v7378 = vsub.f32 %v7154, %v7311
        %v7379 = vsub.f32 %v7155, %v7311
        %v7380 = vsub.f32 %v7156, %v7317
        %v7381 = vsub.f32 %v7157, %v7317
        %v7382 = vsub.f32 %v7158, %v7317
        %v7383 = vsub.f32 %v7159, %v7317
        %v7384 = vsub.f32 %v7160, %v7323
        %v7385 = vsub.f32 %v7161, %v7323
        %v7386 = vsub.f32 %v7162, %v7323
        %v7387 = vsub.f32 %v7163, %v7323
        %v7388 = vmul.f32 %v7324, 1.442695
        %v7389 = vpow.pop %v7388
        %v7390 = vmul.f32 %v7325, 1.442695
        %v7391 = vpow.pop %v7390
        %v7392 = vmul.f32 %v7326, 1.442695
        %v7393 = vpow.pop %v7392
        %v7394 = vmul.f32 %v7327, 1.442695
        %v7395 = vpow.pop %v7394
        %v7396 = vmul.f32 %v7328, 1.442695
        %v7397 = vpow.pop %v7396
        %v7398 = vmul.f32 %v7329, 1.442695
        %v7399 = vpow.pop %v7398
        %v7400 = vmul.f32 %v7330, 1.442695
        %v7401 = vpow.pop %v7400
        %v7402 = vmul.f32 %v7331, 1.442695
        %v7403 = vpow.pop %v7402
        %v7404 = vmul.f32 %v7332, 1.442695
        %v7405 = vpow.pop %v7404
        %v7406 = vmul.f32 %v7333, 1.442695
        %v7407 = vpow.pop %v7406
        %v7408 = vmul.f32 %v7334, 1.442695
        %v7409 = vpow.pop %v7408
        %v7410 = vmul.f32 %v7335, 1.442695
        %v7411 = vpow.pop %v7410
        %v7412 = vmul.f32 %v7336, 1.442695
        %v7413 = vpow.pop %v7412
        %v7414 = vmul.f32 %v7337, 1.442695
        %v7415 = vpow.pop %v7414
        %v7416 = vmul.f32 %v7338, 1.442695
        %v7417 = vpow.pop %v7416
        %v7418 = vmul.f32 %v7339, 1.442695
        %v7419 = vpow.pop %v7418
        %v7420 = vmul.f32 %v7340, 1.442695
        %v7421 = vpow.pop %v7420
        %v7422 = vmul.f32 %v7341, 1.442695
        %v7423 = vpow.pop %v7422
        %v7424 = vmul.f32 %v7342, 1.442695
        %v7425 = vpow.pop %v7424
        %v7426 = vmul.f32 %v7343, 1.442695
        %v7427 = vpow.pop %v7426
        %v7428 = vmul.f32 %v7344, 1.442695
        %v7429 = vpow.pop %v7428
        %v7430 = vmul.f32 %v7345, 1.442695
        %v7431 = vpow.pop %v7430
        %v7432 = vmul.f32 %v7346, 1.442695
        %v7433 = vpow.pop %v7432
        %v7434 = vmul.f32 %v7347, 1.442695
        %v7435 = vpow.pop %v7434
        %v7436 = vmul.f32 %v7348, 1.442695
        %v7437 = vpow.pop %v7436
        %v7438 = vmul.f32 %v7349, 1.442695
        %v7439 = vpow.pop %v7438
        %v7440 = vmul.f32 %v7350, 1.442695
        %v7441 = vpow.pop %v7440
        %v7442 = vmul.f32 %v7351, 1.442695
        %v7443 = vpow.pop %v7442
        %v7444 = vmul.f32 %v7352, 1.442695
        %v7445 = vpow.pop %v7444
        %v7446 = vmul.f32 %v7353, 1.442695
        %v7447 = vpow.pop %v7446
        %v7448 = vmul.f32 %v7354, 1.442695
        %v7449 = vpow.pop %v7448
        %v7450 = vmul.f32 %v7355, 1.442695
        %v7451 = vpow.pop %v7450
        %v7452 = vmul.f32 %v7356, 1.442695
        %v7453 = vpow.pop %v7452
        %v7454 = vmul.f32 %v7357, 1.442695
        %v7455 = vpow.pop %v7454
        %v7456 = vmul.f32 %v7358, 1.442695
        %v7457 = vpow.pop %v7456
        %v7458 = vmul.f32 %v7359, 1.442695
        %v7459 = vpow.pop %v7458
        %v7460 = vmul.f32 %v7360, 1.442695
        %v7461 = vpow.pop %v7460
        %v7462 = vmul.f32 %v7361, 1.442695
        %v7463 = vpow.pop %v7462
        %v7464 = vmul.f32 %v7362, 1.442695
        %v7465 = vpow.pop %v7464
        %v7466 = vmul.f32 %v7363, 1.442695
        %v7467 = vpow.pop %v7466
        %v7468 = vmul.f32 %v7364, 1.442695
        %v7469 = vpow.pop %v7468
        %v7470 = vmul.f32 %v7365, 1.442695
        %v7471 = vpow.pop %v7470
        %v7472 = vmul.f32 %v7366, 1.442695
        %v7473 = vpow.pop %v7472
        %v7474 = vmul.f32 %v7367, 1.442695
        %v7475 = vpow.pop %v7474
        %v7476 = vmul.f32 %v7368, 1.442695
        %v7477 = vpow.pop %v7476
        %v7478 = vmul.f32 %v7369, 1.442695
        %v7479 = vpow.pop %v7478
        %v7480 = vmul.f32 %v7370, 1.442695
        %v7481 = vpow.pop %v7480
        %v7482 = vmul.f32 %v7371, 1.442695
        %v7483 = vpow.pop %v7482
        %v7484 = vmul.f32 %v7372, 1.442695
        %v7485 = vpow.pop %v7484
        %v7486 = vmul.f32 %v7373, 1.442695
        %v7487 = vpow.pop %v7486
        %v7488 = vmul.f32 %v7374, 1.442695
        %v7489 = vpow.pop %v7488
        %v7490 = vmul.f32 %v7375, 1.442695
        %v7491 = vpow.pop %v7490
        %v7492 = vmul.f32 %v7376, 1.442695
        %v7493 = vpow.pop %v7492
        %v7494 = vmul.f32 %v7377, 1.442695
        %v7495 = vpow.pop %v7494
        %v7496 = vmul.f32 %v7378, 1.442695
        %v7497 = vpow.pop %v7496
        %v7498 = vmul.f32 %v7379, 1.442695
        %v7499 = vpow.pop %v7498
        %v7500 = vmul.f32 %v7380, 1.442695
        %v7501 = vpow.pop %v7500
        %v7502 = vmul.f32 %v7381, 1.442695
        %v7503 = vpow.pop %v7502
        %v7504 = vmul.f32 %v7382, 1.442695
        %v7505 = vpow.pop %v7504
        %v7506 = vmul.f32 %v7383, 1.442695
        %v7507 = vpow.pop %v7506
        %v7508 = vmul.f32 %v7384, 1.442695
        %v7509 = vpow.pop %v7508
        %v7510 = vmul.f32 %v7385, 1.442695
        %v7511 = vpow.pop %v7510
        %v7512 = vmul.f32 %v7386, 1.442695
        %v7513 = vpow.pop %v7512
        %v7514 = vmul.f32 %v7387, 1.442695
        %v7515 = vpow.pop %v7514
        %v7516 = vadd.f32 %v7389, %v7391
        %v7517 = vadd.f32 %v7516, %v7393
        %v7518 = vsel %vm5151, %v7395, 0.0
        %v7519 = vadd.f32 %v7517, %v7518
        %7520 = vadd.xlane.f32.xlu0 %v7519
        %v7521 = vpop.xlane.xlu0 %7520
        %v7522 = vadd.f32 %v7397, %v7399
        %v7523 = vadd.f32 %v7522, %v7401
        %v7524 = vsel %vm5151, %v7403, 0.0
        %v7525 = vadd.f32 %v7523, %v7524
        %7526 = vadd.xlane.f32.xlu0 %v7525
        %v7527 = vpop.xlane.xlu0 %7526
        %v7528 = vadd.f32 %v7405, %v7407
        %v7529 = vadd.f32 %v7528, %v7409
        %v7530 = vsel %vm5151, %v7411, 0.0
        %v7531 = vadd.f32 %v7529, %v7530
        %7532 = vadd.xlane.f32.xlu0 %v7531
        %v7533 = vpop.xlane.xlu0 %7532
        %v7534 = vadd.f32 %v7413, %v7415
        %v7535 = vadd.f32 %v7534, %v7417
        %v7536 = vsel %vm5151, %v7419, 0.0
        %v7537 = vadd.f32 %v7535, %v7536
        %7538 = vadd.xlane.f32.xlu0 %v7537
        %v7539 = vpop.xlane.xlu0 %7538
        %v7540 = vadd.f32 %v7421, %v7423
        %v7541 = vadd.f32 %v7540, %v7425
        %v7542 = vsel %vm5151, %v7427, 0.0
        %v7543 = vadd.f32 %v7541, %v7542
        %7544 = vadd.xlane.f32.xlu0 %v7543
        %v7545 = vpop.xlane.xlu0 %7544
        %v7546 = vadd.f32 %v7429, %v7431
        %v7547 = vadd.f32 %v7546, %v7433
        %v7548 = vsel %vm5151, %v7435, 0.0
        %v7549 = vadd.f32 %v7547, %v7548
        %7550 = vadd.xlane.f32.xlu0 %v7549
        %v7551 = vpop.xlane.xlu0 %7550
        %v7552 = vadd.f32 %v7437, %v7439
        %v7553 = vadd.f32 %v7552, %v7441
        %v7554 = vsel %vm5151, %v7443, 0.0
        %v7555 = vadd.f32 %v7553, %v7554
        %7556 = vadd.xlane.f32.xlu0 %v7555
        %v7557 = vpop.xlane.xlu0 %7556
        %v7558 = vadd.f32 %v7445, %v7447
        %v7559 = vadd.f32 %v7558, %v7449
        %v7560 = vsel %vm5151, %v7451, 0.0
        %v7561 = vadd.f32 %v7559, %v7560
        %7562 = vadd.xlane.f32.xlu0 %v7561
        %v7563 = vpop.xlane.xlu0 %7562
        %v7564 = vadd.f32 %v7453, %v7455
        %v7565 = vadd.f32 %v7564, %v7457
        %v7566 = vsel %vm5151, %v7459, 0.0
        %v7567 = vadd.f32 %v7565, %v7566
        %7568 = vadd.xlane.f32.xlu0 %v7567
        %v7569 = vpop.xlane.xlu0 %7568
        %v7570 = vadd.f32 %v7461, %v7463
        %v7571 = vadd.f32 %v7570, %v7465
        %v7572 = vsel %vm5151, %v7467, 0.0
        %v7573 = vadd.f32 %v7571, %v7572
        %7574 = vadd.xlane.f32.xlu0 %v7573
        %v7575 = vpop.xlane.xlu0 %7574
        %v7576 = vadd.f32 %v7469, %v7471
        %v7577 = vadd.f32 %v7576, %v7473
        %v7578 = vsel %vm5151, %v7475, 0.0
        %v7579 = vadd.f32 %v7577, %v7578
        %7580 = vadd.xlane.f32.xlu0 %v7579
        %v7581 = vpop.xlane.xlu0 %7580
        %v7582 = vadd.f32 %v7477, %v7479
        %v7583 = vadd.f32 %v7582, %v7481
        %v7584 = vsel %vm5151, %v7483, 0.0
        %v7585 = vadd.f32 %v7583, %v7584
        %7586 = vadd.xlane.f32.xlu0 %v7585
        %v7587 = vpop.xlane.xlu0 %7586
        %v7588 = vadd.f32 %v7485, %v7487
        %v7589 = vadd.f32 %v7588, %v7489
        %v7590 = vsel %vm5151, %v7491, 0.0
        %v7591 = vadd.f32 %v7589, %v7590
        %7592 = vadd.xlane.f32.xlu0 %v7591
        %v7593 = vpop.xlane.xlu0 %7592
        %v7594 = vadd.f32 %v7493, %v7495
        %v7595 = vadd.f32 %v7594, %v7497
        %v7596 = vsel %vm5151, %v7499, 0.0
        %v7597 = vadd.f32 %v7595, %v7596
        %7598 = vadd.xlane.f32.xlu0 %v7597
        %v7599 = vpop.xlane.xlu0 %7598
        %v7600 = vadd.f32 %v7501, %v7503
        %v7601 = vadd.f32 %v7600, %v7505
        %v7602 = vsel %vm5151, %v7507, 0.0
        %v7603 = vadd.f32 %v7601, %v7602
        %7604 = vadd.xlane.f32.xlu0 %v7603
        %v7605 = vpop.xlane.xlu0 %7604
        %v7606 = vadd.f32 %v7509, %v7511
        %v7607 = vadd.f32 %v7606, %v7513
        %v7608 = vsel %vm5151, %v7515, 0.0
        %v7609 = vadd.f32 %v7607, %v7608
        %7610 = vadd.xlane.f32.xlu0 %v7609
        %v7611 = vpop.xlane.xlu0 %7610
        %v7612 = vrcp.pop %v7521
        %v7613 = vmul.f32 1.0, %v7612
        %v7614 = vrcp.pop %v7527
        %v7615 = vmul.f32 1.0, %v7614
        %v7616 = vrcp.pop %v7533
        %v7617 = vmul.f32 1.0, %v7616
        %v7618 = vrcp.pop %v7539
        %v7619 = vmul.f32 1.0, %v7618
        %v7620 = vrcp.pop %v7545
        %v7621 = vmul.f32 1.0, %v7620
        %v7622 = vrcp.pop %v7551
        %v7623 = vmul.f32 1.0, %v7622
        %v7624 = vrcp.pop %v7557
        %v7625 = vmul.f32 1.0, %v7624
        %v7626 = vrcp.pop %v7563
        %v7627 = vmul.f32 1.0, %v7626
        %v7628 = vrcp.pop %v7569
        %v7629 = vmul.f32 1.0, %v7628
        %v7630 = vrcp.pop %v7575
        %v7631 = vmul.f32 1.0, %v7630
        %v7632 = vrcp.pop %v7581
        %v7633 = vmul.f32 1.0, %v7632
        %v7634 = vrcp.pop %v7587
        %v7635 = vmul.f32 1.0, %v7634
        %v7636 = vrcp.pop %v7593
        %v7637 = vmul.f32 1.0, %v7636
        %v7638 = vrcp.pop %v7599
        %v7639 = vmul.f32 1.0, %v7638
        %v7640 = vrcp.pop %v7605
        %v7641 = vmul.f32 1.0, %v7640
        %v7642 = vrcp.pop %v7611
        %v7643 = vmul.f32 1.0, %v7642
        %v7644 = vmax.f32 %v7613, %v7615
        %v7645 = vrot.slane %v7644, 4
        %v7646 = vmax.f32 %v7644, %v7645
        %v7647 = vrot.slane %v7646, 2
        %v7648 = vmax.f32 %v7646, %v7647
        %v7649 = vrot.slane %v7648, 1
        %v7650 = vmax.f32 %v7648, %v7649
        %v7651 = vmax.f32 %v7617, %v7619
        %v7652 = vrot.slane %v7651, 4
        %v7653 = vmax.f32 %v7651, %v7652
        %v7654 = vrot.slane %v7653, 2
        %v7655 = vmax.f32 %v7653, %v7654
        %v7656 = vrot.slane %v7655, 1
        %v7657 = vmax.f32 %v7655, %v7656
        %v7658 = vmax.f32 %v7621, %v7623
        %v7659 = vrot.slane %v7658, 4
        %v7660 = vmax.f32 %v7658, %v7659
        %v7661 = vrot.slane %v7660, 2
        %v7662 = vmax.f32 %v7660, %v7661
        %v7663 = vrot.slane %v7662, 1
        %v7664 = vmax.f32 %v7662, %v7663
        %v7665 = vmax.f32 %v7625, %v7627
        %v7666 = vrot.slane %v7665, 4
        %v7667 = vmax.f32 %v7665, %v7666
        %v7668 = vrot.slane %v7667, 2
        %v7669 = vmax.f32 %v7667, %v7668
        %v7670 = vrot.slane %v7669, 1
        %v7671 = vmax.f32 %v7669, %v7670
        %v7672 = vmax.f32 %v7629, %v7631
        %v7673 = vrot.slane %v7672, 4
        %v7674 = vmax.f32 %v7672, %v7673
        %v7675 = vrot.slane %v7674, 2
        %v7676 = vmax.f32 %v7674, %v7675
        %v7677 = vrot.slane %v7676, 1
        %v7678 = vmax.f32 %v7676, %v7677
        %v7679 = vmax.f32 %v7633, %v7635
        %v7680 = vrot.slane %v7679, 4
        %v7681 = vmax.f32 %v7679, %v7680
        %v7682 = vrot.slane %v7681, 2
        %v7683 = vmax.f32 %v7681, %v7682
        %v7684 = vrot.slane %v7683, 1
        %v7685 = vmax.f32 %v7683, %v7684
        %v7686 = vmax.f32 %v7637, %v7639
        %v7687 = vrot.slane %v7686, 4
        %v7688 = vmax.f32 %v7686, %v7687
        %v7689 = vrot.slane %v7688, 2
        %v7690 = vmax.f32 %v7688, %v7689
        %v7691 = vrot.slane %v7690, 1
        %v7692 = vmax.f32 %v7690, %v7691
        %v7693 = vmax.f32 %v7641, %v7643
        %v7694 = vrot.slane %v7693, 4
        %v7695 = vmax.f32 %v7693, %v7694
        %v7696 = vrot.slane %v7695, 2
        %v7697 = vmax.f32 %v7695, %v7696
        %v7698 = vrot.slane %v7697, 1
        %v7699 = vmax.f32 %v7697, %v7698
        %v7700 = vsub.f32 %v7613, %v7650
        %v7701 = vsub.f32 %v7615, %v7650
        %v7702 = vsub.f32 %v7617, %v7657
        %v7703 = vsub.f32 %v7619, %v7657
        %v7704 = vsub.f32 %v7621, %v7664
        %v7705 = vsub.f32 %v7623, %v7664
        %v7706 = vsub.f32 %v7625, %v7671
        %v7707 = vsub.f32 %v7627, %v7671
        %v7708 = vsub.f32 %v7629, %v7678
        %v7709 = vsub.f32 %v7631, %v7678
        %v7710 = vsub.f32 %v7633, %v7685
        %v7711 = vsub.f32 %v7635, %v7685
        %v7712 = vsub.f32 %v7637, %v7692
        %v7713 = vsub.f32 %v7639, %v7692
        %v7714 = vsub.f32 %v7641, %v7699
        %v7715 = vsub.f32 %v7643, %v7699
        %v7716 = vmul.f32 %v7700, 1.442695
        %v7717 = vpow.pop %v7716
        %v7718 = vmul.f32 %v7701, 1.442695
        %v7719 = vpow.pop %v7718
        %v7720 = vmul.f32 %v7702, 1.442695
        %v7721 = vpow.pop %v7720
        %v7722 = vmul.f32 %v7703, 1.442695
        %v7723 = vpow.pop %v7722
        %v7724 = vmul.f32 %v7704, 1.442695
        %v7725 = vpow.pop %v7724
        %v7726 = vmul.f32 %v7705, 1.442695
        %v7727 = vpow.pop %v7726
        %v7728 = vmul.f32 %v7706, 1.442695
        %v7729 = vpow.pop %v7728
        %v7730 = vmul.f32 %v7707, 1.442695
        %v7731 = vpow.pop %v7730
        %v7732 = vmul.f32 %v7708, 1.442695
        %v7733 = vpow.pop %v7732
        %v7734 = vmul.f32 %v7709, 1.442695
        %v7735 = vpow.pop %v7734
        %v7736 = vmul.f32 %v7710, 1.442695
        %v7737 = vpow.pop %v7736
        %v7738 = vmul.f32 %v7711, 1.442695
        %v7739 = vpow.pop %v7738
        %v7740 = vmul.f32 %v7712, 1.442695
        %v7741 = vpow.pop %v7740
        %v7742 = vmul.f32 %v7713, 1.442695
        %v7743 = vpow.pop %v7742
        %v7744 = vmul.f32 %v7714, 1.442695
        %v7745 = vpow.pop %v7744
        %v7746 = vmul.f32 %v7715, 1.442695
        %v7747 = vpow.pop %v7746
        %v7748 = vadd.f32 %v7717, %v7719
        %v7749 = vrot.slane %v7748, 4
        %v7750 = vadd.f32 %v7748, %v7749
        %v7751 = vrot.slane %v7750, 2
        %v7752 = vadd.f32 %v7750, %v7751
        %v7753 = vrot.slane %v7752, 1
        %v7754 = vadd.f32 %v7752, %v7753
        %v7755 = vadd.f32 %v7721, %v7723
        %v7756 = vrot.slane %v7755, 4
        %v7757 = vadd.f32 %v7755, %v7756
        %v7758 = vrot.slane %v7757, 2
        %v7759 = vadd.f32 %v7757, %v7758
        %v7760 = vrot.slane %v7759, 1
        %v7761 = vadd.f32 %v7759, %v7760
        %v7762 = vadd.f32 %v7725, %v7727
        %v7763 = vrot.slane %v7762, 4
        %v7764 = vadd.f32 %v7762, %v7763
        %v7765 = vrot.slane %v7764, 2
        %v7766 = vadd.f32 %v7764, %v7765
        %v7767 = vrot.slane %v7766, 1
        %v7768 = vadd.f32 %v7766, %v7767
        %v7769 = vadd.f32 %v7729, %v7731
        %v7770 = vrot.slane %v7769, 4
        %v7771 = vadd.f32 %v7769, %v7770
        %v7772 = vrot.slane %v7771, 2
        %v7773 = vadd.f32 %v7771, %v7772
        %v7774 = vrot.slane %v7773, 1
        %v7775 = vadd.f32 %v7773, %v7774
        %v7776 = vadd.f32 %v7733, %v7735
        %v7777 = vrot.slane %v7776, 4
        %v7778 = vadd.f32 %v7776, %v7777
        %v7779 = vrot.slane %v7778, 2
        %v7780 = vadd.f32 %v7778, %v7779
        %v7781 = vrot.slane %v7780, 1
        %v7782 = vadd.f32 %v7780, %v7781
        %v7783 = vadd.f32 %v7737, %v7739
        %v7784 = vrot.slane %v7783, 4
        %v7785 = vadd.f32 %v7783, %v7784
        %v7786 = vrot.slane %v7785, 2
        %v7787 = vadd.f32 %v7785, %v7786
        %v7788 = vrot.slane %v7787, 1
        %v7789 = vadd.f32 %v7787, %v7788
        %v7790 = vadd.f32 %v7741, %v7743
        %v7791 = vrot.slane %v7790, 4
        %v7792 = vadd.f32 %v7790, %v7791
        %v7793 = vrot.slane %v7792, 2
        %v7794 = vadd.f32 %v7792, %v7793
        %v7795 = vrot.slane %v7794, 1
        %v7796 = vadd.f32 %v7794, %v7795
        %v7797 = vadd.f32 %v7745, %v7747
        %v7798 = vrot.slane %v7797, 4
        %v7799 = vadd.f32 %v7797, %v7798
        %v7800 = vrot.slane %v7799, 2
        %v7801 = vadd.f32 %v7799, %v7800
        %v7802 = vrot.slane %v7801, 1
        %v7803 = vadd.f32 %v7801, %v7802
        %v7804 = vrcp.pop %v7754
        %v7805 = vmul.f32 %v7717, %v7804
        %v7806 = vmul.f32 %v7719, %v7804
        %v7807 = vrcp.pop %v7761
        %v7808 = vmul.f32 %v7721, %v7807
        %v7809 = vmul.f32 %v7723, %v7807
        %v7810 = vrcp.pop %v7768
        %v7811 = vmul.f32 %v7725, %v7810
        %v7812 = vmul.f32 %v7727, %v7810
        %v7813 = vrcp.pop %v7775
        %v7814 = vmul.f32 %v7729, %v7813
        %v7815 = vmul.f32 %v7731, %v7813
        %v7816 = vrcp.pop %v7782
        %v7817 = vmul.f32 %v7733, %v7816
        %v7818 = vmul.f32 %v7735, %v7816
        %v7819 = vrcp.pop %v7789
        %v7820 = vmul.f32 %v7737, %v7819
        %v7821 = vmul.f32 %v7739, %v7819
        %v7822 = vrcp.pop %v7796
        %v7823 = vmul.f32 %v7741, %v7822
        %v7824 = vmul.f32 %v7743, %v7822
        %v7825 = vrcp.pop %v7803
        %v7826 = vmul.f32 %v7745, %v7825
        %v7827 = vmul.f32 %v7747, %v7825
        %vm7828 = vcmask 7168
        %7829 = vst.msk [vmem:[%s211] sm:$0xff] %vm7828, %v7805
        %7830 = vst.msk [vmem:[%s211 + $0x8] sm:$0xff] %vm7828, %v7806
        %7831 = vst.msk [vmem:[%s211 + $0x10] sm:$0xff] %vm7828, %v7808
        %7832 = vst.msk [vmem:[%s211 + $0x18] sm:$0xff] %vm7828, %v7809
        %7833 = vst.msk [vmem:[%s211 + $0x20] sm:$0xff] %vm7828, %v7811
        %7834 = vst.msk [vmem:[%s211 + $0x28] sm:$0xff] %vm7828, %v7812
        %7835 = vst.msk [vmem:[%s211 + $0x30] sm:$0xff] %vm7828, %v7814
        %7836 = vst.msk [vmem:[%s211 + $0x38] sm:$0xff] %vm7828, %v7815
        %7837 = vst.msk [vmem:[%s211 + $0x40] sm:$0xff] %vm7828, %v7817
        %7838 = vst.msk [vmem:[%s211 + $0x48] sm:$0xff] %vm7828, %v7818
        %7839 = vst.msk [vmem:[%s211 + $0x50] sm:$0xff] %vm7828, %v7820
        %7840 = vst.msk [vmem:[%s211 + $0x58] sm:$0xff] %vm7828, %v7821
        %7841 = vst.msk [vmem:[%s211 + $0x60] sm:$0xff] %vm7828, %v7823
        %7842 = vst.msk [vmem:[%s211 + $0x68] sm:$0xff] %vm7828, %v7824
        %7843 = vst.msk [vmem:[%s211 + $0x70] sm:$0xff] %vm7828, %v7826
        %7844 = vst.msk [vmem:[%s211 + $0x78] sm:$0xff] %vm7828, %v7827
        %s7845 = sand.u32 %s95, 1
        %s7846 = scalar_lea.sflag [#allocation3], %s7845
        %s7847 = sand.u32 %s95, 1
        %s7848 = smul.addr %s7847, 512
        %s7849 = scalar_lea.vmem [#allocation2], %s7848
        %s7850 = smul.u32 8, %s19
        %p7851 = scmp.lt.s32.totalorder %s7850, 15
        %s7852 = scalar_select %p7851, %s7850, 15
        %s7853 = smul.addr %s7852, 2
        %s7854 = smul.addr %s7853, 8
        %s7855 = scalar_lea.vmem %s4, %s7854
        // Predicated region
        $region33: #{clusternet_forward.3} parent=31 // pred_check
          %p7856 = pneg %p105
        $region34: #{clusternet_forward.3} parent=31 // pred_check_branch
          %7858 = sbr.rel (%p7856) target = $region36
        $region35: #{clusternet_forward.3} parent=31 // pred_region
          %s7859 = smul.u32 8, %s19
          %s7861 = ssub.s32 8192, 8192
          %7862 = vsyncadd %s7846, %s7861
          %s7863 = smul.addr %s7859, 8
          %s7864 = smul.addr %s7863, 128
          %s7865 = scalar_lea.hbm %s3, %s7864
          %s7866 = sshll.u32 %s7849, 4
          %s7867 = int_to_ptr.vmem [resolvable:$true] %s7866
          %7872 = dma.vmem_to_hbm [thread:$0]  %s7867, 8192, %s7865, %s7846, 512, 512, 32
        $region36: #{clusternet_forward.3} parent=31 // pred_fallthru
          _
        // Predicated region
        $region37: #{clusternet_forward.3} parent=31 // pred_check
          %p7873 = pneg %p131
        $region38: #{clusternet_forward.3} parent=31 // pred_check_branch
          %7875 = sbr.rel (%p7873) target = $region40
        $region39: #{clusternet_forward.3} parent=31 // pred_region
          %s7876 = smul.u32 8, %s19
        $region40: #{clusternet_forward.3} parent=31 // pred_fallthru
          _
      $region32: #{clusternet_forward.3} parent=5 // pred_fallthru
        _
      %p7877 = scmp.le.s32.totalorder 2, %s14
      // Predicated region
      $region41: #{clusternet_forward.3} parent=5 // pred_check
        %p7878 = pneg %p7877
      $region42: #{clusternet_forward.3} parent=5 // pred_check_branch
        %7880 = sbr.rel (%p7878) target = $region44
      $region43: #{clusternet_forward.3} parent=5 // pred_region
        %s7881 = ssub.s32 %s14, 2
        // Predicated region
        $region45: #{clusternet_forward.3} parent=43 // pred_check
          %p7882 = pneg %p111
        $region46: #{clusternet_forward.3} parent=43 // pred_check_branch
          %7884 = sbr.rel (%p7882) target = $region48
        $region47: #{clusternet_forward.3} parent=43 // pred_region
          %s7885 = sand.u32 %s96, 1
          %s7886 = scalar_lea.sflag [#allocation3], %s7885
          %s7887 = sand.u32 %s96, 1
          %s7888 = smul.addr %s7887, 512
          %s7889 = scalar_lea.vmem [#allocation2], %s7888
          %7890 = dma.done %s7886, 8192
        $region48: #{clusternet_forward.3} parent=43 // pred_fallthru
          _
        // Predicated region
        $region49: #{clusternet_forward.3} parent=43 // pred_check
          %p7891 = pneg %p137
        $region50: #{clusternet_forward.3} parent=43 // pred_check_branch
          %7893 = sbr.rel (%p7891) target = $region52
        $region51: #{clusternet_forward.3} parent=43 // pred_region
          %s7894 = smul.u32 8, %s20
          %p7895 = scmp.lt.s32.totalorder %s7894, 15
          %s7896 = scalar_select %p7895, %s7894, 15
          %s7897 = smul.addr %s7896, 2
          %s7898 = smul.addr %s7897, 8
          %s7899 = scalar_lea.vmem %s4, %s7898
        $region52: #{clusternet_forward.3} parent=43 // pred_fallthru
          _
      $region44: #{clusternet_forward.3} parent=5 // pred_fallthru
        _
    $region6: #{clusternet_forward.3} parent=1 // loop_footer
      %s18 = sadd.s32 1, %s14
    $region7: #{clusternet_forward.3} parent=1 // loop_footer_branch
      %13 = sbr.rel target = $region3
    $region8: #{clusternet_forward.3} parent=1 // loop_exit
      _
    %7900 = vsyncpa [#allocation3], 1
    %s7901 = scalar_lea.sflag [#allocation3], 1
    %7902 = vsyncpa %s7901, 1

</llo_original>
